<compile_context>
chip_gen: v7x
topology: tpu7x:2x2x1
jax: 0.10.0
libtpu: 0.0.40
codegen_flags: <defaults>
</compile_context>

<pallas_src>
import functools
import math

import jax
import jax.numpy as jnp
from jax.experimental import pallas as pl
from jax.experimental.pallas import tpu as pltpu


def _compiler_params(dims):
    return pltpu.CompilerParams(
        dimension_semantics=dims,
        vmem_limit_bytes=48 * 1024 * 1024,  # leaves headroom on v7x (64 MiB VMEM)
    )


def _pick_tile(dim, cap):
    """Largest tile <= cap that divides dim (falls back to dim itself)."""
    if dim <= cap:
        return dim
    for t in range(cap, 0, -1):
        if dim % t == 0:
            return t
    return dim


# ---------------------------------------------------------------------------
# Tiled linear kernel: out = x @ W^T + b  (optional fused ReLU, out_dtype param)
# ---------------------------------------------------------------------------
def _linear_kernel(x_ref, w_ref, b_ref, o_ref, acc_ref, *, activation):
    k = pl.program_id(2)

    @pl.when(k == 0)
    def _():
        acc_ref[...] = jnp.zeros_like(acc_ref)

    acc_ref[...] += jnp.dot(x_ref[...].astype(jnp.bfloat16), w_ref[...],
                            preferred_element_type=jnp.float32)

    @pl.when(k == pl.num_programs(2) - 1)
    def _():
        r = acc_ref[...] + b_ref[...]
        if activation == "relu":
            r = jnp.maximum(r, 0.0)
        o_ref[...] = r.astype(o_ref.dtype)


def pallas_linear(x, wt, b2, activation=None, out_dtype=jnp.float32,
                  tm_cap=256, tn_cap=512, tk_cap=512):
    """x: [M, K] (f32 or bf16); wt: [K, N] bf16 (pre-transposed); b2: [1, N] f32."""
    M, K = x.shape
    N = wt.shape[1]
    tm = _pick_tile(M, tm_cap)
    tn = _pick_tile(N, tn_cap)
    tk = _pick_tile(K, tk_cap)

    kernel = functools.partial(_linear_kernel, activation=activation)
    return pl.pallas_call(
        kernel,
        out_shape=jax.ShapeDtypeStruct((M, N), out_dtype),
        grid_spec=pltpu.PrefetchScalarGridSpec(
            num_scalar_prefetch=0,
            grid=(M // tm, N // tn, K // tk),
            in_specs=[
                pl.BlockSpec((tm, tk), lambda i, j, k: (i, k)),
                pl.BlockSpec((tk, tn), lambda i, j, k: (k, j)),
                pl.BlockSpec((1, tn), lambda i, j, k: (0, j)),
            ],
            out_specs=pl.BlockSpec((tm, tn), lambda i, j, k: (i, j)),
            scratch_shapes=[pltpu.VMEM((tm, tn), jnp.float32)],
        ),
        compiler_params=_compiler_params(("parallel", "parallel", "arbitrary")),
    )(x, wt, b2)


# ---------------------------------------------------------------------------
# Linear with fused residual-add + LayerNorm epilogue (requires tn == N == D)
# ---------------------------------------------------------------------------
def _linear_add_ln_kernel(x_ref, w_ref, b_ref, r_ref, g_ref, be_ref, o_ref,
                          acc_ref, *, eps):
    k = pl.program_id(1)

    @pl.when(k == 0)
    def _():
        acc_ref[...] = jnp.zeros_like(acc_ref)

    acc_ref[...] += jnp.dot(x_ref[...].astype(jnp.bfloat16), w_ref[...],
                            preferred_element_type=jnp.float32)

    @pl.when(k == pl.num_programs(1) - 1)
    def _():
        h = acc_ref[...] + b_ref[...] + r_ref[...]       # linear out + residual
        mu = jnp.mean(h, axis=-1, keepdims=True)
        d = h - mu
        var = jnp.mean(d * d, axis=-1, keepdims=True)
        inv = jax.lax.rsqrt(var + eps)
        o_ref[...] = ((d * inv) * g_ref[...] + be_ref[...]).astype(o_ref.dtype)


def pallas_linear_add_ln(x, wt, b2, res, g2, be2, eps=1e-5, tm_cap=256, tk_cap=512):
    """LayerNorm(res + (x @ W^T + b)).  x: [M,K]; wt: [K,N] bf16; res: [M,N] f32."""
    M, K = x.shape
    N = wt.shape[1]
    tm = _pick_tile(M, tm_cap)
    tk = _pick_tile(K, tk_cap)

    kernel = functools.partial(_linear_add_ln_kernel, eps=eps)
    return pl.pallas_call(
        kernel,
        out_shape=jax.ShapeDtypeStruct((M, N), jnp.float32),
        grid_spec=pltpu.PrefetchScalarGridSpec(
            num_scalar_prefetch=0,
            grid=(M // tm, K // tk),
            in_specs=[
                pl.BlockSpec((tm, tk), lambda i, k: (i, k)),
                pl.BlockSpec((tk, N), lambda i, k: (k, 0)),
                pl.BlockSpec((1, N), lambda i, k: (0, 0)),
                pl.BlockSpec((tm, N), lambda i, k: (i, 0)),
                pl.BlockSpec((1, N), lambda i, k: (0, 0)),
                pl.BlockSpec((1, N), lambda i, k: (0, 0)),
            ],
            out_specs=pl.BlockSpec((tm, N), lambda i, k: (i, 0)),
            scratch_shapes=[pltpu.VMEM((tm, N), jnp.float32)],
        ),
        compiler_params=_compiler_params(("parallel", "arbitrary")),
    )(x, wt, b2, res, g2, be2)


# ---------------------------------------------------------------------------
# Flash-style multi-head attention (all heads per grid step, lane-dense output)
# ---------------------------------------------------------------------------
def _flash_attn_kernel(kb_ref, q_ref, k_ref, v_ref, o_ref, m_sc, l_sc, acc_sc,
                       *, n_head, d_k, causal):
    ki = pl.program_id(2)

    @pl.when(ki == 0)
    def _():
        m_sc[...] = jnp.full_like(m_sc, -jnp.inf)
        l_sc[...] = jnp.zeros_like(l_sc)
        acc_sc[...] = jnp.zeros_like(acc_sc)

    q = q_ref[...]               # (tq, D) bf16, scale folded into Wq
    k = k_ref[...]               # (tk, D) bf16
    v = v_ref[...]               # (tk, D) bf16
    tq, tk = q.shape[0], k.shape[0]

    bias = kb_ref[...]           # (1, tk) f32 additive key-padding bias
    if causal:
        q0 = pl.program_id(1) * tq
        k0 = ki * tk
        rows = q0 + jax.lax.broadcasted_iota(jnp.int32, (tq, tk), 0)
        cols = k0 + jax.lax.broadcasted_iota(jnp.int32, (tq, tk), 1)
        bias = bias + jnp.where(cols > rows, jnp.float32(-1e9), jnp.float32(0.0))

    # TODO(synk): attention-weight dropout is eval-mode identity (stochastic
    # dropout would use pltpu.prng_seed / pltpu.prng_random_bits).
    for h in range(n_head):
        sl = slice(h * d_k, (h + 1) * d_k)
        s = jax.lax.dot_general(q[:, sl], k[:, sl], (((1,), (1,)), ((), ())),
                                preferred_element_type=jnp.float32)   # (tq, tk)
        s = s + bias
        m_prev = m_sc[h]                                              # (tq, 1)
        m_new = jnp.maximum(m_prev, jnp.max(s, axis=-1, keepdims=True))
        alpha = jnp.exp(m_prev - m_new)
        p = jnp.exp(s - m_new)
        l_sc[h] = alpha * l_sc[h] + jnp.sum(p, axis=-1, keepdims=True)
        acc_sc[h] = alpha * acc_sc[h] + jnp.dot(
            p.astype(v.dtype), v[:, sl], preferred_element_type=jnp.float32)
        m_sc[h] = m_new

    @pl.when(ki == pl.num_programs(2) - 1)
    def _():
        parts = [acc_sc[h] / l_sc[h] for h in range(n_head)]
        o_ref[...] = jnp.concatenate(parts, axis=-1).astype(o_ref.dtype)


def flash_attention(q_arr, kv_arr, key_bias, *, n_head, d_model, causal,
                    q_col, k_col, v_col):
    """q_arr: [B, Lq, cq*D] bf16; kv_arr: [B, Lk, ck*D] bf16;
    key_bias: [B, 1, Lk] f32 additive bias (0 keep / -1e9 masked).
    q_col/k_col/v_col select the D-wide column block inside the fused activations.
    Returns context [B, Lq, D] bf16 (heads already merged, lane-dense)."""
    B, Lq, _ = q_arr.shape
    Lk = kv_arr.shape[1]
    D = d_model
    d_k = D // n_head
    tq = _pick_tile(Lq, 128)
    tk = _pick_tile(Lk, 512)

    kernel = functools.partial(_flash_attn_kernel, n_head=n_head, d_k=d_k,
                               causal=causal)
    return pl.pallas_call(
        kernel,
        out_shape=jax.ShapeDtypeStruct((B, Lq, D), jnp.bfloat16),
        grid_spec=pltpu.PrefetchScalarGridSpec(
            num_scalar_prefetch=0,
            grid=(B, Lq // tq, Lk // tk),
            in_specs=[
                pl.BlockSpec((None, 1, tk), lambda b, qi, ki: (b, 0, ki)),
                pl.BlockSpec((None, tq, D), lambda b, qi, ki: (b, qi, q_col)),
                pl.BlockSpec((None, tk, D), lambda b, qi, ki: (b, ki, k_col)),
                pl.BlockSpec((None, tk, D), lambda b, qi, ki: (b, ki, v_col)),
            ],
            out_specs=pl.BlockSpec((None, tq, D), lambda b, qi, ki: (b, qi, 0)),
            scratch_shapes=[
                pltpu.VMEM((n_head, tq, 1), jnp.float32),    # running max m
                pltpu.VMEM((n_head, tq, 1), jnp.float32),    # running sum l
                pltpu.VMEM((n_head, tq, d_k), jnp.float32),  # context accumulator
            ],
        ),
        compiler_params=_compiler_params(("parallel", "parallel", "arbitrary")),
    )(key_bias, q_arr, kv_arr, kv_arr)


# ---------------------------------------------------------------------------
# Module forwards built from the kernels (prepared / pre-transposed params)
# ---------------------------------------------------------------------------
def _self_attention_block(x2, B, L, D, p, n_head, key_bias, causal):
    qkv = pallas_linear(x2, p['w_qkv'], p['b_qkv'],
                        out_dtype=jnp.bfloat16).reshape(B, L, 3 * D)
    return flash_attention(qkv, qkv, key_bias, n_head=n_head, d_model=D,
                           causal=causal, q_col=0, k_col=1, v_col=2)


def encoder_layer_forward(x, p, key_bias, n_head):
    B, L, D = x.shape
    x2 = x.reshape(B * L, D)
    ctx = _self_attention_block(x2, B, L, D, p['attn'], n_head, key_bias, False)
    x2 = pallas_linear_add_ln(ctx.reshape(B * L, D), p['attn']['w_o'],
                              p['attn']['b_o'], x2, p['ln1']['g'], p['ln1']['b'])
    # TODO(synk): residual dropout is eval-mode identity.
    h = pallas_linear(x2, p['ffn']['w1'], p['ffn']['b1'], activation="relu",
                      out_dtype=jnp.bfloat16)
    # TODO(synk): dropout between fc1 and fc2 is eval-mode identity.
    x2 = pallas_linear_add_ln(h, p['ffn']['w2'], p['ffn']['b2'],
                              x2, p['ln2']['g'], p['ln2']['b'])
    return x2.reshape(B, L, D)


def decoder_layer_forward(x, enc_out, p, src_key_bias, tgt_key_bias, n_head, causal):
    B, Lt, D = x.shape
    Ls = enc_out.shape[1]
    x2 = x.reshape(B * Lt, D)

    # masked self-attention (causal mask generated in-kernel)
    ctx = _self_attention_block(x2, B, Lt, D, p['self_attn'], n_head,
                                tgt_key_bias, causal)
    x2 = pallas_linear_add_ln(ctx.reshape(B * Lt, D), p['self_attn']['w_o'],
                              p['self_attn']['b_o'], x2, p['ln1']['g'], p['ln1']['b'])

    # encoder-decoder cross-attention (Q from x, fused KV from enc_out)
    q = pallas_linear(x2, p['cross_attn']['w_q'], p['cross_attn']['b_q'],
                      out_dtype=jnp.bfloat16).reshape(B, Lt, D)
    kv = pallas_linear(enc_out.reshape(B * Ls, D), p['cross_attn']['w_kv'],
                       p['cross_attn']['b_kv'],
                       out_dtype=jnp.bfloat16).reshape(B, Ls, 2 * D)
    ctx = flash_attention(q, kv, src_key_bias, n_head=n_head, d_model=D,
                          causal=False, q_col=0, k_col=0, v_col=1)
    x2 = pallas_linear_add_ln(ctx.reshape(B * Lt, D), p['cross_attn']['w_o'],
                              p['cross_attn']['b_o'], x2, p['ln2']['g'], p['ln2']['b'])

    # feed-forward
    h = pallas_linear(x2, p['ffn']['w1'], p['ffn']['b1'], activation="relu",
                      out_dtype=jnp.bfloat16)
    x2 = pallas_linear_add_ln(h, p['ffn']['w2'], p['ffn']['b2'],
                              x2, p['ln3']['g'], p['ln3']['b'])
    return x2.reshape(B, Lt, D)


def _mask_to_key_bias(mask, B, Lk):
    """Compact additive key bias from a [B,1,1,Lk] / [B,1,Lq,Lk] padding mask."""
    if mask is None:
        return jnp.zeros((B, 1, Lk), jnp.float32)
    m = mask.reshape(B, -1, Lk)[:, -1, :]          # last query row carries padding
    return jnp.where(m == 0, jnp.float32(-1e9),
                     jnp.float32(0.0)).reshape(B, 1, Lk)


def encoder_forward(src, src_key_bias, pp, pe, n_head):
    x = pp['embed'][src]                  # TODO(synk): embedding gather stays in XLA.
    x = x + pe[:x.shape[0]][:, None, :]   # mirrors the module's PE[:x.size(0)] indexing
    # TODO(synk): dropout after positional encoding is eval-mode identity.
    for lp in pp['layers']:
        x = encoder_layer_forward(x, lp, src_key_bias, n_head)
    return x


def decoder_forward(tgt, enc_out, src_key_bias, tgt_key_bias, pp, pe, n_head, causal):
    x = pp['embed'][tgt]
    x = x + pe[:x.shape[0]][:, None, :]
    for lp in pp['layers']:
        x = decoder_layer_forward(x, enc_out, lp, src_key_bias, tgt_key_bias,
                                  n_head, causal)
    return x


def transformer_forward(src, tgt, src_mask, tgt_mask, pp, pe, *, n_head, tgt_vocab):
    B, Ls = src.shape
    Lt = tgt.shape[1]
    src_key_bias = _mask_to_key_bias(src_mask, B, Ls)
    # TODO(synk): tgt_mask is interpreted as causal (+ optional key padding); an
    # arbitrary dense non-causal target mask is not plumbed through the kernel.
    causal = tgt_mask is not None
    tgt_key_bias = _mask_to_key_bias(tgt_mask, B, Lt)

    enc_out = encoder_forward(src, src_key_bias, pp['enc'], pe, n_head)
    dec_out = decoder_forward(tgt, enc_out, src_key_bias, tgt_key_bias,
                              pp['dec'], pe, n_head, causal)
    Bt, Lt2, D = dec_out.shape
    logits = pallas_linear(dec_out.reshape(Bt * Lt2, D), pp['out_w'], pp['out_b'])
    return logits.reshape(Bt, Lt2, -1)[:, :, :tgt_vocab]   # drop vocab lane padding


# ---------------------------------------------------------------------------
# One-time parameter preparation (hoisted out of the jitted forward)
# ---------------------------------------------------------------------------
def _prep_linear(w, b):
    return jnp.transpose(w).astype(jnp.bfloat16), b.reshape(1, -1).astype(jnp.float32)


def _prep_ln(ln):
    return {'g': ln['g'].reshape(1, -1).astype(jnp.float32),
            'b': ln['b'].reshape(1, -1).astype(jnp.float32)}


def _prep_self_mha(p, d_model):
    s = 1.0 / math.sqrt(float(d_model))     # fold score scale into Wq AND bq
    w_qkv = jnp.concatenate([p['wq'] * s, p['wk'], p['wv']], axis=0)
    b_qkv = jnp.concatenate([p['bq'] * s, p['bk'], p['bv']], axis=0)
    w_qkv_t, b_qkv2 = _prep_linear(w_qkv, b_qkv)
    w_o, b_o = _prep_linear(p['wo'], p['bo'])
    return {'w_qkv': w_qkv_t, 'b_qkv': b_qkv2, 'w_o': w_o, 'b_o': b_o}


def _prep_cross_mha(p, d_model):
    s = 1.0 / math.sqrt(float(d_model))
    w_q, b_q = _prep_linear(p['wq'] * s, p['bq'] * s)
    w_kv = jnp.concatenate([p['wk'], p['wv']], axis=0)
    b_kv = jnp.concatenate([p['bk'], p['bv']], axis=0)
    w_kv_t, b_kv2 = _prep_linear(w_kv, b_kv)
    w_o, b_o = _prep_linear(p['wo'], p['bo'])
    return {'w_q': w_q, 'b_q': b_q, 'w_kv': w_kv_t, 'b_kv': b_kv2,
            'w_o': w_o, 'b_o': b_o}


def _prep_ffn(p):
    w1, b1 = _prep_linear(p['w1'], p['b1'])
    w2, b2 = _prep_linear(p['w2'], p['b2'])
    return {'w1': w1, 'b1': b1, 'w2': w2, 'b2': b2}


def prepare_params(params, d_model):
    enc_layers = [{'attn': _prep_self_mha(lp['attn'], d_model),
                   'ffn': _prep_ffn(lp['ffn']),
                   'ln1': _prep_ln(lp['ln1']), 'ln2': _prep_ln(lp['ln2'])}
                  for lp in params['enc']['layers']]
    dec_layers = [{'self_attn': _prep_self_mha(lp['self_attn'], d_model),
                   'cross_attn': _prep_cross_mha(lp['cross_attn'], d_model),
                   'ffn': _prep_ffn(lp['ffn']),
                   'ln1': _prep_ln(lp['ln1']), 'ln2': _prep_ln(lp['ln2']),
                   'ln3': _prep_ln(lp['ln3'])}
                  for lp in params['dec']['layers']]
    # Pad the output-projection rows (vocab) to a multiple of 128 lanes.
    out_w, out_b = params['out_w'], params['out_b']
    V, D = out_w.shape
    Vp = ((V + 127) // 128) * 128
    w_pad = jnp.zeros((Vp, D), jnp.float32).at[:V].set(out_w)
    b_pad = jnp.zeros((Vp,), jnp.float32).at[:V].set(out_b)
    out_w_t, out_b2 = _prep_linear(w_pad, b_pad)
    return {'enc': {'embed': params['enc']['embed'], 'layers': enc_layers},
            'dec': {'embed': params['dec']['embed'], 'layers': dec_layers},
            'out_w': out_w_t, 'out_b': out_b2}


# ---------------------------------------------------------------------------
# Parameter init (PyTorch (out, in) weight layout) and positional encoding
# ---------------------------------------------------------------------------
def _xavier(key, shape):
    fan_out, fan_in = shape
    a = math.sqrt(6.0 / (fan_in + fan_out))
    return jax.random.uniform(key, shape, jnp.float32, -a, a)


def _init_linear(key, d_out, d_in):
    kw, kb = jax.random.split(key)
    bound = 1.0 / math.sqrt(d_in)
    return (_xavier(kw, (d_out, d_in)),
            jax.random.uniform(kb, (d_out,), jnp.float32, -bound, bound))


def _init_mha(key, d_model):
    ks = jax.random.split(key, 4)
    wq, bq = _init_linear(ks[0], d_model, d_model)
    wk, bk = _init_linear(ks[1], d_model, d_model)
    wv, bv = _init_linear(ks[2], d_model, d_model)
    wo, bo = _init_linear(ks[3], d_model, d_model)
    return {'wq': wq, 'bq': bq, 'wk': wk, 'bk': bk,
            'wv': wv, 'bv': bv, 'wo': wo, 'bo': bo}


def _init_ffn(key, d_model, d_ff):
    k1, k2 = jax.random.split(key)
    w1, b1 = _init_linear(k1, d_ff, d_model)
    w2, b2 = _init_linear(k2, d_model, d_ff)
    return {'w1': w1, 'b1': b1, 'w2': w2, 'b2': b2}


def _init_ln(d_model):
    return {'g': jnp.ones((d_model,), jnp.float32),
            'b': jnp.zeros((d_model,), jnp.float32)}


def _init_encoder_layer(key, d_model, d_ff):
    k1, k2 = jax.random.split(key)
    return {'attn': _init_mha(k1, d_model), 'ffn': _init_ffn(k2, d_model, d_ff),
            'ln1': _init_ln(d_model), 'ln2': _init_ln(d_model)}


def _init_decoder_layer(key, d_model, d_ff):
    k1, k2, k3 = jax.random.split(key, 3)
    return {'self_attn': _init_mha(k1, d_model), 'cross_attn': _init_mha(k2, d_model),
            'ffn': _init_ffn(k3, d_model, d_ff),
            'ln1': _init_ln(d_model), 'ln2': _init_ln(d_model), 'ln3': _init_ln(d_model)}


def init_transformer(key, src_vocab, tgt_vocab, d_model, d_ff, n_layers):
    ke, kd, ko, kee, ked = jax.random.split(key, 5)
    enc_layers = [_init_encoder_layer(k, d_model, d_ff)
                  for k in jax.random.split(ke, n_layers)]
    dec_layers = [_init_decoder_layer(k, d_model, d_ff)
                  for k in jax.random.split(kd, n_layers)]
    out_w, out_b = _init_linear(ko, tgt_vocab, d_model)
    return {'enc': {'embed': _xavier(kee, (src_vocab, d_model)), 'layers': enc_layers},
            'dec': {'embed': _xavier(ked, (tgt_vocab, d_model)), 'layers': dec_layers},
            'out_w': out_w, 'out_b': out_b}


def make_positional_encoding(max_len, d_model):
    pos = jnp.arange(max_len, dtype=jnp.float32)[:, None]
    div = jnp.exp(jnp.arange(0, d_model, 2, dtype=jnp.float32)
                  * (-math.log(10000.0) / d_model))
    pe = jnp.zeros((max_len, d_model), jnp.float32)
    pe = pe.at[:, 0::2].set(jnp.sin(pos / div))   # mirrors module: sin(position / div_term)
    pe = pe.at[:, 1::2].set(jnp.cos(pos / div))
    return pe


# ---------------------------------------------------------------------------
# Pure-JAX f32 reference mirroring the PyTorch module (eval mode)
# ---------------------------------------------------------------------------
def _ref_linear(x, w, b):
    return x @ w.T + b


def _ref_layer_norm(x, g, b, eps=1e-5):
    mu = jnp.mean(x, axis=-1, keepdims=True)
    var = jnp.mean((x - mu) ** 2, axis=-1, keepdims=True)
    return (x - mu) / jnp.sqrt(var + eps) * g + b


def _ref_mha(q, k, v, p, n_head, mask):
    B, Lq, D = q.shape
    Lk = k.shape[1]
    d_k = D // n_head
    Q = _ref_linear(q, p['wq'], p['bq']).reshape(B, Lq, n_head, d_k).transpose(0, 2, 1, 3)
    K = _ref_linear(k, p['wk'], p['bk']).reshape(B, Lk, n_head, d_k).transpose(0, 2, 1, 3)
    V = _ref_linear(v, p['wv'], p['bv']).reshape(B, Lk, n_head, d_k).transpose(0, 2, 1, 3)
    scores = (Q @ jnp.swapaxes(K, -2, -1)) / math.sqrt(float(D))
    if mask is not None:
        scores = jnp.where(mask == 0, -1e9, scores)
    attn = jax.nn.softmax(scores, axis=-1)
    out = (attn @ V).transpose(0, 2, 1, 3).reshape(B, Lq, D)
    return _ref_linear(out, p['wo'], p['bo'])


def _ref_ffn(x, p):
    return _ref_linear(jax.nn.relu(_ref_linear(x, p['w1'], p['b1'])), p['w2'], p['b2'])


def reference_transformer(src, tgt, src_mask, tgt_mask, params, pe, n_head):
    x = params['enc']['embed'][src]
    x = x + pe[:x.shape[0]][:, None, :]
    for lp in params['enc']['layers']:
        x = _ref_layer_norm(x + _ref_mha(x, x, x, lp['attn'], n_head, src_mask),
                            lp['ln1']['g'], lp['ln1']['b'])
        x = _ref_layer_norm(x + _ref_ffn(x, lp['ffn']), lp['ln2']['g'], lp['ln2']['b'])
    enc_out = x

    x = params['dec']['embed'][tgt]
    x = x + pe[:x.shape[0]][:, None, :]
    for lp in params['dec']['layers']:
        x = _ref_layer_norm(x + _ref_mha(x, x, x, lp['self_attn'], n_head, tgt_mask),
                            lp['ln1']['g'], lp['ln1']['b'])
        x = _ref_layer_norm(x + _ref_mha(x, enc_out, enc_out, lp['cross_attn'],
                                         n_head, src_mask),
                            lp['ln2']['g'], lp['ln2']['b'])
        x = _ref_layer_norm(x + _ref_ffn(x, lp['ffn']), lp['ln3']['g'], lp['ln3']['b'])

    return _ref_linear(x, params['out_w'], params['out_b'])


# ---------------------------------------------------------------------------
if __name__ == "__main__":
    B = 2
    src_len, tgt_len = 16, 16
    d_model, n_head, d_ff, n_layers = 128, 4, 256, 2
    src_vocab, tgt_vocab = 61, 64
    max_len = 64

    root = jax.random.PRNGKey(0)
    kp, ks, kt = jax.random.split(root, 3)
    params = init_transformer(kp, src_vocab, tgt_vocab, d_model, d_ff, n_layers)
    pe = make_positional_encoding(max_len, d_model)
    prepared = prepare_params(params, d_model)   # one-time weight prep, outside jit

    src = jax.random.randint(ks, (B, src_len), 0, src_vocab)
    tgt = jax.random.randint(kt, (B, tgt_len), 0, tgt_vocab)

    # src padding mask (batch 1 has 3 padded key positions) and causal tgt mask,
    # with the shapes the PyTorch module documents.
    src_mask = jnp.ones((B, 1, 1, src_len), jnp.float32)
    src_mask = src_mask.at[1, :, :, src_len - 3:].set(0.0)
    tgt_mask = jnp.broadcast_to(
        jnp.tril(jnp.ones((tgt_len, tgt_len), jnp.float32))[None, None],
        (B, 1, tgt_len, tgt_len))

    fwd = jax.jit(functools.partial(transformer_forward,
                                    n_head=n_head, tgt_vocab=tgt_vocab))
    out = fwd(src, tgt, src_mask, tgt_mask, prepared, pe)
    out = jax.block_until_ready(out)

    ref = reference_transformer(src, tgt, src_mask, tgt_mask, params, pe, n_head)

    assert out.shape == (B, tgt_len, tgt_vocab)
    max_err = float(jnp.max(jnp.abs(out - ref)))
    mean_err = float(jnp.mean(jnp.abs(out - ref)))
    # Tolerance reflects bf16 MXU operands (f32 accumulation) through
    # 2 encoder + 2 decoder layers vs. an all-f32 reference.
    assert jnp.allclose(out, ref, atol=0.25, rtol=0.1), (max_err, mean_err)
    assert mean_err < 0.05, mean_err
    print("KERNEL_OK")
</pallas_src>

<mosaic_0001>
module attributes {stable_mosaic.version = 11 : i64} {
  func.func @_linear_add_ln_kernel(%arg0: i32, %arg1: i32, %arg2: memref<32x128xbf16, #tpu.memory_space<vmem>>, %arg3: memref<128x128xbf16, #tpu.memory_space<vmem>>, %arg4: memref<1x128xf32, #tpu.memory_space<vmem>>, %arg5: memref<32x128xf32, #tpu.memory_space<vmem>>, %arg6: memref<1x128xf32, #tpu.memory_space<vmem>>, %arg7: memref<1x128xf32, #tpu.memory_space<vmem>>, %arg8: memref<32x128xf32, #tpu.memory_space<vmem>>, %arg9: memref<32x128xf32, #tpu.memory_space<vmem>>) attributes {dimension_semantics = [#tpu.dimension_semantics<parallel>, #tpu.dimension_semantics<arbitrary>], iteration_bounds = array<i64: 1, 1>, scalar_prefetch = 0 : i64, scratch_operands = 1 : i64, tpu.core_type = #tpu.core_type<tc>, window_params = [{transform_indices = @transform_0, window_bounds = array<i64: 32, 128>}, {transform_indices = @transform_1, window_bounds = array<i64: 128, 128>}, {pipeline_mode = #tpu.pipeline_mode<synchronous>, transform_indices = @transform_2, window_bounds = array<i64: 1, 128>}, {transform_indices = @transform_3, window_bounds = array<i64: 32, 128>}, {pipeline_mode = #tpu.pipeline_mode<synchronous>, transform_indices = @transform_4, window_bounds = array<i64: 1, 128>}, {pipeline_mode = #tpu.pipeline_mode<synchronous>, transform_indices = @transform_5, window_bounds = array<i64: 1, 128>}, {transform_indices = @transform_6, window_bounds = array<i64: 32, 128>}]} {
    %c0_i32 = arith.constant 0 : i32
    %0 = arith.cmpi eq, %arg1, %c0_i32 : i32
    %1 = arith.extui %0 : i1 to i32
    %c0_i32_0 = arith.constant 0 : i32
    %2 = arith.cmpi ne, %1, %c0_i32_0 : i32
    scf.if %2 {
      %cst_10 = arith.constant 0.000000e+00 : f32
      %12 = vector.broadcast %cst_10 : f32 to vector<32x128xf32>
      %c0_11 = arith.constant 0 : index
      %c0_12 = arith.constant 0 : index
      %13 = vector.load %arg9[%c0_11, %c0_12] : memref<32x128xf32, #tpu.memory_space<vmem>>, vector<32x128xf32>
      tpu.vector_store %arg9[%c0_11, %c0_12], %12 {strides = array<i32>} : memref<32x128xf32, #tpu.memory_space<vmem>>, vector<32x128xf32>,
    } else {
    }
    %c0 = arith.constant 0 : index
    %c0_1 = arith.constant 0 : index
    %3 = vector.load %arg9[%c0, %c0_1] : memref<32x128xf32, #tpu.memory_space<vmem>>, vector<32x128xf32>
    %c0_2 = arith.constant 0 : index
    %c0_3 = arith.constant 0 : index
    %4 = vector.load %arg2[%c0_2, %c0_3] : memref<32x128xbf16, #tpu.memory_space<vmem>>, vector<32x128xbf16>
    %c0_4 = arith.constant 0 : index
    %c0_5 = arith.constant 0 : index
    %5 = vector.load %arg3[%c0_4, %c0_5] : memref<128x128xbf16, #tpu.memory_space<vmem>>, vector<128x128xbf16>
    %cst = arith.constant dense<0.000000e+00> : vector<32x128xf32>
    %6 = tpu.matmul %4, %5, %cst {dimension_numbers = #tpu.dot_dimension_numbers<[1], [0], [0], [1], [0, 0, 1, 1], [], []>} : vector<32x128xbf16>, vector<128x128xbf16>, vector<32x128xf32> -> vector<32x128xf32>
    %7 = arith.addf %3, %6 : vector<32x128xf32>
    %c0_6 = arith.constant 0 : index
    %c0_7 = arith.constant 0 : index
    %8 = vector.load %arg9[%c0_6, %c0_7] : memref<32x128xf32, #tpu.memory_space<vmem>>, vector<32x128xf32>
    tpu.vector_store %arg9[%c0_6, %c0_7], %7 {strides = array<i32>} : memref<32x128xf32, #tpu.memory_space<vmem>>, vector<32x128xf32>,
    %c0_i32_8 = arith.constant 0 : i32
    %9 = arith.cmpi eq, %arg1, %c0_i32_8 : i32
    %10 = arith.extui %9 : i1 to i32
    %c0_i32_9 = arith.constant 0 : i32
    %11 = arith.cmpi ne, %10, %c0_i32_9 : i32
    scf.if %11 {
      %c0_10 = arith.constant 0 : index
      %c0_11 = arith.constant 0 : index
      %12 = vector.load %arg9[%c0_10, %c0_11] : memref<32x128xf32, #tpu.memory_space<vmem>>, vector<32x128xf32>
      %c0_12 = arith.constant 0 : index
      %c0_13 = arith.constant 0 : index
      %13 = vector.load %arg4[%c0_12, %c0_13] : memref<1x128xf32, #tpu.memory_space<vmem>>, vector<1x128xf32>
      %14 = vector.broadcast %13 : vector<1x128xf32> to vector<32x128xf32>
      %15 = arith.addf %12, %14 : vector<32x128xf32>
      %c0_14 = arith.constant 0 : index
      %c0_15 = arith.constant 0 : index
      %16 = vector.load %arg5[%c0_14, %c0_15] : memref<32x128xf32, #tpu.memory_space<vmem>>, vector<32x128xf32>
      %17 = arith.addf %15, %16 : vector<32x128xf32>
      %cst_16 = arith.constant dense<0.000000e+00> : vector<32xf32>
      %18 = vector.multi_reduction <add>, %17, %cst_16 [1] : vector<32x128xf32> to vector<32xf32>
      %19 = vector.shape_cast %18 : vector<32xf32> to vector<32x1xf32>
      %cst_17 = arith.constant 1.280000e+02 : f32
      %20 = vector.broadcast %cst_17 : f32 to vector<32x1xf32>
      %21 = arith.divf %19, %20 : vector<32x1xf32>
      %22 = vector.broadcast %21 : vector<32x1xf32> to vector<32x128xf32>
      %23 = arith.subf %17, %22 : vector<32x128xf32>
      %24 = arith.mulf %23, %23 : vector<32x128xf32>
      %cst_18 = arith.constant dense<0.000000e+00> : vector<32xf32>
      %25 = vector.multi_reduction <add>, %24, %cst_18 [1] : vector<32x128xf32> to vector<32xf32>
      %26 = vector.shape_cast %25 : vector<32xf32> to vector<32x1xf32>
      %cst_19 = arith.constant 1.280000e+02 : f32
      %27 = vector.broadcast %cst_19 : f32 to vector<32x1xf32>
      %28 = arith.divf %26, %27 : vector<32x1xf32>
      %cst_20 = arith.constant 9.99999974E-6 : f32
      %29 = vector.broadcast %cst_20 : f32 to vector<32x1xf32>
      %30 = arith.addf %28, %29 : vector<32x1xf32>
      %31 = math.rsqrt %30 : vector<32x1xf32>
      %32 = vector.broadcast %31 : vector<32x1xf32> to vector<32x128xf32>
      %33 = arith.mulf %23, %32 : vector<32x128xf32>
      %c0_21 = arith.constant 0 : index
      %c0_22 = arith.constant 0 : index
      %34 = vector.load %arg6[%c0_21, %c0_22] : memref<1x128xf32, #tpu.memory_space<vmem>>, vector<1x128xf32>
      %35 = vector.broadcast %34 : vector<1x128xf32> to vector<32x128xf32>
      %36 = arith.mulf %33, %35 : vector<32x128xf32>
      %c0_23 = arith.constant 0 : index
      %c0_24 = arith.constant 0 : index
      %37 = vector.load %arg7[%c0_23, %c0_24] : memref<1x128xf32, #tpu.memory_space<vmem>>, vector<1x128xf32>
      %38 = vector.broadcast %37 : vector<1x128xf32> to vector<32x128xf32>
      %39 = arith.addf %36, %38 : vector<32x128xf32>
      %c0_25 = arith.constant 0 : index
      %c0_26 = arith.constant 0 : index
      %40 = vector.load %arg8[%c0_25, %c0_26] : memref<32x128xf32, #tpu.memory_space<vmem>>, vector<32x128xf32>
      tpu.vector_store %arg8[%c0_25, %c0_26], %39 {strides = array<i32>} : memref<32x128xf32, #tpu.memory_space<vmem>>, vector<32x128xf32>,
    } else {
    }
    return
  }
  func.func @transform_0(%arg0: i32, %arg1: i32) -> (i32, i32) {
    %c0_i32 = arith.constant 0 : i32
    return %arg0, %arg1 : i32, i32
  }
  func.func @transform_1(%arg0: i32, %arg1: i32) -> (i32, i32) {
    %c0_i32 = arith.constant 0 : i32
    %c0_i32_0 = arith.constant 0 : i32
    return %arg1, %c0_i32 : i32, i32
  }
  func.func @transform_2(%arg0: i32, %arg1: i32) -> (i32, i32) {
    %c0_i32 = arith.constant 0 : i32
    %c0_i32_0 = arith.constant 0 : i32
    %c0_i32_1 = arith.constant 0 : i32
    return %c0_i32, %c0_i32_0 : i32, i32
  }
  func.func @transform_3(%arg0: i32, %arg1: i32) -> (i32, i32) {
    %c0_i32 = arith.constant 0 : i32
    %c0_i32_0 = arith.constant 0 : i32
    return %arg0, %c0_i32 : i32, i32
  }
  func.func @transform_4(%arg0: i32, %arg1: i32) -> (i32, i32) {
    %c0_i32 = arith.constant 0 : i32
    %c0_i32_0 = arith.constant 0 : i32
    %c0_i32_1 = arith.constant 0 : i32
    return %c0_i32, %c0_i32_0 : i32, i32
  }
  func.func @transform_5(%arg0: i32, %arg1: i32) -> (i32, i32) {
    %c0_i32 = arith.constant 0 : i32
    %c0_i32_0 = arith.constant 0 : i32
    %c0_i32_1 = arith.constant 0 : i32
    return %c0_i32, %c0_i32_0 : i32, i32
  }
  func.func @transform_6(%arg0: i32, %arg1: i32) -> (i32, i32) {
    %c0_i32 = arith.constant 0 : i32
    %c0_i32_0 = arith.constant 0 : i32
    return %arg0, %c0_i32 : i32, i32
  }
}

module attributes {stable_mosaic.version = 11 : i64} {
  func.func @_linear_kernel(%arg0: i32, %arg1: i32, %arg2: i32, %arg3: memref<32x128xf32, #tpu.memory_space<vmem>>, %arg4: memref<128x384xbf16, #tpu.memory_space<vmem>>, %arg5: memref<1x384xf32, #tpu.memory_space<vmem>>, %arg6: memref<32x384xbf16, #tpu.memory_space<vmem>>, %arg7: memref<32x384xf32, #tpu.memory_space<vmem>>) attributes {dimension_semantics = [#tpu.dimension_semantics<parallel>, #tpu.dimension_semantics<parallel>, #tpu.dimension_semantics<arbitrary>], iteration_bounds = array<i64: 1, 1, 1>, scalar_prefetch = 0 : i64, scratch_operands = 1 : i64, tpu.core_type = #tpu.core_type<tc>, window_params = [{transform_indices = @transform_0, window_bounds = array<i64: 32, 128>}, {transform_indices = @transform_1, window_bounds = array<i64: 128, 384>}, {transform_indices = @transform_2, window_bounds = array<i64: 1, 384>}, {transform_indices = @transform_3, window_bounds = array<i64: 32, 384>}]} {
    %c0_i32 = arith.constant 0 : i32
    %0 = arith.cmpi eq, %arg2, %c0_i32 : i32
    %1 = arith.extui %0 : i1 to i32
    %c0_i32_0 = arith.constant 0 : i32
    %2 = arith.cmpi ne, %1, %c0_i32_0 : i32
    scf.if %2 {
      %cst_10 = arith.constant 0.000000e+00 : f32
      %13 = vector.broadcast %cst_10 : f32 to vector<32x384xf32>
      %c0_11 = arith.constant 0 : index
      %c0_12 = arith.constant 0 : index
      %14 = vector.load %arg7[%c0_11, %c0_12] : memref<32x384xf32, #tpu.memory_space<vmem>>, vector<32x384xf32>
      tpu.vector_store %arg7[%c0_11, %c0_12], %13 {strides = array<i32>} : memref<32x384xf32, #tpu.memory_space<vmem>>, vector<32x384xf32>,
    } else {
    }
    %c0 = arith.constant 0 : index
    %c0_1 = arith.constant 0 : index
    %3 = vector.load %arg7[%c0, %c0_1] : memref<32x384xf32, #tpu.memory_space<vmem>>, vector<32x384xf32>
    %c0_2 = arith.constant 0 : index
    %c0_3 = arith.constant 0 : index
    %4 = vector.load %arg3[%c0_2, %c0_3] : memref<32x128xf32, #tpu.memory_space<vmem>>, vector<32x128xf32>
    %5 = arith.truncf %4 : vector<32x128xf32> to vector<32x128xbf16>
    %c0_4 = arith.constant 0 : index
    %c0_5 = arith.constant 0 : index
    %6 = vector.load %arg4[%c0_4, %c0_5] : memref<128x384xbf16, #tpu.memory_space<vmem>>, vector<128x384xbf16>
    %cst = arith.constant dense<0.000000e+00> : vector<32x384xf32>
    %7 = tpu.matmul %5, %6, %cst {dimension_numbers = #tpu.dot_dimension_numbers<[1], [0], [0], [1], [0, 0, 1, 1], [], []>} : vector<32x128xbf16>, vector<128x384xbf16>, vector<32x384xf32> -> vector<32x384xf32>
    %8 = arith.addf %3, %7 : vector<32x384xf32>
    %c0_6 = arith.constant 0 : index
    %c0_7 = arith.constant 0 : index
    %9 = vector.load %arg7[%c0_6, %c0_7] : memref<32x384xf32, #tpu.memory_space<vmem>>, vector<32x384xf32>
    tpu.vector_store %arg7[%c0_6, %c0_7], %8 {strides = array<i32>} : memref<32x384xf32, #tpu.memory_space<vmem>>, vector<32x384xf32>,
    %c0_i32_8 = arith.constant 0 : i32
    %10 = arith.cmpi eq, %arg2, %c0_i32_8 : i32
    %11 = arith.extui %10 : i1 to i32
    %c0_i32_9 = arith.constant 0 : i32
    %12 = arith.cmpi ne, %11, %c0_i32_9 : i32
    scf.if %12 {
      %c0_10 = arith.constant 0 : index
      %c0_11 = arith.constant 0 : index
      %13 = vector.load %arg7[%c0_10, %c0_11] : memref<32x384xf32, #tpu.memory_space<vmem>>, vector<32x384xf32>
      %c0_12 = arith.constant 0 : index
      %c0_13 = arith.constant 0 : index
      %14 = vector.load %arg5[%c0_12, %c0_13] : memref<1x384xf32, #tpu.memory_space<vmem>>, vector<1x384xf32>
      %15 = vector.broadcast %14 : vector<1x384xf32> to vector<32x384xf32>
      %16 = arith.addf %13, %15 : vector<32x384xf32>
      %17 = arith.truncf %16 : vector<32x384xf32> to vector<32x384xbf16>
      %c0_14 = arith.constant 0 : index
      %c0_15 = arith.constant 0 : index
      %18 = vector.load %arg6[%c0_14, %c0_15] : memref<32x384xbf16, #tpu.memory_space<vmem>>, vector<32x384xbf16>
      tpu.vector_store %arg6[%c0_14, %c0_15], %17 {strides = array<i32>} : memref<32x384xbf16, #tpu.memory_space<vmem>>, vector<32x384xbf16>,
    } else {
    }
    return
  }
  func.func @transform_0(%arg0: i32, %arg1: i32, %arg2: i32) -> (i32, i32) {
    %c0_i32 = arith.constant 0 : i32
    return %arg0, %arg2 : i32, i32
  }
  func.func @transform_1(%arg0: i32, %arg1: i32, %arg2: i32) -> (i32, i32) {
    %c0_i32 = arith.constant 0 : i32
    return %arg2, %arg1 : i32, i32
  }
  func.func @transform_2(%arg0: i32, %arg1: i32, %arg2: i32) -> (i32, i32) {
    %c0_i32 = arith.constant 0 : i32
    %c0_i32_0 = arith.constant 0 : i32
    return %c0_i32, %arg1 : i32, i32
  }
  func.func @transform_3(%arg0: i32, %arg1: i32, %arg2: i32) -> (i32, i32) {
    %c0_i32 = arith.constant 0 : i32
    return %arg0, %arg1 : i32, i32
  }
}

module attributes {stable_mosaic.version = 11 : i64} {
  func.func @_flash_attn_kernel(%arg0: i32, %arg1: i32, %arg2: i32, %arg3: memref<1x1x16xf32, #tpu.memory_space<vmem>>, %arg4: memref<1x16x128xbf16, #tpu.memory_space<vmem>>, %arg5: memref<1x16x128xbf16, #tpu.memory_space<vmem>>, %arg6: memref<1x16x128xbf16, #tpu.memory_space<vmem>>, %arg7: memref<1x16x128xbf16, #tpu.memory_space<vmem>>, %arg8: memref<4x16x1xf32, #tpu.memory_space<vmem>>, %arg9: memref<4x16x1xf32, #tpu.memory_space<vmem>>, %arg10: memref<4x16x32xf32, #tpu.memory_space<vmem>>) attributes {dimension_semantics = [#tpu.dimension_semantics<parallel>, #tpu.dimension_semantics<parallel>, #tpu.dimension_semantics<arbitrary>], iteration_bounds = array<i64: 2, 1, 1>, scalar_prefetch = 0 : i64, scratch_operands = 3 : i64, tpu.core_type = #tpu.core_type<tc>, window_params = [{transform_indices = @transform_0, window_bounds = array<i64: 1, 1, 16>}, {transform_indices = @transform_1, window_bounds = array<i64: 1, 16, 128>}, {transform_indices = @transform_2, window_bounds = array<i64: 1, 16, 128>}, {transform_indices = @transform_3, window_bounds = array<i64: 1, 16, 128>}, {transform_indices = @transform_4, window_bounds = array<i64: 1, 16, 128>}]} {
    %c0_i32 = arith.constant 0 : i32
    %0 = arith.cmpi eq, %arg2, %c0_i32 : i32
    %1 = arith.extui %0 : i1 to i32
    %c0_i32_0 = arith.constant 0 : i32
    %2 = arith.cmpi ne, %1, %c0_i32_0 : i32
    scf.if %2 {
      %cst_101 = arith.constant 0xFF800000 : f32
      %176 = vector.broadcast %cst_101 : f32 to vector<4x16x1xf32>
      %c0_102 = arith.constant 0 : index
      %c0_103 = arith.constant 0 : index
      %c0_104 = arith.constant 0 : index
      %177 = vector.load %arg8[%c0_102, %c0_103, %c0_104] : memref<4x16x1xf32, #tpu.memory_space<vmem>>, vector<4x16x1xf32>
      tpu.vector_store %arg8[%c0_102, %c0_103, %c0_104], %176 {strides = array<i32>} : memref<4x16x1xf32, #tpu.memory_space<vmem>>, vector<4x16x1xf32>,
      %cst_105 = arith.constant 0.000000e+00 : f32
      %178 = vector.broadcast %cst_105 : f32 to vector<4x16x1xf32>
      %c0_106 = arith.constant 0 : index
      %c0_107 = arith.constant 0 : index
      %c0_108 = arith.constant 0 : index
      %179 = vector.load %arg9[%c0_106, %c0_107, %c0_108] : memref<4x16x1xf32, #tpu.memory_space<vmem>>, vector<4x16x1xf32>
      tpu.vector_store %arg9[%c0_106, %c0_107, %c0_108], %178 {strides = array<i32>} : memref<4x16x1xf32, #tpu.memory_space<vmem>>, vector<4x16x1xf32>,
      %cst_109 = arith.constant 0.000000e+00 : f32
      %180 = vector.broadcast %cst_109 : f32 to vector<4x16x32xf32>
      %c0_110 = arith.constant 0 : index
      %c0_111 = arith.constant 0 : index
      %c0_112 = arith.constant 0 : index
      %181 = vector.load %arg10[%c0_110, %c0_111, %c0_112] : memref<4x16x32xf32, #tpu.memory_space<vmem>>, vector<4x16x32xf32>
      tpu.vector_store %arg10[%c0_110, %c0_111, %c0_112], %180 {strides = array<i32>} : memref<4x16x32xf32, #tpu.memory_space<vmem>>, vector<4x16x32xf32>,
    } else {
    }
    %c0 = arith.constant 0 : index
    %c0_1 = arith.constant 0 : index
    %c0_2 = arith.constant 0 : index
    %3 = vector.load %arg4[%c0, %c0_1, %c0_2] : memref<1x16x128xbf16, #tpu.memory_space<vmem>>, vector<1x16x128xbf16>
    %4 = vector.shape_cast %3 : vector<1x16x128xbf16> to vector<16x128xbf16>
    %c0_3 = arith.constant 0 : index
    %c0_4 = arith.constant 0 : index
    %c0_5 = arith.constant 0 : index
    %5 = vector.load %arg5[%c0_3, %c0_4, %c0_5] : memref<1x16x128xbf16, #tpu.memory_space<vmem>>, vector<1x16x128xbf16>
    %6 = vector.shape_cast %5 : vector<1x16x128xbf16> to vector<16x128xbf16>
    %c0_6 = arith.constant 0 : index
    %c0_7 = arith.constant 0 : index
    %c0_8 = arith.constant 0 : index
    %7 = vector.load %arg6[%c0_6, %c0_7, %c0_8] : memref<1x16x128xbf16, #tpu.memory_space<vmem>>, vector<1x16x128xbf16>
    %8 = vector.shape_cast %7 : vector<1x16x128xbf16> to vector<16x128xbf16>
    %c0_9 = arith.constant 0 : index
    %c0_10 = arith.constant 0 : index
    %c0_11 = arith.constant 0 : index
    %9 = vector.load %arg3[%c0_9, %c0_10, %c0_11] : memref<1x1x16xf32, #tpu.memory_space<vmem>>, vector<1x1x16xf32>
    %10 = vector.shape_cast %9 : vector<1x1x16xf32> to vector<1x16xf32>
    %c16_i32 = arith.constant 16 : i32
    %11 = arith.muli %arg1, %c16_i32 : i32
    %c16_i32_12 = arith.constant 16 : i32
    %12 = arith.muli %arg2, %c16_i32_12 : i32
    %13 = tpu.iota {dimensions = array<i32: 0>} : vector<16x16xi32>
    %14 = vector.broadcast %11 : i32 to vector<16x16xi32>
    %15 = arith.addi %14, %13 : vector<16x16xi32>
    %16 = tpu.iota {dimensions = array<i32: 1>} : vector<16x16xi32>
    %17 = vector.broadcast %12 : i32 to vector<16x16xi32>
    %18 = arith.addi %17, %16 : vector<16x16xi32>
    %19 = arith.cmpi sgt, %18, %15 : vector<16x16xi32>
    %cst = arith.constant -1.000000e+09 : f32
    %cst_13 = arith.constant 0.000000e+00 : f32
    %20 = vector.broadcast %cst : f32 to vector<16x16xf32>
    %21 = vector.broadcast %cst_13 : f32 to vector<16x16xf32>
    %22 = arith.select %19, %20, %21 : vector<16x16xi1>, vector<16x16xf32>
    %23 = vector.broadcast %10 : vector<1x16xf32> to vector<16x16xf32>
    %24 = arith.addf %23, %22 : vector<16x16xf32>
    %25 = vector.extract_strided_slice %4 {offsets = [0, 0], sizes = [16, 32], strides = [1, 1]} : vector<16x128xbf16> to vector<16x32xbf16>
    %26 = vector.extract_strided_slice %6 {offsets = [0, 0], sizes = [16, 32], strides = [1, 1]} : vector<16x128xbf16> to vector<16x32xbf16>
    %cst_14 = arith.constant dense<0.000000e+00> : vector<16x16xf32>
    %27 = tpu.matmul %25, %26, %cst_14 {dimension_numbers = #tpu.dot_dimension_numbers<[1], [1], [0], [0], [0, 0, 1, 0], [], []>} : vector<16x32xbf16>, vector<16x32xbf16>, vector<16x16xf32> -> vector<16x16xf32>
    %28 = arith.addf %27, %24 : vector<16x16xf32>
    %c0_15 = arith.constant 0 : index
    %c0_16 = arith.constant 0 : index
    %c0_17 = arith.constant 0 : index
    %29 = vector.load %arg8[%c0_15, %c0_16, %c0_17] : memref<4x16x1xf32, #tpu.memory_space<vmem>>, vector<1x16x1xf32>
    %30 = vector.shape_cast %29 : vector<1x16x1xf32> to vector<16x1xf32>
    %cst_18 = arith.constant dense<0xFF800000> : vector<16xf32>
    %31 = vector.multi_reduction <maximumf>, %28, %cst_18 [1] : vector<16x16xf32> to vector<16xf32>
    %32 = vector.shape_cast %31 : vector<16xf32> to vector<16x1xf32>
    %33 = arith.maximumf %30, %32 : vector<16x1xf32>
    %34 = arith.subf %30, %33 : vector<16x1xf32>
    %35 = math.exp %34 : vector<16x1xf32>
    %36 = vector.broadcast %33 : vector<16x1xf32> to vector<16x16xf32>
    %37 = arith.subf %28, %36 : vector<16x16xf32>
    %38 = math.exp %37 : vector<16x16xf32>
    %c0_19 = arith.constant 0 : index
    %c0_20 = arith.constant 0 : index
    %c0_21 = arith.constant 0 : index
    %39 = vector.load %arg9[%c0_19, %c0_20, %c0_21] : memref<4x16x1xf32, #tpu.memory_space<vmem>>, vector<1x16x1xf32>
    %40 = vector.shape_cast %39 : vector<1x16x1xf32> to vector<16x1xf32>
    %41 = arith.mulf %35, %40 : vector<16x1xf32>
    %cst_22 = arith.constant dense<0.000000e+00> : vector<16xf32>
    %42 = vector.multi_reduction <add>, %38, %cst_22 [1] : vector<16x16xf32> to vector<16xf32>
    %43 = vector.shape_cast %42 : vector<16xf32> to vector<16x1xf32>
    %44 = arith.addf %41, %43 : vector<16x1xf32>
    %c0_23 = arith.constant 0 : index
    %c0_24 = arith.constant 0 : index
    %c0_25 = arith.constant 0 : index
    %45 = vector.load %arg9[%c0_23, %c0_24, %c0_25] : memref<4x16x1xf32, #tpu.memory_space<vmem>>, vector<1x16x1xf32>
    %46 = vector.shape_cast %45 : vector<1x16x1xf32> to vector<16x1xf32>
    %47 = vector.shape_cast %44 : vector<16x1xf32> to vector<1x16x1xf32>
    tpu.vector_store %arg9[%c0_23, %c0_24, %c0_25], %47 {strides = array<i32>} : memref<4x16x1xf32, #tpu.memory_space<vmem>>, vector<1x16x1xf32>,
    %c0_26 = arith.constant 0 : index
    %c0_27 = arith.constant 0 : index
    %c0_28 = arith.constant 0 : index
    %48 = vector.load %arg10[%c0_26, %c0_27, %c0_28] : memref<4x16x32xf32, #tpu.memory_space<vmem>>, vector<1x16x32xf32>
    %49 = vector.shape_cast %48 : vector<1x16x32xf32> to vector<16x32xf32>
    %50 = vector.broadcast %35 : vector<16x1xf32> to vector<16x32xf32>
    %51 = arith.mulf %50, %49 : vector<16x32xf32>
    %52 = arith.truncf %38 : vector<16x16xf32> to vector<16x16xbf16>
    %53 = vector.extract_strided_slice %8 {offsets = [0, 0], sizes = [16, 32], strides = [1, 1]} : vector<16x128xbf16> to vector<16x32xbf16>
    %cst_29 = arith.constant dense<0.000000e+00> : vector<16x32xf32>
    %54 = tpu.matmul %52, %53, %cst_29 {dimension_numbers = #tpu.dot_dimension_numbers<[1], [0], [0], [1], [0, 0, 1, 1], [], []>} : vector<16x16xbf16>, vector<16x32xbf16>, vector<16x32xf32> -> vector<16x32xf32>
    %55 = arith.addf %51, %54 : vector<16x32xf32>
    %c0_30 = arith.constant 0 : index
    %c0_31 = arith.constant 0 : index
    %c0_32 = arith.constant 0 : index
    %56 = vector.load %arg10[%c0_30, %c0_31, %c0_32] : memref<4x16x32xf32, #tpu.memory_space<vmem>>, vector<1x16x32xf32>
    %57 = vector.shape_cast %56 : vector<1x16x32xf32> to vector<16x32xf32>
    %58 = vector.shape_cast %55 : vector<16x32xf32> to vector<1x16x32xf32>
    tpu.vector_store %arg10[%c0_30, %c0_31, %c0_32], %58 {strides = array<i32>} : memref<4x16x32xf32, #tpu.memory_space<vmem>>, vector<1x16x32xf32>,
    %c0_33 = arith.constant 0 : index
    %c0_34 = arith.constant 0 : index
    %c0_35 = arith.constant 0 : index
    %59 = vector.load %arg8[%c0_33, %c0_34, %c0_35] : memref<4x16x1xf32, #tpu.memory_space<vmem>>, vector<1x16x1xf32>
    %60 = vector.shape_cast %59 : vector<1x16x1xf32> to vector<16x1xf32>
    %61 = vector.shape_cast %33 : vector<16x1xf32> to vector<1x16x1xf32>
    tpu.vector_store %arg8[%c0_33, %c0_34, %c0_35], %61 {strides = array<i32>} : memref<4x16x1xf32, #tpu.memory_space<vmem>>, vector<1x16x1xf32>,
    %62 = vector.extract_strided_slice %4 {offsets = [0, 32], sizes = [16, 32], strides = [1, 1]} : vector<16x128xbf16> to vector<16x32xbf16>
    %63 = vector.extract_strided_slice %6 {offsets = [0, 32], sizes = [16, 32], strides = [1, 1]} : vector<16x128xbf16> to vector<16x32xbf16>
    %cst_36 = arith.constant dense<0.000000e+00> : vector<16x16xf32>
    %64 = tpu.matmul %62, %63, %cst_36 {dimension_numbers = #tpu.dot_dimension_numbers<[1], [1], [0], [0], [0, 0, 1, 0], [], []>} : vector<16x32xbf16>, vector<16x32xbf16>, vector<16x16xf32> -> vector<16x16xf32>
    %65 = arith.addf %64, %24 : vector<16x16xf32>
    %c1 = arith.constant 1 : index
    %c0_37 = arith.constant 0 : index
    %c0_38 = arith.constant 0 : index
    %66 = vector.load %arg8[%c1, %c0_37, %c0_38] : memref<4x16x1xf32, #tpu.memory_space<vmem>>, vector<1x16x1xf32>
    %67 = vector.shape_cast %66 : vector<1x16x1xf32> to vector<16x1xf32>
    %cst_39 = arith.constant dense<0xFF800000> : vector<16xf32>
    %68 = vector.multi_reduction <maximumf>, %65, %cst_39 [1] : vector<16x16xf32> to vector<16xf32>
    %69 = vector.shape_cast %68 : vector<16xf32> to vector<16x1xf32>
    %70 = arith.maximumf %67, %69 : vector<16x1xf32>
    %71 = arith.subf %67, %70 : vector<16x1xf32>
    %72 = math.exp %71 : vector<16x1xf32>
    %73 = vector.broadcast %70 : vector<16x1xf32> to vector<16x16xf32>
    %74 = arith.subf %65, %73 : vector<16x16xf32>
    %75 = math.exp %74 : vector<16x16xf32>
    %c1_40 = arith.constant 1 : index
    %c0_41 = arith.constant 0 : index
    %c0_42 = arith.constant 0 : index
    %76 = vector.load %arg9[%c1_40, %c0_41, %c0_42] : memref<4x16x1xf32, #tpu.memory_space<vmem>>, vector<1x16x1xf32>
    %77 = vector.shape_cast %76 : vector<1x16x1xf32> to vector<16x1xf32>
    %78 = arith.mulf %72, %77 : vector<16x1xf32>
    %cst_43 = arith.constant dense<0.000000e+00> : vector<16xf32>
    %79 = vector.multi_reduction <add>, %75, %cst_43 [1] : vector<16x16xf32> to vector<16xf32>
    %80 = vector.shape_cast %79 : vector<16xf32> to vector<16x1xf32>
    %81 = arith.addf %78, %80 : vector<16x1xf32>
    %c1_44 = arith.constant 1 : index
    %c0_45 = arith.constant 0 : index
    %c0_46 = arith.constant 0 : index
    %82 = vector.load %arg9[%c1_44, %c0_45, %c0_46] : memref<4x16x1xf32, #tpu.memory_space<vmem>>, vector<1x16x1xf32>
    %83 = vector.shape_cast %82 : vector<1x16x1xf32> to vector<16x1xf32>
    %84 = vector.shape_cast %81 : vector<16x1xf32> to vector<1x16x1xf32>
    tpu.vector_store %arg9[%c1_44, %c0_45, %c0_46], %84 {strides = array<i32>} : memref<4x16x1xf32, #tpu.memory_space<vmem>>, vector<1x16x1xf32>,
    %c1_47 = arith.constant 1 : index
    %c0_48 = arith.constant 0 : index
    %c0_49 = arith.constant 0 : index
    %85 = vector.load %arg10[%c1_47, %c0_48, %c0_49] : memref<4x16x32xf32, #tpu.memory_space<vmem>>, vector<1x16x32xf32>
    %86 = vector.shape_cast %85 : vector<1x16x32xf32> to vector<16x32xf32>
    %87 = vector.broadcast %72 : vector<16x1xf32> to vector<16x32xf32>
    %88 = arith.mulf %87, %86 : vector<16x32xf32>
    %89 = arith.truncf %75 : vector<16x16xf32> to vector<16x16xbf16>
    %90 = vector.extract_strided_slice %8 {offsets = [0, 32], sizes = [16, 32], strides = [1, 1]} : vector<16x128xbf16> to vector<16x32xbf16>
    %cst_50 = arith.constant dense<0.000000e+00> : vector<16x32xf32>
    %91 = tpu.matmul %89, %90, %cst_50 {dimension_numbers = #tpu.dot_dimension_numbers<[1], [0], [0], [1], [0, 0, 1, 1], [], []>} : vector<16x16xbf16>, vector<16x32xbf16>, vector<16x32xf32> -> vector<16x32xf32>
    %92 = arith.addf %88, %91 : vector<16x32xf32>
    %c1_51 = arith.constant 1 : index
    %c0_52 = arith.constant 0 : index
    %c0_53 = arith.constant 0 : index
    %93 = vector.load %arg10[%c1_51, %c0_52, %c0_53] : memref<4x16x32xf32, #tpu.memory_space<vmem>>, vector<1x16x32xf32>
    %94 = vector.shape_cast %93 : vector<1x16x32xf32> to vector<16x32xf32>
    %95 = vector.shape_cast %92 : vector<16x32xf32> to vector<1x16x32xf32>
    tpu.vector_store %arg10[%c1_51, %c0_52, %c0_53], %95 {strides = array<i32>} : memref<4x16x32xf32, #tpu.memory_space<vmem>>, vector<1x16x32xf32>,
    %c1_54 = arith.constant 1 : index
    %c0_55 = arith.constant 0 : index
    %c0_56 = arith.constant 0 : index
    %96 = vector.load %arg8[%c1_54, %c0_55, %c0_56] : memref<4x16x1xf32, #tpu.memory_space<vmem>>, vector<1x16x1xf32>
    %97 = vector.shape_cast %96 : vector<1x16x1xf32> to vector<16x1xf32>
    %98 = vector.shape_cast %70 : vector<16x1xf32> to vector<1x16x1xf32>
    tpu.vector_store %arg8[%c1_54, %c0_55, %c0_56], %98 {strides = array<i32>} : memref<4x16x1xf32, #tpu.memory_space<vmem>>, vector<1x16x1xf32>,
    %99 = vector.extract_strided_slice %4 {offsets = [0, 64], sizes = [16, 32], strides = [1, 1]} : vector<16x128xbf16> to vector<16x32xbf16>
    %100 = vector.extract_strided_slice %6 {offsets = [0, 64], sizes = [16, 32], strides = [1, 1]} : vector<16x128xbf16> to vector<16x32xbf16>
    %cst_57 = arith.constant dense<0.000000e+00> : vector<16x16xf32>
    %101 = tpu.matmul %99, %100, %cst_57 {dimension_numbers = #tpu.dot_dimension_numbers<[1], [1], [0], [0], [0, 0, 1, 0], [], []>} : vector<16x32xbf16>, vector<16x32xbf16>, vector<16x16xf32> -> vector<16x16xf32>
    %102 = arith.addf %101, %24 : vector<16x16xf32>
    %c2 = arith.constant 2 : index
    %c0_58 = arith.constant 0 : index
    %c0_59 = arith.constant 0 : index
    %103 = vector.load %arg8[%c2, %c0_58, %c0_59] : memref<4x16x1xf32, #tpu.memory_space<vmem>>, vector<1x16x1xf32>
    %104 = vector.shape_cast %103 : vector<1x16x1xf32> to vector<16x1xf32>
    %cst_60 = arith.constant dense<0xFF800000> : vector<16xf32>
    %105 = vector.multi_reduction <maximumf>, %102, %cst_60 [1] : vector<16x16xf32> to vector<16xf32>
    %106 = vector.shape_cast %105 : vector<16xf32> to vector<16x1xf32>
    %107 = arith.maximumf %104, %106 : vector<16x1xf32>
    %108 = arith.subf %104, %107 : vector<16x1xf32>
    %109 = math.exp %108 : vector<16x1xf32>
    %110 = vector.broadcast %107 : vector<16x1xf32> to vector<16x16xf32>
    %111 = arith.subf %102, %110 : vector<16x16xf32>
    %112 = math.exp %111 : vector<16x16xf32>
    %c2_61 = arith.constant 2 : index
    %c0_62 = arith.constant 0 : index
    %c0_63 = arith.constant 0 : index
    %113 = vector.load %arg9[%c2_61, %c0_62, %c0_63] : memref<4x16x1xf32, #tpu.memory_space<vmem>>, vector<1x16x1xf32>
    %114 = vector.shape_cast %113 : vector<1x16x1xf32> to vector<16x1xf32>
    %115 = arith.mulf %109, %114 : vector<16x1xf32>
    %cst_64 = arith.constant dense<0.000000e+00> : vector<16xf32>
    %116 = vector.multi_reduction <add>, %112, %cst_64 [1] : vector<16x16xf32> to vector<16xf32>
    %117 = vector.shape_cast %116 : vector<16xf32> to vector<16x1xf32>
    %118 = arith.addf %115, %117 : vector<16x1xf32>
    %c2_65 = arith.constant 2 : index
    %c0_66 = arith.constant 0 : index
    %c0_67 = arith.constant 0 : index
    %119 = vector.load %arg9[%c2_65, %c0_66, %c0_67] : memref<4x16x1xf32, #tpu.memory_space<vmem>>, vector<1x16x1xf32>
    %120 = vector.shape_cast %119 : vector<1x16x1xf32> to vector<16x1xf32>
    %121 = vector.shape_cast %118 : vector<16x1xf32> to vector<1x16x1xf32>
    tpu.vector_store %arg9[%c2_65, %c0_66, %c0_67], %121 {strides = array<i32>} : memref<4x16x1xf32, #tpu.memory_space<vmem>>, vector<1x16x1xf32>,
    %c2_68 = arith.constant 2 : index
    %c0_69 = arith.constant 0 : index
    %c0_70 = arith.constant 0 : index
    %122 = vector.load %arg10[%c2_68, %c0_69, %c0_70] : memref<4x16x32xf32, #tpu.memory_space<vmem>>, vector<1x16x32xf32>
    %123 = vector.shape_cast %122 : vector<1x16x32xf32> to vector<16x32xf32>
    %124 = vector.broadcast %109 : vector<16x1xf32> to vector<16x32xf32>
    %125 = arith.mulf %124, %123 : vector<16x32xf32>
    %126 = arith.truncf %112 : vector<16x16xf32> to vector<16x16xbf16>
    %127 = vector.extract_strided_slice %8 {offsets = [0, 64], sizes = [16, 32], strides = [1, 1]} : vector<16x128xbf16> to vector<16x32xbf16>
    %cst_71 = arith.constant dense<0.000000e+00> : vector<16x32xf32>
    %128 = tpu.matmul %126, %127, %cst_71 {dimension_numbers = #tpu.dot_dimension_numbers<[1], [0], [0], [1], [0, 0, 1, 1], [], []>} : vector<16x16xbf16>, vector<16x32xbf16>, vector<16x32xf32> -> vector<16x32xf32>
    %129 = arith.addf %125, %128 : vector<16x32xf32>
    %c2_72 = arith.constant 2 : index
    %c0_73 = arith.constant 0 : index
    %c0_74 = arith.constant 0 : index
    %130 = vector.load %arg10[%c2_72, %c0_73, %c0_74] : memref<4x16x32xf32, #tpu.memory_space<vmem>>, vector<1x16x32xf32>
    %131 = vector.shape_cast %130 : vector<1x16x32xf32> to vector<16x32xf32>
    %132 = vector.shape_cast %129 : vector<16x32xf32> to vector<1x16x32xf32>
    tpu.vector_store %arg10[%c2_72, %c0_73, %c0_74], %132 {strides = array<i32>} : memref<4x16x32xf32, #tpu.memory_space<vmem>>, vector<1x16x32xf32>,
    %c2_75 = arith.constant 2 : index
    %c0_76 = arith.constant 0 : index
    %c0_77 = arith.constant 0 : index
    %133 = vector.load %arg8[%c2_75, %c0_76, %c0_77] : memref<4x16x1xf32, #tpu.memory_space<vmem>>, vector<1x16x1xf32>
    %134 = vector.shape_cast %133 : vector<1x16x1xf32> to vector<16x1xf32>
    %135 = vector.shape_cast %107 : vector<16x1xf32> to vector<1x16x1xf32>
    tpu.vector_store %arg8[%c2_75, %c0_76, %c0_77], %135 {strides = array<i32>} : memref<4x16x1xf32, #tpu.memory_space<vmem>>, vector<1x16x1xf32>,
    %136 = vector.extract_strided_slice %4 {offsets = [0, 96], sizes = [16, 32], strides = [1, 1]} : vector<16x128xbf16> to vector<16x32xbf16>
    %137 = vector.extract_strided_slice %6 {offsets = [0, 96], sizes = [16, 32], strides = [1, 1]} : vector<16x128xbf16> to vector<16x32xbf16>
    %cst_78 = arith.constant dense<0.000000e+00> : vector<16x16xf32>
    %138 = tpu.matmul %136, %137, %cst_78 {dimension_numbers = #tpu.dot_dimension_numbers<[1], [1], [0], [0], [0, 0, 1, 0], [], []>} : vector<16x32xbf16>, vector<16x32xbf16>, vector<16x16xf32> -> vector<16x16xf32>
    %139 = arith.addf %138, %24 : vector<16x16xf32>
    %c3 = arith.constant 3 : index
    %c0_79 = arith.constant 0 : index
    %c0_80 = arith.constant 0 : index
    %140 = vector.load %arg8[%c3, %c0_79, %c0_80] : memref<4x16x1xf32, #tpu.memory_space<vmem>>, vector<1x16x1xf32>
    %141 = vector.shape_cast %140 : vector<1x16x1xf32> to vector<16x1xf32>
    %cst_81 = arith.constant dense<0xFF800000> : vector<16xf32>
    %142 = vector.multi_reduction <maximumf>, %139, %cst_81 [1] : vector<16x16xf32> to vector<16xf32>
    %143 = vector.shape_cast %142 : vector<16xf32> to vector<16x1xf32>
    %144 = arith.maximumf %141, %143 : vector<16x1xf32>
    %145 = arith.subf %141, %144 : vector<16x1xf32>
    %146 = math.exp %145 : vector<16x1xf32>
    %147 = vector.broadcast %144 : vector<16x1xf32> to vector<16x16xf32>
    %148 = arith.subf %139, %147 : vector<16x16xf32>
    %149 = math.exp %148 : vector<16x16xf32>
    %c3_82 = arith.constant 3 : index
    %c0_83 = arith.constant 0 : index
    %c0_84 = arith.constant 0 : index
    %150 = vector.load %arg9[%c3_82, %c0_83, %c0_84] : memref<4x16x1xf32, #tpu.memory_space<vmem>>, vector<1x16x1xf32>
    %151 = vector.shape_cast %150 : vector<1x16x1xf32> to vector<16x1xf32>
    %152 = arith.mulf %146, %151 : vector<16x1xf32>
    %cst_85 = arith.constant dense<0.000000e+00> : vector<16xf32>
    %153 = vector.multi_reduction <add>, %149, %cst_85 [1] : vector<16x16xf32> to vector<16xf32>
    %154 = vector.shape_cast %153 : vector<16xf32> to vector<16x1xf32>
    %155 = arith.addf %152, %154 : vector<16x1xf32>
    %c3_86 = arith.constant 3 : index
    %c0_87 = arith.constant 0 : index
    %c0_88 = arith.constant 0 : index
    %156 = vector.load %arg9[%c3_86, %c0_87, %c0_88] : memref<4x16x1xf32, #tpu.memory_space<vmem>>, vector<1x16x1xf32>
    %157 = vector.shape_cast %156 : vector<1x16x1xf32> to vector<16x1xf32>
    %158 = vector.shape_cast %155 : vector<16x1xf32> to vector<1x16x1xf32>
    tpu.vector_store %arg9[%c3_86, %c0_87, %c0_88], %158 {strides = array<i32>} : memref<4x16x1xf32, #tpu.memory_space<vmem>>, vector<1x16x1xf32>,
    %c3_89 = arith.constant 3 : index
    %c0_90 = arith.constant 0 : index
    %c0_91 = arith.constant 0 : index
    %159 = vector.load %arg10[%c3_89, %c0_90, %c0_91] : memref<4x16x32xf32, #tpu.memory_space<vmem>>, vector<1x16x32xf32>
    %160 = vector.shape_cast %159 : vector<1x16x32xf32> to vector<16x32xf32>
    %161 = vector.broadcast %146 : vector<16x1xf32> to vector<16x32xf32>
    %162 = arith.mulf %161, %160 : vector<16x32xf32>
    %163 = arith.truncf %149 : vector<16x16xf32> to vector<16x16xbf16>
    %164 = vector.extract_strided_slice %8 {offsets = [0, 96], sizes = [16, 32], strides = [1, 1]} : vector<16x128xbf16> to vector<16x32xbf16>
    %cst_92 = arith.constant dense<0.000000e+00> : vector<16x32xf32>
    %165 = tpu.matmul %163, %164, %cst_92 {dimension_numbers = #tpu.dot_dimension_numbers<[1], [0], [0], [1], [0, 0, 1, 1], [], []>} : vector<16x16xbf16>, vector<16x32xbf16>, vector<16x32xf32> -> vector<16x32xf32>
    %166 = arith.addf %162, %165 : vector<16x32xf32>
    %c3_93 = arith.constant 3 : index
    %c0_94 = arith.constant 0 : index
    %c0_95 = arith.constant 0 : index
    %167 = vector.load %arg10[%c3_93, %c0_94, %c0_95] : memref<4x16x32xf32, #tpu.memory_space<vmem>>, vector<1x16x32xf32>
    %168 = vector.shape_cast %167 : vector<1x16x32xf32> to vector<16x32xf32>
    %169 = vector.shape_cast %166 : vector<16x32xf32> to vector<1x16x32xf32>
    tpu.vector_store %arg10[%c3_93, %c0_94, %c0_95], %169 {strides = array<i32>} : memref<4x16x32xf32, #tpu.memory_space<vmem>>, vector<1x16x32xf32>,
    %c3_96 = arith.constant 3 : index
    %c0_97 = arith.constant 0 : index
    %c0_98 = arith.constant 0 : index
    %170 = vector.load %arg8[%c3_96, %c0_97, %c0_98] : memref<4x16x1xf32, #tpu.memory_space<vmem>>, vector<1x16x1xf32>
    %171 = vector.shape_cast %170 : vector<1x16x1xf32> to vector<16x1xf32>
    %172 = vector.shape_cast %144 : vector<16x1xf32> to vector<1x16x1xf32>
    tpu.vector_store %arg8[%c3_96, %c0_97, %c0_98], %172 {strides = array<i32>} : memref<4x16x1xf32, #tpu.memory_space<vmem>>, vector<1x16x1xf32>,
    %c0_i32_99 = arith.constant 0 : i32
    %173 = arith.cmpi eq, %arg2, %c0_i32_99 : i32
    %174 = arith.extui %173 : i1 to i32
    %c0_i32_100 = arith.constant 0 : i32
    %175 = arith.cmpi ne, %174, %c0_i32_100 : i32
    scf.if %175 {
      %c0_101 = arith.constant 0 : index
      %c0_102 = arith.constant 0 : index
      %c0_103 = arith.constant 0 : index
      %176 = vector.load %arg10[%c0_101, %c0_102, %c0_103] : memref<4x16x32xf32, #tpu.memory_space<vmem>>, vector<1x16x32xf32>
      %177 = vector.shape_cast %176 : vector<1x16x32xf32> to vector<16x32xf32>
      %c0_104 = arith.constant 0 : index
      %c0_105 = arith.constant 0 : index
      %c0_106 = arith.constant 0 : index
      %178 = vector.load %arg9[%c0_104, %c0_105, %c0_106] : memref<4x16x1xf32, #tpu.memory_space<vmem>>, vector<1x16x1xf32>
      %179 = vector.shape_cast %178 : vector<1x16x1xf32> to vector<16x1xf32>
      %180 = vector.broadcast %179 : vector<16x1xf32> to vector<16x32xf32>
      %181 = arith.divf %177, %180 : vector<16x32xf32>
      %c1_107 = arith.constant 1 : index
      %c0_108 = arith.constant 0 : index
      %c0_109 = arith.constant 0 : index
      %182 = vector.load %arg10[%c1_107, %c0_108, %c0_109] : memref<4x16x32xf32, #tpu.memory_space<vmem>>, vector<1x16x32xf32>
      %183 = vector.shape_cast %182 : vector<1x16x32xf32> to vector<16x32xf32>
      %c1_110 = arith.constant 1 : index
      %c0_111 = arith.constant 0 : index
      %c0_112 = arith.constant 0 : index
      %184 = vector.load %arg9[%c1_110, %c0_111, %c0_112] : memref<4x16x1xf32, #tpu.memory_space<vmem>>, vector<1x16x1xf32>
      %185 = vector.shape_cast %184 : vector<1x16x1xf32> to vector<16x1xf32>
      %186 = vector.broadcast %185 : vector<16x1xf32> to vector<16x32xf32>
      %187 = arith.divf %183, %186 : vector<16x32xf32>
      %c2_113 = arith.constant 2 : index
      %c0_114 = arith.constant 0 : index
      %c0_115 = arith.constant 0 : index
      %188 = vector.load %arg10[%c2_113, %c0_114, %c0_115] : memref<4x16x32xf32, #tpu.memory_space<vmem>>, vector<1x16x32xf32>
      %189 = vector.shape_cast %188 : vector<1x16x32xf32> to vector<16x32xf32>
      %c2_116 = arith.constant 2 : index
      %c0_117 = arith.constant 0 : index
      %c0_118 = arith.constant 0 : index
      %190 = vector.load %arg9[%c2_116, %c0_117, %c0_118] : memref<4x16x1xf32, #tpu.memory_space<vmem>>, vector<1x16x1xf32>
      %191 = vector.shape_cast %190 : vector<1x16x1xf32> to vector<16x1xf32>
      %192 = vector.broadcast %191 : vector<16x1xf32> to vector<16x32xf32>
      %193 = arith.divf %189, %192 : vector<16x32xf32>
      %c3_119 = arith.constant 3 : index
      %c0_120 = arith.constant 0 : index
      %c0_121 = arith.constant 0 : index
      %194 = vector.load %arg10[%c3_119, %c0_120, %c0_121] : memref<4x16x32xf32, #tpu.memory_space<vmem>>, vector<1x16x32xf32>
      %195 = vector.shape_cast %194 : vector<1x16x32xf32> to vector<16x32xf32>
      %c3_122 = arith.constant 3 : index
      %c0_123 = arith.constant 0 : index
      %c0_124 = arith.constant 0 : index
      %196 = vector.load %arg9[%c3_122, %c0_123, %c0_124] : memref<4x16x1xf32, #tpu.memory_space<vmem>>, vector<1x16x1xf32>
      %197 = vector.shape_cast %196 : vector<1x16x1xf32> to vector<16x1xf32>
      %198 = vector.broadcast %197 : vector<16x1xf32> to vector<16x32xf32>
      %199 = arith.divf %195, %198 : vector<16x32xf32>
      %200 = tpu.concatenate %181, %187, %193, %199 in 1 : vector<16x32xf32>, vector<16x32xf32>, vector<16x32xf32>, vector<16x32xf32> -> vector<16x128xf32>
      %201 = arith.truncf %200 : vector<16x128xf32> to vector<16x128xbf16>
      %c0_125 = arith.constant 0 : index
      %c0_126 = arith.constant 0 : index
      %c0_127 = arith.constant 0 : index
      %202 = vector.load %arg7[%c0_125, %c0_126, %c0_127] : memref<1x16x128xbf16, #tpu.memory_space<vmem>>, vector<1x16x128xbf16>
      %203 = vector.shape_cast %202 : vector<1x16x128xbf16> to vector<16x128xbf16>
      %204 = vector.shape_cast %201 : vector<16x128xbf16> to vector<1x16x128xbf16>
      tpu.vector_store %arg7[%c0_125, %c0_126, %c0_127], %204 {strides = array<i32>} : memref<1x16x128xbf16, #tpu.memory_space<vmem>>, vector<1x16x128xbf16>,
    } else {
    }
    return
  }
  func.func @transform_0(%arg0: i32, %arg1: i32, %arg2: i32) -> (i32, i32, i32) {
    %c0_i32 = arith.constant 0 : i32
    %c0_i32_0 = arith.constant 0 : i32
    return %arg0, %c0_i32, %arg2 : i32, i32, i32
  }
  func.func @transform_1(%arg0: i32, %arg1: i32, %arg2: i32) -> (i32, i32, i32) {
    %c0_i32 = arith.constant 0 : i32
    %c0_i32_0 = arith.constant 0 : i32
    return %arg0, %arg1, %c0_i32 : i32, i32, i32
  }
  func.func @transform_2(%arg0: i32, %arg1: i32, %arg2: i32) -> (i32, i32, i32) {
    %c1_i32 = arith.constant 1 : i32
    %c0_i32 = arith.constant 0 : i32
    return %arg0, %arg2, %c1_i32 : i32, i32, i32
  }
  func.func @transform_3(%arg0: i32, %arg1: i32, %arg2: i32) -> (i32, i32, i32) {
    %c2_i32 = arith.constant 2 : i32
    %c0_i32 = arith.constant 0 : i32
    return %arg0, %arg2, %c2_i32 : i32, i32, i32
  }
  func.func @transform_4(%arg0: i32, %arg1: i32, %arg2: i32) -> (i32, i32, i32) {
    %c0_i32 = arith.constant 0 : i32
    %c0_i32_0 = arith.constant 0 : i32
    return %arg0, %arg1, %c0_i32 : i32, i32, i32
  }
}

module attributes {stable_mosaic.version = 11 : i64} {
  func.func @_linear_kernel(%arg0: i32, %arg1: i32, %arg2: i32, %arg3: memref<32x128xf32, #tpu.memory_space<vmem>>, %arg4: memref<128x128xbf16, #tpu.memory_space<vmem>>, %arg5: memref<1x128xf32, #tpu.memory_space<vmem>>, %arg6: memref<32x128xbf16, #tpu.memory_space<vmem>>, %arg7: memref<32x128xf32, #tpu.memory_space<vmem>>) attributes {dimension_semantics = [#tpu.dimension_semantics<parallel>, #tpu.dimension_semantics<parallel>, #tpu.dimension_semantics<arbitrary>], iteration_bounds = array<i64: 1, 1, 1>, scalar_prefetch = 0 : i64, scratch_operands = 1 : i64, tpu.core_type = #tpu.core_type<tc>, window_params = [{transform_indices = @transform_0, window_bounds = array<i64: 32, 128>}, {transform_indices = @transform_1, window_bounds = array<i64: 128, 128>}, {transform_indices = @transform_2, window_bounds = array<i64: 1, 128>}, {transform_indices = @transform_3, window_bounds = array<i64: 32, 128>}]} {
    %c0_i32 = arith.constant 0 : i32
    %0 = arith.cmpi eq, %arg2, %c0_i32 : i32
    %1 = arith.extui %0 : i1 to i32
    %c0_i32_0 = arith.constant 0 : i32
    %2 = arith.cmpi ne, %1, %c0_i32_0 : i32
    scf.if %2 {
      %cst_10 = arith.constant 0.000000e+00 : f32
      %13 = vector.broadcast %cst_10 : f32 to vector<32x128xf32>
      %c0_11 = arith.constant 0 : index
      %c0_12 = arith.constant 0 : index
      %14 = vector.load %arg7[%c0_11, %c0_12] : memref<32x128xf32, #tpu.memory_space<vmem>>, vector<32x128xf32>
      tpu.vector_store %arg7[%c0_11, %c0_12], %13 {strides = array<i32>} : memref<32x128xf32, #tpu.memory_space<vmem>>, vector<32x128xf32>,
    } else {
    }
    %c0 = arith.constant 0 : index
    %c0_1 = arith.constant 0 : index
    %3 = vector.load %arg7[%c0, %c0_1] : memref<32x128xf32, #tpu.memory_space<vmem>>, vector<32x128xf32>
    %c0_2 = arith.constant 0 : index
    %c0_3 = arith.constant 0 : index
    %4 = vector.load %arg3[%c0_2, %c0_3] : memref<32x128xf32, #tpu.memory_space<vmem>>, vector<32x128xf32>
    %5 = arith.truncf %4 : vector<32x128xf32> to vector<32x128xbf16>
    %c0_4 = arith.constant 0 : index
    %c0_5 = arith.constant 0 : index
    %6 = vector.load %arg4[%c0_4, %c0_5] : memref<128x128xbf16, #tpu.memory_space<vmem>>, vector<128x128xbf16>
    %cst = arith.constant dense<0.000000e+00> : vector<32x128xf32>
    %7 = tpu.matmul %5, %6, %cst {dimension_numbers = #tpu.dot_dimension_numbers<[1], [0], [0], [1], [0, 0, 1, 1], [], []>} : vector<32x128xbf16>, vector<128x128xbf16>, vector<32x128xf32> -> vector<32x128xf32>
    %8 = arith.addf %3, %7 : vector<32x128xf32>
    %c0_6 = arith.constant 0 : index
    %c0_7 = arith.constant 0 : index
    %9 = vector.load %arg7[%c0_6, %c0_7] : memref<32x128xf32, #tpu.memory_space<vmem>>, vector<32x128xf32>
    tpu.vector_store %arg7[%c0_6, %c0_7], %8 {strides = array<i32>} : memref<32x128xf32, #tpu.memory_space<vmem>>, vector<32x128xf32>,
    %c0_i32_8 = arith.constant 0 : i32
    %10 = arith.cmpi eq, %arg2, %c0_i32_8 : i32
    %11 = arith.extui %10 : i1 to i32
    %c0_i32_9 = arith.constant 0 : i32
    %12 = arith.cmpi ne, %11, %c0_i32_9 : i32
    scf.if %12 {
      %c0_10 = arith.constant 0 : index
      %c0_11 = arith.constant 0 : index
      %13 = vector.load %arg7[%c0_10, %c0_11] : memref<32x128xf32, #tpu.memory_space<vmem>>, vector<32x128xf32>
      %c0_12 = arith.constant 0 : index
      %c0_13 = arith.constant 0 : index
      %14 = vector.load %arg5[%c0_12, %c0_13] : memref<1x128xf32, #tpu.memory_space<vmem>>, vector<1x128xf32>
      %15 = vector.broadcast %14 : vector<1x128xf32> to vector<32x128xf32>
      %16 = arith.addf %13, %15 : vector<32x128xf32>
      %17 = arith.truncf %16 : vector<32x128xf32> to vector<32x128xbf16>
      %c0_14 = arith.constant 0 : index
      %c0_15 = arith.constant 0 : index
      %18 = vector.load %arg6[%c0_14, %c0_15] : memref<32x128xbf16, #tpu.memory_space<vmem>>, vector<32x128xbf16>
      tpu.vector_store %arg6[%c0_14, %c0_15], %17 {strides = array<i32>} : memref<32x128xbf16, #tpu.memory_space<vmem>>, vector<32x128xbf16>,
    } else {
    }
    return
  }
  func.func @transform_0(%arg0: i32, %arg1: i32, %arg2: i32) -> (i32, i32) {
    %c0_i32 = arith.constant 0 : i32
    return %arg0, %arg2 : i32, i32
  }
  func.func @transform_1(%arg0: i32, %arg1: i32, %arg2: i32) -> (i32, i32) {
    %c0_i32 = arith.constant 0 : i32
    return %arg2, %arg1 : i32, i32
  }
  func.func @transform_2(%arg0: i32, %arg1: i32, %arg2: i32) -> (i32, i32) {
    %c0_i32 = arith.constant 0 : i32
    %c0_i32_0 = arith.constant 0 : i32
    return %c0_i32, %arg1 : i32, i32
  }
  func.func @transform_3(%arg0: i32, %arg1: i32, %arg2: i32) -> (i32, i32) {
    %c0_i32 = arith.constant 0 : i32
    return %arg0, %arg1 : i32, i32
  }
}

module attributes {stable_mosaic.version = 11 : i64} {
  func.func @_linear_kernel(%arg0: i32, %arg1: i32, %arg2: i32, %arg3: memref<32x128xf32, #tpu.memory_space<vmem>>, %arg4: memref<128x256xbf16, #tpu.memory_space<vmem>>, %arg5: memref<1x256xf32, #tpu.memory_space<vmem>>, %arg6: memref<32x256xbf16, #tpu.memory_space<vmem>>, %arg7: memref<32x256xf32, #tpu.memory_space<vmem>>) attributes {dimension_semantics = [#tpu.dimension_semantics<parallel>, #tpu.dimension_semantics<parallel>, #tpu.dimension_semantics<arbitrary>], iteration_bounds = array<i64: 1, 1, 1>, scalar_prefetch = 0 : i64, scratch_operands = 1 : i64, tpu.core_type = #tpu.core_type<tc>, window_params = [{transform_indices = @transform_0, window_bounds = array<i64: 32, 128>}, {transform_indices = @transform_1, window_bounds = array<i64: 128, 256>}, {transform_indices = @transform_2, window_bounds = array<i64: 1, 256>}, {transform_indices = @transform_3, window_bounds = array<i64: 32, 256>}]} {
    %c0_i32 = arith.constant 0 : i32
    %0 = arith.cmpi eq, %arg2, %c0_i32 : i32
    %1 = arith.extui %0 : i1 to i32
    %c0_i32_0 = arith.constant 0 : i32
    %2 = arith.cmpi ne, %1, %c0_i32_0 : i32
    scf.if %2 {
      %cst_10 = arith.constant 0.000000e+00 : f32
      %13 = vector.broadcast %cst_10 : f32 to vector<32x256xf32>
      %c0_11 = arith.constant 0 : index
      %c0_12 = arith.constant 0 : index
      %14 = vector.load %arg7[%c0_11, %c0_12] : memref<32x256xf32, #tpu.memory_space<vmem>>, vector<32x256xf32>
      tpu.vector_store %arg7[%c0_11, %c0_12], %13 {strides = array<i32>} : memref<32x256xf32, #tpu.memory_space<vmem>>, vector<32x256xf32>,
    } else {
    }
    %c0 = arith.constant 0 : index
    %c0_1 = arith.constant 0 : index
    %3 = vector.load %arg7[%c0, %c0_1] : memref<32x256xf32, #tpu.memory_space<vmem>>, vector<32x256xf32>
    %c0_2 = arith.constant 0 : index
    %c0_3 = arith.constant 0 : index
    %4 = vector.load %arg3[%c0_2, %c0_3] : memref<32x128xf32, #tpu.memory_space<vmem>>, vector<32x128xf32>
    %5 = arith.truncf %4 : vector<32x128xf32> to vector<32x128xbf16>
    %c0_4 = arith.constant 0 : index
    %c0_5 = arith.constant 0 : index
    %6 = vector.load %arg4[%c0_4, %c0_5] : memref<128x256xbf16, #tpu.memory_space<vmem>>, vector<128x256xbf16>
    %cst = arith.constant dense<0.000000e+00> : vector<32x256xf32>
    %7 = tpu.matmul %5, %6, %cst {dimension_numbers = #tpu.dot_dimension_numbers<[1], [0], [0], [1], [0, 0, 1, 1], [], []>} : vector<32x128xbf16>, vector<128x256xbf16>, vector<32x256xf32> -> vector<32x256xf32>
    %8 = arith.addf %3, %7 : vector<32x256xf32>
    %c0_6 = arith.constant 0 : index
    %c0_7 = arith.constant 0 : index
    %9 = vector.load %arg7[%c0_6, %c0_7] : memref<32x256xf32, #tpu.memory_space<vmem>>, vector<32x256xf32>
    tpu.vector_store %arg7[%c0_6, %c0_7], %8 {strides = array<i32>} : memref<32x256xf32, #tpu.memory_space<vmem>>, vector<32x256xf32>,
    %c0_i32_8 = arith.constant 0 : i32
    %10 = arith.cmpi eq, %arg2, %c0_i32_8 : i32
    %11 = arith.extui %10 : i1 to i32
    %c0_i32_9 = arith.constant 0 : i32
    %12 = arith.cmpi ne, %11, %c0_i32_9 : i32
    scf.if %12 {
      %c0_10 = arith.constant 0 : index
      %c0_11 = arith.constant 0 : index
      %13 = vector.load %arg7[%c0_10, %c0_11] : memref<32x256xf32, #tpu.memory_space<vmem>>, vector<32x256xf32>
      %c0_12 = arith.constant 0 : index
      %c0_13 = arith.constant 0 : index
      %14 = vector.load %arg5[%c0_12, %c0_13] : memref<1x256xf32, #tpu.memory_space<vmem>>, vector<1x256xf32>
      %15 = vector.broadcast %14 : vector<1x256xf32> to vector<32x256xf32>
      %16 = arith.addf %13, %15 : vector<32x256xf32>
      %cst_14 = arith.constant 0.000000e+00 : f32
      %17 = vector.broadcast %cst_14 : f32 to vector<32x256xf32>
      %18 = arith.maximumf %16, %17 : vector<32x256xf32>
      %19 = arith.truncf %18 : vector<32x256xf32> to vector<32x256xbf16>
      %c0_15 = arith.constant 0 : index
      %c0_16 = arith.constant 0 : index
      %20 = vector.load %arg6[%c0_15, %c0_16] : memref<32x256xbf16, #tpu.memory_space<vmem>>, vector<32x256xbf16>
      tpu.vector_store %arg6[%c0_15, %c0_16], %19 {strides = array<i32>} : memref<32x256xbf16, #tpu.memory_space<vmem>>, vector<32x256xbf16>,
    } else {
    }
    return
  }
  func.func @transform_0(%arg0: i32, %arg1: i32, %arg2: i32) -> (i32, i32) {
    %c0_i32 = arith.constant 0 : i32
    return %arg0, %arg2 : i32, i32
  }
  func.func @transform_1(%arg0: i32, %arg1: i32, %arg2: i32) -> (i32, i32) {
    %c0_i32 = arith.constant 0 : i32
    return %arg2, %arg1 : i32, i32
  }
  func.func @transform_2(%arg0: i32, %arg1: i32, %arg2: i32) -> (i32, i32) {
    %c0_i32 = arith.constant 0 : i32
    %c0_i32_0 = arith.constant 0 : i32
    return %c0_i32, %arg1 : i32, i32
  }
  func.func @transform_3(%arg0: i32, %arg1: i32, %arg2: i32) -> (i32, i32) {
    %c0_i32 = arith.constant 0 : i32
    return %arg0, %arg1 : i32, i32
  }
}

module attributes {stable_mosaic.version = 11 : i64} {
  func.func @_linear_add_ln_kernel(%arg0: i32, %arg1: i32, %arg2: memref<32x256xbf16, #tpu.memory_space<vmem>>, %arg3: memref<256x128xbf16, #tpu.memory_space<vmem>>, %arg4: memref<1x128xf32, #tpu.memory_space<vmem>>, %arg5: memref<32x128xf32, #tpu.memory_space<vmem>>, %arg6: memref<1x128xf32, #tpu.memory_space<vmem>>, %arg7: memref<1x128xf32, #tpu.memory_space<vmem>>, %arg8: memref<32x128xf32, #tpu.memory_space<vmem>>, %arg9: memref<32x128xf32, #tpu.memory_space<vmem>>) attributes {dimension_semantics = [#tpu.dimension_semantics<parallel>, #tpu.dimension_semantics<arbitrary>], iteration_bounds = array<i64: 1, 1>, scalar_prefetch = 0 : i64, scratch_operands = 1 : i64, tpu.core_type = #tpu.core_type<tc>, window_params = [{transform_indices = @transform_0, window_bounds = array<i64: 32, 256>}, {transform_indices = @transform_1, window_bounds = array<i64: 256, 128>}, {pipeline_mode = #tpu.pipeline_mode<synchronous>, transform_indices = @transform_2, window_bounds = array<i64: 1, 128>}, {transform_indices = @transform_3, window_bounds = array<i64: 32, 128>}, {pipeline_mode = #tpu.pipeline_mode<synchronous>, transform_indices = @transform_4, window_bounds = array<i64: 1, 128>}, {pipeline_mode = #tpu.pipeline_mode<synchronous>, transform_indices = @transform_5, window_bounds = array<i64: 1, 128>}, {transform_indices = @transform_6, window_bounds = array<i64: 32, 128>}]} {
    %c0_i32 = arith.constant 0 : i32
    %0 = arith.cmpi eq, %arg1, %c0_i32 : i32
    %1 = arith.extui %0 : i1 to i32
    %c0_i32_0 = arith.constant 0 : i32
    %2 = arith.cmpi ne, %1, %c0_i32_0 : i32
    scf.if %2 {
      %cst_10 = arith.constant 0.000000e+00 : f32
      %12 = vector.broadcast %cst_10 : f32 to vector<32x128xf32>
      %c0_11 = arith.constant 0 : index
      %c0_12 = arith.constant 0 : index
      %13 = vector.load %arg9[%c0_11, %c0_12] : memref<32x128xf32, #tpu.memory_space<vmem>>, vector<32x128xf32>
      tpu.vector_store %arg9[%c0_11, %c0_12], %12 {strides = array<i32>} : memref<32x128xf32, #tpu.memory_space<vmem>>, vector<32x128xf32>,
    } else {
    }
    %c0 = arith.constant 0 : index
    %c0_1 = arith.constant 0 : index
    %3 = vector.load %arg9[%c0, %c0_1] : memref<32x128xf32, #tpu.memory_space<vmem>>, vector<32x128xf32>
    %c0_2 = arith.constant 0 : index
    %c0_3 = arith.constant 0 : index
    %4 = vector.load %arg2[%c0_2, %c0_3] : memref<32x256xbf16, #tpu.memory_space<vmem>>, vector<32x256xbf16>
    %c0_4 = arith.constant 0 : index
    %c0_5 = arith.constant 0 : index
    %5 = vector.load %arg3[%c0_4, %c0_5] : memref<256x128xbf16, #tpu.memory_space<vmem>>, vector<256x128xbf16>
    %cst = arith.constant dense<0.000000e+00> : vector<32x128xf32>
    %6 = tpu.matmul %4, %5, %cst {dimension_numbers = #tpu.dot_dimension_numbers<[1], [0], [0], [1], [0, 0, 1, 1], [], []>} : vector<32x256xbf16>, vector<256x128xbf16>, vector<32x128xf32> -> vector<32x128xf32>
    %7 = arith.addf %3, %6 : vector<32x128xf32>
    %c0_6 = arith.constant 0 : index
    %c0_7 = arith.constant 0 : index
    %8 = vector.load %arg9[%c0_6, %c0_7] : memref<32x128xf32, #tpu.memory_space<vmem>>, vector<32x128xf32>
    tpu.vector_store %arg9[%c0_6, %c0_7], %7 {strides = array<i32>} : memref<32x128xf32, #tpu.memory_space<vmem>>, vector<32x128xf32>,
    %c0_i32_8 = arith.constant 0 : i32
    %9 = arith.cmpi eq, %arg1, %c0_i32_8 : i32
    %10 = arith.extui %9 : i1 to i32
    %c0_i32_9 = arith.constant 0 : i32
    %11 = arith.cmpi ne, %10, %c0_i32_9 : i32
    scf.if %11 {
      %c0_10 = arith.constant 0 : index
      %c0_11 = arith.constant 0 : index
      %12 = vector.load %arg9[%c0_10, %c0_11] : memref<32x128xf32, #tpu.memory_space<vmem>>, vector<32x128xf32>
      %c0_12 = arith.constant 0 : index
      %c0_13 = arith.constant 0 : index
      %13 = vector.load %arg4[%c0_12, %c0_13] : memref<1x128xf32, #tpu.memory_space<vmem>>, vector<1x128xf32>
      %14 = vector.broadcast %13 : vector<1x128xf32> to vector<32x128xf32>
      %15 = arith.addf %12, %14 : vector<32x128xf32>
      %c0_14 = arith.constant 0 : index
      %c0_15 = arith.constant 0 : index
      %16 = vector.load %arg5[%c0_14, %c0_15] : memref<32x128xf32, #tpu.memory_space<vmem>>, vector<32x128xf32>
      %17 = arith.addf %15, %16 : vector<32x128xf32>
      %cst_16 = arith.constant dense<0.000000e+00> : vector<32xf32>
      %18 = vector.multi_reduction <add>, %17, %cst_16 [1] : vector<32x128xf32> to vector<32xf32>
      %19 = vector.shape_cast %18 : vector<32xf32> to vector<32x1xf32>
      %cst_17 = arith.constant 1.280000e+02 : f32
      %20 = vector.broadcast %cst_17 : f32 to vector<32x1xf32>
      %21 = arith.divf %19, %20 : vector<32x1xf32>
      %22 = vector.broadcast %21 : vector<32x1xf32> to vector<32x128xf32>
      %23 = arith.subf %17, %22 : vector<32x128xf32>
      %24 = arith.mulf %23, %23 : vector<32x128xf32>
      %cst_18 = arith.constant dense<0.000000e+00> : vector<32xf32>
      %25 = vector.multi_reduction <add>, %24, %cst_18 [1] : vector<32x128xf32> to vector<32xf32>
      %26 = vector.shape_cast %25 : vector<32xf32> to vector<32x1xf32>
      %cst_19 = arith.constant 1.280000e+02 : f32
      %27 = vector.broadcast %cst_19 : f32 to vector<32x1xf32>
      %28 = arith.divf %26, %27 : vector<32x1xf32>
      %cst_20 = arith.constant 9.99999974E-6 : f32
      %29 = vector.broadcast %cst_20 : f32 to vector<32x1xf32>
      %30 = arith.addf %28, %29 : vector<32x1xf32>
      %31 = math.rsqrt %30 : vector<32x1xf32>
      %32 = vector.broadcast %31 : vector<32x1xf32> to vector<32x128xf32>
      %33 = arith.mulf %23, %32 : vector<32x128xf32>
      %c0_21 = arith.constant 0 : index
      %c0_22 = arith.constant 0 : index
      %34 = vector.load %arg6[%c0_21, %c0_22] : memref<1x128xf32, #tpu.memory_space<vmem>>, vector<1x128xf32>
      %35 = vector.broadcast %34 : vector<1x128xf32> to vector<32x128xf32>
      %36 = arith.mulf %33, %35 : vector<32x128xf32>
      %c0_23 = arith.constant 0 : index
      %c0_24 = arith.constant 0 : index
      %37 = vector.load %arg7[%c0_23, %c0_24] : memref<1x128xf32, #tpu.memory_space<vmem>>, vector<1x128xf32>
      %38 = vector.broadcast %37 : vector<1x128xf32> to vector<32x128xf32>
      %39 = arith.addf %36, %38 : vector<32x128xf32>
      %c0_25 = arith.constant 0 : index
      %c0_26 = arith.constant 0 : index
      %40 = vector.load %arg8[%c0_25, %c0_26] : memref<32x128xf32, #tpu.memory_space<vmem>>, vector<32x128xf32>
      tpu.vector_store %arg8[%c0_25, %c0_26], %39 {strides = array<i32>} : memref<32x128xf32, #tpu.memory_space<vmem>>, vector<32x128xf32>,
    } else {
    }
    return
  }
  func.func @transform_0(%arg0: i32, %arg1: i32) -> (i32, i32) {
    %c0_i32 = arith.constant 0 : i32
    return %arg0, %arg1 : i32, i32
  }
  func.func @transform_1(%arg0: i32, %arg1: i32) -> (i32, i32) {
    %c0_i32 = arith.constant 0 : i32
    %c0_i32_0 = arith.constant 0 : i32
    return %arg1, %c0_i32 : i32, i32
  }
  func.func @transform_2(%arg0: i32, %arg1: i32) -> (i32, i32) {
    %c0_i32 = arith.constant 0 : i32
    %c0_i32_0 = arith.constant 0 : i32
    %c0_i32_1 = arith.constant 0 : i32
    return %c0_i32, %c0_i32_0 : i32, i32
  }
  func.func @transform_3(%arg0: i32, %arg1: i32) -> (i32, i32) {
    %c0_i32 = arith.constant 0 : i32
    %c0_i32_0 = arith.constant 0 : i32
    return %arg0, %c0_i32 : i32, i32
  }
  func.func @transform_4(%arg0: i32, %arg1: i32) -> (i32, i32) {
    %c0_i32 = arith.constant 0 : i32
    %c0_i32_0 = arith.constant 0 : i32
    %c0_i32_1 = arith.constant 0 : i32
    return %c0_i32, %c0_i32_0 : i32, i32
  }
  func.func @transform_5(%arg0: i32, %arg1: i32) -> (i32, i32) {
    %c0_i32 = arith.constant 0 : i32
    %c0_i32_0 = arith.constant 0 : i32
    %c0_i32_1 = arith.constant 0 : i32
    return %c0_i32, %c0_i32_0 : i32, i32
  }
  func.func @transform_6(%arg0: i32, %arg1: i32) -> (i32, i32) {
    %c0_i32 = arith.constant 0 : i32
    %c0_i32_0 = arith.constant 0 : i32
    return %arg0, %c0_i32 : i32, i32
  }
}

module attributes {stable_mosaic.version = 11 : i64} {
  func.func @_flash_attn_kernel(%arg0: i32, %arg1: i32, %arg2: i32, %arg3: memref<1x1x16xf32, #tpu.memory_space<vmem>>, %arg4: memref<1x16x128xbf16, #tpu.memory_space<vmem>>, %arg5: memref<1x16x128xbf16, #tpu.memory_space<vmem>>, %arg6: memref<1x16x128xbf16, #tpu.memory_space<vmem>>, %arg7: memref<1x16x128xbf16, #tpu.memory_space<vmem>>, %arg8: memref<4x16x1xf32, #tpu.memory_space<vmem>>, %arg9: memref<4x16x1xf32, #tpu.memory_space<vmem>>, %arg10: memref<4x16x32xf32, #tpu.memory_space<vmem>>) attributes {dimension_semantics = [#tpu.dimension_semantics<parallel>, #tpu.dimension_semantics<parallel>, #tpu.dimension_semantics<arbitrary>], iteration_bounds = array<i64: 2, 1, 1>, scalar_prefetch = 0 : i64, scratch_operands = 3 : i64, tpu.core_type = #tpu.core_type<tc>, window_params = [{transform_indices = @transform_0, window_bounds = array<i64: 1, 1, 16>}, {transform_indices = @transform_1, window_bounds = array<i64: 1, 16, 128>}, {transform_indices = @transform_2, window_bounds = array<i64: 1, 16, 128>}, {transform_indices = @transform_3, window_bounds = array<i64: 1, 16, 128>}, {transform_indices = @transform_4, window_bounds = array<i64: 1, 16, 128>}]} {
    %c0_i32 = arith.constant 0 : i32
    %0 = arith.cmpi eq, %arg2, %c0_i32 : i32
    %1 = arith.extui %0 : i1 to i32
    %c0_i32_0 = arith.constant 0 : i32
    %2 = arith.cmpi ne, %1, %c0_i32_0 : i32
    scf.if %2 {
      %cst_98 = arith.constant 0xFF800000 : f32
      %166 = vector.broadcast %cst_98 : f32 to vector<4x16x1xf32>
      %c0_99 = arith.constant 0 : index
      %c0_100 = arith.constant 0 : index
      %c0_101 = arith.constant 0 : index
      %167 = vector.load %arg8[%c0_99, %c0_100, %c0_101] : memref<4x16x1xf32, #tpu.memory_space<vmem>>, vector<4x16x1xf32>
      tpu.vector_store %arg8[%c0_99, %c0_100, %c0_101], %166 {strides = array<i32>} : memref<4x16x1xf32, #tpu.memory_space<vmem>>, vector<4x16x1xf32>,
      %cst_102 = arith.constant 0.000000e+00 : f32
      %168 = vector.broadcast %cst_102 : f32 to vector<4x16x1xf32>
      %c0_103 = arith.constant 0 : index
      %c0_104 = arith.constant 0 : index
      %c0_105 = arith.constant 0 : index
      %169 = vector.load %arg9[%c0_103, %c0_104, %c0_105] : memref<4x16x1xf32, #tpu.memory_space<vmem>>, vector<4x16x1xf32>
      tpu.vector_store %arg9[%c0_103, %c0_104, %c0_105], %168 {strides = array<i32>} : memref<4x16x1xf32, #tpu.memory_space<vmem>>, vector<4x16x1xf32>,
      %cst_106 = arith.constant 0.000000e+00 : f32
      %170 = vector.broadcast %cst_106 : f32 to vector<4x16x32xf32>
      %c0_107 = arith.constant 0 : index
      %c0_108 = arith.constant 0 : index
      %c0_109 = arith.constant 0 : index
      %171 = vector.load %arg10[%c0_107, %c0_108, %c0_109] : memref<4x16x32xf32, #tpu.memory_space<vmem>>, vector<4x16x32xf32>
      tpu.vector_store %arg10[%c0_107, %c0_108, %c0_109], %170 {strides = array<i32>} : memref<4x16x32xf32, #tpu.memory_space<vmem>>, vector<4x16x32xf32>,
    } else {
    }
    %c0 = arith.constant 0 : index
    %c0_1 = arith.constant 0 : index
    %c0_2 = arith.constant 0 : index
    %3 = vector.load %arg4[%c0, %c0_1, %c0_2] : memref<1x16x128xbf16, #tpu.memory_space<vmem>>, vector<1x16x128xbf16>
    %4 = vector.shape_cast %3 : vector<1x16x128xbf16> to vector<16x128xbf16>
    %c0_3 = arith.constant 0 : index
    %c0_4 = arith.constant 0 : index
    %c0_5 = arith.constant 0 : index
    %5 = vector.load %arg5[%c0_3, %c0_4, %c0_5] : memref<1x16x128xbf16, #tpu.memory_space<vmem>>, vector<1x16x128xbf16>
    %6 = vector.shape_cast %5 : vector<1x16x128xbf16> to vector<16x128xbf16>
    %c0_6 = arith.constant 0 : index
    %c0_7 = arith.constant 0 : index
    %c0_8 = arith.constant 0 : index
    %7 = vector.load %arg6[%c0_6, %c0_7, %c0_8] : memref<1x16x128xbf16, #tpu.memory_space<vmem>>, vector<1x16x128xbf16>
    %8 = vector.shape_cast %7 : vector<1x16x128xbf16> to vector<16x128xbf16>
    %c0_9 = arith.constant 0 : index
    %c0_10 = arith.constant 0 : index
    %c0_11 = arith.constant 0 : index
    %9 = vector.load %arg3[%c0_9, %c0_10, %c0_11] : memref<1x1x16xf32, #tpu.memory_space<vmem>>, vector<1x1x16xf32>
    %10 = vector.shape_cast %9 : vector<1x1x16xf32> to vector<1x16xf32>
    %11 = vector.extract_strided_slice %4 {offsets = [0, 0], sizes = [16, 32], strides = [1, 1]} : vector<16x128xbf16> to vector<16x32xbf16>
    %12 = vector.extract_strided_slice %6 {offsets = [0, 0], sizes = [16, 32], strides = [1, 1]} : vector<16x128xbf16> to vector<16x32xbf16>
    %cst = arith.constant dense<0.000000e+00> : vector<16x16xf32>
    %13 = tpu.matmul %11, %12, %cst {dimension_numbers = #tpu.dot_dimension_numbers<[1], [1], [0], [0], [0, 0, 1, 0], [], []>} : vector<16x32xbf16>, vector<16x32xbf16>, vector<16x16xf32> -> vector<16x16xf32>
    %14 = vector.broadcast %10 : vector<1x16xf32> to vector<16x16xf32>
    %15 = arith.addf %13, %14 : vector<16x16xf32>
    %c0_12 = arith.constant 0 : index
    %c0_13 = arith.constant 0 : index
    %c0_14 = arith.constant 0 : index
    %16 = vector.load %arg8[%c0_12, %c0_13, %c0_14] : memref<4x16x1xf32, #tpu.memory_space<vmem>>, vector<1x16x1xf32>
    %17 = vector.shape_cast %16 : vector<1x16x1xf32> to vector<16x1xf32>
    %cst_15 = arith.constant dense<0xFF800000> : vector<16xf32>
    %18 = vector.multi_reduction <maximumf>, %15, %cst_15 [1] : vector<16x16xf32> to vector<16xf32>
    %19 = vector.shape_cast %18 : vector<16xf32> to vector<16x1xf32>
    %20 = arith.maximumf %17, %19 : vector<16x1xf32>
    %21 = arith.subf %17, %20 : vector<16x1xf32>
    %22 = math.exp %21 : vector<16x1xf32>
    %23 = vector.broadcast %20 : vector<16x1xf32> to vector<16x16xf32>
    %24 = arith.subf %15, %23 : vector<16x16xf32>
    %25 = math.exp %24 : vector<16x16xf32>
    %c0_16 = arith.constant 0 : index
    %c0_17 = arith.constant 0 : index
    %c0_18 = arith.constant 0 : index
    %26 = vector.load %arg9[%c0_16, %c0_17, %c0_18] : memref<4x16x1xf32, #tpu.memory_space<vmem>>, vector<1x16x1xf32>
    %27 = vector.shape_cast %26 : vector<1x16x1xf32> to vector<16x1xf32>
    %28 = arith.mulf %22, %27 : vector<16x1xf32>
    %cst_19 = arith.constant dense<0.000000e+00> : vector<16xf32>
    %29 = vector.multi_reduction <add>, %25, %cst_19 [1] : vector<16x16xf32> to vector<16xf32>
    %30 = vector.shape_cast %29 : vector<16xf32> to vector<16x1xf32>
    %31 = arith.addf %28, %30 : vector<16x1xf32>
    %c0_20 = arith.constant 0 : index
    %c0_21 = arith.constant 0 : index
    %c0_22 = arith.constant 0 : index
    %32 = vector.load %arg9[%c0_20, %c0_21, %c0_22] : memref<4x16x1xf32, #tpu.memory_space<vmem>>, vector<1x16x1xf32>
    %33 = vector.shape_cast %32 : vector<1x16x1xf32> to vector<16x1xf32>
    %34 = vector.shape_cast %31 : vector<16x1xf32> to vector<1x16x1xf32>
    tpu.vector_store %arg9[%c0_20, %c0_21, %c0_22], %34 {strides = array<i32>} : memref<4x16x1xf32, #tpu.memory_space<vmem>>, vector<1x16x1xf32>,
    %c0_23 = arith.constant 0 : index
    %c0_24 = arith.constant 0 : index
    %c0_25 = arith.constant 0 : index
    %35 = vector.load %arg10[%c0_23, %c0_24, %c0_25] : memref<4x16x32xf32, #tpu.memory_space<vmem>>, vector<1x16x32xf32>
    %36 = vector.shape_cast %35 : vector<1x16x32xf32> to vector<16x32xf32>
    %37 = vector.broadcast %22 : vector<16x1xf32> to vector<16x32xf32>
    %38 = arith.mulf %37, %36 : vector<16x32xf32>
    %39 = arith.truncf %25 : vector<16x16xf32> to vector<16x16xbf16>
    %40 = vector.extract_strided_slice %8 {offsets = [0, 0], sizes = [16, 32], strides = [1, 1]} : vector<16x128xbf16> to vector<16x32xbf16>
    %cst_26 = arith.constant dense<0.000000e+00> : vector<16x32xf32>
    %41 = tpu.matmul %39, %40, %cst_26 {dimension_numbers = #tpu.dot_dimension_numbers<[1], [0], [0], [1], [0, 0, 1, 1], [], []>} : vector<16x16xbf16>, vector<16x32xbf16>, vector<16x32xf32> -> vector<16x32xf32>
    %42 = arith.addf %38, %41 : vector<16x32xf32>
    %c0_27 = arith.constant 0 : index
    %c0_28 = arith.constant 0 : index
    %c0_29 = arith.constant 0 : index
    %43 = vector.load %arg10[%c0_27, %c0_28, %c0_29] : memref<4x16x32xf32, #tpu.memory_space<vmem>>, vector<1x16x32xf32>
    %44 = vector.shape_cast %43 : vector<1x16x32xf32> to vector<16x32xf32>
    %45 = vector.shape_cast %42 : vector<16x32xf32> to vector<1x16x32xf32>
    tpu.vector_store %arg10[%c0_27, %c0_28, %c0_29], %45 {strides = array<i32>} : memref<4x16x32xf32, #tpu.memory_space<vmem>>, vector<1x16x32xf32>,
    %c0_30 = arith.constant 0 : index
    %c0_31 = arith.constant 0 : index
    %c0_32 = arith.constant 0 : index
    %46 = vector.load %arg8[%c0_30, %c0_31, %c0_32] : memref<4x16x1xf32, #tpu.memory_space<vmem>>, vector<1x16x1xf32>
    %47 = vector.shape_cast %46 : vector<1x16x1xf32> to vector<16x1xf32>
    %48 = vector.shape_cast %20 : vector<16x1xf32> to vector<1x16x1xf32>
    tpu.vector_store %arg8[%c0_30, %c0_31, %c0_32], %48 {strides = array<i32>} : memref<4x16x1xf32, #tpu.memory_space<vmem>>, vector<1x16x1xf32>,
    %49 = vector.extract_strided_slice %4 {offsets = [0, 32], sizes = [16, 32], strides = [1, 1]} : vector<16x128xbf16> to vector<16x32xbf16>
    %50 = vector.extract_strided_slice %6 {offsets = [0, 32], sizes = [16, 32], strides = [1, 1]} : vector<16x128xbf16> to vector<16x32xbf16>
    %cst_33 = arith.constant dense<0.000000e+00> : vector<16x16xf32>
    %51 = tpu.matmul %49, %50, %cst_33 {dimension_numbers = #tpu.dot_dimension_numbers<[1], [1], [0], [0], [0, 0, 1, 0], [], []>} : vector<16x32xbf16>, vector<16x32xbf16>, vector<16x16xf32> -> vector<16x16xf32>
    %52 = vector.broadcast %10 : vector<1x16xf32> to vector<16x16xf32>
    %53 = arith.addf %51, %52 : vector<16x16xf32>
    %c1 = arith.constant 1 : index
    %c0_34 = arith.constant 0 : index
    %c0_35 = arith.constant 0 : index
    %54 = vector.load %arg8[%c1, %c0_34, %c0_35] : memref<4x16x1xf32, #tpu.memory_space<vmem>>, vector<1x16x1xf32>
    %55 = vector.shape_cast %54 : vector<1x16x1xf32> to vector<16x1xf32>
    %cst_36 = arith.constant dense<0xFF800000> : vector<16xf32>
    %56 = vector.multi_reduction <maximumf>, %53, %cst_36 [1] : vector<16x16xf32> to vector<16xf32>
    %57 = vector.shape_cast %56 : vector<16xf32> to vector<16x1xf32>
    %58 = arith.maximumf %55, %57 : vector<16x1xf32>
    %59 = arith.subf %55, %58 : vector<16x1xf32>
    %60 = math.exp %59 : vector<16x1xf32>
    %61 = vector.broadcast %58 : vector<16x1xf32> to vector<16x16xf32>
    %62 = arith.subf %53, %61 : vector<16x16xf32>
    %63 = math.exp %62 : vector<16x16xf32>
    %c1_37 = arith.constant 1 : index
    %c0_38 = arith.constant 0 : index
    %c0_39 = arith.constant 0 : index
    %64 = vector.load %arg9[%c1_37, %c0_38, %c0_39] : memref<4x16x1xf32, #tpu.memory_space<vmem>>, vector<1x16x1xf32>
    %65 = vector.shape_cast %64 : vector<1x16x1xf32> to vector<16x1xf32>
    %66 = arith.mulf %60, %65 : vector<16x1xf32>
    %cst_40 = arith.constant dense<0.000000e+00> : vector<16xf32>
    %67 = vector.multi_reduction <add>, %63, %cst_40 [1] : vector<16x16xf32> to vector<16xf32>
    %68 = vector.shape_cast %67 : vector<16xf32> to vector<16x1xf32>
    %69 = arith.addf %66, %68 : vector<16x1xf32>
    %c1_41 = arith.constant 1 : index
    %c0_42 = arith.constant 0 : index
    %c0_43 = arith.constant 0 : index
    %70 = vector.load %arg9[%c1_41, %c0_42, %c0_43] : memref<4x16x1xf32, #tpu.memory_space<vmem>>, vector<1x16x1xf32>
    %71 = vector.shape_cast %70 : vector<1x16x1xf32> to vector<16x1xf32>
    %72 = vector.shape_cast %69 : vector<16x1xf32> to vector<1x16x1xf32>
    tpu.vector_store %arg9[%c1_41, %c0_42, %c0_43], %72 {strides = array<i32>} : memref<4x16x1xf32, #tpu.memory_space<vmem>>, vector<1x16x1xf32>,
    %c1_44 = arith.constant 1 : index
    %c0_45 = arith.constant 0 : index
    %c0_46 = arith.constant 0 : index
    %73 = vector.load %arg10[%c1_44, %c0_45, %c0_46] : memref<4x16x32xf32, #tpu.memory_space<vmem>>, vector<1x16x32xf32>
    %74 = vector.shape_cast %73 : vector<1x16x32xf32> to vector<16x32xf32>
    %75 = vector.broadcast %60 : vector<16x1xf32> to vector<16x32xf32>
    %76 = arith.mulf %75, %74 : vector<16x32xf32>
    %77 = arith.truncf %63 : vector<16x16xf32> to vector<16x16xbf16>
    %78 = vector.extract_strided_slice %8 {offsets = [0, 32], sizes = [16, 32], strides = [1, 1]} : vector<16x128xbf16> to vector<16x32xbf16>
    %cst_47 = arith.constant dense<0.000000e+00> : vector<16x32xf32>
    %79 = tpu.matmul %77, %78, %cst_47 {dimension_numbers = #tpu.dot_dimension_numbers<[1], [0], [0], [1], [0, 0, 1, 1], [], []>} : vector<16x16xbf16>, vector<16x32xbf16>, vector<16x32xf32> -> vector<16x32xf32>
    %80 = arith.addf %76, %79 : vector<16x32xf32>
    %c1_48 = arith.constant 1 : index
    %c0_49 = arith.constant 0 : index
    %c0_50 = arith.constant 0 : index
    %81 = vector.load %arg10[%c1_48, %c0_49, %c0_50] : memref<4x16x32xf32, #tpu.memory_space<vmem>>, vector<1x16x32xf32>
    %82 = vector.shape_cast %81 : vector<1x16x32xf32> to vector<16x32xf32>
    %83 = vector.shape_cast %80 : vector<16x32xf32> to vector<1x16x32xf32>
    tpu.vector_store %arg10[%c1_48, %c0_49, %c0_50], %83 {strides = array<i32>} : memref<4x16x32xf32, #tpu.memory_space<vmem>>, vector<1x16x32xf32>,
    %c1_51 = arith.constant 1 : index
    %c0_52 = arith.constant 0 : index
    %c0_53 = arith.constant 0 : index
    %84 = vector.load %arg8[%c1_51, %c0_52, %c0_53] : memref<4x16x1xf32, #tpu.memory_space<vmem>>, vector<1x16x1xf32>
    %85 = vector.shape_cast %84 : vector<1x16x1xf32> to vector<16x1xf32>
    %86 = vector.shape_cast %58 : vector<16x1xf32> to vector<1x16x1xf32>
    tpu.vector_store %arg8[%c1_51, %c0_52, %c0_53], %86 {strides = array<i32>} : memref<4x16x1xf32, #tpu.memory_space<vmem>>, vector<1x16x1xf32>,
    %87 = vector.extract_strided_slice %4 {offsets = [0, 64], sizes = [16, 32], strides = [1, 1]} : vector<16x128xbf16> to vector<16x32xbf16>
    %88 = vector.extract_strided_slice %6 {offsets = [0, 64], sizes = [16, 32], strides = [1, 1]} : vector<16x128xbf16> to vector<16x32xbf16>
    %cst_54 = arith.constant dense<0.000000e+00> : vector<16x16xf32>
    %89 = tpu.matmul %87, %88, %cst_54 {dimension_numbers = #tpu.dot_dimension_numbers<[1], [1], [0], [0], [0, 0, 1, 0], [], []>} : vector<16x32xbf16>, vector<16x32xbf16>, vector<16x16xf32> -> vector<16x16xf32>
    %90 = vector.broadcast %10 : vector<1x16xf32> to vector<16x16xf32>
    %91 = arith.addf %89, %90 : vector<16x16xf32>
    %c2 = arith.constant 2 : index
    %c0_55 = arith.constant 0 : index
    %c0_56 = arith.constant 0 : index
    %92 = vector.load %arg8[%c2, %c0_55, %c0_56] : memref<4x16x1xf32, #tpu.memory_space<vmem>>, vector<1x16x1xf32>
    %93 = vector.shape_cast %92 : vector<1x16x1xf32> to vector<16x1xf32>
    %cst_57 = arith.constant dense<0xFF800000> : vector<16xf32>
    %94 = vector.multi_reduction <maximumf>, %91, %cst_57 [1] : vector<16x16xf32> to vector<16xf32>
    %95 = vector.shape_cast %94 : vector<16xf32> to vector<16x1xf32>
    %96 = arith.maximumf %93, %95 : vector<16x1xf32>
    %97 = arith.subf %93, %96 : vector<16x1xf32>
    %98 = math.exp %97 : vector<16x1xf32>
    %99 = vector.broadcast %96 : vector<16x1xf32> to vector<16x16xf32>
    %100 = arith.subf %91, %99 : vector<16x16xf32>
    %101 = math.exp %100 : vector<16x16xf32>
    %c2_58 = arith.constant 2 : index
    %c0_59 = arith.constant 0 : index
    %c0_60 = arith.constant 0 : index
    %102 = vector.load %arg9[%c2_58, %c0_59, %c0_60] : memref<4x16x1xf32, #tpu.memory_space<vmem>>, vector<1x16x1xf32>
    %103 = vector.shape_cast %102 : vector<1x16x1xf32> to vector<16x1xf32>
    %104 = arith.mulf %98, %103 : vector<16x1xf32>
    %cst_61 = arith.constant dense<0.000000e+00> : vector<16xf32>
    %105 = vector.multi_reduction <add>, %101, %cst_61 [1] : vector<16x16xf32> to vector<16xf32>
    %106 = vector.shape_cast %105 : vector<16xf32> to vector<16x1xf32>
    %107 = arith.addf %104, %106 : vector<16x1xf32>
    %c2_62 = arith.constant 2 : index
    %c0_63 = arith.constant 0 : index
    %c0_64 = arith.constant 0 : index
    %108 = vector.load %arg9[%c2_62, %c0_63, %c0_64] : memref<4x16x1xf32, #tpu.memory_space<vmem>>, vector<1x16x1xf32>
    %109 = vector.shape_cast %108 : vector<1x16x1xf32> to vector<16x1xf32>
    %110 = vector.shape_cast %107 : vector<16x1xf32> to vector<1x16x1xf32>
    tpu.vector_store %arg9[%c2_62, %c0_63, %c0_64], %110 {strides = array<i32>} : memref<4x16x1xf32, #tpu.memory_space<vmem>>, vector<1x16x1xf32>,
    %c2_65 = arith.constant 2 : index
    %c0_66 = arith.constant 0 : index
    %c0_67 = arith.constant 0 : index
    %111 = vector.load %arg10[%c2_65, %c0_66, %c0_67] : memref<4x16x32xf32, #tpu.memory_space<vmem>>, vector<1x16x32xf32>
    %112 = vector.shape_cast %111 : vector<1x16x32xf32> to vector<16x32xf32>
    %113 = vector.broadcast %98 : vector<16x1xf32> to vector<16x32xf32>
    %114 = arith.mulf %113, %112 : vector<16x32xf32>
    %115 = arith.truncf %101 : vector<16x16xf32> to vector<16x16xbf16>
    %116 = vector.extract_strided_slice %8 {offsets = [0, 64], sizes = [16, 32], strides = [1, 1]} : vector<16x128xbf16> to vector<16x32xbf16>
    %cst_68 = arith.constant dense<0.000000e+00> : vector<16x32xf32>
    %117 = tpu.matmul %115, %116, %cst_68 {dimension_numbers = #tpu.dot_dimension_numbers<[1], [0], [0], [1], [0, 0, 1, 1], [], []>} : vector<16x16xbf16>, vector<16x32xbf16>, vector<16x32xf32> -> vector<16x32xf32>
    %118 = arith.addf %114, %117 : vector<16x32xf32>
    %c2_69 = arith.constant 2 : index
    %c0_70 = arith.constant 0 : index
    %c0_71 = arith.constant 0 : index
    %119 = vector.load %arg10[%c2_69, %c0_70, %c0_71] : memref<4x16x32xf32, #tpu.memory_space<vmem>>, vector<1x16x32xf32>
    %120 = vector.shape_cast %119 : vector<1x16x32xf32> to vector<16x32xf32>
    %121 = vector.shape_cast %118 : vector<16x32xf32> to vector<1x16x32xf32>
    tpu.vector_store %arg10[%c2_69, %c0_70, %c0_71], %121 {strides = array<i32>} : memref<4x16x32xf32, #tpu.memory_space<vmem>>, vector<1x16x32xf32>,
    %c2_72 = arith.constant 2 : index
    %c0_73 = arith.constant 0 : index
    %c0_74 = arith.constant 0 : index
    %122 = vector.load %arg8[%c2_72, %c0_73, %c0_74] : memref<4x16x1xf32, #tpu.memory_space<vmem>>, vector<1x16x1xf32>
    %123 = vector.shape_cast %122 : vector<1x16x1xf32> to vector<16x1xf32>
    %124 = vector.shape_cast %96 : vector<16x1xf32> to vector<1x16x1xf32>
    tpu.vector_store %arg8[%c2_72, %c0_73, %c0_74], %124 {strides = array<i32>} : memref<4x16x1xf32, #tpu.memory_space<vmem>>, vector<1x16x1xf32>,
    %125 = vector.extract_strided_slice %4 {offsets = [0, 96], sizes = [16, 32], strides = [1, 1]} : vector<16x128xbf16> to vector<16x32xbf16>
    %126 = vector.extract_strided_slice %6 {offsets = [0, 96], sizes = [16, 32], strides = [1, 1]} : vector<16x128xbf16> to vector<16x32xbf16>
    %cst_75 = arith.constant dense<0.000000e+00> : vector<16x16xf32>
    %127 = tpu.matmul %125, %126, %cst_75 {dimension_numbers = #tpu.dot_dimension_numbers<[1], [1], [0], [0], [0, 0, 1, 0], [], []>} : vector<16x32xbf16>, vector<16x32xbf16>, vector<16x16xf32> -> vector<16x16xf32>
    %128 = vector.broadcast %10 : vector<1x16xf32> to vector<16x16xf32>
    %129 = arith.addf %127, %128 : vector<16x16xf32>
    %c3 = arith.constant 3 : index
    %c0_76 = arith.constant 0 : index
    %c0_77 = arith.constant 0 : index
    %130 = vector.load %arg8[%c3, %c0_76, %c0_77] : memref<4x16x1xf32, #tpu.memory_space<vmem>>, vector<1x16x1xf32>
    %131 = vector.shape_cast %130 : vector<1x16x1xf32> to vector<16x1xf32>
    %cst_78 = arith.constant dense<0xFF800000> : vector<16xf32>
    %132 = vector.multi_reduction <maximumf>, %129, %cst_78 [1] : vector<16x16xf32> to vector<16xf32>
    %133 = vector.shape_cast %132 : vector<16xf32> to vector<16x1xf32>
    %134 = arith.maximumf %131, %133 : vector<16x1xf32>
    %135 = arith.subf %131, %134 : vector<16x1xf32>
    %136 = math.exp %135 : vector<16x1xf32>
    %137 = vector.broadcast %134 : vector<16x1xf32> to vector<16x16xf32>
    %138 = arith.subf %129, %137 : vector<16x16xf32>
    %139 = math.exp %138 : vector<16x16xf32>
    %c3_79 = arith.constant 3 : index
    %c0_80 = arith.constant 0 : index
    %c0_81 = arith.constant 0 : index
    %140 = vector.load %arg9[%c3_79, %c0_80, %c0_81] : memref<4x16x1xf32, #tpu.memory_space<vmem>>, vector<1x16x1xf32>
    %141 = vector.shape_cast %140 : vector<1x16x1xf32> to vector<16x1xf32>
    %142 = arith.mulf %136, %141 : vector<16x1xf32>
    %cst_82 = arith.constant dense<0.000000e+00> : vector<16xf32>
    %143 = vector.multi_reduction <add>, %139, %cst_82 [1] : vector<16x16xf32> to vector<16xf32>
    %144 = vector.shape_cast %143 : vector<16xf32> to vector<16x1xf32>
    %145 = arith.addf %142, %144 : vector<16x1xf32>
    %c3_83 = arith.constant 3 : index
    %c0_84 = arith.constant 0 : index
    %c0_85 = arith.constant 0 : index
    %146 = vector.load %arg9[%c3_83, %c0_84, %c0_85] : memref<4x16x1xf32, #tpu.memory_space<vmem>>, vector<1x16x1xf32>
    %147 = vector.shape_cast %146 : vector<1x16x1xf32> to vector<16x1xf32>
    %148 = vector.shape_cast %145 : vector<16x1xf32> to vector<1x16x1xf32>
    tpu.vector_store %arg9[%c3_83, %c0_84, %c0_85], %148 {strides = array<i32>} : memref<4x16x1xf32, #tpu.memory_space<vmem>>, vector<1x16x1xf32>,
    %c3_86 = arith.constant 3 : index
    %c0_87 = arith.constant 0 : index
    %c0_88 = arith.constant 0 : index
    %149 = vector.load %arg10[%c3_86, %c0_87, %c0_88] : memref<4x16x32xf32, #tpu.memory_space<vmem>>, vector<1x16x32xf32>
    %150 = vector.shape_cast %149 : vector<1x16x32xf32> to vector<16x32xf32>
    %151 = vector.broadcast %136 : vector<16x1xf32> to vector<16x32xf32>
    %152 = arith.mulf %151, %150 : vector<16x32xf32>
    %153 = arith.truncf %139 : vector<16x16xf32> to vector<16x16xbf16>
    %154 = vector.extract_strided_slice %8 {offsets = [0, 96], sizes = [16, 32], strides = [1, 1]} : vector<16x128xbf16> to vector<16x32xbf16>
    %cst_89 = arith.constant dense<0.000000e+00> : vector<16x32xf32>
    %155 = tpu.matmul %153, %154, %cst_89 {dimension_numbers = #tpu.dot_dimension_numbers<[1], [0], [0], [1], [0, 0, 1, 1], [], []>} : vector<16x16xbf16>, vector<16x32xbf16>, vector<16x32xf32> -> vector<16x32xf32>
    %156 = arith.addf %152, %155 : vector<16x32xf32>
    %c3_90 = arith.constant 3 : index
    %c0_91 = arith.constant 0 : index
    %c0_92 = arith.constant 0 : index
    %157 = vector.load %arg10[%c3_90, %c0_91, %c0_92] : memref<4x16x32xf32, #tpu.memory_space<vmem>>, vector<1x16x32xf32>
    %158 = vector.shape_cast %157 : vector<1x16x32xf32> to vector<16x32xf32>
    %159 = vector.shape_cast %156 : vector<16x32xf32> to vector<1x16x32xf32>
    tpu.vector_store %arg10[%c3_90, %c0_91, %c0_92], %159 {strides = array<i32>} : memref<4x16x32xf32, #tpu.memory_space<vmem>>, vector<1x16x32xf32>,
    %c3_93 = arith.constant 3 : index
    %c0_94 = arith.constant 0 : index
    %c0_95 = arith.constant 0 : index
    %160 = vector.load %arg8[%c3_93, %c0_94, %c0_95] : memref<4x16x1xf32, #tpu.memory_space<vmem>>, vector<1x16x1xf32>
    %161 = vector.shape_cast %160 : vector<1x16x1xf32> to vector<16x1xf32>
    %162 = vector.shape_cast %134 : vector<16x1xf32> to vector<1x16x1xf32>
    tpu.vector_store %arg8[%c3_93, %c0_94, %c0_95], %162 {strides = array<i32>} : memref<4x16x1xf32, #tpu.memory_space<vmem>>, vector<1x16x1xf32>,
    %c0_i32_96 = arith.constant 0 : i32
    %163 = arith.cmpi eq, %arg2, %c0_i32_96 : i32
    %164 = arith.extui %163 : i1 to i32
    %c0_i32_97 = arith.constant 0 : i32
    %165 = arith.cmpi ne, %164, %c0_i32_97 : i32
    scf.if %165 {
      %c0_98 = arith.constant 0 : index
      %c0_99 = arith.constant 0 : index
      %c0_100 = arith.constant 0 : index
      %166 = vector.load %arg10[%c0_98, %c0_99, %c0_100] : memref<4x16x32xf32, #tpu.memory_space<vmem>>, vector<1x16x32xf32>
      %167 = vector.shape_cast %166 : vector<1x16x32xf32> to vector<16x32xf32>
      %c0_101 = arith.constant 0 : index
      %c0_102 = arith.constant 0 : index
      %c0_103 = arith.constant 0 : index
      %168 = vector.load %arg9[%c0_101, %c0_102, %c0_103] : memref<4x16x1xf32, #tpu.memory_space<vmem>>, vector<1x16x1xf32>
      %169 = vector.shape_cast %168 : vector<1x16x1xf32> to vector<16x1xf32>
      %170 = vector.broadcast %169 : vector<16x1xf32> to vector<16x32xf32>
      %171 = arith.divf %167, %170 : vector<16x32xf32>
      %c1_104 = arith.constant 1 : index
      %c0_105 = arith.constant 0 : index
      %c0_106 = arith.constant 0 : index
      %172 = vector.load %arg10[%c1_104, %c0_105, %c0_106] : memref<4x16x32xf32, #tpu.memory_space<vmem>>, vector<1x16x32xf32>
      %173 = vector.shape_cast %172 : vector<1x16x32xf32> to vector<16x32xf32>
      %c1_107 = arith.constant 1 : index
      %c0_108 = arith.constant 0 : index
      %c0_109 = arith.constant 0 : index
      %174 = vector.load %arg9[%c1_107, %c0_108, %c0_109] : memref<4x16x1xf32, #tpu.memory_space<vmem>>, vector<1x16x1xf32>
      %175 = vector.shape_cast %174 : vector<1x16x1xf32> to vector<16x1xf32>
      %176 = vector.broadcast %175 : vector<16x1xf32> to vector<16x32xf32>
      %177 = arith.divf %173, %176 : vector<16x32xf32>
      %c2_110 = arith.constant 2 : index
      %c0_111 = arith.constant 0 : index
      %c0_112 = arith.constant 0 : index
      %178 = vector.load %arg10[%c2_110, %c0_111, %c0_112] : memref<4x16x32xf32, #tpu.memory_space<vmem>>, vector<1x16x32xf32>
      %179 = vector.shape_cast %178 : vector<1x16x32xf32> to vector<16x32xf32>
      %c2_113 = arith.constant 2 : index
      %c0_114 = arith.constant 0 : index
      %c0_115 = arith.constant 0 : index
      %180 = vector.load %arg9[%c2_113, %c0_114, %c0_115] : memref<4x16x1xf32, #tpu.memory_space<vmem>>, vector<1x16x1xf32>
      %181 = vector.shape_cast %180 : vector<1x16x1xf32> to vector<16x1xf32>
      %182 = vector.broadcast %181 : vector<16x1xf32> to vector<16x32xf32>
      %183 = arith.divf %179, %182 : vector<16x32xf32>
      %c3_116 = arith.constant 3 : index
      %c0_117 = arith.constant 0 : index
      %c0_118 = arith.constant 0 : index
      %184 = vector.load %arg10[%c3_116, %c0_117, %c0_118] : memref<4x16x32xf32, #tpu.memory_space<vmem>>, vector<1x16x32xf32>
      %185 = vector.shape_cast %184 : vector<1x16x32xf32> to vector<16x32xf32>
      %c3_119 = arith.constant 3 : index
      %c0_120 = arith.constant 0 : index
      %c0_121 = arith.constant 0 : index
      %186 = vector.load %arg9[%c3_119, %c0_120, %c0_121] : memref<4x16x1xf32, #tpu.memory_space<vmem>>, vector<1x16x1xf32>
      %187 = vector.shape_cast %186 : vector<1x16x1xf32> to vector<16x1xf32>
      %188 = vector.broadcast %187 : vector<16x1xf32> to vector<16x32xf32>
      %189 = arith.divf %185, %188 : vector<16x32xf32>
      %190 = tpu.concatenate %171, %177, %183, %189 in 1 : vector<16x32xf32>, vector<16x32xf32>, vector<16x32xf32>, vector<16x32xf32> -> vector<16x128xf32>
      %191 = arith.truncf %190 : vector<16x128xf32> to vector<16x128xbf16>
      %c0_122 = arith.constant 0 : index
      %c0_123 = arith.constant 0 : index
      %c0_124 = arith.constant 0 : index
      %192 = vector.load %arg7[%c0_122, %c0_123, %c0_124] : memref<1x16x128xbf16, #tpu.memory_space<vmem>>, vector<1x16x128xbf16>
      %193 = vector.shape_cast %192 : vector<1x16x128xbf16> to vector<16x128xbf16>
      %194 = vector.shape_cast %191 : vector<16x128xbf16> to vector<1x16x128xbf16>
      tpu.vector_store %arg7[%c0_122, %c0_123, %c0_124], %194 {strides = array<i32>} : memref<1x16x128xbf16, #tpu.memory_space<vmem>>, vector<1x16x128xbf16>,
    } else {
    }
    return
  }
  func.func @transform_0(%arg0: i32, %arg1: i32, %arg2: i32) -> (i32, i32, i32) {
    %c0_i32 = arith.constant 0 : i32
    %c0_i32_0 = arith.constant 0 : i32
    return %arg0, %c0_i32, %arg2 : i32, i32, i32
  }
  func.func @transform_1(%arg0: i32, %arg1: i32, %arg2: i32) -> (i32, i32, i32) {
    %c0_i32 = arith.constant 0 : i32
    %c0_i32_0 = arith.constant 0 : i32
    return %arg0, %arg1, %c0_i32 : i32, i32, i32
  }
  func.func @transform_2(%arg0: i32, %arg1: i32, %arg2: i32) -> (i32, i32, i32) {
    %c1_i32 = arith.constant 1 : i32
    %c0_i32 = arith.constant 0 : i32
    return %arg0, %arg2, %c1_i32 : i32, i32, i32
  }
  func.func @transform_3(%arg0: i32, %arg1: i32, %arg2: i32) -> (i32, i32, i32) {
    %c2_i32 = arith.constant 2 : i32
    %c0_i32 = arith.constant 0 : i32
    return %arg0, %arg2, %c2_i32 : i32, i32, i32
  }
  func.func @transform_4(%arg0: i32, %arg1: i32, %arg2: i32) -> (i32, i32, i32) {
    %c0_i32 = arith.constant 0 : i32
    %c0_i32_0 = arith.constant 0 : i32
    return %arg0, %arg1, %c0_i32 : i32, i32, i32
  }
}

module attributes {stable_mosaic.version = 11 : i64} {
  func.func @_linear_kernel(%arg0: i32, %arg1: i32, %arg2: i32, %arg3: memref<32x128xf32, #tpu.memory_space<vmem>>, %arg4: memref<128x256xbf16, #tpu.memory_space<vmem>>, %arg5: memref<1x256xf32, #tpu.memory_space<vmem>>, %arg6: memref<32x256xbf16, #tpu.memory_space<vmem>>, %arg7: memref<32x256xf32, #tpu.memory_space<vmem>>) attributes {dimension_semantics = [#tpu.dimension_semantics<parallel>, #tpu.dimension_semantics<parallel>, #tpu.dimension_semantics<arbitrary>], iteration_bounds = array<i64: 1, 1, 1>, scalar_prefetch = 0 : i64, scratch_operands = 1 : i64, tpu.core_type = #tpu.core_type<tc>, window_params = [{transform_indices = @transform_0, window_bounds = array<i64: 32, 128>}, {transform_indices = @transform_1, window_bounds = array<i64: 128, 256>}, {transform_indices = @transform_2, window_bounds = array<i64: 1, 256>}, {transform_indices = @transform_3, window_bounds = array<i64: 32, 256>}]} {
    %c0_i32 = arith.constant 0 : i32
    %0 = arith.cmpi eq, %arg2, %c0_i32 : i32
    %1 = arith.extui %0 : i1 to i32
    %c0_i32_0 = arith.constant 0 : i32
    %2 = arith.cmpi ne, %1, %c0_i32_0 : i32
    scf.if %2 {
      %cst_10 = arith.constant 0.000000e+00 : f32
      %13 = vector.broadcast %cst_10 : f32 to vector<32x256xf32>
      %c0_11 = arith.constant 0 : index
      %c0_12 = arith.constant 0 : index
      %14 = vector.load %arg7[%c0_11, %c0_12] : memref<32x256xf32, #tpu.memory_space<vmem>>, vector<32x256xf32>
      tpu.vector_store %arg7[%c0_11, %c0_12], %13 {strides = array<i32>} : memref<32x256xf32, #tpu.memory_space<vmem>>, vector<32x256xf32>,
    } else {
    }
    %c0 = arith.constant 0 : index
    %c0_1 = arith.constant 0 : index
    %3 = vector.load %arg7[%c0, %c0_1] : memref<32x256xf32, #tpu.memory_space<vmem>>, vector<32x256xf32>
    %c0_2 = arith.constant 0 : index
    %c0_3 = arith.constant 0 : index
    %4 = vector.load %arg3[%c0_2, %c0_3] : memref<32x128xf32, #tpu.memory_space<vmem>>, vector<32x128xf32>
    %5 = arith.truncf %4 : vector<32x128xf32> to vector<32x128xbf16>
    %c0_4 = arith.constant 0 : index
    %c0_5 = arith.constant 0 : index
    %6 = vector.load %arg4[%c0_4, %c0_5] : memref<128x256xbf16, #tpu.memory_space<vmem>>, vector<128x256xbf16>
    %cst = arith.constant dense<0.000000e+00> : vector<32x256xf32>
    %7 = tpu.matmul %5, %6, %cst {dimension_numbers = #tpu.dot_dimension_numbers<[1], [0], [0], [1], [0, 0, 1, 1], [], []>} : vector<32x128xbf16>, vector<128x256xbf16>, vector<32x256xf32> -> vector<32x256xf32>
    %8 = arith.addf %3, %7 : vector<32x256xf32>
    %c0_6 = arith.constant 0 : index
    %c0_7 = arith.constant 0 : index
    %9 = vector.load %arg7[%c0_6, %c0_7] : memref<32x256xf32, #tpu.memory_space<vmem>>, vector<32x256xf32>
    tpu.vector_store %arg7[%c0_6, %c0_7], %8 {strides = array<i32>} : memref<32x256xf32, #tpu.memory_space<vmem>>, vector<32x256xf32>,
    %c0_i32_8 = arith.constant 0 : i32
    %10 = arith.cmpi eq, %arg2, %c0_i32_8 : i32
    %11 = arith.extui %10 : i1 to i32
    %c0_i32_9 = arith.constant 0 : i32
    %12 = arith.cmpi ne, %11, %c0_i32_9 : i32
    scf.if %12 {
      %c0_10 = arith.constant 0 : index
      %c0_11 = arith.constant 0 : index
      %13 = vector.load %arg7[%c0_10, %c0_11] : memref<32x256xf32, #tpu.memory_space<vmem>>, vector<32x256xf32>
      %c0_12 = arith.constant 0 : index
      %c0_13 = arith.constant 0 : index
      %14 = vector.load %arg5[%c0_12, %c0_13] : memref<1x256xf32, #tpu.memory_space<vmem>>, vector<1x256xf32>
      %15 = vector.broadcast %14 : vector<1x256xf32> to vector<32x256xf32>
      %16 = arith.addf %13, %15 : vector<32x256xf32>
      %17 = arith.truncf %16 : vector<32x256xf32> to vector<32x256xbf16>
      %c0_14 = arith.constant 0 : index
      %c0_15 = arith.constant 0 : index
      %18 = vector.load %arg6[%c0_14, %c0_15] : memref<32x256xbf16, #tpu.memory_space<vmem>>, vector<32x256xbf16>
      tpu.vector_store %arg6[%c0_14, %c0_15], %17 {strides = array<i32>} : memref<32x256xbf16, #tpu.memory_space<vmem>>, vector<32x256xbf16>,
    } else {
    }
    return
  }
  func.func @transform_0(%arg0: i32, %arg1: i32, %arg2: i32) -> (i32, i32) {
    %c0_i32 = arith.constant 0 : i32
    return %arg0, %arg2 : i32, i32
  }
  func.func @transform_1(%arg0: i32, %arg1: i32, %arg2: i32) -> (i32, i32) {
    %c0_i32 = arith.constant 0 : i32
    return %arg2, %arg1 : i32, i32
  }
  func.func @transform_2(%arg0: i32, %arg1: i32, %arg2: i32) -> (i32, i32) {
    %c0_i32 = arith.constant 0 : i32
    %c0_i32_0 = arith.constant 0 : i32
    return %c0_i32, %arg1 : i32, i32
  }
  func.func @transform_3(%arg0: i32, %arg1: i32, %arg2: i32) -> (i32, i32) {
    %c0_i32 = arith.constant 0 : i32
    return %arg0, %arg1 : i32, i32
  }
}

module attributes {stable_mosaic.version = 11 : i64} {
  func.func @_linear_kernel(%arg0: i32, %arg1: i32, %arg2: i32, %arg3: memref<32x128xf32, #tpu.memory_space<vmem>>, %arg4: memref<128x128xbf16, #tpu.memory_space<vmem>>, %arg5: memref<1x128xf32, #tpu.memory_space<vmem>>, %arg6: memref<32x128xf32, #tpu.memory_space<vmem>>, %arg7: memref<32x128xf32, #tpu.memory_space<vmem>>) attributes {dimension_semantics = [#tpu.dimension_semantics<parallel>, #tpu.dimension_semantics<parallel>, #tpu.dimension_semantics<arbitrary>], iteration_bounds = array<i64: 1, 1, 1>, scalar_prefetch = 0 : i64, scratch_operands = 1 : i64, tpu.core_type = #tpu.core_type<tc>, window_params = [{transform_indices = @transform_0, window_bounds = array<i64: 32, 128>}, {transform_indices = @transform_1, window_bounds = array<i64: 128, 128>}, {transform_indices = @transform_2, window_bounds = array<i64: 1, 128>}, {transform_indices = @transform_3, window_bounds = array<i64: 32, 128>}]} {
    %c0_i32 = arith.constant 0 : i32
    %0 = arith.cmpi eq, %arg2, %c0_i32 : i32
    %1 = arith.extui %0 : i1 to i32
    %c0_i32_0 = arith.constant 0 : i32
    %2 = arith.cmpi ne, %1, %c0_i32_0 : i32
    scf.if %2 {
      %cst_10 = arith.constant 0.000000e+00 : f32
      %13 = vector.broadcast %cst_10 : f32 to vector<32x128xf32>
      %c0_11 = arith.constant 0 : index
      %c0_12 = arith.constant 0 : index
      %14 = vector.load %arg7[%c0_11, %c0_12] : memref<32x128xf32, #tpu.memory_space<vmem>>, vector<32x128xf32>
      tpu.vector_store %arg7[%c0_11, %c0_12], %13 {strides = array<i32>} : memref<32x128xf32, #tpu.memory_space<vmem>>, vector<32x128xf32>,
    } else {
    }
    %c0 = arith.constant 0 : index
    %c0_1 = arith.constant 0 : index
    %3 = vector.load %arg7[%c0, %c0_1] : memref<32x128xf32, #tpu.memory_space<vmem>>, vector<32x128xf32>
    %c0_2 = arith.constant 0 : index
    %c0_3 = arith.constant 0 : index
    %4 = vector.load %arg3[%c0_2, %c0_3] : memref<32x128xf32, #tpu.memory_space<vmem>>, vector<32x128xf32>
    %5 = arith.truncf %4 : vector<32x128xf32> to vector<32x128xbf16>
    %c0_4 = arith.constant 0 : index
    %c0_5 = arith.constant 0 : index
    %6 = vector.load %arg4[%c0_4, %c0_5] : memref<128x128xbf16, #tpu.memory_space<vmem>>, vector<128x128xbf16>
    %cst = arith.constant dense<0.000000e+00> : vector<32x128xf32>
    %7 = tpu.matmul %5, %6, %cst {dimension_numbers = #tpu.dot_dimension_numbers<[1], [0], [0], [1], [0, 0, 1, 1], [], []>} : vector<32x128xbf16>, vector<128x128xbf16>, vector<32x128xf32> -> vector<32x128xf32>
    %8 = arith.addf %3, %7 : vector<32x128xf32>
    %c0_6 = arith.constant 0 : index
    %c0_7 = arith.constant 0 : index
    %9 = vector.load %arg7[%c0_6, %c0_7] : memref<32x128xf32, #tpu.memory_space<vmem>>, vector<32x128xf32>
    tpu.vector_store %arg7[%c0_6, %c0_7], %8 {strides = array<i32>} : memref<32x128xf32, #tpu.memory_space<vmem>>, vector<32x128xf32>,
    %c0_i32_8 = arith.constant 0 : i32
    %10 = arith.cmpi eq, %arg2, %c0_i32_8 : i32
    %11 = arith.extui %10 : i1 to i32
    %c0_i32_9 = arith.constant 0 : i32
    %12 = arith.cmpi ne, %11, %c0_i32_9 : i32
    scf.if %12 {
      %c0_10 = arith.constant 0 : index
      %c0_11 = arith.constant 0 : index
      %13 = vector.load %arg7[%c0_10, %c0_11] : memref<32x128xf32, #tpu.memory_space<vmem>>, vector<32x128xf32>
      %c0_12 = arith.constant 0 : index
      %c0_13 = arith.constant 0 : index
      %14 = vector.load %arg5[%c0_12, %c0_13] : memref<1x128xf32, #tpu.memory_space<vmem>>, vector<1x128xf32>
      %15 = vector.broadcast %14 : vector<1x128xf32> to vector<32x128xf32>
      %16 = arith.addf %13, %15 : vector<32x128xf32>
      %c0_14 = arith.constant 0 : index
      %c0_15 = arith.constant 0 : index
      %17 = vector.load %arg6[%c0_14, %c0_15] : memref<32x128xf32, #tpu.memory_space<vmem>>, vector<32x128xf32>
      tpu.vector_store %arg6[%c0_14, %c0_15], %16 {strides = array<i32>} : memref<32x128xf32, #tpu.memory_space<vmem>>, vector<32x128xf32>,
    } else {
    }
    return
  }
  func.func @transform_0(%arg0: i32, %arg1: i32, %arg2: i32) -> (i32, i32) {
    %c0_i32 = arith.constant 0 : i32
    return %arg0, %arg2 : i32, i32
  }
  func.func @transform_1(%arg0: i32, %arg1: i32, %arg2: i32) -> (i32, i32) {
    %c0_i32 = arith.constant 0 : i32
    return %arg2, %arg1 : i32, i32
  }
  func.func @transform_2(%arg0: i32, %arg1: i32, %arg2: i32) -> (i32, i32) {
    %c0_i32 = arith.constant 0 : i32
    %c0_i32_0 = arith.constant 0 : i32
    return %c0_i32, %arg1 : i32, i32
  }
  func.func @transform_3(%arg0: i32, %arg1: i32, %arg2: i32) -> (i32, i32) {
    %c0_i32 = arith.constant 0 : i32
    return %arg0, %arg1 : i32, i32
  }
}

module attributes {stable_mosaic.version = 11 : i64} {
  func.func @_flash_attn_kernel(%arg0: i32, %arg1: i32, %arg2: i32, %arg3: memref<1x1x16xf32, #tpu.memory_space<vmem>>, %arg4: memref<1x16x128xbf16, #tpu.memory_space<vmem>>, %arg5: memref<1x16x128xbf16, #tpu.memory_space<vmem>>, %arg6: memref<1x16x128xbf16, #tpu.memory_space<vmem>>, %arg7: memref<1x16x128xbf16, #tpu.memory_space<vmem>>, %arg8: memref<4x16x1xf32, #tpu.memory_space<vmem>>, %arg9: memref<4x16x1xf32, #tpu.memory_space<vmem>>, %arg10: memref<4x16x32xf32, #tpu.memory_space<vmem>>) attributes {dimension_semantics = [#tpu.dimension_semantics<parallel>, #tpu.dimension_semantics<parallel>, #tpu.dimension_semantics<arbitrary>], iteration_bounds = array<i64: 2, 1, 1>, scalar_prefetch = 0 : i64, scratch_operands = 3 : i64, tpu.core_type = #tpu.core_type<tc>, window_params = [{transform_indices = @transform_0, window_bounds = array<i64: 1, 1, 16>}, {transform_indices = @transform_1, window_bounds = array<i64: 1, 16, 128>}, {transform_indices = @transform_2, window_bounds = array<i64: 1, 16, 128>}, {transform_indices = @transform_3, window_bounds = array<i64: 1, 16, 128>}, {transform_indices = @transform_4, window_bounds = array<i64: 1, 16, 128>}]} {
    %c0_i32 = arith.constant 0 : i32
    %0 = arith.cmpi eq, %arg2, %c0_i32 : i32
    %1 = arith.extui %0 : i1 to i32
    %c0_i32_0 = arith.constant 0 : i32
    %2 = arith.cmpi ne, %1, %c0_i32_0 : i32
    scf.if %2 {
      %cst_98 = arith.constant 0xFF800000 : f32
      %166 = vector.broadcast %cst_98 : f32 to vector<4x16x1xf32>
      %c0_99 = arith.constant 0 : index
      %c0_100 = arith.constant 0 : index
      %c0_101 = arith.constant 0 : index
      %167 = vector.load %arg8[%c0_99, %c0_100, %c0_101] : memref<4x16x1xf32, #tpu.memory_space<vmem>>, vector<4x16x1xf32>
      tpu.vector_store %arg8[%c0_99, %c0_100, %c0_101], %166 {strides = array<i32>} : memref<4x16x1xf32, #tpu.memory_space<vmem>>, vector<4x16x1xf32>,
      %cst_102 = arith.constant 0.000000e+00 : f32
      %168 = vector.broadcast %cst_102 : f32 to vector<4x16x1xf32>
      %c0_103 = arith.constant 0 : index
      %c0_104 = arith.constant 0 : index
      %c0_105 = arith.constant 0 : index
      %169 = vector.load %arg9[%c0_103, %c0_104, %c0_105] : memref<4x16x1xf32, #tpu.memory_space<vmem>>, vector<4x16x1xf32>
      tpu.vector_store %arg9[%c0_103, %c0_104, %c0_105], %168 {strides = array<i32>} : memref<4x16x1xf32, #tpu.memory_space<vmem>>, vector<4x16x1xf32>,
      %cst_106 = arith.constant 0.000000e+00 : f32
      %170 = vector.broadcast %cst_106 : f32 to vector<4x16x32xf32>
      %c0_107 = arith.constant 0 : index
      %c0_108 = arith.constant 0 : index
      %c0_109 = arith.constant 0 : index
      %171 = vector.load %arg10[%c0_107, %c0_108, %c0_109] : memref<4x16x32xf32, #tpu.memory_space<vmem>>, vector<4x16x32xf32>
      tpu.vector_store %arg10[%c0_107, %c0_108, %c0_109], %170 {strides = array<i32>} : memref<4x16x32xf32, #tpu.memory_space<vmem>>, vector<4x16x32xf32>,
    } else {
    }
    %c0 = arith.constant 0 : index
    %c0_1 = arith.constant 0 : index
    %c0_2 = arith.constant 0 : index
    %3 = vector.load %arg4[%c0, %c0_1, %c0_2] : memref<1x16x128xbf16, #tpu.memory_space<vmem>>, vector<1x16x128xbf16>
    %4 = vector.shape_cast %3 : vector<1x16x128xbf16> to vector<16x128xbf16>
    %c0_3 = arith.constant 0 : index
    %c0_4 = arith.constant 0 : index
    %c0_5 = arith.constant 0 : index
    %5 = vector.load %arg5[%c0_3, %c0_4, %c0_5] : memref<1x16x128xbf16, #tpu.memory_space<vmem>>, vector<1x16x128xbf16>
    %6 = vector.shape_cast %5 : vector<1x16x128xbf16> to vector<16x128xbf16>
    %c0_6 = arith.constant 0 : index
    %c0_7 = arith.constant 0 : index
    %c0_8 = arith.constant 0 : index
    %7 = vector.load %arg6[%c0_6, %c0_7, %c0_8] : memref<1x16x128xbf16, #tpu.memory_space<vmem>>, vector<1x16x128xbf16>
    %8 = vector.shape_cast %7 : vector<1x16x128xbf16> to vector<16x128xbf16>
    %c0_9 = arith.constant 0 : index
    %c0_10 = arith.constant 0 : index
    %c0_11 = arith.constant 0 : index
    %9 = vector.load %arg3[%c0_9, %c0_10, %c0_11] : memref<1x1x16xf32, #tpu.memory_space<vmem>>, vector<1x1x16xf32>
    %10 = vector.shape_cast %9 : vector<1x1x16xf32> to vector<1x16xf32>
    %11 = vector.extract_strided_slice %4 {offsets = [0, 0], sizes = [16, 32], strides = [1, 1]} : vector<16x128xbf16> to vector<16x32xbf16>
    %12 = vector.extract_strided_slice %6 {offsets = [0, 0], sizes = [16, 32], strides = [1, 1]} : vector<16x128xbf16> to vector<16x32xbf16>
    %cst = arith.constant dense<0.000000e+00> : vector<16x16xf32>
    %13 = tpu.matmul %11, %12, %cst {dimension_numbers = #tpu.dot_dimension_numbers<[1], [1], [0], [0], [0, 0, 1, 0], [], []>} : vector<16x32xbf16>, vector<16x32xbf16>, vector<16x16xf32> -> vector<16x16xf32>
    %14 = vector.broadcast %10 : vector<1x16xf32> to vector<16x16xf32>
    %15 = arith.addf %13, %14 : vector<16x16xf32>
    %c0_12 = arith.constant 0 : index
    %c0_13 = arith.constant 0 : index
    %c0_14 = arith.constant 0 : index
    %16 = vector.load %arg8[%c0_12, %c0_13, %c0_14] : memref<4x16x1xf32, #tpu.memory_space<vmem>>, vector<1x16x1xf32>
    %17 = vector.shape_cast %16 : vector<1x16x1xf32> to vector<16x1xf32>
    %cst_15 = arith.constant dense<0xFF800000> : vector<16xf32>
    %18 = vector.multi_reduction <maximumf>, %15, %cst_15 [1] : vector<16x16xf32> to vector<16xf32>
    %19 = vector.shape_cast %18 : vector<16xf32> to vector<16x1xf32>
    %20 = arith.maximumf %17, %19 : vector<16x1xf32>
    %21 = arith.subf %17, %20 : vector<16x1xf32>
    %22 = math.exp %21 : vector<16x1xf32>
    %23 = vector.broadcast %20 : vector<16x1xf32> to vector<16x16xf32>
    %24 = arith.subf %15, %23 : vector<16x16xf32>
    %25 = math.exp %24 : vector<16x16xf32>
    %c0_16 = arith.constant 0 : index
    %c0_17 = arith.constant 0 : index
    %c0_18 = arith.constant 0 : index
    %26 = vector.load %arg9[%c0_16, %c0_17, %c0_18] : memref<4x16x1xf32, #tpu.memory_space<vmem>>, vector<1x16x1xf32>
    %27 = vector.shape_cast %26 : vector<1x16x1xf32> to vector<16x1xf32>
    %28 = arith.mulf %22, %27 : vector<16x1xf32>
    %cst_19 = arith.constant dense<0.000000e+00> : vector<16xf32>
    %29 = vector.multi_reduction <add>, %25, %cst_19 [1] : vector<16x16xf32> to vector<16xf32>
    %30 = vector.shape_cast %29 : vector<16xf32> to vector<16x1xf32>
    %31 = arith.addf %28, %30 : vector<16x1xf32>
    %c0_20 = arith.constant 0 : index
    %c0_21 = arith.constant 0 : index
    %c0_22 = arith.constant 0 : index
    %32 = vector.load %arg9[%c0_20, %c0_21, %c0_22] : memref<4x16x1xf32, #tpu.memory_space<vmem>>, vector<1x16x1xf32>
    %33 = vector.shape_cast %32 : vector<1x16x1xf32> to vector<16x1xf32>
    %34 = vector.shape_cast %31 : vector<16x1xf32> to vector<1x16x1xf32>
    tpu.vector_store %arg9[%c0_20, %c0_21, %c0_22], %34 {strides = array<i32>} : memref<4x16x1xf32, #tpu.memory_space<vmem>>, vector<1x16x1xf32>,
    %c0_23 = arith.constant 0 : index
    %c0_24 = arith.constant 0 : index
    %c0_25 = arith.constant 0 : index
    %35 = vector.load %arg10[%c0_23, %c0_24, %c0_25] : memref<4x16x32xf32, #tpu.memory_space<vmem>>, vector<1x16x32xf32>
    %36 = vector.shape_cast %35 : vector<1x16x32xf32> to vector<16x32xf32>
    %37 = vector.broadcast %22 : vector<16x1xf32> to vector<16x32xf32>
    %38 = arith.mulf %37, %36 : vector<16x32xf32>
    %39 = arith.truncf %25 : vector<16x16xf32> to vector<16x16xbf16>
    %40 = vector.extract_strided_slice %8 {offsets = [0, 0], sizes = [16, 32], strides = [1, 1]} : vector<16x128xbf16> to vector<16x32xbf16>
    %cst_26 = arith.constant dense<0.000000e+00> : vector<16x32xf32>
    %41 = tpu.matmul %39, %40, %cst_26 {dimension_numbers = #tpu.dot_dimension_numbers<[1], [0], [0], [1], [0, 0, 1, 1], [], []>} : vector<16x16xbf16>, vector<16x32xbf16>, vector<16x32xf32> -> vector<16x32xf32>
    %42 = arith.addf %38, %41 : vector<16x32xf32>
    %c0_27 = arith.constant 0 : index
    %c0_28 = arith.constant 0 : index
    %c0_29 = arith.constant 0 : index
    %43 = vector.load %arg10[%c0_27, %c0_28, %c0_29] : memref<4x16x32xf32, #tpu.memory_space<vmem>>, vector<1x16x32xf32>
    %44 = vector.shape_cast %43 : vector<1x16x32xf32> to vector<16x32xf32>
    %45 = vector.shape_cast %42 : vector<16x32xf32> to vector<1x16x32xf32>
    tpu.vector_store %arg10[%c0_27, %c0_28, %c0_29], %45 {strides = array<i32>} : memref<4x16x32xf32, #tpu.memory_space<vmem>>, vector<1x16x32xf32>,
    %c0_30 = arith.constant 0 : index
    %c0_31 = arith.constant 0 : index
    %c0_32 = arith.constant 0 : index
    %46 = vector.load %arg8[%c0_30, %c0_31, %c0_32] : memref<4x16x1xf32, #tpu.memory_space<vmem>>, vector<1x16x1xf32>
    %47 = vector.shape_cast %46 : vector<1x16x1xf32> to vector<16x1xf32>
    %48 = vector.shape_cast %20 : vector<16x1xf32> to vector<1x16x1xf32>
    tpu.vector_store %arg8[%c0_30, %c0_31, %c0_32], %48 {strides = array<i32>} : memref<4x16x1xf32, #tpu.memory_space<vmem>>, vector<1x16x1xf32>,
    %49 = vector.extract_strided_slice %4 {offsets = [0, 32], sizes = [16, 32], strides = [1, 1]} : vector<16x128xbf16> to vector<16x32xbf16>
    %50 = vector.extract_strided_slice %6 {offsets = [0, 32], sizes = [16, 32], strides = [1, 1]} : vector<16x128xbf16> to vector<16x32xbf16>
    %cst_33 = arith.constant dense<0.000000e+00> : vector<16x16xf32>
    %51 = tpu.matmul %49, %50, %cst_33 {dimension_numbers = #tpu.dot_dimension_numbers<[1], [1], [0], [0], [0, 0, 1, 0], [], []>} : vector<16x32xbf16>, vector<16x32xbf16>, vector<16x16xf32> -> vector<16x16xf32>
    %52 = vector.broadcast %10 : vector<1x16xf32> to vector<16x16xf32>
    %53 = arith.addf %51, %52 : vector<16x16xf32>
    %c1 = arith.constant 1 : index
    %c0_34 = arith.constant 0 : index
    %c0_35 = arith.constant 0 : index
    %54 = vector.load %arg8[%c1, %c0_34, %c0_35] : memref<4x16x1xf32, #tpu.memory_space<vmem>>, vector<1x16x1xf32>
    %55 = vector.shape_cast %54 : vector<1x16x1xf32> to vector<16x1xf32>
    %cst_36 = arith.constant dense<0xFF800000> : vector<16xf32>
    %56 = vector.multi_reduction <maximumf>, %53, %cst_36 [1] : vector<16x16xf32> to vector<16xf32>
    %57 = vector.shape_cast %56 : vector<16xf32> to vector<16x1xf32>
    %58 = arith.maximumf %55, %57 : vector<16x1xf32>
    %59 = arith.subf %55, %58 : vector<16x1xf32>
    %60 = math.exp %59 : vector<16x1xf32>
    %61 = vector.broadcast %58 : vector<16x1xf32> to vector<16x16xf32>
    %62 = arith.subf %53, %61 : vector<16x16xf32>
    %63 = math.exp %62 : vector<16x16xf32>
    %c1_37 = arith.constant 1 : index
    %c0_38 = arith.constant 0 : index
    %c0_39 = arith.constant 0 : index
    %64 = vector.load %arg9[%c1_37, %c0_38, %c0_39] : memref<4x16x1xf32, #tpu.memory_space<vmem>>, vector<1x16x1xf32>
    %65 = vector.shape_cast %64 : vector<1x16x1xf32> to vector<16x1xf32>
    %66 = arith.mulf %60, %65 : vector<16x1xf32>
    %cst_40 = arith.constant dense<0.000000e+00> : vector<16xf32>
    %67 = vector.multi_reduction <add>, %63, %cst_40 [1] : vector<16x16xf32> to vector<16xf32>
    %68 = vector.shape_cast %67 : vector<16xf32> to vector<16x1xf32>
    %69 = arith.addf %66, %68 : vector<16x1xf32>
    %c1_41 = arith.constant 1 : index
    %c0_42 = arith.constant 0 : index
    %c0_43 = arith.constant 0 : index
    %70 = vector.load %arg9[%c1_41, %c0_42, %c0_43] : memref<4x16x1xf32, #tpu.memory_space<vmem>>, vector<1x16x1xf32>
    %71 = vector.shape_cast %70 : vector<1x16x1xf32> to vector<16x1xf32>
    %72 = vector.shape_cast %69 : vector<16x1xf32> to vector<1x16x1xf32>
    tpu.vector_store %arg9[%c1_41, %c0_42, %c0_43], %72 {strides = array<i32>} : memref<4x16x1xf32, #tpu.memory_space<vmem>>, vector<1x16x1xf32>,
    %c1_44 = arith.constant 1 : index
    %c0_45 = arith.constant 0 : index
    %c0_46 = arith.constant 0 : index
    %73 = vector.load %arg10[%c1_44, %c0_45, %c0_46] : memref<4x16x32xf32, #tpu.memory_space<vmem>>, vector<1x16x32xf32>
    %74 = vector.shape_cast %73 : vector<1x16x32xf32> to vector<16x32xf32>
    %75 = vector.broadcast %60 : vector<16x1xf32> to vector<16x32xf32>
    %76 = arith.mulf %75, %74 : vector<16x32xf32>
    %77 = arith.truncf %63 : vector<16x16xf32> to vector<16x16xbf16>
    %78 = vector.extract_strided_slice %8 {offsets = [0, 32], sizes = [16, 32], strides = [1, 1]} : vector<16x128xbf16> to vector<16x32xbf16>
    %cst_47 = arith.constant dense<0.000000e+00> : vector<16x32xf32>
    %79 = tpu.matmul %77, %78, %cst_47 {dimension_numbers = #tpu.dot_dimension_numbers<[1], [0], [0], [1], [0, 0, 1, 1], [], []>} : vector<16x16xbf16>, vector<16x32xbf16>, vector<16x32xf32> -> vector<16x32xf32>
    %80 = arith.addf %76, %79 : vector<16x32xf32>
    %c1_48 = arith.constant 1 : index
    %c0_49 = arith.constant 0 : index
    %c0_50 = arith.constant 0 : index
    %81 = vector.load %arg10[%c1_48, %c0_49, %c0_50] : memref<4x16x32xf32, #tpu.memory_space<vmem>>, vector<1x16x32xf32>
    %82 = vector.shape_cast %81 : vector<1x16x32xf32> to vector<16x32xf32>
    %83 = vector.shape_cast %80 : vector<16x32xf32> to vector<1x16x32xf32>
    tpu.vector_store %arg10[%c1_48, %c0_49, %c0_50], %83 {strides = array<i32>} : memref<4x16x32xf32, #tpu.memory_space<vmem>>, vector<1x16x32xf32>,
    %c1_51 = arith.constant 1 : index
    %c0_52 = arith.constant 0 : index
    %c0_53 = arith.constant 0 : index
    %84 = vector.load %arg8[%c1_51, %c0_52, %c0_53] : memref<4x16x1xf32, #tpu.memory_space<vmem>>, vector<1x16x1xf32>
    %85 = vector.shape_cast %84 : vector<1x16x1xf32> to vector<16x1xf32>
    %86 = vector.shape_cast %58 : vector<16x1xf32> to vector<1x16x1xf32>
    tpu.vector_store %arg8[%c1_51, %c0_52, %c0_53], %86 {strides = array<i32>} : memref<4x16x1xf32, #tpu.memory_space<vmem>>, vector<1x16x1xf32>,
    %87 = vector.extract_strided_slice %4 {offsets = [0, 64], sizes = [16, 32], strides = [1, 1]} : vector<16x128xbf16> to vector<16x32xbf16>
    %88 = vector.extract_strided_slice %6 {offsets = [0, 64], sizes = [16, 32], strides = [1, 1]} : vector<16x128xbf16> to vector<16x32xbf16>
    %cst_54 = arith.constant dense<0.000000e+00> : vector<16x16xf32>
    %89 = tpu.matmul %87, %88, %cst_54 {dimension_numbers = #tpu.dot_dimension_numbers<[1], [1], [0], [0], [0, 0, 1, 0], [], []>} : vector<16x32xbf16>, vector<16x32xbf16>, vector<16x16xf32> -> vector<16x16xf32>
    %90 = vector.broadcast %10 : vector<1x16xf32> to vector<16x16xf32>
    %91 = arith.addf %89, %90 : vector<16x16xf32>
    %c2 = arith.constant 2 : index
    %c0_55 = arith.constant 0 : index
    %c0_56 = arith.constant 0 : index
    %92 = vector.load %arg8[%c2, %c0_55, %c0_56] : memref<4x16x1xf32, #tpu.memory_space<vmem>>, vector<1x16x1xf32>
    %93 = vector.shape_cast %92 : vector<1x16x1xf32> to vector<16x1xf32>
    %cst_57 = arith.constant dense<0xFF800000> : vector<16xf32>
    %94 = vector.multi_reduction <maximumf>, %91, %cst_57 [1] : vector<16x16xf32> to vector<16xf32>
    %95 = vector.shape_cast %94 : vector<16xf32> to vector<16x1xf32>
    %96 = arith.maximumf %93, %95 : vector<16x1xf32>
    %97 = arith.subf %93, %96 : vector<16x1xf32>
    %98 = math.exp %97 : vector<16x1xf32>
    %99 = vector.broadcast %96 : vector<16x1xf32> to vector<16x16xf32>
    %100 = arith.subf %91, %99 : vector<16x16xf32>
    %101 = math.exp %100 : vector<16x16xf32>
    %c2_58 = arith.constant 2 : index
    %c0_59 = arith.constant 0 : index
    %c0_60 = arith.constant 0 : index
    %102 = vector.load %arg9[%c2_58, %c0_59, %c0_60] : memref<4x16x1xf32, #tpu.memory_space<vmem>>, vector<1x16x1xf32>
    %103 = vector.shape_cast %102 : vector<1x16x1xf32> to vector<16x1xf32>
    %104 = arith.mulf %98, %103 : vector<16x1xf32>
    %cst_61 = arith.constant dense<0.000000e+00> : vector<16xf32>
    %105 = vector.multi_reduction <add>, %101, %cst_61 [1] : vector<16x16xf32> to vector<16xf32>
    %106 = vector.shape_cast %105 : vector<16xf32> to vector<16x1xf32>
    %107 = arith.addf %104, %106 : vector<16x1xf32>
    %c2_62 = arith.constant 2 : index
    %c0_63 = arith.constant 0 : index
    %c0_64 = arith.constant 0 : index
    %108 = vector.load %arg9[%c2_62, %c0_63, %c0_64] : memref<4x16x1xf32, #tpu.memory_space<vmem>>, vector<1x16x1xf32>
    %109 = vector.shape_cast %108 : vector<1x16x1xf32> to vector<16x1xf32>
    %110 = vector.shape_cast %107 : vector<16x1xf32> to vector<1x16x1xf32>
    tpu.vector_store %arg9[%c2_62, %c0_63, %c0_64], %110 {strides = array<i32>} : memref<4x16x1xf32, #tpu.memory_space<vmem>>, vector<1x16x1xf32>,
    %c2_65 = arith.constant 2 : index
    %c0_66 = arith.constant 0 : index
    %c0_67 = arith.constant 0 : index
    %111 = vector.load %arg10[%c2_65, %c0_66, %c0_67] : memref<4x16x32xf32, #tpu.memory_space<vmem>>, vector<1x16x32xf32>
    %112 = vector.shape_cast %111 : vector<1x16x32xf32> to vector<16x32xf32>
    %113 = vector.broadcast %98 : vector<16x1xf32> to vector<16x32xf32>
    %114 = arith.mulf %113, %112 : vector<16x32xf32>
    %115 = arith.truncf %101 : vector<16x16xf32> to vector<16x16xbf16>
    %116 = vector.extract_strided_slice %8 {offsets = [0, 64], sizes = [16, 32], strides = [1, 1]} : vector<16x128xbf16> to vector<16x32xbf16>
    %cst_68 = arith.constant dense<0.000000e+00> : vector<16x32xf32>
    %117 = tpu.matmul %115, %116, %cst_68 {dimension_numbers = #tpu.dot_dimension_numbers<[1], [0], [0], [1], [0, 0, 1, 1], [], []>} : vector<16x16xbf16>, vector<16x32xbf16>, vector<16x32xf32> -> vector<16x32xf32>
    %118 = arith.addf %114, %117 : vector<16x32xf32>
    %c2_69 = arith.constant 2 : index
    %c0_70 = arith.constant 0 : index
    %c0_71 = arith.constant 0 : index
    %119 = vector.load %arg10[%c2_69, %c0_70, %c0_71] : memref<4x16x32xf32, #tpu.memory_space<vmem>>, vector<1x16x32xf32>
    %120 = vector.shape_cast %119 : vector<1x16x32xf32> to vector<16x32xf32>
    %121 = vector.shape_cast %118 : vector<16x32xf32> to vector<1x16x32xf32>
    tpu.vector_store %arg10[%c2_69, %c0_70, %c0_71], %121 {strides = array<i32>} : memref<4x16x32xf32, #tpu.memory_space<vmem>>, vector<1x16x32xf32>,
    %c2_72 = arith.constant 2 : index
    %c0_73 = arith.constant 0 : index
    %c0_74 = arith.constant 0 : index
    %122 = vector.load %arg8[%c2_72, %c0_73, %c0_74] : memref<4x16x1xf32, #tpu.memory_space<vmem>>, vector<1x16x1xf32>
    %123 = vector.shape_cast %122 : vector<1x16x1xf32> to vector<16x1xf32>
    %124 = vector.shape_cast %96 : vector<16x1xf32> to vector<1x16x1xf32>
    tpu.vector_store %arg8[%c2_72, %c0_73, %c0_74], %124 {strides = array<i32>} : memref<4x16x1xf32, #tpu.memory_space<vmem>>, vector<1x16x1xf32>,
    %125 = vector.extract_strided_slice %4 {offsets = [0, 96], sizes = [16, 32], strides = [1, 1]} : vector<16x128xbf16> to vector<16x32xbf16>
    %126 = vector.extract_strided_slice %6 {offsets = [0, 96], sizes = [16, 32], strides = [1, 1]} : vector<16x128xbf16> to vector<16x32xbf16>
    %cst_75 = arith.constant dense<0.000000e+00> : vector<16x16xf32>
    %127 = tpu.matmul %125, %126, %cst_75 {dimension_numbers = #tpu.dot_dimension_numbers<[1], [1], [0], [0], [0, 0, 1, 0], [], []>} : vector<16x32xbf16>, vector<16x32xbf16>, vector<16x16xf32> -> vector<16x16xf32>
    %128 = vector.broadcast %10 : vector<1x16xf32> to vector<16x16xf32>
    %129 = arith.addf %127, %128 : vector<16x16xf32>
    %c3 = arith.constant 3 : index
    %c0_76 = arith.constant 0 : index
    %c0_77 = arith.constant 0 : index
    %130 = vector.load %arg8[%c3, %c0_76, %c0_77] : memref<4x16x1xf32, #tpu.memory_space<vmem>>, vector<1x16x1xf32>
    %131 = vector.shape_cast %130 : vector<1x16x1xf32> to vector<16x1xf32>
    %cst_78 = arith.constant dense<0xFF800000> : vector<16xf32>
    %132 = vector.multi_reduction <maximumf>, %129, %cst_78 [1] : vector<16x16xf32> to vector<16xf32>
    %133 = vector.shape_cast %132 : vector<16xf32> to vector<16x1xf32>
    %134 = arith.maximumf %131, %133 : vector<16x1xf32>
    %135 = arith.subf %131, %134 : vector<16x1xf32>
    %136 = math.exp %135 : vector<16x1xf32>
    %137 = vector.broadcast %134 : vector<16x1xf32> to vector<16x16xf32>
    %138 = arith.subf %129, %137 : vector<16x16xf32>
    %139 = math.exp %138 : vector<16x16xf32>
    %c3_79 = arith.constant 3 : index
    %c0_80 = arith.constant 0 : index
    %c0_81 = arith.constant 0 : index
    %140 = vector.load %arg9[%c3_79, %c0_80, %c0_81] : memref<4x16x1xf32, #tpu.memory_space<vmem>>, vector<1x16x1xf32>
    %141 = vector.shape_cast %140 : vector<1x16x1xf32> to vector<16x1xf32>
    %142 = arith.mulf %136, %141 : vector<16x1xf32>
    %cst_82 = arith.constant dense<0.000000e+00> : vector<16xf32>
    %143 = vector.multi_reduction <add>, %139, %cst_82 [1] : vector<16x16xf32> to vector<16xf32>
    %144 = vector.shape_cast %143 : vector<16xf32> to vector<16x1xf32>
    %145 = arith.addf %142, %144 : vector<16x1xf32>
    %c3_83 = arith.constant 3 : index
    %c0_84 = arith.constant 0 : index
    %c0_85 = arith.constant 0 : index
    %146 = vector.load %arg9[%c3_83, %c0_84, %c0_85] : memref<4x16x1xf32, #tpu.memory_space<vmem>>, vector<1x16x1xf32>
    %147 = vector.shape_cast %146 : vector<1x16x1xf32> to vector<16x1xf32>
    %148 = vector.shape_cast %145 : vector<16x1xf32> to vector<1x16x1xf32>
    tpu.vector_store %arg9[%c3_83, %c0_84, %c0_85], %148 {strides = array<i32>} : memref<4x16x1xf32, #tpu.memory_space<vmem>>, vector<1x16x1xf32>,
    %c3_86 = arith.constant 3 : index
    %c0_87 = arith.constant 0 : index
    %c0_88 = arith.constant 0 : index
    %149 = vector.load %arg10[%c3_86, %c0_87, %c0_88] : memref<4x16x32xf32, #tpu.memory_space<vmem>>, vector<1x16x32xf32>
    %150 = vector.shape_cast %149 : vector<1x16x32xf32> to vector<16x32xf32>
    %151 = vector.broadcast %136 : vector<16x1xf32> to vector<16x32xf32>
    %152 = arith.mulf %151, %150 : vector<16x32xf32>
    %153 = arith.truncf %139 : vector<16x16xf32> to vector<16x16xbf16>
    %154 = vector.extract_strided_slice %8 {offsets = [0, 96], sizes = [16, 32], strides = [1, 1]} : vector<16x128xbf16> to vector<16x32xbf16>
    %cst_89 = arith.constant dense<0.000000e+00> : vector<16x32xf32>
    %155 = tpu.matmul %153, %154, %cst_89 {dimension_numbers = #tpu.dot_dimension_numbers<[1], [0], [0], [1], [0, 0, 1, 1], [], []>} : vector<16x16xbf16>, vector<16x32xbf16>, vector<16x32xf32> -> vector<16x32xf32>
    %156 = arith.addf %152, %155 : vector<16x32xf32>
    %c3_90 = arith.constant 3 : index
    %c0_91 = arith.constant 0 : index
    %c0_92 = arith.constant 0 : index
    %157 = vector.load %arg10[%c3_90, %c0_91, %c0_92] : memref<4x16x32xf32, #tpu.memory_space<vmem>>, vector<1x16x32xf32>
    %158 = vector.shape_cast %157 : vector<1x16x32xf32> to vector<16x32xf32>
    %159 = vector.shape_cast %156 : vector<16x32xf32> to vector<1x16x32xf32>
    tpu.vector_store %arg10[%c3_90, %c0_91, %c0_92], %159 {strides = array<i32>} : memref<4x16x32xf32, #tpu.memory_space<vmem>>, vector<1x16x32xf32>,
    %c3_93 = arith.constant 3 : index
    %c0_94 = arith.constant 0 : index
    %c0_95 = arith.constant 0 : index
    %160 = vector.load %arg8[%c3_93, %c0_94, %c0_95] : memref<4x16x1xf32, #tpu.memory_space<vmem>>, vector<1x16x1xf32>
    %161 = vector.shape_cast %160 : vector<1x16x1xf32> to vector<16x1xf32>
    %162 = vector.shape_cast %134 : vector<16x1xf32> to vector<1x16x1xf32>
    tpu.vector_store %arg8[%c3_93, %c0_94, %c0_95], %162 {strides = array<i32>} : memref<4x16x1xf32, #tpu.memory_space<vmem>>, vector<1x16x1xf32>,
    %c0_i32_96 = arith.constant 0 : i32
    %163 = arith.cmpi eq, %arg2, %c0_i32_96 : i32
    %164 = arith.extui %163 : i1 to i32
    %c0_i32_97 = arith.constant 0 : i32
    %165 = arith.cmpi ne, %164, %c0_i32_97 : i32
    scf.if %165 {
      %c0_98 = arith.constant 0 : index
      %c0_99 = arith.constant 0 : index
      %c0_100 = arith.constant 0 : index
      %166 = vector.load %arg10[%c0_98, %c0_99, %c0_100] : memref<4x16x32xf32, #tpu.memory_space<vmem>>, vector<1x16x32xf32>
      %167 = vector.shape_cast %166 : vector<1x16x32xf32> to vector<16x32xf32>
      %c0_101 = arith.constant 0 : index
      %c0_102 = arith.constant 0 : index
      %c0_103 = arith.constant 0 : index
      %168 = vector.load %arg9[%c0_101, %c0_102, %c0_103] : memref<4x16x1xf32, #tpu.memory_space<vmem>>, vector<1x16x1xf32>
      %169 = vector.shape_cast %168 : vector<1x16x1xf32> to vector<16x1xf32>
      %170 = vector.broadcast %169 : vector<16x1xf32> to vector<16x32xf32>
      %171 = arith.divf %167, %170 : vector<16x32xf32>
      %c1_104 = arith.constant 1 : index
      %c0_105 = arith.constant 0 : index
      %c0_106 = arith.constant 0 : index
      %172 = vector.load %arg10[%c1_104, %c0_105, %c0_106] : memref<4x16x32xf32, #tpu.memory_space<vmem>>, vector<1x16x32xf32>
      %173 = vector.shape_cast %172 : vector<1x16x32xf32> to vector<16x32xf32>
      %c1_107 = arith.constant 1 : index
      %c0_108 = arith.constant 0 : index
      %c0_109 = arith.constant 0 : index
      %174 = vector.load %arg9[%c1_107, %c0_108, %c0_109] : memref<4x16x1xf32, #tpu.memory_space<vmem>>, vector<1x16x1xf32>
      %175 = vector.shape_cast %174 : vector<1x16x1xf32> to vector<16x1xf32>
      %176 = vector.broadcast %175 : vector<16x1xf32> to vector<16x32xf32>
      %177 = arith.divf %173, %176 : vector<16x32xf32>
      %c2_110 = arith.constant 2 : index
      %c0_111 = arith.constant 0 : index
      %c0_112 = arith.constant 0 : index
      %178 = vector.load %arg10[%c2_110, %c0_111, %c0_112] : memref<4x16x32xf32, #tpu.memory_space<vmem>>, vector<1x16x32xf32>
      %179 = vector.shape_cast %178 : vector<1x16x32xf32> to vector<16x32xf32>
      %c2_113 = arith.constant 2 : index
      %c0_114 = arith.constant 0 : index
      %c0_115 = arith.constant 0 : index
      %180 = vector.load %arg9[%c2_113, %c0_114, %c0_115] : memref<4x16x1xf32, #tpu.memory_space<vmem>>, vector<1x16x1xf32>
      %181 = vector.shape_cast %180 : vector<1x16x1xf32> to vector<16x1xf32>
      %182 = vector.broadcast %181 : vector<16x1xf32> to vector<16x32xf32>
      %183 = arith.divf %179, %182 : vector<16x32xf32>
      %c3_116 = arith.constant 3 : index
      %c0_117 = arith.constant 0 : index
      %c0_118 = arith.constant 0 : index
      %184 = vector.load %arg10[%c3_116, %c0_117, %c0_118] : memref<4x16x32xf32, #tpu.memory_space<vmem>>, vector<1x16x32xf32>
      %185 = vector.shape_cast %184 : vector<1x16x32xf32> to vector<16x32xf32>
      %c3_119 = arith.constant 3 : index
      %c0_120 = arith.constant 0 : index
      %c0_121 = arith.constant 0 : index
      %186 = vector.load %arg9[%c3_119, %c0_120, %c0_121] : memref<4x16x1xf32, #tpu.memory_space<vmem>>, vector<1x16x1xf32>
      %187 = vector.shape_cast %186 : vector<1x16x1xf32> to vector<16x1xf32>
      %188 = vector.broadcast %187 : vector<16x1xf32> to vector<16x32xf32>
      %189 = arith.divf %185, %188 : vector<16x32xf32>
      %190 = tpu.concatenate %171, %177, %183, %189 in 1 : vector<16x32xf32>, vector<16x32xf32>, vector<16x32xf32>, vector<16x32xf32> -> vector<16x128xf32>
      %191 = arith.truncf %190 : vector<16x128xf32> to vector<16x128xbf16>
      %c0_122 = arith.constant 0 : index
      %c0_123 = arith.constant 0 : index
      %c0_124 = arith.constant 0 : index
      %192 = vector.load %arg7[%c0_122, %c0_123, %c0_124] : memref<1x16x128xbf16, #tpu.memory_space<vmem>>, vector<1x16x128xbf16>
      %193 = vector.shape_cast %192 : vector<1x16x128xbf16> to vector<16x128xbf16>
      %194 = vector.shape_cast %191 : vector<16x128xbf16> to vector<1x16x128xbf16>
      tpu.vector_store %arg7[%c0_122, %c0_123, %c0_124], %194 {strides = array<i32>} : memref<1x16x128xbf16, #tpu.memory_space<vmem>>, vector<1x16x128xbf16>,
    } else {
    }
    return
  }
  func.func @transform_0(%arg0: i32, %arg1: i32, %arg2: i32) -> (i32, i32, i32) {
    %c0_i32 = arith.constant 0 : i32
    %c0_i32_0 = arith.constant 0 : i32
    return %arg0, %c0_i32, %arg2 : i32, i32, i32
  }
  func.func @transform_1(%arg0: i32, %arg1: i32, %arg2: i32) -> (i32, i32, i32) {
    %c0_i32 = arith.constant 0 : i32
    %c0_i32_0 = arith.constant 0 : i32
    return %arg0, %arg1, %c0_i32 : i32, i32, i32
  }
  func.func @transform_2(%arg0: i32, %arg1: i32, %arg2: i32) -> (i32, i32, i32) {
    %c0_i32 = arith.constant 0 : i32
    %c0_i32_0 = arith.constant 0 : i32
    return %arg0, %arg2, %c0_i32 : i32, i32, i32
  }
  func.func @transform_3(%arg0: i32, %arg1: i32, %arg2: i32) -> (i32, i32, i32) {
    %c1_i32 = arith.constant 1 : i32
    %c0_i32 = arith.constant 0 : i32
    return %arg0, %arg2, %c1_i32 : i32, i32, i32
  }
  func.func @transform_4(%arg0: i32, %arg1: i32, %arg2: i32) -> (i32, i32, i32) {
    %c0_i32 = arith.constant 0 : i32
    %c0_i32_0 = arith.constant 0 : i32
    return %arg0, %arg1, %c0_i32 : i32, i32, i32
  }
}

</mosaic_0001>

<llo_original>
// kernel: transformer_forward.41
$region0: #{transformer_forward.41}
  #allocation0 [shape = 'u32[]', space=smem, size = 0x4, offset = 0x4, fixed_abs, tag = 'smem constant byte address 0x4 - core index']
  #allocation1 [shape = 'u32[144,128]{1,0:T(1,128)}', space=vmem, size = 0x12000, scoped, tag = 'internal scratch']
  #allocation2 [shape = 'f32[32,128]{1,0:T(8,128)}', space=vmem, size = 0x4000, scoped, tag = 'scratch operand']
  %s0 = inlined_call_operand.vmem [shape: bf16[32,128], index: 0, kind: input, shape index: {}]
  %s1 = inlined_call_operand.vmem [shape: bf16[128,128], index: 1, kind: input, shape index: {}]
  %s2 = inlined_call_operand.vmem [shape: f32[1,128], index: 2, kind: input, shape index: {}]
  %s3 = inlined_call_operand.vmem [shape: f32[32,128], index: 3, kind: input, shape index: {}]
  %s4 = inlined_call_operand.vmem [shape: f32[1,128], index: 4, kind: input, shape index: {}]
  %s5 = inlined_call_operand.vmem [shape: f32[1,128], index: 5, kind: input, shape index: {}]
  %s6 = inlined_call_operand.vmem [shape: f32[32,128], index: 6, kind: output, shape index: {}]
  %s7 = sld [smem:[#allocation0]]
  $region42: #{transformer_forward.41} parent=0
    _
  %s9 = ssub.s32 1, %s7
  %s10 = scalar_select 0, %s9, %s7
  // Predicated region
  $region2: #{transformer_forward.41} parent=0 // pred_check
    _
  $region3: #{transformer_forward.41} parent=0 // pred_check_branch
    %12 = sbr.rel (0) target = $region5
  $region4: #{transformer_forward.41} parent=0 // pred_region
    _
  $region5: #{transformer_forward.41} parent=0 // pred_fallthru
    _
  // Predicated region
  $region6: #{transformer_forward.41} parent=0 // pred_check
    _
  $region7: #{transformer_forward.41} parent=0 // pred_check_branch
    %14 = sbr.rel (0) target = $region9
  $region8: #{transformer_forward.41} parent=0 // pred_region
    _
  $region9: #{transformer_forward.41} parent=0 // pred_fallthru
    _
  // Predicated region
  $region10: #{transformer_forward.41} parent=0 // pred_check
    _
  $region11: #{transformer_forward.41} parent=0 // pred_check_branch
    %16 = sbr.rel (0) target = $region13
  $region12: #{transformer_forward.41} parent=0 // pred_region
    _
  $region13: #{transformer_forward.41} parent=0 // pred_fallthru
    _
  // Predicated region
  $region14: #{transformer_forward.41} parent=0 // pred_check
    _
  $region15: #{transformer_forward.41} parent=0 // pred_check_branch
    %18 = sbr.rel (0) target = $region17
  $region16: #{transformer_forward.41} parent=0 // pred_region
    _
  $region17: #{transformer_forward.41} parent=0 // pred_fallthru
    _
  // Predicated region
  $region18: #{transformer_forward.41} parent=0 // pred_check
    _
  $region19: #{transformer_forward.41} parent=0 // pred_check_branch
    %20 = sbr.rel (0) target = $region21
  $region20: #{transformer_forward.41} parent=0 // pred_region
    _
  $region21: #{transformer_forward.41} parent=0 // pred_fallthru
    _
  // Predicated region
  $region22: #{transformer_forward.41} parent=0 // pred_check
    _
  $region23: #{transformer_forward.41} parent=0 // pred_check_branch
    %22 = sbr.rel (0) target = $region25
  $region24: #{transformer_forward.41} parent=0 // pred_region
    _
  $region25: #{transformer_forward.41} parent=0 // pred_fallthru
    _
  %p24 = scmp.eq.s32.totalorder 0, 0
  // Predicated region
  $region26: #{transformer_forward.41} parent=0 // pred_check
    %p25 = pneg %p24
  $region27: #{transformer_forward.41} parent=0 // pred_check_branch
    %27 = sbr.rel (%p25) target = $region29
  $region28: #{transformer_forward.41} parent=0 // pred_region
    %28 = vst [vmem:[#allocation2] sm:$0xff] 0.0
    %29 = vst [vmem:[#allocation2 + $0x8] sm:$0xff] 0.0
    %30 = vst [vmem:[#allocation2 + $0x10] sm:$0xff] 0.0
    %31 = vst [vmem:[#allocation2 + $0x18] sm:$0xff] 0.0
  $region29: #{transformer_forward.41} parent=0 // pred_fallthru
    _
  %v32 = vld [vmem:[#allocation2] sm:$0xff]
  %v33 = vld [vmem:[#allocation2 + $0x8] sm:$0xff]
  %v34 = vld [vmem:[#allocation2 + $0x10] sm:$0xff]
  %v35 = vld [vmem:[#allocation2 + $0x18] sm:$0xff]
  %v36 = vld [vmem:[%s0] sm:$0xf]
  %v37 = vld [vmem:[%s0 + $0x4] sm:$0xf]
  %v38 = vld [vmem:[%s0 + $0x8] sm:$0xf]
  %v39 = vld [vmem:[%s0 + $0xc] sm:$0xf]
  %v40 = vld [vmem:[%s1] sm:$0xf]
  %v41 = vld [vmem:[%s1 + $0x4] sm:$0xf]
  %v42 = vld [vmem:[%s1 + $0x8] sm:$0xf]
  %v43 = vld [vmem:[%s1 + $0xc] sm:$0xf]
  %v44 = vld [vmem:[%s1 + $0x10] sm:$0xf]
  %v45 = vld [vmem:[%s1 + $0x14] sm:$0xf]
  %v46 = vld [vmem:[%s1 + $0x18] sm:$0xf]
  %v47 = vld [vmem:[%s1 + $0x1c] sm:$0xf]
  %v48 = vld [vmem:[%s1 + $0x20] sm:$0xf]
  %v49 = vld [vmem:[%s1 + $0x24] sm:$0xf]
  %v50 = vld [vmem:[%s1 + $0x28] sm:$0xf]
  %v51 = vld [vmem:[%s1 + $0x2c] sm:$0xf]
  %v52 = vld [vmem:[%s1 + $0x30] sm:$0xf]
  %v53 = vld [vmem:[%s1 + $0x34] sm:$0xf]
  %v54 = vld [vmem:[%s1 + $0x38] sm:$0xf]
  %v55 = vld [vmem:[%s1 + $0x3c] sm:$0xf]
  %v60 = vunpack.c.l.b16 %v36
  %v61 = vunpack.c.l.b16 %v37
  %v62 = vunpack.c.l.b16 %v38
  %v63 = vunpack.c.l.b16 %v39
  %v64 = vpack.c.b16 %v61, %v60
  %v65 = vpack.c.b16 %v63, %v62
  %v84 = vunpack.c.l.b16 %v40
  %v85 = vunpack.c.l.b16 %v41
  %v86 = vunpack.c.l.b16 %v42
  %v87 = vunpack.c.l.b16 %v43
  %v88 = vunpack.c.l.b16 %v44
  %v89 = vunpack.c.l.b16 %v45
  %v90 = vunpack.c.l.b16 %v46
  %v91 = vunpack.c.l.b16 %v47
  %v92 = vunpack.c.l.b16 %v48
  %v93 = vunpack.c.l.b16 %v49
  %v94 = vunpack.c.l.b16 %v50
  %v95 = vunpack.c.l.b16 %v51
  %v96 = vunpack.c.l.b16 %v52
  %v97 = vunpack.c.l.b16 %v53
  %v98 = vunpack.c.l.b16 %v54
  %v99 = vunpack.c.l.b16 %v55
  %v100 = vpack.c.b16 %v85, %v84
  %v101 = vpack.c.b16 %v87, %v86
  %v102 = vpack.c.b16 %v89, %v88
  %v103 = vpack.c.b16 %v91, %v90
  %v104 = vpack.c.b16 %v93, %v92
  %v105 = vpack.c.b16 %v95, %v94
  %v106 = vpack.c.b16 %v97, %v96
  %v107 = vpack.c.b16 %v99, %v98
  %116 = vmatprep.subr.bf16.mxu0 0
  %117 = vmatpush1.bf16.msra.mxu0 %v100
  %118 = vmatprep.subr.bf16.mxu0 0
  %119 = vmatpush1.bf16.msra.mxu0 %v101
  %120 = vmatprep.subr.bf16.mxu0 0
  %121 = vmatpush1.bf16.msra.mxu0 %v102
  %122 = vmatprep.subr.bf16.mxu0 0
  %123 = vmatpush1.bf16.msra.mxu0 %v103
  %124 = vmatprep.subr.bf16.mxu0 0
  %125 = vmatpush1.bf16.msra.mxu0 %v104
  %126 = vmatprep.subr.bf16.mxu0 0
  %127 = vmatpush1.bf16.msra.mxu0 %v105
  %128 = vmatprep.subr.bf16.mxu0 0
  %129 = vmatpush1.bf16.msra.mxu0 %v106
  %130 = vmatprep.subr.bf16.mxu0 0
  %131 = vmatpush1.bf16.msra.mxu0 %v107
  %132 = vmatprep.subr.bf16.mxu0 0
  %133 = vmatpush1.bf16.msra.mxu0 0
  %134 = vmatprep.subr.bf16.mxu0 0
  %135 = vmatpush1.bf16.msra.mxu0 0
  %136 = vmatprep.subr.bf16.mxu0 0
  %137 = vmatpush1.bf16.msra.mxu0 0
  %138 = vmatprep.subr.bf16.mxu0 0
  %139 = vmatpush1.bf16.msra.mxu0 0
  %140 = vmatprep.subr.bf16.mxu0 0
  %141 = vmatpush1.bf16.msra.mxu0 0
  %142 = vmatprep.subr.bf16.mxu0 0
  %143 = vmatpush1.bf16.msra.mxu0 0
  %144 = vmatprep.subr.bf16.mxu0 0
  %145 = vmatpush1.bf16.msra.mxu0 0
  %146 = vmatprep.subr.bf16.mxu0 0
  %147 = vmatpush1.bf16.msra.mxu0 0
  %148 = vmatprep.mubr.bf16.mxu0 0
  %149 = vmatmul.mubr.bf16.gmra.mrb[0].mxu0 %v64
  %v150 = vpop.f32.mrb[0].mxu0
  %v151 = vadd.f32 0.0, %v150
  %v152 = vpop.f32.mrb[0].mxu0
  %v153 = vpop.f32.mrb[0].mxu0
  %v154 = vadd.f32 0.0, %v153
  %v155 = vpop.f32.mrb[0].mxu0
  %156 = vmatprep.mubr.bf16.mxu0 0
  %157 = vmatmul.mubr.bf16.gmra.mrb[0].mxu0 %v65
  %v158 = vpop.f32.mrb[0].mxu0
  %v159 = vadd.f32 0.0, %v158
  %v160 = vpop.f32.mrb[0].mxu0
  %v161 = vpop.f32.mrb[0].mxu0
  %v162 = vadd.f32 0.0, %v161
  %v163 = vpop.f32.mrb[0].mxu0
  %164 = vdwg.mxu0
  %v165 = vadd.f32 %v32, %v151
  %v166 = vadd.f32 %v33, %v154
  %v167 = vadd.f32 %v34, %v159
  %v168 = vadd.f32 %v35, %v162
  %169 = vst [vmem:[#allocation2] sm:$0xff] %v165
  %170 = vst [vmem:[#allocation2 + $0x8] sm:$0xff] %v166
  %171 = vst [vmem:[#allocation2 + $0x10] sm:$0xff] %v167
  %172 = vst [vmem:[#allocation2 + $0x18] sm:$0xff] %v168
  // Predicated region
  $region30: #{transformer_forward.41} parent=0 // pred_check
    %p173 = pneg %p24
  $region31: #{transformer_forward.41} parent=0 // pred_check_branch
    %175 = sbr.rel (%p173) target = $region33
  $region32: #{transformer_forward.41} parent=0 // pred_region
    %v176 = vld [vmem:[#allocation2] sm:$0xff]
    %v177 = vld [vmem:[#allocation2 + $0x8] sm:$0xff]
    %v178 = vld [vmem:[#allocation2 + $0x10] sm:$0xff]
    %v179 = vld [vmem:[#allocation2 + $0x18] sm:$0xff]
    %v180 = vld [vmem:[%s2] sm:$0x1]
    %v182 = vlaneseq
    %v183 = vshrl.u32 %v182, 7
    %v184 = vsub.s32 0, %v183
    %v185 = vrot.slane %v180, %v184
    %v187 = vadd.f32 %v176, %v185
    %v188 = vadd.f32 %v177, %v185
    %v189 = vadd.f32 %v178, %v185
    %v190 = vadd.f32 %v179, %v185
    %v191 = vld [vmem:[%s3] sm:$0xff]
    %v192 = vld [vmem:[%s3 + $0x8] sm:$0xff]
    %v193 = vld [vmem:[%s3 + $0x10] sm:$0xff]
    %v194 = vld [vmem:[%s3 + $0x18] sm:$0xff]
    %v195 = vadd.f32 %v187, %v191
    %v196 = vadd.f32 %v188, %v192
    %v197 = vadd.f32 %v189, %v193
    %v198 = vadd.f32 %v190, %v194
    %199 = vadd.xlane.f32.xlu0 %v195
    %v200 = vpop.xlane.xlu0 %199
    %201 = vadd.xlane.f32.xlu0 %v196
    %v202 = vpop.xlane.xlu0 %201
    %203 = vadd.xlane.f32.xlu0 %v197
    %v204 = vpop.xlane.xlu0 %203
    %205 = vadd.xlane.f32.xlu0 %v198
    %v206 = vpop.xlane.xlu0 %205
    %v207 = vrcp.pop 128.0
    %v208 = vmul.f32 %v200, %v207
    %v209 = vmul.f32 %v202, %v207
    %v210 = vmul.f32 %v204, %v207
    %v211 = vmul.f32 %v206, %v207
    %v212 = vsub.f32 %v195, %v208
    %v213 = vsub.f32 %v196, %v209
    %v214 = vsub.f32 %v197, %v210
    %v215 = vsub.f32 %v198, %v211
    %v216 = vmul.f32 %v212, %v212
    %v217 = vmul.f32 %v213, %v213
    %v218 = vmul.f32 %v214, %v214
    %v219 = vmul.f32 %v215, %v215
    %220 = vadd.xlane.f32.xlu0 %v216
    %v221 = vpop.xlane.xlu0 %220
    %222 = vadd.xlane.f32.xlu0 %v217
    %v223 = vpop.xlane.xlu0 %222
    %224 = vadd.xlane.f32.xlu0 %v218
    %v225 = vpop.xlane.xlu0 %224
    %226 = vadd.xlane.f32.xlu0 %v219
    %v227 = vpop.xlane.xlu0 %226
    %v228 = vmul.f32 %v221, %v207
    %v229 = vmul.f32 %v223, %v207
    %v230 = vmul.f32 %v225, %v207
    %v231 = vmul.f32 %v227, %v207
    %v232 = vadd.f32 %v228, 1e-05
    %v233 = vadd.f32 %v229, 1e-05
    %v234 = vadd.f32 %v230, 1e-05
    %v235 = vadd.f32 %v231, 1e-05
    %v236 = vrsqrt.pop %v232
    %v237 = vrsqrt.pop %v233
    %v238 = vrsqrt.pop %v234
    %v239 = vrsqrt.pop %v235
    %v240 = vmul.f32 %v212, %v236
    %v241 = vmul.f32 %v213, %v237
    %v242 = vmul.f32 %v214, %v238
    %v243 = vmul.f32 %v215, %v239
    %v244 = vld [vmem:[%s4] sm:$0x1]
    %v246 = vlaneseq
    %v247 = vshrl.u32 %v246, 7
    %v248 = vsub.s32 0, %v247
    %v249 = vrot.slane %v244, %v248
    %v251 = vmul.f32 %v240, %v249
    %v252 = vmul.f32 %v241, %v249
    %v253 = vmul.f32 %v242, %v249
    %v254 = vmul.f32 %v243, %v249
    %v255 = vld [vmem:[%s5] sm:$0x1]
    %v257 = vlaneseq
    %v258 = vshrl.u32 %v257, 7
    %v259 = vsub.s32 0, %v258
    %v260 = vrot.slane %v255, %v259
    %v262 = vadd.f32 %v251, %v260
    %v263 = vadd.f32 %v252, %v260
    %v264 = vadd.f32 %v253, %v260
    %v265 = vadd.f32 %v254, %v260
    %266 = vst [vmem:[%s6] sm:$0xff] %v262
    %267 = vst [vmem:[%s6 + $0x8] sm:$0xff] %v263
    %268 = vst [vmem:[%s6 + $0x10] sm:$0xff] %v264
    %269 = vst [vmem:[%s6 + $0x18] sm:$0xff] %v265
  $region33: #{transformer_forward.41} parent=0 // pred_fallthru
    _
  // Predicated region
  $region34: #{transformer_forward.41} parent=0 // pred_check
    _
  $region35: #{transformer_forward.41} parent=0 // pred_check_branch
    %271 = sbr.rel (0) target = $region37
  $region36: #{transformer_forward.41} parent=0 // pred_region
    _
  $region37: #{transformer_forward.41} parent=0 // pred_fallthru
    _
  // Predicated region
  $region38: #{transformer_forward.41} parent=0 // pred_check
    _
  $region39: #{transformer_forward.41} parent=0 // pred_check_branch
    %273 = sbr.rel (0) target = $region41
  $region40: #{transformer_forward.41} parent=0 // pred_region
    _
  $region41: #{transformer_forward.41} parent=0 // pred_fallthru
    _

// kernel: transformer_forward.42
$region0: #{transformer_forward.42}
  #allocation0 [shape = 'u32[]', space=smem, size = 0x4, offset = 0x4, fixed_abs, tag = 'smem constant byte address 0x4 - core index']
  #allocation1 [shape = 'u32[144,128]{1,0:T(1,128)}', space=vmem, size = 0x12000, scoped, tag = 'internal scratch']
  #allocation2 [shape = 'f32[32,128]{1,0:T(8,128)}', space=vmem, size = 0x4000, scoped, tag = 'scratch operand']
  %s0 = inlined_call_operand.vmem [shape: f32[32,128], index: 0, kind: input, shape index: {}]
  %s1 = inlined_call_operand.vmem [shape: bf16[128,128], index: 1, kind: input, shape index: {}]
  %s2 = inlined_call_operand.vmem [shape: f32[1,128], index: 2, kind: input, shape index: {}]
  %s3 = inlined_call_operand.vmem [shape: bf16[32,128], index: 3, kind: output, shape index: {}]
  %s4 = sld [smem:[#allocation0]]
  $region30: #{transformer_forward.42} parent=0
    _
  %s6 = ssub.s32 1, %s4
  %s7 = scalar_select 0, %s6, %s4
  // Predicated region
  $region2: #{transformer_forward.42} parent=0 // pred_check
    _
  $region3: #{transformer_forward.42} parent=0 // pred_check_branch
    %9 = sbr.rel (0) target = $region5
  $region4: #{transformer_forward.42} parent=0 // pred_region
    _
  $region5: #{transformer_forward.42} parent=0 // pred_fallthru
    _
  // Predicated region
  $region6: #{transformer_forward.42} parent=0 // pred_check
    _
  $region7: #{transformer_forward.42} parent=0 // pred_check_branch
    %11 = sbr.rel (0) target = $region9
  $region8: #{transformer_forward.42} parent=0 // pred_region
    _
  $region9: #{transformer_forward.42} parent=0 // pred_fallthru
    _
  // Predicated region
  $region10: #{transformer_forward.42} parent=0 // pred_check
    _
  $region11: #{transformer_forward.42} parent=0 // pred_check_branch
    %13 = sbr.rel (0) target = $region13
  $region12: #{transformer_forward.42} parent=0 // pred_region
    _
  $region13: #{transformer_forward.42} parent=0 // pred_fallthru
    _
  %p15 = scmp.eq.s32.totalorder 0, 0
  // Predicated region
  $region14: #{transformer_forward.42} parent=0 // pred_check
    %p16 = pneg %p15
  $region15: #{transformer_forward.42} parent=0 // pred_check_branch
    %18 = sbr.rel (%p16) target = $region17
  $region16: #{transformer_forward.42} parent=0 // pred_region
    %19 = vst [vmem:[#allocation2] sm:$0xff] 0.0
    %20 = vst [vmem:[#allocation2 + $0x8] sm:$0xff] 0.0
    %21 = vst [vmem:[#allocation2 + $0x10] sm:$0xff] 0.0
    %22 = vst [vmem:[#allocation2 + $0x18] sm:$0xff] 0.0
  $region17: #{transformer_forward.42} parent=0 // pred_fallthru
    _
  %v23 = vld [vmem:[#allocation2] sm:$0xff]
  %v24 = vld [vmem:[#allocation2 + $0x8] sm:$0xff]
  %v25 = vld [vmem:[#allocation2 + $0x10] sm:$0xff]
  %v26 = vld [vmem:[#allocation2 + $0x18] sm:$0xff]
  %v27 = vld [vmem:[%s0] sm:$0xff]
  %v28 = vld [vmem:[%s0 + $0x8] sm:$0xff]
  %v29 = vld [vmem:[%s0 + $0x10] sm:$0xff]
  %v30 = vld [vmem:[%s0 + $0x18] sm:$0xff]
  %v31 = vpack.c.bf16 %v28, %v27
  %v32 = vpack.c.bf16 %v30, %v29
  %v33 = vld [vmem:[%s1] sm:$0xf]
  %v34 = vld [vmem:[%s1 + $0x4] sm:$0xf]
  %v35 = vld [vmem:[%s1 + $0x8] sm:$0xf]
  %v36 = vld [vmem:[%s1 + $0xc] sm:$0xf]
  %v37 = vld [vmem:[%s1 + $0x10] sm:$0xf]
  %v38 = vld [vmem:[%s1 + $0x14] sm:$0xf]
  %v39 = vld [vmem:[%s1 + $0x18] sm:$0xf]
  %v40 = vld [vmem:[%s1 + $0x1c] sm:$0xf]
  %v41 = vld [vmem:[%s1 + $0x20] sm:$0xf]
  %v42 = vld [vmem:[%s1 + $0x24] sm:$0xf]
  %v43 = vld [vmem:[%s1 + $0x28] sm:$0xf]
  %v44 = vld [vmem:[%s1 + $0x2c] sm:$0xf]
  %v45 = vld [vmem:[%s1 + $0x30] sm:$0xf]
  %v46 = vld [vmem:[%s1 + $0x34] sm:$0xf]
  %v47 = vld [vmem:[%s1 + $0x38] sm:$0xf]
  %v48 = vld [vmem:[%s1 + $0x3c] sm:$0xf]
  %v65 = vunpack.c.l.b16 %v33
  %v66 = vunpack.c.l.b16 %v34
  %v67 = vunpack.c.l.b16 %v35
  %v68 = vunpack.c.l.b16 %v36
  %v69 = vunpack.c.l.b16 %v37
  %v70 = vunpack.c.l.b16 %v38
  %v71 = vunpack.c.l.b16 %v39
  %v72 = vunpack.c.l.b16 %v40
  %v73 = vunpack.c.l.b16 %v41
  %v74 = vunpack.c.l.b16 %v42
  %v75 = vunpack.c.l.b16 %v43
  %v76 = vunpack.c.l.b16 %v44
  %v77 = vunpack.c.l.b16 %v45
  %v78 = vunpack.c.l.b16 %v46
  %v79 = vunpack.c.l.b16 %v47
  %v80 = vunpack.c.l.b16 %v48
  %v81 = vpack.c.b16 %v66, %v65
  %v82 = vpack.c.b16 %v68, %v67
  %v83 = vpack.c.b16 %v70, %v69
  %v84 = vpack.c.b16 %v72, %v71
  %v85 = vpack.c.b16 %v74, %v73
  %v86 = vpack.c.b16 %v76, %v75
  %v87 = vpack.c.b16 %v78, %v77
  %v88 = vpack.c.b16 %v80, %v79
  %97 = vmatprep.subr.bf16.mxu0 0
  %98 = vmatpush1.bf16.msra.mxu0 %v81
  %99 = vmatprep.subr.bf16.mxu0 0
  %100 = vmatpush1.bf16.msra.mxu0 %v82
  %101 = vmatprep.subr.bf16.mxu0 0
  %102 = vmatpush1.bf16.msra.mxu0 %v83
  %103 = vmatprep.subr.bf16.mxu0 0
  %104 = vmatpush1.bf16.msra.mxu0 %v84
  %105 = vmatprep.subr.bf16.mxu0 0
  %106 = vmatpush1.bf16.msra.mxu0 %v85
  %107 = vmatprep.subr.bf16.mxu0 0
  %108 = vmatpush1.bf16.msra.mxu0 %v86
  %109 = vmatprep.subr.bf16.mxu0 0
  %110 = vmatpush1.bf16.msra.mxu0 %v87
  %111 = vmatprep.subr.bf16.mxu0 0
  %112 = vmatpush1.bf16.msra.mxu0 %v88
  %113 = vmatprep.subr.bf16.mxu0 0
  %114 = vmatpush1.bf16.msra.mxu0 0
  %115 = vmatprep.subr.bf16.mxu0 0
  %116 = vmatpush1.bf16.msra.mxu0 0
  %117 = vmatprep.subr.bf16.mxu0 0
  %118 = vmatpush1.bf16.msra.mxu0 0
  %119 = vmatprep.subr.bf16.mxu0 0
  %120 = vmatpush1.bf16.msra.mxu0 0
  %121 = vmatprep.subr.bf16.mxu0 0
  %122 = vmatpush1.bf16.msra.mxu0 0
  %123 = vmatprep.subr.bf16.mxu0 0
  %124 = vmatpush1.bf16.msra.mxu0 0
  %125 = vmatprep.subr.bf16.mxu0 0
  %126 = vmatpush1.bf16.msra.mxu0 0
  %127 = vmatprep.subr.bf16.mxu0 0
  %128 = vmatpush1.bf16.msra.mxu0 0
  %129 = vmatprep.mubr.bf16.mxu0 0
  %130 = vmatmul.mubr.bf16.gmra.mrb[0].mxu0 %v31
  %v131 = vpop.f32.mrb[0].mxu0
  %v132 = vadd.f32 0.0, %v131
  %v133 = vpop.f32.mrb[0].mxu0
  %v134 = vpop.f32.mrb[0].mxu0
  %v135 = vadd.f32 0.0, %v134
  %v136 = vpop.f32.mrb[0].mxu0
  %137 = vmatprep.mubr.bf16.mxu0 0
  %138 = vmatmul.mubr.bf16.gmra.mrb[0].mxu0 %v32
  %v139 = vpop.f32.mrb[0].mxu0
  %v140 = vadd.f32 0.0, %v139
  %v141 = vpop.f32.mrb[0].mxu0
  %v142 = vpop.f32.mrb[0].mxu0
  %v143 = vadd.f32 0.0, %v142
  %v144 = vpop.f32.mrb[0].mxu0
  %145 = vdwg.mxu0
  %v146 = vadd.f32 %v23, %v132
  %v147 = vadd.f32 %v24, %v135
  %v148 = vadd.f32 %v25, %v140
  %v149 = vadd.f32 %v26, %v143
  %150 = vst [vmem:[#allocation2] sm:$0xff] %v146
  %151 = vst [vmem:[#allocation2 + $0x8] sm:$0xff] %v147
  %152 = vst [vmem:[#allocation2 + $0x10] sm:$0xff] %v148
  %153 = vst [vmem:[#allocation2 + $0x18] sm:$0xff] %v149
  // Predicated region
  $region18: #{transformer_forward.42} parent=0 // pred_check
    %p154 = pneg %p15
  $region19: #{transformer_forward.42} parent=0 // pred_check_branch
    %156 = sbr.rel (%p154) target = $region21
  $region20: #{transformer_forward.42} parent=0 // pred_region
    %v157 = vld [vmem:[#allocation2] sm:$0xff]
    %v158 = vld [vmem:[#allocation2 + $0x8] sm:$0xff]
    %v159 = vld [vmem:[#allocation2 + $0x10] sm:$0xff]
    %v160 = vld [vmem:[#allocation2 + $0x18] sm:$0xff]
    %v161 = vld [vmem:[%s2] sm:$0x1]
    %v163 = vlaneseq
    %v164 = vshrl.u32 %v163, 7
    %v165 = vsub.s32 0, %v164
    %v166 = vrot.slane %v161, %v165
    %v168 = vadd.f32 %v157, %v166
    %v169 = vadd.f32 %v158, %v166
    %v170 = vadd.f32 %v159, %v166
    %v171 = vadd.f32 %v160, %v166
    %v172 = vpack.c.bf16 %v169, %v168
    %v173 = vpack.c.bf16 %v171, %v170
    %v176 = vunpack.c.l.b16 %v172
    %v177 = vunpack.c.h.b16 %v172
    %v178 = vunpack.c.l.b16 %v173
    %v179 = vunpack.c.h.b16 %v173
    %v180 = vpack.c.b16 %v176, %v176
    %v181 = vpack.c.b16 %v177, %v177
    %v182 = vpack.c.b16 %v178, %v178
    %v183 = vpack.c.b16 %v179, %v179
    %188 = vst [vmem:[%s3] sm:$0xf] %v180
    %189 = vst [vmem:[%s3 + $0x4] sm:$0xf] %v181
    %190 = vst [vmem:[%s3 + $0x8] sm:$0xf] %v182
    %191 = vst [vmem:[%s3 + $0xc] sm:$0xf] %v183
  $region21: #{transformer_forward.42} parent=0 // pred_fallthru
    _
  // Predicated region
  $region22: #{transformer_forward.42} parent=0 // pred_check
    _
  $region23: #{transformer_forward.42} parent=0 // pred_check_branch
    %193 = sbr.rel (0) target = $region25
  $region24: #{transformer_forward.42} parent=0 // pred_region
    _
  $region25: #{transformer_forward.42} parent=0 // pred_fallthru
    _
  // Predicated region
  $region26: #{transformer_forward.42} parent=0 // pred_check
    _
  $region27: #{transformer_forward.42} parent=0 // pred_check_branch
    %195 = sbr.rel (0) target = $region29
  $region28: #{transformer_forward.42} parent=0 // pred_region
    _
  $region29: #{transformer_forward.42} parent=0 // pred_fallthru
    _

// kernel: transformer_forward.39
$region0: #{transformer_forward.39}
  #allocation0 [shape = 'u32[]', space=smem, size = 0x4, offset = 0x4, fixed_abs, tag = 'smem constant byte address 0x4 - core index']
  #allocation1 [shape = 'u32[144,128]{1,0:T(1,128)}', space=vmem, size = 0x12000, scoped, tag = 'internal scratch']
  #allocation2 [shape = 'f32[32,384]{1,0:T(8,128)}', space=vmem, size = 0xc000, scoped, tag = 'scratch operand']
  %s0 = inlined_call_operand.vmem [shape: f32[32,128], index: 0, kind: input, shape index: {}]
  %s1 = inlined_call_operand.vmem [shape: bf16[128,384], index: 1, kind: input, shape index: {}]
  %s2 = inlined_call_operand.vmem [shape: f32[1,384], index: 2, kind: input, shape index: {}]
  %s3 = inlined_call_operand.vmem [shape: bf16[32,384], index: 3, kind: output, shape index: {}]
  %s4 = sld [smem:[#allocation0]]
  $region30: #{transformer_forward.39} parent=0
    _
  %s6 = ssub.s32 1, %s4
  %s7 = scalar_select 0, %s6, %s4
  // Predicated region
  $region2: #{transformer_forward.39} parent=0 // pred_check
    _
  $region3: #{transformer_forward.39} parent=0 // pred_check_branch
    %9 = sbr.rel (0) target = $region5
  $region4: #{transformer_forward.39} parent=0 // pred_region
    _
  $region5: #{transformer_forward.39} parent=0 // pred_fallthru
    _
  // Predicated region
  $region6: #{transformer_forward.39} parent=0 // pred_check
    _
  $region7: #{transformer_forward.39} parent=0 // pred_check_branch
    %11 = sbr.rel (0) target = $region9
  $region8: #{transformer_forward.39} parent=0 // pred_region
    _
  $region9: #{transformer_forward.39} parent=0 // pred_fallthru
    _
  // Predicated region
  $region10: #{transformer_forward.39} parent=0 // pred_check
    _
  $region11: #{transformer_forward.39} parent=0 // pred_check_branch
    %13 = sbr.rel (0) target = $region13
  $region12: #{transformer_forward.39} parent=0 // pred_region
    _
  $region13: #{transformer_forward.39} parent=0 // pred_fallthru
    _
  %p15 = scmp.eq.s32.totalorder 0, 0
  // Predicated region
  $region14: #{transformer_forward.39} parent=0 // pred_check
    %p16 = pneg %p15
  $region15: #{transformer_forward.39} parent=0 // pred_check_branch
    %18 = sbr.rel (%p16) target = $region17
  $region16: #{transformer_forward.39} parent=0 // pred_region
    %19 = vst [vmem:[#allocation2] sm:$0xff] 0.0
    %20 = vst [vmem:[#allocation2 + $0x8] sm:$0xff] 0.0
    %21 = vst [vmem:[#allocation2 + $0x10] sm:$0xff] 0.0
    %22 = vst [vmem:[#allocation2 + $0x18] sm:$0xff] 0.0
    %23 = vst [vmem:[#allocation2 + $0x20] sm:$0xff] 0.0
    %24 = vst [vmem:[#allocation2 + $0x28] sm:$0xff] 0.0
    %25 = vst [vmem:[#allocation2 + $0x30] sm:$0xff] 0.0
    %26 = vst [vmem:[#allocation2 + $0x38] sm:$0xff] 0.0
    %27 = vst [vmem:[#allocation2 + $0x40] sm:$0xff] 0.0
    %28 = vst [vmem:[#allocation2 + $0x48] sm:$0xff] 0.0
    %29 = vst [vmem:[#allocation2 + $0x50] sm:$0xff] 0.0
    %30 = vst [vmem:[#allocation2 + $0x58] sm:$0xff] 0.0
  $region17: #{transformer_forward.39} parent=0 // pred_fallthru
    _
  %v31 = vld [vmem:[#allocation2] sm:$0xff]
  %v32 = vld [vmem:[#allocation2 + $0x8] sm:$0xff]
  %v33 = vld [vmem:[#allocation2 + $0x10] sm:$0xff]
  %v34 = vld [vmem:[#allocation2 + $0x18] sm:$0xff]
  %v35 = vld [vmem:[#allocation2 + $0x20] sm:$0xff]
  %v36 = vld [vmem:[#allocation2 + $0x28] sm:$0xff]
  %v37 = vld [vmem:[#allocation2 + $0x30] sm:$0xff]
  %v38 = vld [vmem:[#allocation2 + $0x38] sm:$0xff]
  %v39 = vld [vmem:[#allocation2 + $0x40] sm:$0xff]
  %v40 = vld [vmem:[#allocation2 + $0x48] sm:$0xff]
  %v41 = vld [vmem:[#allocation2 + $0x50] sm:$0xff]
  %v42 = vld [vmem:[#allocation2 + $0x58] sm:$0xff]
  %v43 = vld [vmem:[%s0] sm:$0xff]
  %v44 = vld [vmem:[%s0 + $0x8] sm:$0xff]
  %v45 = vld [vmem:[%s0 + $0x10] sm:$0xff]
  %v46 = vld [vmem:[%s0 + $0x18] sm:$0xff]
  %v47 = vpack.c.bf16 %v44, %v43
  %v48 = vpack.c.bf16 %v46, %v45
  %v49 = vld [vmem:[%s1] sm:$0xff]
  %v50 = vld [vmem:[%s1 + $0x8] sm:$0xf]
  %v51 = vld [vmem:[%s1 + $0xc] sm:$0xff]
  %v52 = vld [vmem:[%s1 + $0x14] sm:$0xf]
  %v53 = vld [vmem:[%s1 + $0x18] sm:$0xff]
  %v54 = vld [vmem:[%s1 + $0x20] sm:$0xf]
  %v55 = vld [vmem:[%s1 + $0x24] sm:$0xff]
  %v56 = vld [vmem:[%s1 + $0x2c] sm:$0xf]
  %v57 = vld [vmem:[%s1 + $0x30] sm:$0xff]
  %v58 = vld [vmem:[%s1 + $0x38] sm:$0xf]
  %v59 = vld [vmem:[%s1 + $0x3c] sm:$0xff]
  %v60 = vld [vmem:[%s1 + $0x44] sm:$0xf]
  %v61 = vld [vmem:[%s1 + $0x48] sm:$0xff]
  %v62 = vld [vmem:[%s1 + $0x50] sm:$0xf]
  %v63 = vld [vmem:[%s1 + $0x54] sm:$0xff]
  %v64 = vld [vmem:[%s1 + $0x5c] sm:$0xf]
  %v65 = vld [vmem:[%s1 + $0x60] sm:$0xff]
  %v66 = vld [vmem:[%s1 + $0x68] sm:$0xf]
  %v67 = vld [vmem:[%s1 + $0x6c] sm:$0xff]
  %v68 = vld [vmem:[%s1 + $0x74] sm:$0xf]
  %v69 = vld [vmem:[%s1 + $0x78] sm:$0xff]
  %v70 = vld [vmem:[%s1 + $0x80] sm:$0xf]
  %v71 = vld [vmem:[%s1 + $0x84] sm:$0xff]
  %v72 = vld [vmem:[%s1 + $0x8c] sm:$0xf]
  %v73 = vld [vmem:[%s1 + $0x90] sm:$0xff]
  %v74 = vld [vmem:[%s1 + $0x98] sm:$0xf]
  %v75 = vld [vmem:[%s1 + $0x9c] sm:$0xff]
  %v76 = vld [vmem:[%s1 + $0xa4] sm:$0xf]
  %v77 = vld [vmem:[%s1 + $0xa8] sm:$0xff]
  %v78 = vld [vmem:[%s1 + $0xb0] sm:$0xf]
  %v79 = vld [vmem:[%s1 + $0xb4] sm:$0xff]
  %v80 = vld [vmem:[%s1 + $0xbc] sm:$0xf]
  %v113 = vunpack.c.l.b16 %v49
  %v114 = vunpack.c.h.b16 %v49
  %v115 = vunpack.c.l.b16 %v50
  %v116 = vunpack.c.l.b16 %v51
  %v117 = vunpack.c.h.b16 %v51
  %v118 = vunpack.c.l.b16 %v52
  %v119 = vunpack.c.l.b16 %v53
  %v120 = vunpack.c.h.b16 %v53
  %v121 = vunpack.c.l.b16 %v54
  %v122 = vunpack.c.l.b16 %v55
  %v123 = vunpack.c.h.b16 %v55
  %v124 = vunpack.c.l.b16 %v56
  %v125 = vunpack.c.l.b16 %v57
  %v126 = vunpack.c.h.b16 %v57
  %v127 = vunpack.c.l.b16 %v58
  %v128 = vunpack.c.l.b16 %v59
  %v129 = vunpack.c.h.b16 %v59
  %v130 = vunpack.c.l.b16 %v60
  %v131 = vunpack.c.l.b16 %v61
  %v132 = vunpack.c.h.b16 %v61
  %v133 = vunpack.c.l.b16 %v62
  %v134 = vunpack.c.l.b16 %v63
  %v135 = vunpack.c.h.b16 %v63
  %v136 = vunpack.c.l.b16 %v64
  %v137 = vunpack.c.l.b16 %v65
  %v138 = vunpack.c.h.b16 %v65
  %v139 = vunpack.c.l.b16 %v66
  %v140 = vunpack.c.l.b16 %v67
  %v141 = vunpack.c.h.b16 %v67
  %v142 = vunpack.c.l.b16 %v68
  %v143 = vunpack.c.l.b16 %v69
  %v144 = vunpack.c.h.b16 %v69
  %v145 = vunpack.c.l.b16 %v70
  %v146 = vunpack.c.l.b16 %v71
  %v147 = vunpack.c.h.b16 %v71
  %v148 = vunpack.c.l.b16 %v72
  %v149 = vunpack.c.l.b16 %v73
  %v150 = vunpack.c.h.b16 %v73
  %v151 = vunpack.c.l.b16 %v74
  %v152 = vunpack.c.l.b16 %v75
  %v153 = vunpack.c.h.b16 %v75
  %v154 = vunpack.c.l.b16 %v76
  %v155 = vunpack.c.l.b16 %v77
  %v156 = vunpack.c.h.b16 %v77
  %v157 = vunpack.c.l.b16 %v78
  %v158 = vunpack.c.l.b16 %v79
  %v159 = vunpack.c.h.b16 %v79
  %v160 = vunpack.c.l.b16 %v80
  %v161 = vpack.c.b16 %v116, %v113
  %v162 = vpack.c.b16 %v117, %v114
  %v163 = vpack.c.b16 %v118, %v115
  %v164 = vpack.c.b16 %v122, %v119
  %v165 = vpack.c.b16 %v123, %v120
  %v166 = vpack.c.b16 %v124, %v121
  %v167 = vpack.c.b16 %v128, %v125
  %v168 = vpack.c.b16 %v129, %v126
  %v169 = vpack.c.b16 %v130, %v127
  %v170 = vpack.c.b16 %v134, %v131
  %v171 = vpack.c.b16 %v135, %v132
  %v172 = vpack.c.b16 %v136, %v133
  %v173 = vpack.c.b16 %v140, %v137
  %v174 = vpack.c.b16 %v141, %v138
  %v175 = vpack.c.b16 %v142, %v139
  %v176 = vpack.c.b16 %v146, %v143
  %v177 = vpack.c.b16 %v147, %v144
  %v178 = vpack.c.b16 %v148, %v145
  %v179 = vpack.c.b16 %v152, %v149
  %v180 = vpack.c.b16 %v153, %v150
  %v181 = vpack.c.b16 %v154, %v151
  %v182 = vpack.c.b16 %v158, %v155
  %v183 = vpack.c.b16 %v159, %v156
  %v184 = vpack.c.b16 %v160, %v157
  %209 = vmatprep.subr.bf16.mxu0 %v162
  %210 = vmatpush1.bf16.msra.mxu0 %v161
  %211 = vmatprep.subr.bf16.mxu0 %v165
  %212 = vmatpush1.bf16.msra.mxu0 %v164
  %213 = vmatprep.subr.bf16.mxu0 %v168
  %214 = vmatpush1.bf16.msra.mxu0 %v167
  %215 = vmatprep.subr.bf16.mxu0 %v171
  %216 = vmatpush1.bf16.msra.mxu0 %v170
  %217 = vmatprep.subr.bf16.mxu0 %v174
  %218 = vmatpush1.bf16.msra.mxu0 %v173
  %219 = vmatprep.subr.bf16.mxu0 %v177
  %220 = vmatpush1.bf16.msra.mxu0 %v176
  %221 = vmatprep.subr.bf16.mxu0 %v180
  %222 = vmatpush1.bf16.msra.mxu0 %v179
  %223 = vmatprep.subr.bf16.mxu0 %v183
  %224 = vmatpush1.bf16.msra.mxu0 %v182
  %225 = vmatprep.subr.bf16.mxu0 0
  %226 = vmatpush1.bf16.msra.mxu0 0
  %227 = vmatprep.subr.bf16.mxu0 0
  %228 = vmatpush1.bf16.msra.mxu0 0
  %229 = vmatprep.subr.bf16.mxu0 0
  %230 = vmatpush1.bf16.msra.mxu0 0
  %231 = vmatprep.subr.bf16.mxu0 0
  %232 = vmatpush1.bf16.msra.mxu0 0
  %233 = vmatprep.subr.bf16.mxu0 0
  %234 = vmatpush1.bf16.msra.mxu0 0
  %235 = vmatprep.subr.bf16.mxu0 0
  %236 = vmatpush1.bf16.msra.mxu0 0
  %237 = vmatprep.subr.bf16.mxu0 0
  %238 = vmatpush1.bf16.msra.mxu0 0
  %239 = vmatprep.subr.bf16.mxu0 0
  %240 = vmatpush1.bf16.msra.mxu0 0
  %241 = vmatprep.mubr.bf16.mxu0 0
  %242 = vmatmul.mubr.bf16.gmra.mrb[0].mxu0 %v47
  %v243 = vpop.f32.mrb[0].mxu0
  %v244 = vadd.f32 0.0, %v243
  %v245 = vpop.f32.mrb[0].mxu0
  %v246 = vadd.f32 0.0, %v245
  %v247 = vpop.f32.mrb[0].mxu0
  %v248 = vadd.f32 0.0, %v247
  %v249 = vpop.f32.mrb[0].mxu0
  %v250 = vadd.f32 0.0, %v249
  %251 = vmatprep.mubr.bf16.mxu0 0
  %252 = vmatmul.mubr.bf16.gmra.mrb[0].mxu0 %v48
  %v253 = vpop.f32.mrb[0].mxu0
  %v254 = vadd.f32 0.0, %v253
  %v255 = vpop.f32.mrb[0].mxu0
  %v256 = vadd.f32 0.0, %v255
  %v257 = vpop.f32.mrb[0].mxu0
  %v258 = vadd.f32 0.0, %v257
  %v259 = vpop.f32.mrb[0].mxu0
  %v260 = vadd.f32 0.0, %v259
  %261 = vdwg.mxu0
  %262 = vmatprep.subr.bf16.mxu0 0
  %263 = vmatpush1.bf16.msra.mxu0 %v163
  %264 = vmatprep.subr.bf16.mxu0 0
  %265 = vmatpush1.bf16.msra.mxu0 %v166
  %266 = vmatprep.subr.bf16.mxu0 0
  %267 = vmatpush1.bf16.msra.mxu0 %v169
  %268 = vmatprep.subr.bf16.mxu0 0
  %269 = vmatpush1.bf16.msra.mxu0 %v172
  %270 = vmatprep.subr.bf16.mxu0 0
  %271 = vmatpush1.bf16.msra.mxu0 %v175
  %272 = vmatprep.subr.bf16.mxu0 0
  %273 = vmatpush1.bf16.msra.mxu0 %v178
  %274 = vmatprep.subr.bf16.mxu0 0
  %275 = vmatpush1.bf16.msra.mxu0 %v181
  %276 = vmatprep.subr.bf16.mxu0 0
  %277 = vmatpush1.bf16.msra.mxu0 %v184
  %278 = vmatprep.subr.bf16.mxu0 0
  %279 = vmatpush1.bf16.msra.mxu0 0
  %280 = vmatprep.subr.bf16.mxu0 0
  %281 = vmatpush1.bf16.msra.mxu0 0
  %282 = vmatprep.subr.bf16.mxu0 0
  %283 = vmatpush1.bf16.msra.mxu0 0
  %284 = vmatprep.subr.bf16.mxu0 0
  %285 = vmatpush1.bf16.msra.mxu0 0
  %286 = vmatprep.subr.bf16.mxu0 0
  %287 = vmatpush1.bf16.msra.mxu0 0
  %288 = vmatprep.subr.bf16.mxu0 0
  %289 = vmatpush1.bf16.msra.mxu0 0
  %290 = vmatprep.subr.bf16.mxu0 0
  %291 = vmatpush1.bf16.msra.mxu0 0
  %292 = vmatprep.subr.bf16.mxu0 0
  %293 = vmatpush1.bf16.msra.mxu0 0
  %294 = vmatprep.mubr.bf16.mxu0 0
  %295 = vmatmul.mubr.bf16.gmra.mrb[0].mxu0 %v47
  %v296 = vpop.f32.mrb[0].mxu0
  %v297 = vadd.f32 0.0, %v296
  %v298 = vpop.f32.mrb[0].mxu0
  %v299 = vpop.f32.mrb[0].mxu0
  %v300 = vadd.f32 0.0, %v299
  %v301 = vpop.f32.mrb[0].mxu0
  %302 = vmatprep.mubr.bf16.mxu0 0
  %303 = vmatmul.mubr.bf16.gmra.mrb[0].mxu0 %v48
  %v304 = vpop.f32.mrb[0].mxu0
  %v305 = vadd.f32 0.0, %v304
  %v306 = vpop.f32.mrb[0].mxu0
  %v307 = vpop.f32.mrb[0].mxu0
  %v308 = vadd.f32 0.0, %v307
  %v309 = vpop.f32.mrb[0].mxu0
  %310 = vdwg.mxu0
  %v311 = vadd.f32 %v31, %v244
  %v312 = vadd.f32 %v32, %v246
  %v313 = vadd.f32 %v33, %v297
  %v314 = vadd.f32 %v34, %v248
  %v315 = vadd.f32 %v35, %v250
  %v316 = vadd.f32 %v36, %v300
  %v317 = vadd.f32 %v37, %v254
  %v318 = vadd.f32 %v38, %v256
  %v319 = vadd.f32 %v39, %v305
  %v320 = vadd.f32 %v40, %v258
  %v321 = vadd.f32 %v41, %v260
  %v322 = vadd.f32 %v42, %v308
  %323 = vst [vmem:[#allocation2] sm:$0xff] %v311
  %324 = vst [vmem:[#allocation2 + $0x8] sm:$0xff] %v312
  %325 = vst [vmem:[#allocation2 + $0x10] sm:$0xff] %v313
  %326 = vst [vmem:[#allocation2 + $0x18] sm:$0xff] %v314
  %327 = vst [vmem:[#allocation2 + $0x20] sm:$0xff] %v315
  %328 = vst [vmem:[#allocation2 + $0x28] sm:$0xff] %v316
  %329 = vst [vmem:[#allocation2 + $0x30] sm:$0xff] %v317
  %330 = vst [vmem:[#allocation2 + $0x38] sm:$0xff] %v318
  %331 = vst [vmem:[#allocation2 + $0x40] sm:$0xff] %v319
  %332 = vst [vmem:[#allocation2 + $0x48] sm:$0xff] %v320
  %333 = vst [vmem:[#allocation2 + $0x50] sm:$0xff] %v321
  %334 = vst [vmem:[#allocation2 + $0x58] sm:$0xff] %v322
  // Predicated region
  $region18: #{transformer_forward.39} parent=0 // pred_check
    %p335 = pneg %p15
  $region19: #{transformer_forward.39} parent=0 // pred_check_branch
    %337 = sbr.rel (%p335) target = $region21
  $region20: #{transformer_forward.39} parent=0 // pred_region
    %v338 = vld [vmem:[#allocation2] sm:$0xff]
    %v339 = vld [vmem:[#allocation2 + $0x8] sm:$0xff]
    %v340 = vld [vmem:[#allocation2 + $0x10] sm:$0xff]
    %v341 = vld [vmem:[#allocation2 + $0x18] sm:$0xff]
    %v342 = vld [vmem:[#allocation2 + $0x20] sm:$0xff]
    %v343 = vld [vmem:[#allocation2 + $0x28] sm:$0xff]
    %v344 = vld [vmem:[#allocation2 + $0x30] sm:$0xff]
    %v345 = vld [vmem:[#allocation2 + $0x38] sm:$0xff]
    %v346 = vld [vmem:[#allocation2 + $0x40] sm:$0xff]
    %v347 = vld [vmem:[#allocation2 + $0x48] sm:$0xff]
    %v348 = vld [vmem:[#allocation2 + $0x50] sm:$0xff]
    %v349 = vld [vmem:[#allocation2 + $0x58] sm:$0xff]
    %v350 = vld [vmem:[%s2] sm:$0x7]
    %v352 = vlaneseq
    %v353 = vshrl.u32 %v352, 7
    %v354 = vsub.s32 0, %v353
    %v355 = vrot.slane %v350, %v354
    %v356 = vlaneseq
    %v357 = vshrl.u32 %v356, 7
    %v358 = vsub.s32 1, %v357
    %v359 = vrot.slane %v350, %v358
    %v360 = vlaneseq
    %v361 = vshrl.u32 %v360, 7
    %v362 = vsub.s32 2, %v361
    %v363 = vrot.slane %v350, %v362
    %v367 = vadd.f32 %v338, %v355
    %v368 = vadd.f32 %v339, %v359
    %v369 = vadd.f32 %v340, %v363
    %v370 = vadd.f32 %v341, %v355
    %v371 = vadd.f32 %v342, %v359
    %v372 = vadd.f32 %v343, %v363
    %v373 = vadd.f32 %v344, %v355
    %v374 = vadd.f32 %v345, %v359
    %v375 = vadd.f32 %v346, %v363
    %v376 = vadd.f32 %v347, %v355
    %v377 = vadd.f32 %v348, %v359
    %v378 = vadd.f32 %v349, %v363
    %v379 = vpack.c.bf16 %v370, %v367
    %v380 = vpack.c.bf16 %v371, %v368
    %v381 = vpack.c.bf16 %v372, %v369
    %v382 = vpack.c.bf16 %v376, %v373
    %v383 = vpack.c.bf16 %v377, %v374
    %v384 = vpack.c.bf16 %v378, %v375
    %v391 = vunpack.c.l.b16 %v379
    %v392 = vunpack.c.l.b16 %v380
    %v393 = vunpack.c.l.b16 %v381
    %v394 = vunpack.c.h.b16 %v379
    %v395 = vunpack.c.h.b16 %v380
    %v396 = vunpack.c.h.b16 %v381
    %v397 = vunpack.c.l.b16 %v382
    %v398 = vunpack.c.l.b16 %v383
    %v399 = vunpack.c.l.b16 %v384
    %v400 = vunpack.c.h.b16 %v382
    %v401 = vunpack.c.h.b16 %v383
    %v402 = vunpack.c.h.b16 %v384
    %v403 = vpack.c.b16 %v392, %v391
    %v404 = vpack.c.b16 %v393, %v393
    %v405 = vpack.c.b16 %v395, %v394
    %v406 = vpack.c.b16 %v396, %v396
    %v407 = vpack.c.b16 %v398, %v397
    %v408 = vpack.c.b16 %v399, %v399
    %v409 = vpack.c.b16 %v401, %v400
    %v410 = vpack.c.b16 %v402, %v402
    %419 = vst [vmem:[%s3] sm:$0xff] %v403
    %420 = vst [vmem:[%s3 + $0x8] sm:$0xf] %v404
    %421 = vst [vmem:[%s3 + $0xc] sm:$0xff] %v405
    %422 = vst [vmem:[%s3 + $0x14] sm:$0xf] %v406
    %423 = vst [vmem:[%s3 + $0x18] sm:$0xff] %v407
    %424 = vst [vmem:[%s3 + $0x20] sm:$0xf] %v408
    %425 = vst [vmem:[%s3 + $0x24] sm:$0xff] %v409
    %426 = vst [vmem:[%s3 + $0x2c] sm:$0xf] %v410
  $region21: #{transformer_forward.39} parent=0 // pred_fallthru
    _
  // Predicated region
  $region22: #{transformer_forward.39} parent=0 // pred_check
    _
  $region23: #{transformer_forward.39} parent=0 // pred_check_branch
    %428 = sbr.rel (0) target = $region25
  $region24: #{transformer_forward.39} parent=0 // pred_region
    _
  $region25: #{transformer_forward.39} parent=0 // pred_fallthru
    _
  // Predicated region
  $region26: #{transformer_forward.39} parent=0 // pred_check
    _
  $region27: #{transformer_forward.39} parent=0 // pred_check_branch
    %430 = sbr.rel (0) target = $region29
  $region28: #{transformer_forward.39} parent=0 // pred_region
    _
  $region29: #{transformer_forward.39} parent=0 // pred_fallthru
    _

// kernel: transformer_forward.40
$region0: #{transformer_forward.40}
  #allocation0 [shape = 'u32[]', space=smem, size = 0x4, offset = 0x4, fixed_abs, tag = 'smem constant byte address 0x4 - core index']
  #allocation1 [shape = 'u32[144,128]{1,0:T(1,128)}', space=vmem, size = 0x12000, scoped, tag = 'internal scratch']
  #allocation2 [shape = 'f32[4,16,1]{2,1,0:T(8,128)}', space=vmem, size = 0x8000, scoped, tag = 'scratch operand']
  #allocation3 [shape = 'f32[4,16,1]{2,1,0:T(8,128)}', space=vmem, size = 0x8000, scoped, tag = 'scratch operand']
  #allocation4 [shape = 'f32[4,16,32]{2,1,0:T(8,128)}', space=vmem, size = 0x8000, scoped, tag = 'scratch operand']
  %s0 = inlined_call_operand.vmem [shape: f32[2,1,16], index: 0, kind: input, shape index: {}]
  %s1 = inlined_call_operand.vmem [shape: bf16[2,16,384], index: 1, kind: input, shape index: {}, may-alias: {1,2,3}]
  %s2 = inlined_call_operand.vmem [shape: bf16[2,16,384], index: 2, kind: input, shape index: {}, may-alias: {1,2,3}]
  %s3 = inlined_call_operand.vmem [shape: bf16[2,16,384], index: 3, kind: input, shape index: {}, may-alias: {1,2,3}]
  %s4 = inlined_call_operand.vmem [shape: bf16[2,16,128], index: 4, kind: output, shape index: {}]
  %s5 = sld [smem:[#allocation0]]
  $region180: #{transformer_forward.40} parent=0
    _
  %s7 = ssub.s32 1, %s5
  %s8 = scalar_select 0, %s7, %s5
  $region1: #{transformer_forward.40} parent=0
    #allocation5 [shape = 'u8[8192]{0}', space=vmem, size = 0x2000, scoped, tag = 'input window, operand 1']
    #allocation6 [shape = 'u8[8192]{0}', space=vmem, size = 0x2000, scoped, tag = 'input window, operand 2']
    #allocation7 [shape = 'u8[8192]{0}', space=vmem, size = 0x2000, scoped, tag = 'input window, operand 3']
    loop: start=0, step=1, limit=4
    $region2: #{transformer_forward.40} parent=1 // loop_pre_header
      _
    $region3: #{transformer_forward.40} parent=1 // loop_header
      %s10 = sphi 0, %s14
      %p11 = scmp.ge.s32.totalorder %s10, 4
      %s17 = sphi 0, %s36
      %s18 = sphi 0, %s32
      %s19 = sphi 0, %s28
      %s20 = sphi 0, %s17
      %s21 = sphi 0, %s18
      %s22 = sphi 0, %s19
      %s23 = sphi 0, %s20
      %s24 = sphi 0, %s21
      %s25 = sphi 0, %s22
      %s41 = sphi 0, %s43
      %s44 = sphi 0, %s41
      %s45 = sphi 0, %s44
      %s61 = sphi 0, %s45
      %s69 = sphi 0, %s71
      %s72 = sphi 0, %s69
      %s73 = sphi 0, %s72
      %s89 = sphi 0, %s73
      %s97 = sphi 0, %s99
      %s100 = sphi 0, %s97
      %s101 = sphi 0, %s100
      %s117 = sphi 0, %s101
      %s125 = sphi 0, %s127
      %s128 = sphi 0, %s125
      %s129 = sphi 0, %s128
      %s145 = sphi 0, %s129
      %s153 = sphi 0, %s155
      %s156 = sphi 0, %s153
      %s157 = sphi 0, %s156
      %s173 = sphi 0, %s157
    $region4: #{transformer_forward.40} parent=1 // loop_header_branch
      %13 = sbr.rel (%p11) target = $region8
    $region5: #{transformer_forward.40} parent=1 // loop_body
      %s15 = ssub.s32 %s10, 1
      %s16 = ssub.s32 %s10, 2
      %s26 = sadd.s32 1, %s19
      %p27 = scmp.ge.s32.totalorder %s26, 1
      %s28 = scalar_select %p27, 0, %s26
      %s29 = sadd.s32 1, %s18
      %s30 = scalar_select %p27, %s29, %s18
      %p31 = scmp.ge.s32.totalorder %s30, 1
      %s32 = scalar_select %p31, 0, %s30
      %s33 = sadd.s32 1, %s17
      %s34 = scalar_select %p31, %s33, %s17
      %p35 = scmp.ge.s32.totalorder %s34, 2
      %s36 = scalar_select %p35, 0, %s34
      %s37 = ssub.s32 %s17, %s36
      %s38 = ssub.s32 %s19, %s28
      %s39 = sor.u32 %s37, %s38
      %p40 = scmp.eq.s32.totalorder %s39, 0
      %s42 = sadd.s32 %s41, 1
      %s43 = scalar_select %p40, %s41, %s42
      %p46 = pneg %p40
      %p47 = scmp.eq.s32.totalorder %s10, 1
      %p48 = por %p46, %p47
      %p49 = scmp.ne.s32.totalorder %s41, %s44
      %p50 = scmp.eq.s32.totalorder %s10, 0
      %p51 = por %p49, %p50
      %p52 = scmp.ne.s32.totalorder %s41, %s44
      %p53 = scmp.eq.s32.totalorder %s15, 1
      %p54 = por %p52, %p53
      %p55 = scmp.ne.s32.totalorder %s44, %s45
      %p56 = scmp.eq.s32.totalorder %s15, 0
      %p57 = por %p55, %p56
      %p58 = scmp.ne.s32.totalorder %s44, %s45
      %p59 = scmp.eq.s32.totalorder %s16, 1
      %p60 = por %p58, %p59
      %p62 = scmp.ne.s32.totalorder %s45, %s61
      %p63 = scmp.eq.s32.totalorder %s16, 0
      %p64 = por %p62, %p63
      %s65 = ssub.s32 %s17, %s36
      %s66 = ssub.s32 %s18, %s32
      %s67 = sor.u32 %s65, %s66
      %p68 = scmp.eq.s32.totalorder %s67, 0
      %s70 = sadd.s32 %s69, 1
      %s71 = scalar_select %p68, %s69, %s70
      %p74 = pneg %p68
      %p75 = scmp.eq.s32.totalorder %s10, 1
      %p76 = por %p74, %p75
      %p77 = scmp.ne.s32.totalorder %s69, %s72
      %p78 = scmp.eq.s32.totalorder %s10, 0
      %p79 = por %p77, %p78
      %p80 = scmp.ne.s32.totalorder %s69, %s72
      %p81 = scmp.eq.s32.totalorder %s15, 1
      %p82 = por %p80, %p81
      %p83 = scmp.ne.s32.totalorder %s72, %s73
      %p84 = scmp.eq.s32.totalorder %s15, 0
      %p85 = por %p83, %p84
      %p86 = scmp.ne.s32.totalorder %s72, %s73
      %p87 = scmp.eq.s32.totalorder %s16, 1
      %p88 = por %p86, %p87
      %p90 = scmp.ne.s32.totalorder %s73, %s89
      %p91 = scmp.eq.s32.totalorder %s16, 0
      %p92 = por %p90, %p91
      %s93 = ssub.s32 %s17, %s36
      %s94 = ssub.s32 %s19, %s28
      %s95 = sor.u32 %s93, %s94
      %p96 = scmp.eq.s32.totalorder %s95, 0
      %s98 = sadd.s32 %s97, 1
      %s99 = scalar_select %p96, %s97, %s98
      %p102 = pneg %p96
      %p103 = scmp.eq.s32.totalorder %s10, 1
      %p104 = por %p102, %p103
      %p105 = scmp.ne.s32.totalorder %s97, %s100
      %p106 = scmp.eq.s32.totalorder %s10, 0
      %p107 = por %p105, %p106
      %p108 = scmp.ne.s32.totalorder %s97, %s100
      %p109 = scmp.eq.s32.totalorder %s15, 1
      %p110 = por %p108, %p109
      %p111 = scmp.ne.s32.totalorder %s100, %s101
      %p112 = scmp.eq.s32.totalorder %s15, 0
      %p113 = por %p111, %p112
      %p114 = scmp.ne.s32.totalorder %s100, %s101
      %p115 = scmp.eq.s32.totalorder %s16, 1
      %p116 = por %p114, %p115
      %p118 = scmp.ne.s32.totalorder %s101, %s117
      %p119 = scmp.eq.s32.totalorder %s16, 0
      %p120 = por %p118, %p119
      %s121 = ssub.s32 %s17, %s36
      %s122 = ssub.s32 %s19, %s28
      %s123 = sor.u32 %s121, %s122
      %p124 = scmp.eq.s32.totalorder %s123, 0
      %s126 = sadd.s32 %s125, 1
      %s127 = scalar_select %p124, %s125, %s126
      %p130 = pneg %p124
      %p131 = scmp.eq.s32.totalorder %s10, 1
      %p132 = por %p130, %p131
      %p133 = scmp.ne.s32.totalorder %s125, %s128
      %p134 = scmp.eq.s32.totalorder %s10, 0
      %p135 = por %p133, %p134
      %p136 = scmp.ne.s32.totalorder %s125, %s128
      %p137 = scmp.eq.s32.totalorder %s15, 1
      %p138 = por %p136, %p137
      %p139 = scmp.ne.s32.totalorder %s128, %s129
      %p140 = scmp.eq.s32.totalorder %s15, 0
      %p141 = por %p139, %p140
      %p142 = scmp.ne.s32.totalorder %s128, %s129
      %p143 = scmp.eq.s32.totalorder %s16, 1
      %p144 = por %p142, %p143
      %p146 = scmp.ne.s32.totalorder %s129, %s145
      %p147 = scmp.eq.s32.totalorder %s16, 0
      %p148 = por %p146, %p147
      %s149 = ssub.s32 %s17, %s36
      %s150 = ssub.s32 %s18, %s32
      %s151 = sor.u32 %s149, %s150
      %p152 = scmp.eq.s32.totalorder %s151, 0
      %s154 = sadd.s32 %s153, 1
      %s155 = scalar_select %p152, %s153, %s154
      %p158 = pneg %p152
      %p159 = scmp.eq.s32.totalorder %s10, 1
      %p160 = por %p158, %p159
      %p161 = scmp.ne.s32.totalorder %s153, %s156
      %p162 = scmp.eq.s32.totalorder %s10, 0
      %p163 = por %p161, %p162
      %p164 = scmp.ne.s32.totalorder %s153, %s156
      %p165 = scmp.eq.s32.totalorder %s15, 1
      %p166 = por %p164, %p165
      %p167 = scmp.ne.s32.totalorder %s156, %s157
      %p168 = scmp.eq.s32.totalorder %s15, 0
      %p169 = por %p167, %p168
      %p170 = scmp.ne.s32.totalorder %s156, %s157
      %p171 = scmp.eq.s32.totalorder %s16, 1
      %p172 = por %p170, %p171
      %p174 = scmp.ne.s32.totalorder %s157, %s173
      %p175 = scmp.eq.s32.totalorder %s16, 0
      %p176 = por %p174, %p175
      %p177 = scmp.le.s32.totalorder 1, %s10
      %p178 = scmp.lt.s32.totalorder %s10, 3
      %p179 = pnand %p177, %p178
      %p180 = pneg %p179
      // Predicated region
      $region9: #{transformer_forward.40} parent=5 // pred_check
        _
      $region10: #{transformer_forward.40} parent=5 // pred_check_branch
        %182 = sbr.rel (%p179) target = $region12
      $region11: #{transformer_forward.40} parent=5 // pred_region
        %s183 = ssub.s32 %s10, 1
      $region12: #{transformer_forward.40} parent=5 // pred_fallthru
        _
      %p184 = scmp.lt.s32.totalorder %s10, 2
      // Predicated region
      $region13: #{transformer_forward.40} parent=5 // pred_check
        %p185 = pneg %p184
      $region14: #{transformer_forward.40} parent=5 // pred_check_branch
        %187 = sbr.rel (%p185) target = $region16
      $region15: #{transformer_forward.40} parent=5 // pred_region
        // Predicated region
        $region17: #{transformer_forward.40} parent=15 // pred_check
          %p188 = pneg %p51
        $region18: #{transformer_forward.40} parent=15 // pred_check_branch
          %190 = sbr.rel (%p188) target = $region20
        $region19: #{transformer_forward.40} parent=15 // pred_region
          %p191 = scmp.lt.s32.totalorder %s17, 1
          %s192 = scalar_select %p191, %s17, 1
          %p193 = scmp.lt.s32.totalorder %s19, 0
          %s194 = scalar_select %p193, %s19, 0
          %s195 = sadd.s32 %s194, %s192
          %s196 = scalar_lea.vmem %s0, %s195
        $region20: #{transformer_forward.40} parent=15 // pred_fallthru
          _
        // Predicated region
        $region21: #{transformer_forward.40} parent=15 // pred_check
          %p197 = pneg %p79
        $region22: #{transformer_forward.40} parent=15 // pred_check_branch
          %199 = sbr.rel (%p197) target = $region24
        $region23: #{transformer_forward.40} parent=15 // pred_region
          %s200 = sand.u32 %s69, 1
          %s201 = sand.u32 %s69, 1
          %s202 = smul.addr %s201, 8
          %s203 = scalar_lea.vmem [#allocation5], %s202
          %s204 = smul.u32 2, %s18
          %s205 = smul.addr %s204, 3
          %s206 = smul.addr %s17, 6
          %s207 = sadd.s32 %s205, %s206
          %s208 = smul.addr %s207, 4
          %s209 = scalar_lea.vmem %s1, %s208
          // Predicated region
          $region25: #{transformer_forward.40} parent=23 // pred_check
            _
          $region26: #{transformer_forward.40} parent=23 // pred_check_branch
            %211 = sbr.rel (0) target = $region28
          $region27: #{transformer_forward.40} parent=23 // pred_region
            // Predicated region
            $region29: #{transformer_forward.40} parent=27 // pred_check
              _
            $region30: #{transformer_forward.40} parent=27 // pred_check_branch
              %213 = sbr.rel target = $region32
            $region31: #{transformer_forward.40} parent=27 // pred_region
              // Predicated region
              $region44: #{transformer_forward.40} parent=31 // pred_check
                _
              $region45: #{transformer_forward.40} parent=31 // pred_check_branch
                %230 = sbr.rel (0) target = $region47
              $region46: #{transformer_forward.40} parent=31 // pred_region
                loop: start=0, step=1, limit=1
                $region48: #{transformer_forward.40} parent=46 // loop_pre_header
                  _
                $region49: #{transformer_forward.40} parent=46 // loop_header
                  %s232 = sphi 0, %s236
                  %p233 = scmp.ge.s32.totalorder %s232, 1
                  %s237 = sphi %s209, %s209
                  %s238 = sphi %s203, %s203
                $region50: #{transformer_forward.40} parent=46 // loop_header_branch
                  %235 = sbr.rel (%p233) target = $region54
                $region51: #{transformer_forward.40} parent=46 // loop_body
                  _
                $region52: #{transformer_forward.40} parent=46 // loop_footer
                  %s236 = sadd.s32 1, %s232
                $region53: #{transformer_forward.40} parent=46 // loop_footer_branch
                  %231 = sbr.rel target = $region49
                $region54: #{transformer_forward.40} parent=46 // loop_exit
                  _
                loop: start=0, step=1, limit=1
                $region55: #{transformer_forward.40} parent=46 // loop_pre_header
                  _
                $region56: #{transformer_forward.40} parent=46 // loop_header
                  %s241 = sphi 0, %s245
                  %p242 = scmp.ge.s32.totalorder %s241, 1
                  %s246 = sphi %s209, %s209
                  %s247 = sphi %s203, %s203
                $region57: #{transformer_forward.40} parent=46 // loop_header_branch
                  %244 = sbr.rel (%p242) target = $region61
                $region58: #{transformer_forward.40} parent=46 // loop_body
                  %v248 = vld [vmem:[%s246] sm:$0xf]
                  %249 = vst [vmem:[%s247] sm:$0xf] %v248
                  %v250 = vld [vmem:[%s246 + $0xc] sm:$0xf]
                  %251 = vst [vmem:[%s247 + $0x4] sm:$0xf] %v250
                $region59: #{transformer_forward.40} parent=46 // loop_footer
                  %s245 = sadd.s32 1, %s241
                $region60: #{transformer_forward.40} parent=46 // loop_footer_branch
                  %240 = sbr.rel target = $region56
                $region61: #{transformer_forward.40} parent=46 // loop_exit
                  _
              $region47: #{transformer_forward.40} parent=31 // pred_fallthru
                _
            $region32: #{transformer_forward.40} parent=27 // pred_fallthru
              _
            // Predicated region
            $region33: #{transformer_forward.40} parent=27 // pred_check
              _
            $region34: #{transformer_forward.40} parent=27 // pred_check_branch
              %215 = sbr.rel (0) target = $region36
            $region35: #{transformer_forward.40} parent=27 // pred_region
              loop: start=0, step=1, limit=1
              $region37: #{transformer_forward.40} parent=35 // loop_pre_header
                _
              $region38: #{transformer_forward.40} parent=35 // loop_header
                %s218 = sphi 0, %s222
                %p219 = scmp.ge.s32.totalorder %s218, 1
                %s223 = sphi %s209, %s209
                %s224 = sphi %s203, %s203
              $region39: #{transformer_forward.40} parent=35 // loop_header_branch
                %221 = sbr.rel (%p219) target = $region43
              $region40: #{transformer_forward.40} parent=35 // loop_body
                %v225 = vld [vmem:[%s223] sm:$0xf]
                %226 = vst [vmem:[%s224] sm:$0xf] %v225
                %v227 = vld [vmem:[%s223 + $0xc] sm:$0xf]
                %228 = vst [vmem:[%s224 + $0x4] sm:$0xf] %v227
              $region41: #{transformer_forward.40} parent=35 // loop_footer
                %s222 = sadd.s32 1, %s218
              $region42: #{transformer_forward.40} parent=35 // loop_footer_branch
                %217 = sbr.rel target = $region38
              $region43: #{transformer_forward.40} parent=35 // loop_exit
                _
            $region36: #{transformer_forward.40} parent=27 // pred_fallthru
              _
          $region28: #{transformer_forward.40} parent=23 // pred_fallthru
            _
          %252 = vnop
        $region24: #{transformer_forward.40} parent=15 // pred_fallthru
          _
        // Predicated region
        $region62: #{transformer_forward.40} parent=15 // pred_check
          %p253 = pneg %p107
        $region63: #{transformer_forward.40} parent=15 // pred_check_branch
          %255 = sbr.rel (%p253) target = $region65
        $region64: #{transformer_forward.40} parent=15 // pred_region
          %s256 = sand.u32 %s97, 1
          %s257 = sand.u32 %s97, 1
          %s258 = smul.addr %s257, 8
          %s259 = scalar_lea.vmem [#allocation6], %s258
          %s260 = smul.u32 2, %s19
          %s261 = smul.addr %s260, 3
          %s262 = sadd.s32 1, %s261
          %s263 = smul.addr %s17, 6
          %s264 = sadd.s32 %s262, %s263
          %s265 = smul.addr %s264, 4
          %s266 = scalar_lea.vmem %s2, %s265
          // Predicated region
          $region66: #{transformer_forward.40} parent=64 // pred_check
            _
          $region67: #{transformer_forward.40} parent=64 // pred_check_branch
            %268 = sbr.rel (0) target = $region69
          $region68: #{transformer_forward.40} parent=64 // pred_region
            // Predicated region
            $region70: #{transformer_forward.40} parent=68 // pred_check
              _
            $region71: #{transformer_forward.40} parent=68 // pred_check_branch
              %270 = sbr.rel target = $region73
            $region72: #{transformer_forward.40} parent=68 // pred_region
              // Predicated region
              $region85: #{transformer_forward.40} parent=72 // pred_check
                _
              $region86: #{transformer_forward.40} parent=72 // pred_check_branch
                %287 = sbr.rel (0) target = $region88
              $region87: #{transformer_forward.40} parent=72 // pred_region
                loop: start=0, step=1, limit=1
                $region89: #{transformer_forward.40} parent=87 // loop_pre_header
                  _
                $region90: #{transformer_forward.40} parent=87 // loop_header
                  %s289 = sphi 0, %s293
                  %p290 = scmp.ge.s32.totalorder %s289, 1
                  %s294 = sphi %s266, %s266
                  %s295 = sphi %s259, %s259
                $region91: #{transformer_forward.40} parent=87 // loop_header_branch
                  %292 = sbr.rel (%p290) target = $region95
                $region92: #{transformer_forward.40} parent=87 // loop_body
                  _
                $region93: #{transformer_forward.40} parent=87 // loop_footer
                  %s293 = sadd.s32 1, %s289
                $region94: #{transformer_forward.40} parent=87 // loop_footer_branch
                  %288 = sbr.rel target = $region90
                $region95: #{transformer_forward.40} parent=87 // loop_exit
                  _
                loop: start=0, step=1, limit=1
                $region96: #{transformer_forward.40} parent=87 // loop_pre_header
                  _
                $region97: #{transformer_forward.40} parent=87 // loop_header
                  %s298 = sphi 0, %s302
                  %p299 = scmp.ge.s32.totalorder %s298, 1
                  %s303 = sphi %s266, %s266
                  %s304 = sphi %s259, %s259
                $region98: #{transformer_forward.40} parent=87 // loop_header_branch
                  %301 = sbr.rel (%p299) target = $region102
                $region99: #{transformer_forward.40} parent=87 // loop_body
                  %v305 = vld [vmem:[%s303] sm:$0xf]
                  %306 = vst [vmem:[%s304] sm:$0xf] %v305
                  %v307 = vld [vmem:[%s303 + $0xc] sm:$0xf]
                  %308 = vst [vmem:[%s304 + $0x4] sm:$0xf] %v307
                $region100: #{transformer_forward.40} parent=87 // loop_footer
                  %s302 = sadd.s32 1, %s298
                $region101: #{transformer_forward.40} parent=87 // loop_footer_branch
                  %297 = sbr.rel target = $region97
                $region102: #{transformer_forward.40} parent=87 // loop_exit
                  _
              $region88: #{transformer_forward.40} parent=72 // pred_fallthru
                _
            $region73: #{transformer_forward.40} parent=68 // pred_fallthru
              _
            // Predicated region
            $region74: #{transformer_forward.40} parent=68 // pred_check
              _
            $region75: #{transformer_forward.40} parent=68 // pred_check_branch
              %272 = sbr.rel (0) target = $region77
            $region76: #{transformer_forward.40} parent=68 // pred_region
              loop: start=0, step=1, limit=1
              $region78: #{transformer_forward.40} parent=76 // loop_pre_header
                _
              $region79: #{transformer_forward.40} parent=76 // loop_header
                %s275 = sphi 0, %s279
                %p276 = scmp.ge.s32.totalorder %s275, 1
                %s280 = sphi %s266, %s266
                %s281 = sphi %s259, %s259
              $region80: #{transformer_forward.40} parent=76 // loop_header_branch
                %278 = sbr.rel (%p276) target = $region84
              $region81: #{transformer_forward.40} parent=76 // loop_body
                %v282 = vld [vmem:[%s280] sm:$0xf]
                %283 = vst [vmem:[%s281] sm:$0xf] %v282
                %v284 = vld [vmem:[%s280 + $0xc] sm:$0xf]
                %285 = vst [vmem:[%s281 + $0x4] sm:$0xf] %v284
              $region82: #{transformer_forward.40} parent=76 // loop_footer
                %s279 = sadd.s32 1, %s275
              $region83: #{transformer_forward.40} parent=76 // loop_footer_branch
                %274 = sbr.rel target = $region79
              $region84: #{transformer_forward.40} parent=76 // loop_exit
                _
            $region77: #{transformer_forward.40} parent=68 // pred_fallthru
              _
          $region69: #{transformer_forward.40} parent=64 // pred_fallthru
            _
          %309 = vnop
        $region65: #{transformer_forward.40} parent=15 // pred_fallthru
          _
        // Predicated region
        $region103: #{transformer_forward.40} parent=15 // pred_check
          %p310 = pneg %p135
        $region104: #{transformer_forward.40} parent=15 // pred_check_branch
          %312 = sbr.rel (%p310) target = $region106
        $region105: #{transformer_forward.40} parent=15 // pred_region
          %s313 = sand.u32 %s125, 1
          %s314 = sand.u32 %s125, 1
          %s315 = smul.addr %s314, 8
          %s316 = scalar_lea.vmem [#allocation7], %s315
          %s317 = smul.u32 2, %s19
          %s318 = smul.addr %s317, 3
          %s319 = sadd.s32 2, %s318
          %s320 = smul.addr %s17, 6
          %s321 = sadd.s32 %s319, %s320
          %s322 = smul.addr %s321, 4
          %s323 = scalar_lea.vmem %s3, %s322
          // Predicated region
          $region107: #{transformer_forward.40} parent=105 // pred_check
            _
          $region108: #{transformer_forward.40} parent=105 // pred_check_branch
            %325 = sbr.rel (0) target = $region110
          $region109: #{transformer_forward.40} parent=105 // pred_region
            // Predicated region
            $region111: #{transformer_forward.40} parent=109 // pred_check
              _
            $region112: #{transformer_forward.40} parent=109 // pred_check_branch
              %327 = sbr.rel target = $region114
            $region113: #{transformer_forward.40} parent=109 // pred_region
              // Predicated region
              $region126: #{transformer_forward.40} parent=113 // pred_check
                _
              $region127: #{transformer_forward.40} parent=113 // pred_check_branch
                %344 = sbr.rel (0) target = $region129
              $region128: #{transformer_forward.40} parent=113 // pred_region
                loop: start=0, step=1, limit=1
                $region130: #{transformer_forward.40} parent=128 // loop_pre_header
                  _
                $region131: #{transformer_forward.40} parent=128 // loop_header
                  %s346 = sphi 0, %s350
                  %p347 = scmp.ge.s32.totalorder %s346, 1
                  %s351 = sphi %s323, %s323
                  %s352 = sphi %s316, %s316
                $region132: #{transformer_forward.40} parent=128 // loop_header_branch
                  %349 = sbr.rel (%p347) target = $region136
                $region133: #{transformer_forward.40} parent=128 // loop_body
                  _
                $region134: #{transformer_forward.40} parent=128 // loop_footer
                  %s350 = sadd.s32 1, %s346
                $region135: #{transformer_forward.40} parent=128 // loop_footer_branch
                  %345 = sbr.rel target = $region131
                $region136: #{transformer_forward.40} parent=128 // loop_exit
                  _
                loop: start=0, step=1, limit=1
                $region137: #{transformer_forward.40} parent=128 // loop_pre_header
                  _
                $region138: #{transformer_forward.40} parent=128 // loop_header
                  %s355 = sphi 0, %s359
                  %p356 = scmp.ge.s32.totalorder %s355, 1
                  %s360 = sphi %s323, %s323
                  %s361 = sphi %s316, %s316
                $region139: #{transformer_forward.40} parent=128 // loop_header_branch
                  %358 = sbr.rel (%p356) target = $region143
                $region140: #{transformer_forward.40} parent=128 // loop_body
                  %v362 = vld [vmem:[%s360] sm:$0xf]
                  %363 = vst [vmem:[%s361] sm:$0xf] %v362
                  %v364 = vld [vmem:[%s360 + $0xc] sm:$0xf]
                  %365 = vst [vmem:[%s361 + $0x4] sm:$0xf] %v364
                $region141: #{transformer_forward.40} parent=128 // loop_footer
                  %s359 = sadd.s32 1, %s355
                $region142: #{transformer_forward.40} parent=128 // loop_footer_branch
                  %354 = sbr.rel target = $region138
                $region143: #{transformer_forward.40} parent=128 // loop_exit
                  _
              $region129: #{transformer_forward.40} parent=113 // pred_fallthru
                _
            $region114: #{transformer_forward.40} parent=109 // pred_fallthru
              _
            // Predicated region
            $region115: #{transformer_forward.40} parent=109 // pred_check
              _
            $region116: #{transformer_forward.40} parent=109 // pred_check_branch
              %329 = sbr.rel (0) target = $region118
            $region117: #{transformer_forward.40} parent=109 // pred_region
              loop: start=0, step=1, limit=1
              $region119: #{transformer_forward.40} parent=117 // loop_pre_header
                _
              $region120: #{transformer_forward.40} parent=117 // loop_header
                %s332 = sphi 0, %s336
                %p333 = scmp.ge.s32.totalorder %s332, 1
                %s337 = sphi %s323, %s323
                %s338 = sphi %s316, %s316
              $region121: #{transformer_forward.40} parent=117 // loop_header_branch
                %335 = sbr.rel (%p333) target = $region125
              $region122: #{transformer_forward.40} parent=117 // loop_body
                %v339 = vld [vmem:[%s337] sm:$0xf]
                %340 = vst [vmem:[%s338] sm:$0xf] %v339
                %v341 = vld [vmem:[%s337 + $0xc] sm:$0xf]
                %342 = vst [vmem:[%s338 + $0x4] sm:$0xf] %v341
              $region123: #{transformer_forward.40} parent=117 // loop_footer
                %s336 = sadd.s32 1, %s332
              $region124: #{transformer_forward.40} parent=117 // loop_footer_branch
                %331 = sbr.rel target = $region120
              $region125: #{transformer_forward.40} parent=117 // loop_exit
                _
            $region118: #{transformer_forward.40} parent=109 // pred_fallthru
              _
          $region110: #{transformer_forward.40} parent=105 // pred_fallthru
            _
          %366 = vnop
        $region106: #{transformer_forward.40} parent=15 // pred_fallthru
          _
      $region16: #{transformer_forward.40} parent=5 // pred_fallthru
        _
      %p367 = scmp.le.s32.totalorder 1, %s10
      %p368 = scmp.lt.s32.totalorder %s10, 3
      %p369 = pnand %p367, %p368
      %p370 = pneg %p369
      // Predicated region
      $region144: #{transformer_forward.40} parent=5 // pred_check
        _
      $region145: #{transformer_forward.40} parent=5 // pred_check_branch
        %372 = sbr.rel (%p369) target = $region147
      $region146: #{transformer_forward.40} parent=5 // pred_region
        %s373 = ssub.s32 %s10, 1
        %s374 = sand.u32 %s72, 1
        %s375 = sand.u32 %s72, 1
        %s376 = smul.addr %s375, 8
        %s377 = scalar_lea.vmem [#allocation5], %s376
        // Predicated region
        $region148: #{transformer_forward.40} parent=146 // pred_check
          %p378 = pneg %p85
        $region149: #{transformer_forward.40} parent=146 // pred_check_branch
          %380 = sbr.rel (%p378) target = $region151
        $region150: #{transformer_forward.40} parent=146 // pred_region
          _
        $region151: #{transformer_forward.40} parent=146 // pred_fallthru
          _
        %s381 = sand.u32 %s100, 1
        %s382 = sand.u32 %s100, 1
        %s383 = smul.addr %s382, 8
        %s384 = scalar_lea.vmem [#allocation6], %s383
        // Predicated region
        $region152: #{transformer_forward.40} parent=146 // pred_check
          %p385 = pneg %p113
        $region153: #{transformer_forward.40} parent=146 // pred_check_branch
          %387 = sbr.rel (%p385) target = $region155
        $region154: #{transformer_forward.40} parent=146 // pred_region
          _
        $region155: #{transformer_forward.40} parent=146 // pred_fallthru
          _
        %s388 = sand.u32 %s128, 1
        %s389 = sand.u32 %s128, 1
        %s390 = smul.addr %s389, 8
        %s391 = scalar_lea.vmem [#allocation7], %s390
        // Predicated region
        $region156: #{transformer_forward.40} parent=146 // pred_check
          %p392 = pneg %p141
        $region157: #{transformer_forward.40} parent=146 // pred_check_branch
          %394 = sbr.rel (%p392) target = $region159
        $region158: #{transformer_forward.40} parent=146 // pred_region
          _
        $region159: #{transformer_forward.40} parent=146 // pred_fallthru
          _
        %p395 = scmp.lt.s32.totalorder %s20, 1
        %s396 = scalar_select %p395, %s20, 1
        %p397 = scmp.lt.s32.totalorder %s22, 0
        %s398 = scalar_select %p397, %s22, 0
        %s399 = sadd.s32 %s398, %s396
        %s400 = scalar_lea.vmem %s0, %s399
        %p401 = pneg %p57
        %p402 = pneg %p54
        %s403 = sand.u32 %s72, 1
        %s404 = sand.u32 %s72, 1
        %s405 = smul.addr %s404, 8
        %s406 = scalar_lea.vmem [#allocation5], %s405
        %p407 = pneg %p85
        %p408 = pneg %p82
        %s409 = sand.u32 %s100, 1
        %s410 = sand.u32 %s100, 1
        %s411 = smul.addr %s410, 8
        %s412 = scalar_lea.vmem [#allocation6], %s411
        %p413 = pneg %p113
        %p414 = pneg %p110
        %s415 = sand.u32 %s128, 1
        %s416 = sand.u32 %s128, 1
        %s417 = smul.addr %s416, 8
        %s418 = scalar_lea.vmem [#allocation7], %s417
        %p419 = pneg %p141
        %p420 = pneg %p138
        %p421 = pneg %p169
        %p422 = pneg %p166
        %s423 = smul.u32 2, %s21
        %p424 = scmp.lt.s32.totalorder %s20, 1
        %s425 = scalar_select %p424, %s20, 1
        %p426 = scmp.lt.s32.totalorder %s423, 1
        %s427 = scalar_select %p426, %s423, 1
        %s428 = smul.addr %s425, 2
        %s429 = sadd.s32 %s427, %s428
        %s430 = smul.addr %s429, 4
        %s431 = scalar_lea.vmem %s4, %s430
        %p432 = scmp.lt.s32.totalorder %s20, 1
        %s433 = scalar_select %p432, %s20, 1
        %p434 = scmp.lt.s32.totalorder %s22, 0
        %s435 = scalar_select %p434, %s22, 0
        %s436 = sadd.s32 %s435, %s433
        %s437 = scalar_lea.vmem %s0, %s436
        %s438 = smul.u32 2, %s21
        %s439 = smul.u32 2, %s22
        %s440 = smul.u32 2, %s22
        %s441 = smul.u32 2, %s21
        %p442 = scmp.lt.s32.totalorder %s20, 1
        %s443 = scalar_select %p442, %s20, 1
        %p444 = scmp.lt.s32.totalorder %s441, 1
        %s445 = scalar_select %p444, %s441, 1
        %s446 = smul.addr %s443, 2
        %s447 = sadd.s32 %s445, %s446
        %s448 = smul.addr %s447, 4
        %s449 = scalar_lea.vmem %s4, %s448
        %s450 = smul.u32 2, %s21
        %p452 = scmp.eq.s32.totalorder %s22, 0
        // Predicated region
        $region160: #{transformer_forward.40} parent=146 // pred_check
          %p453 = pneg %p452
        $region161: #{transformer_forward.40} parent=146 // pred_check_branch
          %455 = sbr.rel (%p453) target = $region163
        $region162: #{transformer_forward.40} parent=146 // pred_region
          %vm456 = vcmask 7168
          %457 = vst.msk [vmem:[#allocation2] sm:$0xff] %vm456, -inf
          %458 = vst.msk [vmem:[#allocation2 + $0x8] sm:$0xff] %vm456, -inf
          %459 = vst.msk [vmem:[#allocation2 + $0x10] sm:$0xff] %vm456, -inf
          %460 = vst.msk [vmem:[#allocation2 + $0x18] sm:$0xff] %vm456, -inf
          %461 = vst.msk [vmem:[#allocation2 + $0x20] sm:$0xff] %vm456, -inf
          %462 = vst.msk [vmem:[#allocation2 + $0x28] sm:$0xff] %vm456, -inf
          %463 = vst.msk [vmem:[#allocation2 + $0x30] sm:$0xff] %vm456, -inf
          %464 = vst.msk [vmem:[#allocation2 + $0x38] sm:$0xff] %vm456, -inf
          %465 = vst.msk [vmem:[#allocation3] sm:$0xff] %vm456, 0.0
          %466 = vst.msk [vmem:[#allocation3 + $0x8] sm:$0xff] %vm456, 0.0
          %467 = vst.msk [vmem:[#allocation3 + $0x10] sm:$0xff] %vm456, 0.0
          %468 = vst.msk [vmem:[#allocation3 + $0x18] sm:$0xff] %vm456, 0.0
          %469 = vst.msk [vmem:[#allocation3 + $0x20] sm:$0xff] %vm456, 0.0
          %470 = vst.msk [vmem:[#allocation3 + $0x28] sm:$0xff] %vm456, 0.0
          %471 = vst.msk [vmem:[#allocation3 + $0x30] sm:$0xff] %vm456, 0.0
          %472 = vst.msk [vmem:[#allocation3 + $0x38] sm:$0xff] %vm456, 0.0
          %vm473 = vcmask 261120
          %474 = vst.msk [vmem:[#allocation4] sm:$0xff] %vm473, 0.0
          %475 = vst.msk [vmem:[#allocation4 + $0x8] sm:$0xff] %vm473, 0.0
          %476 = vst.msk [vmem:[#allocation4 + $0x10] sm:$0xff] %vm473, 0.0
          %477 = vst.msk [vmem:[#allocation4 + $0x18] sm:$0xff] %vm473, 0.0
          %478 = vst.msk [vmem:[#allocation4 + $0x20] sm:$0xff] %vm473, 0.0
          %479 = vst.msk [vmem:[#allocation4 + $0x28] sm:$0xff] %vm473, 0.0
          %480 = vst.msk [vmem:[#allocation4 + $0x30] sm:$0xff] %vm473, 0.0
          %481 = vst.msk [vmem:[#allocation4 + $0x38] sm:$0xff] %vm473, 0.0
        $region163: #{transformer_forward.40} parent=146 // pred_fallthru
          _
        %v482 = vld [vmem:[%s377] sm:$0xf]
        %v483 = vld [vmem:[%s377 + $0x4] sm:$0xf]
        %v484 = vld [vmem:[%s384] sm:$0xf]
        %v485 = vld [vmem:[%s384 + $0x4] sm:$0xf]
        %v486 = vld [vmem:[%s391] sm:$0xf]
        %v487 = vld [vmem:[%s391 + $0x4] sm:$0xf]
        %v488 = vld [vmem:[%s437] sm:$0x1]
        %s489 = smul.u32 %s21, 16
        %s490 = smul.u32 %s22, 16
        %v491 = vlaneseq
        %v492 = vshrl.u32 %v491, 7
        %v493 = vadd.s32 %v492, 8
        %v494 = vstv %s489
        %v495 = vadd.s32 %v494, %v492
        %v496 = vadd.s32 %v494, %v493
        %v497 = vlaneseq
        %v498 = vand.u32 %v497, 127
        %v499 = vstv %s490
        %v500 = vadd.s32 %v499, %v498
        %vm501 = vcmp.gt.s32.totalorder %v500, %v495
        %vm502 = vcmp.gt.s32.totalorder %v500, %v496
        %v503 = vsel %vm501, -1e+09, 0.0
        %v504 = vsel %vm502, -1e+09, 0.0
        %v506 = vlaneseq
        %v507 = vshrl.u32 %v506, 7
        %v508 = vsub.s32 0, %v507
        %v509 = vrot.slane %v488, %v508
        %v511 = vadd.f32 %v509, %v503
        %v512 = vadd.f32 %v509, %v504
        %v515 = vunpack.c.l.b16 %v482
        %v516 = vunpack.c.l.b16 %v483
        %v517 = vpack.c.b16 %v516, %v515
        %v520 = vunpack.c.l.b16 %v484
        %v521 = vunpack.c.l.b16 %v485
        %v522 = vpack.c.b16 %v521, %v520
        %vm523 = vcmask 261120
        %v525 = vsel %vm523, %v517, 0
        %v528 = vsel %vm523, %v522, 0
        %530 = vmatprep.subr.bf16.mxu0 0
        %531 = vmatpush1.bf16.xpose.msra.mxu0 %v528
        %532 = vmatprep.subr.bf16.mxu0 0
        %533 = vmatpush1.bf16.xpose.msra.mxu0 0
        %534 = vmatprep.subr.bf16.mxu0 0
        %535 = vmatpush1.bf16.xpose.msra.mxu0 0
        %536 = vmatprep.subr.bf16.mxu0 0
        %537 = vmatpush1.bf16.xpose.msra.mxu0 0
        %538 = vmatprep.subr.bf16.mxu0 0
        %539 = vmatpush1.bf16.xpose.msra.mxu0 0
        %540 = vmatprep.subr.bf16.mxu0 0
        %541 = vmatpush1.bf16.xpose.msra.mxu0 0
        %542 = vmatprep.subr.bf16.mxu0 0
        %543 = vmatpush1.bf16.xpose.msra.mxu0 0
        %544 = vmatprep.subr.bf16.mxu0 0
        %545 = vmatpush1.bf16.xpose.msra.mxu0 0
        %546 = vmatprep.subr.bf16.mxu0 0
        %547 = vmatpush1.bf16.xpose.msra.mxu0 0
        %548 = vmatprep.subr.bf16.mxu0 0
        %549 = vmatpush1.bf16.xpose.msra.mxu0 0
        %550 = vmatprep.subr.bf16.mxu0 0
        %551 = vmatpush1.bf16.xpose.msra.mxu0 0
        %552 = vmatprep.subr.bf16.mxu0 0
        %553 = vmatpush1.bf16.xpose.msra.mxu0 0
        %554 = vmatprep.subr.bf16.mxu0 0
        %555 = vmatpush1.bf16.xpose.msra.mxu0 0
        %556 = vmatprep.subr.bf16.mxu0 0
        %557 = vmatpush1.bf16.xpose.msra.mxu0 0
        %558 = vmatprep.subr.bf16.mxu0 0
        %559 = vmatpush1.bf16.xpose.msra.mxu0 0
        %560 = vmatprep.subr.bf16.mxu0 0
        %561 = vmatpush1.bf16.xpose.msra.mxu0 0
        %562 = vmatprep.mubr.bf16.mxu0 0
        %563 = vmatmul.mubr.bf16.gmra.mrb[0].mxu0 %v525
        %v564 = vpop.f32.mrb[0].mxu0
        %v565 = vadd.f32 %v511, %v564
        %v566 = vpop.f32.mrb[0].mxu0
        %v567 = vpop.f32.mrb[0].mxu0
        %v568 = vadd.f32 %v512, %v567
        %v569 = vpop.f32.mrb[0].mxu0
        %570 = vdwg.mxu0
        %v571 = vld [vmem:[#allocation2] sm:$0xff]
        %v572 = vld [vmem:[#allocation2 + $0x8] sm:$0xff]
        %vm573 = vcmask 130048
        %v574 = vsel %vm573, %v565, -inf
        %575 = vmax.xlane.f32.xlu0 %v574
        %v576 = vpop.xlane.xlu0 %575
        %v577 = vsel %vm573, %v568, -inf
        %578 = vmax.xlane.f32.xlu0 %v577
        %v579 = vpop.xlane.xlu0 %578
        %v580 = vmax.f32 %v571, %v576
        %v581 = vmax.f32 %v572, %v579
        %v582 = vsub.f32 %v571, %v580
        %v583 = vsub.f32 %v572, %v581
        %v584 = vmul.f32 %v582, 1.442695
        %v585 = vpow.pop %v584
        %v586 = vmul.f32 %v583, 1.442695
        %v587 = vpow.pop %v586
        %589 = vset.pattern.permute.xlu0 0
        %590 = vperm.xlu0 %589, %v580
        %v591 = vpop.permute.xlu0 %590
        %594 = vset.pattern.permute.xlu0 0
        %595 = vperm.xlu0 %594, %v581
        %v596 = vpop.permute.xlu0 %595
        %v598 = vsub.f32 %v565, %v591
        %v599 = vsub.f32 %v568, %v596
        %v600 = vmul.f32 %v598, 1.442695
        %v601 = vpow.pop %v600
        %v602 = vmul.f32 %v599, 1.442695
        %v603 = vpow.pop %v602
        %v604 = vld [vmem:[#allocation3] sm:$0xff]
        %v605 = vld [vmem:[#allocation3 + $0x8] sm:$0xff]
        %v606 = vmul.f32 %v585, %v604
        %v607 = vmul.f32 %v587, %v605
        %v608 = vsel %vm573, %v601, 0.0
        %609 = vadd.xlane.f32.xlu0 %v608
        %v610 = vpop.xlane.xlu0 %609
        %v611 = vsel %vm573, %v603, 0.0
        %612 = vadd.xlane.f32.xlu0 %v611
        %v613 = vpop.xlane.xlu0 %612
        %v614 = vadd.f32 %v606, %v610
        %v615 = vadd.f32 %v607, %v613
        %vm616 = vcmask 7168
        %617 = vst.msk [vmem:[#allocation3] sm:$0xff] %vm616, %v614
        %618 = vst.msk [vmem:[#allocation3 + $0x8] sm:$0xff] %vm616, %v615
        %v619 = vld [vmem:[#allocation4] sm:$0xff]
        %v620 = vld [vmem:[#allocation4 + $0x8] sm:$0xff]
        %622 = vset.pattern.permute.xlu0 0
        %623 = vperm.xlu0 %622, %v585
        %v624 = vpop.permute.xlu0 %623
        %627 = vset.pattern.permute.xlu0 0
        %628 = vperm.xlu0 %627, %v587
        %v629 = vpop.permute.xlu0 %628
        %v631 = vmul.f32 %v624, %v619
        %v632 = vmul.f32 %v629, %v620
        %v633 = vpack.c.bf16 %v603, %v601
        %v636 = vunpack.c.l.b16 %v486
        %v637 = vunpack.c.l.b16 %v487
        %v638 = vpack.c.b16 %v637, %v636
        %v641 = vsel %vm573, %v633, 0
        %643 = vmatprep.subr.bf16.mxu0 0
        %644 = vmatpush1.bf16.msra.mxu0 %v638
        %645 = vmatprep.subr.bf16.mxu0 0
        %646 = vmatpush1.bf16.msra.mxu0 0
        %647 = vmatprep.subr.bf16.mxu0 0
        %648 = vmatpush1.bf16.msra.mxu0 0
        %649 = vmatprep.subr.bf16.mxu0 0
        %650 = vmatpush1.bf16.msra.mxu0 0
        %651 = vmatprep.subr.bf16.mxu0 0
        %652 = vmatpush1.bf16.msra.mxu0 0
        %653 = vmatprep.subr.bf16.mxu0 0
        %654 = vmatpush1.bf16.msra.mxu0 0
        %655 = vmatprep.subr.bf16.mxu0 0
        %656 = vmatpush1.bf16.msra.mxu0 0
        %657 = vmatprep.subr.bf16.mxu0 0
        %658 = vmatpush1.bf16.msra.mxu0 0
        %659 = vmatprep.subr.bf16.mxu0 0
        %660 = vmatpush1.bf16.msra.mxu0 0
        %661 = vmatprep.subr.bf16.mxu0 0
        %662 = vmatpush1.bf16.msra.mxu0 0
        %663 = vmatprep.subr.bf16.mxu0 0
        %664 = vmatpush1.bf16.msra.mxu0 0
        %665 = vmatprep.subr.bf16.mxu0 0
        %666 = vmatpush1.bf16.msra.mxu0 0
        %667 = vmatprep.subr.bf16.mxu0 0
        %668 = vmatpush1.bf16.msra.mxu0 0
        %669 = vmatprep.subr.bf16.mxu0 0
        %670 = vmatpush1.bf16.msra.mxu0 0
        %671 = vmatprep.subr.bf16.mxu0 0
        %672 = vmatpush1.bf16.msra.mxu0 0
        %673 = vmatprep.subr.bf16.mxu0 0
        %674 = vmatpush1.bf16.msra.mxu0 0
        %675 = vmatprep.mubr.bf16.mxu0 0
        %676 = vmatmul.mubr.bf16.gmra.mrb[0].mxu0 %v641
        %v677 = vpop.f32.mrb[0].mxu0
        %v678 = vadd.f32 0.0, %v677
        %v679 = vpop.f32.mrb[0].mxu0
        %v680 = vpop.f32.mrb[0].mxu0
        %v681 = vadd.f32 0.0, %v680
        %v682 = vpop.f32.mrb[0].mxu0
        %683 = vdwg.mxu0
        %v684 = vadd.f32 %v631, %v678
        %v685 = vadd.f32 %v632, %v681
        %686 = vst.msk [vmem:[#allocation4] sm:$0xff] %vm523, %v684
        %687 = vst.msk [vmem:[#allocation4 + $0x8] sm:$0xff] %vm523, %v685
        %688 = vst.msk [vmem:[#allocation2] sm:$0xff] %vm616, %v580
        %689 = vst.msk [vmem:[#allocation2 + $0x8] sm:$0xff] %vm616, %v581
        %690 = vrot.lane.b32.xlu0 %v517, 96
        %v691 = vpop.permute.xlu0 %690
        %692 = vrot.lane.b32.xlu0 %v522, 96
        %v693 = vpop.permute.xlu0 %692
        %v695 = vsel %vm523, %v691, 0
        %v698 = vsel %vm523, %v693, 0
        %700 = vmatprep.subr.bf16.mxu0 0
        %701 = vmatpush1.bf16.xpose.msra.mxu0 %v698
        %702 = vmatprep.subr.bf16.mxu0 0
        %703 = vmatpush1.bf16.xpose.msra.mxu0 0
        %704 = vmatprep.subr.bf16.mxu0 0
        %705 = vmatpush1.bf16.xpose.msra.mxu0 0
        %706 = vmatprep.subr.bf16.mxu0 0
        %707 = vmatpush1.bf16.xpose.msra.mxu0 0
        %708 = vmatprep.subr.bf16.mxu0 0
        %709 = vmatpush1.bf16.xpose.msra.mxu0 0
        %710 = vmatprep.subr.bf16.mxu0 0
        %711 = vmatpush1.bf16.xpose.msra.mxu0 0
        %712 = vmatprep.subr.bf16.mxu0 0
        %713 = vmatpush1.bf16.xpose.msra.mxu0 0
        %714 = vmatprep.subr.bf16.mxu0 0
        %715 = vmatpush1.bf16.xpose.msra.mxu0 0
        %716 = vmatprep.subr.bf16.mxu0 0
        %717 = vmatpush1.bf16.xpose.msra.mxu0 0
        %718 = vmatprep.subr.bf16.mxu0 0
        %719 = vmatpush1.bf16.xpose.msra.mxu0 0
        %720 = vmatprep.subr.bf16.mxu0 0
        %721 = vmatpush1.bf16.xpose.msra.mxu0 0
        %722 = vmatprep.subr.bf16.mxu0 0
        %723 = vmatpush1.bf16.xpose.msra.mxu0 0
        %724 = vmatprep.subr.bf16.mxu0 0
        %725 = vmatpush1.bf16.xpose.msra.mxu0 0
        %726 = vmatprep.subr.bf16.mxu0 0
        %727 = vmatpush1.bf16.xpose.msra.mxu0 0
        %728 = vmatprep.subr.bf16.mxu0 0
        %729 = vmatpush1.bf16.xpose.msra.mxu0 0
        %730 = vmatprep.subr.bf16.mxu0 0
        %731 = vmatpush1.bf16.xpose.msra.mxu0 0
        %732 = vmatprep.mubr.bf16.mxu0 0
        %733 = vmatmul.mubr.bf16.gmra.mrb[0].mxu0 %v695
        %v734 = vpop.f32.mrb[0].mxu0
        %v735 = vadd.f32 %v511, %v734
        %v736 = vpop.f32.mrb[0].mxu0
        %v737 = vpop.f32.mrb[0].mxu0
        %v738 = vadd.f32 %v512, %v737
        %v739 = vpop.f32.mrb[0].mxu0
        %740 = vdwg.mxu0
        %s741 = scalar_lea.vmem [#allocation2], 16
        %v742 = vld [vmem:[%s741] sm:$0xff]
        %v743 = vld [vmem:[%s741 + $0x8] sm:$0xff]
        %v744 = vsel %vm573, %v735, -inf
        %745 = vmax.xlane.f32.xlu0 %v744
        %v746 = vpop.xlane.xlu0 %745
        %v747 = vsel %vm573, %v738, -inf
        %748 = vmax.xlane.f32.xlu0 %v747
        %v749 = vpop.xlane.xlu0 %748
        %v750 = vmax.f32 %v742, %v746
        %v751 = vmax.f32 %v743, %v749
        %v752 = vsub.f32 %v742, %v750
        %v753 = vsub.f32 %v743, %v751
        %v754 = vmul.f32 %v752, 1.442695
        %v755 = vpow.pop %v754
        %v756 = vmul.f32 %v753, 1.442695
        %v757 = vpow.pop %v756
        %759 = vset.pattern.permute.xlu0 0
        %760 = vperm.xlu0 %759, %v750
        %v761 = vpop.permute.xlu0 %760
        %764 = vset.pattern.permute.xlu0 0
        %765 = vperm.xlu0 %764, %v751
        %v766 = vpop.permute.xlu0 %765
        %v768 = vsub.f32 %v735, %v761
        %v769 = vsub.f32 %v738, %v766
        %v770 = vmul.f32 %v768, 1.442695
        %v771 = vpow.pop %v770
        %v772 = vmul.f32 %v769, 1.442695
        %v773 = vpow.pop %v772
        %s774 = scalar_lea.vmem [#allocation3], 16
        %v775 = vld [vmem:[%s774] sm:$0xff]
        %v776 = vld [vmem:[%s774 + $0x8] sm:$0xff]
        %v777 = vmul.f32 %v755, %v775
        %v778 = vmul.f32 %v757, %v776
        %v779 = vsel %vm573, %v771, 0.0
        %780 = vadd.xlane.f32.xlu0 %v779
        %v781 = vpop.xlane.xlu0 %780
        %v782 = vsel %vm573, %v773, 0.0
        %783 = vadd.xlane.f32.xlu0 %v782
        %v784 = vpop.xlane.xlu0 %783
        %v785 = vadd.f32 %v777, %v781
        %v786 = vadd.f32 %v778, %v784
        %787 = vst.msk [vmem:[%s774] sm:$0xff] %vm616, %v785
        %788 = vst.msk [vmem:[%s774 + $0x8] sm:$0xff] %vm616, %v786
        %s789 = scalar_lea.vmem [#allocation4], 16
        %v790 = vld [vmem:[%s789] sm:$0xff]
        %v791 = vld [vmem:[%s789 + $0x8] sm:$0xff]
        %793 = vset.pattern.permute.xlu0 0
        %794 = vperm.xlu0 %793, %v755
        %v795 = vpop.permute.xlu0 %794
        %798 = vset.pattern.permute.xlu0 0
        %799 = vperm.xlu0 %798, %v757
        %v800 = vpop.permute.xlu0 %799
        %v802 = vmul.f32 %v795, %v790
        %v803 = vmul.f32 %v800, %v791
        %v804 = vpack.c.bf16 %v773, %v771
        %805 = vrot.lane.b32.xlu0 %v638, 96
        %v806 = vpop.permute.xlu0 %805
        %v809 = vsel %vm573, %v804, 0
        %811 = vmatprep.subr.bf16.mxu0 0
        %812 = vmatpush1.bf16.msra.mxu0 %v806
        %813 = vmatprep.subr.bf16.mxu0 0
        %814 = vmatpush1.bf16.msra.mxu0 0
        %815 = vmatprep.subr.bf16.mxu0 0
        %816 = vmatpush1.bf16.msra.mxu0 0
        %817 = vmatprep.subr.bf16.mxu0 0
        %818 = vmatpush1.bf16.msra.mxu0 0
        %819 = vmatprep.subr.bf16.mxu0 0
        %820 = vmatpush1.bf16.msra.mxu0 0
        %821 = vmatprep.subr.bf16.mxu0 0
        %822 = vmatpush1.bf16.msra.mxu0 0
        %823 = vmatprep.subr.bf16.mxu0 0
        %824 = vmatpush1.bf16.msra.mxu0 0
        %825 = vmatprep.subr.bf16.mxu0 0
        %826 = vmatpush1.bf16.msra.mxu0 0
        %827 = vmatprep.subr.bf16.mxu0 0
        %828 = vmatpush1.bf16.msra.mxu0 0
        %829 = vmatprep.subr.bf16.mxu0 0
        %830 = vmatpush1.bf16.msra.mxu0 0
        %831 = vmatprep.subr.bf16.mxu0 0
        %832 = vmatpush1.bf16.msra.mxu0 0
        %833 = vmatprep.subr.bf16.mxu0 0
        %834 = vmatpush1.bf16.msra.mxu0 0
        %835 = vmatprep.subr.bf16.mxu0 0
        %836 = vmatpush1.bf16.msra.mxu0 0
        %837 = vmatprep.subr.bf16.mxu0 0
        %838 = vmatpush1.bf16.msra.mxu0 0
        %839 = vmatprep.subr.bf16.mxu0 0
        %840 = vmatpush1.bf16.msra.mxu0 0
        %841 = vmatprep.subr.bf16.mxu0 0
        %842 = vmatpush1.bf16.msra.mxu0 0
        %843 = vmatprep.mubr.bf16.mxu0 0
        %844 = vmatmul.mubr.bf16.gmra.mrb[0].mxu0 %v809
        %v845 = vpop.f32.mrb[0].mxu0
        %v846 = vadd.f32 0.0, %v845
        %v847 = vpop.f32.mrb[0].mxu0
        %v848 = vpop.f32.mrb[0].mxu0
        %v849 = vadd.f32 0.0, %v848
        %v850 = vpop.f32.mrb[0].mxu0
        %851 = vdwg.mxu0
        %v852 = vadd.f32 %v802, %v846
        %v853 = vadd.f32 %v803, %v849
        %854 = vst.msk [vmem:[%s789] sm:$0xff] %vm523, %v852
        %855 = vst.msk [vmem:[%s789 + $0x8] sm:$0xff] %vm523, %v853
        %856 = vst.msk [vmem:[%s741] sm:$0xff] %vm616, %v750
        %857 = vst.msk [vmem:[%s741 + $0x8] sm:$0xff] %vm616, %v751
        %858 = vrot.lane.b32.xlu0 %v517, 64
        %v859 = vpop.permute.xlu0 %858
        %860 = vrot.lane.b32.xlu0 %v522, 64
        %v861 = vpop.permute.xlu0 %860
        %v863 = vsel %vm523, %v859, 0
        %v866 = vsel %vm523, %v861, 0
        %868 = vmatprep.subr.bf16.mxu0 0
        %869 = vmatpush1.bf16.xpose.msra.mxu0 %v866
        %870 = vmatprep.subr.bf16.mxu0 0
        %871 = vmatpush1.bf16.xpose.msra.mxu0 0
        %872 = vmatprep.subr.bf16.mxu0 0
        %873 = vmatpush1.bf16.xpose.msra.mxu0 0
        %874 = vmatprep.subr.bf16.mxu0 0
        %875 = vmatpush1.bf16.xpose.msra.mxu0 0
        %876 = vmatprep.subr.bf16.mxu0 0
        %877 = vmatpush1.bf16.xpose.msra.mxu0 0
        %878 = vmatprep.subr.bf16.mxu0 0
        %879 = vmatpush1.bf16.xpose.msra.mxu0 0
        %880 = vmatprep.subr.bf16.mxu0 0
        %881 = vmatpush1.bf16.xpose.msra.mxu0 0
        %882 = vmatprep.subr.bf16.mxu0 0
        %883 = vmatpush1.bf16.xpose.msra.mxu0 0
        %884 = vmatprep.subr.bf16.mxu0 0
        %885 = vmatpush1.bf16.xpose.msra.mxu0 0
        %886 = vmatprep.subr.bf16.mxu0 0
        %887 = vmatpush1.bf16.xpose.msra.mxu0 0
        %888 = vmatprep.subr.bf16.mxu0 0
        %889 = vmatpush1.bf16.xpose.msra.mxu0 0
        %890 = vmatprep.subr.bf16.mxu0 0
        %891 = vmatpush1.bf16.xpose.msra.mxu0 0
        %892 = vmatprep.subr.bf16.mxu0 0
        %893 = vmatpush1.bf16.xpose.msra.mxu0 0
        %894 = vmatprep.subr.bf16.mxu0 0
        %895 = vmatpush1.bf16.xpose.msra.mxu0 0
        %896 = vmatprep.subr.bf16.mxu0 0
        %897 = vmatpush1.bf16.xpose.msra.mxu0 0
        %898 = vmatprep.subr.bf16.mxu0 0
        %899 = vmatpush1.bf16.xpose.msra.mxu0 0
        %900 = vmatprep.mubr.bf16.mxu0 0
        %901 = vmatmul.mubr.bf16.gmra.mrb[0].mxu0 %v863
        %v902 = vpop.f32.mrb[0].mxu0
        %v903 = vadd.f32 %v511, %v902
        %v904 = vpop.f32.mrb[0].mxu0
        %v905 = vpop.f32.mrb[0].mxu0
        %v906 = vadd.f32 %v512, %v905
        %v907 = vpop.f32.mrb[0].mxu0
        %908 = vdwg.mxu0
        %s909 = scalar_lea.vmem [#allocation2], 32
        %v910 = vld [vmem:[%s909] sm:$0xff]
        %v911 = vld [vmem:[%s909 + $0x8] sm:$0xff]
        %v912 = vsel %vm573, %v903, -inf
        %913 = vmax.xlane.f32.xlu0 %v912
        %v914 = vpop.xlane.xlu0 %913
        %v915 = vsel %vm573, %v906, -inf
        %916 = vmax.xlane.f32.xlu0 %v915
        %v917 = vpop.xlane.xlu0 %916
        %v918 = vmax.f32 %v910, %v914
        %v919 = vmax.f32 %v911, %v917
        %v920 = vsub.f32 %v910, %v918
        %v921 = vsub.f32 %v911, %v919
        %v922 = vmul.f32 %v920, 1.442695
        %v923 = vpow.pop %v922
        %v924 = vmul.f32 %v921, 1.442695
        %v925 = vpow.pop %v924
        %927 = vset.pattern.permute.xlu0 0
        %928 = vperm.xlu0 %927, %v918
        %v929 = vpop.permute.xlu0 %928
        %932 = vset.pattern.permute.xlu0 0
        %933 = vperm.xlu0 %932, %v919
        %v934 = vpop.permute.xlu0 %933
        %v936 = vsub.f32 %v903, %v929
        %v937 = vsub.f32 %v906, %v934
        %v938 = vmul.f32 %v936, 1.442695
        %v939 = vpow.pop %v938
        %v940 = vmul.f32 %v937, 1.442695
        %v941 = vpow.pop %v940
        %s942 = scalar_lea.vmem [#allocation3], 32
        %v943 = vld [vmem:[%s942] sm:$0xff]
        %v944 = vld [vmem:[%s942 + $0x8] sm:$0xff]
        %v945 = vmul.f32 %v923, %v943
        %v946 = vmul.f32 %v925, %v944
        %v947 = vsel %vm573, %v939, 0.0
        %948 = vadd.xlane.f32.xlu0 %v947
        %v949 = vpop.xlane.xlu0 %948
        %v950 = vsel %vm573, %v941, 0.0
        %951 = vadd.xlane.f32.xlu0 %v950
        %v952 = vpop.xlane.xlu0 %951
        %v953 = vadd.f32 %v945, %v949
        %v954 = vadd.f32 %v946, %v952
        %955 = vst.msk [vmem:[%s942] sm:$0xff] %vm616, %v953
        %956 = vst.msk [vmem:[%s942 + $0x8] sm:$0xff] %vm616, %v954
        %s957 = scalar_lea.vmem [#allocation4], 32
        %v958 = vld [vmem:[%s957] sm:$0xff]
        %v959 = vld [vmem:[%s957 + $0x8] sm:$0xff]
        %961 = vset.pattern.permute.xlu0 0
        %962 = vperm.xlu0 %961, %v923
        %v963 = vpop.permute.xlu0 %962
        %966 = vset.pattern.permute.xlu0 0
        %967 = vperm.xlu0 %966, %v925
        %v968 = vpop.permute.xlu0 %967
        %v970 = vmul.f32 %v963, %v958
        %v971 = vmul.f32 %v968, %v959
        %v972 = vpack.c.bf16 %v941, %v939
        %973 = vrot.lane.b32.xlu0 %v638, 64
        %v974 = vpop.permute.xlu0 %973
        %v977 = vsel %vm573, %v972, 0
        %979 = vmatprep.subr.bf16.mxu0 0
        %980 = vmatpush1.bf16.msra.mxu0 %v974
        %981 = vmatprep.subr.bf16.mxu0 0
        %982 = vmatpush1.bf16.msra.mxu0 0
        %983 = vmatprep.subr.bf16.mxu0 0
        %984 = vmatpush1.bf16.msra.mxu0 0
        %985 = vmatprep.subr.bf16.mxu0 0
        %986 = vmatpush1.bf16.msra.mxu0 0
        %987 = vmatprep.subr.bf16.mxu0 0
        %988 = vmatpush1.bf16.msra.mxu0 0
        %989 = vmatprep.subr.bf16.mxu0 0
        %990 = vmatpush1.bf16.msra.mxu0 0
        %991 = vmatprep.subr.bf16.mxu0 0
        %992 = vmatpush1.bf16.msra.mxu0 0
        %993 = vmatprep.subr.bf16.mxu0 0
        %994 = vmatpush1.bf16.msra.mxu0 0
        %995 = vmatprep.subr.bf16.mxu0 0
        %996 = vmatpush1.bf16.msra.mxu0 0
        %997 = vmatprep.subr.bf16.mxu0 0
        %998 = vmatpush1.bf16.msra.mxu0 0
        %999 = vmatprep.subr.bf16.mxu0 0
        %1000 = vmatpush1.bf16.msra.mxu0 0
        %1001 = vmatprep.subr.bf16.mxu0 0
        %1002 = vmatpush1.bf16.msra.mxu0 0
        %1003 = vmatprep.subr.bf16.mxu0 0
        %1004 = vmatpush1.bf16.msra.mxu0 0
        %1005 = vmatprep.subr.bf16.mxu0 0
        %1006 = vmatpush1.bf16.msra.mxu0 0
        %1007 = vmatprep.subr.bf16.mxu0 0
        %1008 = vmatpush1.bf16.msra.mxu0 0
        %1009 = vmatprep.subr.bf16.mxu0 0
        %1010 = vmatpush1.bf16.msra.mxu0 0
        %1011 = vmatprep.mubr.bf16.mxu0 0
        %1012 = vmatmul.mubr.bf16.gmra.mrb[0].mxu0 %v977
        %v1013 = vpop.f32.mrb[0].mxu0
        %v1014 = vadd.f32 0.0, %v1013
        %v1015 = vpop.f32.mrb[0].mxu0
        %v1016 = vpop.f32.mrb[0].mxu0
        %v1017 = vadd.f32 0.0, %v1016
        %v1018 = vpop.f32.mrb[0].mxu0
        %1019 = vdwg.mxu0
        %v1020 = vadd.f32 %v970, %v1014
        %v1021 = vadd.f32 %v971, %v1017
        %1022 = vst.msk [vmem:[%s957] sm:$0xff] %vm523, %v1020
        %1023 = vst.msk [vmem:[%s957 + $0x8] sm:$0xff] %vm523, %v1021
        %1024 = vst.msk [vmem:[%s909] sm:$0xff] %vm616, %v918
        %1025 = vst.msk [vmem:[%s909 + $0x8] sm:$0xff] %vm616, %v919
        %1026 = vrot.lane.b32.xlu0 %v517, 32
        %v1027 = vpop.permute.xlu0 %1026
        %1028 = vrot.lane.b32.xlu0 %v522, 32
        %v1029 = vpop.permute.xlu0 %1028
        %v1031 = vsel %vm523, %v1027, 0
        %v1034 = vsel %vm523, %v1029, 0
        %1036 = vmatprep.subr.bf16.mxu0 0
        %1037 = vmatpush1.bf16.xpose.msra.mxu0 %v1034
        %1038 = vmatprep.subr.bf16.mxu0 0
        %1039 = vmatpush1.bf16.xpose.msra.mxu0 0
        %1040 = vmatprep.subr.bf16.mxu0 0
        %1041 = vmatpush1.bf16.xpose.msra.mxu0 0
        %1042 = vmatprep.subr.bf16.mxu0 0
        %1043 = vmatpush1.bf16.xpose.msra.mxu0 0
        %1044 = vmatprep.subr.bf16.mxu0 0
        %1045 = vmatpush1.bf16.xpose.msra.mxu0 0
        %1046 = vmatprep.subr.bf16.mxu0 0
        %1047 = vmatpush1.bf16.xpose.msra.mxu0 0
        %1048 = vmatprep.subr.bf16.mxu0 0
        %1049 = vmatpush1.bf16.xpose.msra.mxu0 0
        %1050 = vmatprep.subr.bf16.mxu0 0
        %1051 = vmatpush1.bf16.xpose.msra.mxu0 0
        %1052 = vmatprep.subr.bf16.mxu0 0
        %1053 = vmatpush1.bf16.xpose.msra.mxu0 0
        %1054 = vmatprep.subr.bf16.mxu0 0
        %1055 = vmatpush1.bf16.xpose.msra.mxu0 0
        %1056 = vmatprep.subr.bf16.mxu0 0
        %1057 = vmatpush1.bf16.xpose.msra.mxu0 0
        %1058 = vmatprep.subr.bf16.mxu0 0
        %1059 = vmatpush1.bf16.xpose.msra.mxu0 0
        %1060 = vmatprep.subr.bf16.mxu0 0
        %1061 = vmatpush1.bf16.xpose.msra.mxu0 0
        %1062 = vmatprep.subr.bf16.mxu0 0
        %1063 = vmatpush1.bf16.xpose.msra.mxu0 0
        %1064 = vmatprep.subr.bf16.mxu0 0
        %1065 = vmatpush1.bf16.xpose.msra.mxu0 0
        %1066 = vmatprep.subr.bf16.mxu0 0
        %1067 = vmatpush1.bf16.xpose.msra.mxu0 0
        %1068 = vmatprep.mubr.bf16.mxu0 0
        %1069 = vmatmul.mubr.bf16.gmra.mrb[0].mxu0 %v1031
        %v1070 = vpop.f32.mrb[0].mxu0
        %v1071 = vadd.f32 %v511, %v1070
        %v1072 = vpop.f32.mrb[0].mxu0
        %v1073 = vpop.f32.mrb[0].mxu0
        %v1074 = vadd.f32 %v512, %v1073
        %v1075 = vpop.f32.mrb[0].mxu0
        %1076 = vdwg.mxu0
        %s1077 = scalar_lea.vmem [#allocation2], 48
        %v1078 = vld [vmem:[%s1077] sm:$0xff]
        %v1079 = vld [vmem:[%s1077 + $0x8] sm:$0xff]
        %v1080 = vsel %vm573, %v1071, -inf
        %1081 = vmax.xlane.f32.xlu0 %v1080
        %v1082 = vpop.xlane.xlu0 %1081
        %v1083 = vsel %vm573, %v1074, -inf
        %1084 = vmax.xlane.f32.xlu0 %v1083
        %v1085 = vpop.xlane.xlu0 %1084
        %v1086 = vmax.f32 %v1078, %v1082
        %v1087 = vmax.f32 %v1079, %v1085
        %v1088 = vsub.f32 %v1078, %v1086
        %v1089 = vsub.f32 %v1079, %v1087
        %v1090 = vmul.f32 %v1088, 1.442695
        %v1091 = vpow.pop %v1090
        %v1092 = vmul.f32 %v1089, 1.442695
        %v1093 = vpow.pop %v1092
        %1095 = vset.pattern.permute.xlu0 0
        %1096 = vperm.xlu0 %1095, %v1086
        %v1097 = vpop.permute.xlu0 %1096
        %1100 = vset.pattern.permute.xlu0 0
        %1101 = vperm.xlu0 %1100, %v1087
        %v1102 = vpop.permute.xlu0 %1101
        %v1104 = vsub.f32 %v1071, %v1097
        %v1105 = vsub.f32 %v1074, %v1102
        %v1106 = vmul.f32 %v1104, 1.442695
        %v1107 = vpow.pop %v1106
        %v1108 = vmul.f32 %v1105, 1.442695
        %v1109 = vpow.pop %v1108
        %s1110 = scalar_lea.vmem [#allocation3], 48
        %v1111 = vld [vmem:[%s1110] sm:$0xff]
        %v1112 = vld [vmem:[%s1110 + $0x8] sm:$0xff]
        %v1113 = vmul.f32 %v1091, %v1111
        %v1114 = vmul.f32 %v1093, %v1112
        %v1115 = vsel %vm573, %v1107, 0.0
        %1116 = vadd.xlane.f32.xlu0 %v1115
        %v1117 = vpop.xlane.xlu0 %1116
        %v1118 = vsel %vm573, %v1109, 0.0
        %1119 = vadd.xlane.f32.xlu0 %v1118
        %v1120 = vpop.xlane.xlu0 %1119
        %v1121 = vadd.f32 %v1113, %v1117
        %v1122 = vadd.f32 %v1114, %v1120
        %1123 = vst.msk [vmem:[%s1110] sm:$0xff] %vm616, %v1121
        %1124 = vst.msk [vmem:[%s1110 + $0x8] sm:$0xff] %vm616, %v1122
        %s1125 = scalar_lea.vmem [#allocation4], 48
        %v1126 = vld [vmem:[%s1125] sm:$0xff]
        %v1127 = vld [vmem:[%s1125 + $0x8] sm:$0xff]
        %1129 = vset.pattern.permute.xlu0 0
        %1130 = vperm.xlu0 %1129, %v1091
        %v1131 = vpop.permute.xlu0 %1130
        %1134 = vset.pattern.permute.xlu0 0
        %1135 = vperm.xlu0 %1134, %v1093
        %v1136 = vpop.permute.xlu0 %1135
        %v1138 = vmul.f32 %v1131, %v1126
        %v1139 = vmul.f32 %v1136, %v1127
        %v1140 = vpack.c.bf16 %v1109, %v1107
        %1141 = vrot.lane.b32.xlu0 %v638, 32
        %v1142 = vpop.permute.xlu0 %1141
        %v1145 = vsel %vm573, %v1140, 0
        %1147 = vmatprep.subr.bf16.mxu0 0
        %1148 = vmatpush1.bf16.msra.mxu0 %v1142
        %1149 = vmatprep.subr.bf16.mxu0 0
        %1150 = vmatpush1.bf16.msra.mxu0 0
        %1151 = vmatprep.subr.bf16.mxu0 0
        %1152 = vmatpush1.bf16.msra.mxu0 0
        %1153 = vmatprep.subr.bf16.mxu0 0
        %1154 = vmatpush1.bf16.msra.mxu0 0
        %1155 = vmatprep.subr.bf16.mxu0 0
        %1156 = vmatpush1.bf16.msra.mxu0 0
        %1157 = vmatprep.subr.bf16.mxu0 0
        %1158 = vmatpush1.bf16.msra.mxu0 0
        %1159 = vmatprep.subr.bf16.mxu0 0
        %1160 = vmatpush1.bf16.msra.mxu0 0
        %1161 = vmatprep.subr.bf16.mxu0 0
        %1162 = vmatpush1.bf16.msra.mxu0 0
        %1163 = vmatprep.subr.bf16.mxu0 0
        %1164 = vmatpush1.bf16.msra.mxu0 0
        %1165 = vmatprep.subr.bf16.mxu0 0
        %1166 = vmatpush1.bf16.msra.mxu0 0
        %1167 = vmatprep.subr.bf16.mxu0 0
        %1168 = vmatpush1.bf16.msra.mxu0 0
        %1169 = vmatprep.subr.bf16.mxu0 0
        %1170 = vmatpush1.bf16.msra.mxu0 0
        %1171 = vmatprep.subr.bf16.mxu0 0
        %1172 = vmatpush1.bf16.msra.mxu0 0
        %1173 = vmatprep.subr.bf16.mxu0 0
        %1174 = vmatpush1.bf16.msra.mxu0 0
        %1175 = vmatprep.subr.bf16.mxu0 0
        %1176 = vmatpush1.bf16.msra.mxu0 0
        %1177 = vmatprep.subr.bf16.mxu0 0
        %1178 = vmatpush1.bf16.msra.mxu0 0
        %1179 = vmatprep.mubr.bf16.mxu0 0
        %1180 = vmatmul.mubr.bf16.gmra.mrb[0].mxu0 %v1145
        %v1181 = vpop.f32.mrb[0].mxu0
        %v1182 = vadd.f32 0.0, %v1181
        %v1183 = vpop.f32.mrb[0].mxu0
        %v1184 = vpop.f32.mrb[0].mxu0
        %v1185 = vadd.f32 0.0, %v1184
        %v1186 = vpop.f32.mrb[0].mxu0
        %1187 = vdwg.mxu0
        %v1188 = vadd.f32 %v1138, %v1182
        %v1189 = vadd.f32 %v1139, %v1185
        %1190 = vst.msk [vmem:[%s1125] sm:$0xff] %vm523, %v1188
        %1191 = vst.msk [vmem:[%s1125 + $0x8] sm:$0xff] %vm523, %v1189
        %1192 = vst.msk [vmem:[%s1077] sm:$0xff] %vm616, %v1086
        %1193 = vst.msk [vmem:[%s1077 + $0x8] sm:$0xff] %vm616, %v1087
        // Predicated region
        $region164: #{transformer_forward.40} parent=146 // pred_check
          %p1194 = pneg %p452
        $region165: #{transformer_forward.40} parent=146 // pred_check_branch
          %1196 = sbr.rel (%p1194) target = $region167
        $region166: #{transformer_forward.40} parent=146 // pred_region
          %v1197 = vld [vmem:[#allocation4] sm:$0xff]
          %v1198 = vld [vmem:[#allocation4 + $0x8] sm:$0xff]
          %v1199 = vld [vmem:[#allocation3] sm:$0xff]
          %v1200 = vld [vmem:[#allocation3 + $0x8] sm:$0xff]
          %1202 = vset.pattern.permute.xlu0 0
          %1203 = vperm.xlu0 %1202, %v1199
          %v1204 = vpop.permute.xlu0 %1203
          %1207 = vset.pattern.permute.xlu0 0
          %1208 = vperm.xlu0 %1207, %v1200
          %v1209 = vpop.permute.xlu0 %1208
          %v1211 = vrcp.pop %v1204
          %v1212 = vmul.f32 %v1197, %v1211
          %v1213 = vrcp.pop %v1209
          %v1214 = vmul.f32 %v1198, %v1213
          %v1215 = vld [vmem:[%s789] sm:$0xff]
          %v1216 = vld [vmem:[%s789 + $0x8] sm:$0xff]
          %v1217 = vld [vmem:[%s774] sm:$0xff]
          %v1218 = vld [vmem:[%s774 + $0x8] sm:$0xff]
          %1220 = vset.pattern.permute.xlu0 0
          %1221 = vperm.xlu0 %1220, %v1217
          %v1222 = vpop.permute.xlu0 %1221
          %1225 = vset.pattern.permute.xlu0 0
          %1226 = vperm.xlu0 %1225, %v1218
          %v1227 = vpop.permute.xlu0 %1226
          %v1229 = vrcp.pop %v1222
          %v1230 = vmul.f32 %v1215, %v1229
          %v1231 = vrcp.pop %v1227
          %v1232 = vmul.f32 %v1216, %v1231
          %v1233 = vld [vmem:[%s957] sm:$0xff]
          %v1234 = vld [vmem:[%s957 + $0x8] sm:$0xff]
          %v1235 = vld [vmem:[%s942] sm:$0xff]
          %v1236 = vld [vmem:[%s942 + $0x8] sm:$0xff]
          %1238 = vset.pattern.permute.xlu0 0
          %1239 = vperm.xlu0 %1238, %v1235
          %v1240 = vpop.permute.xlu0 %1239
          %1243 = vset.pattern.permute.xlu0 0
          %1244 = vperm.xlu0 %1243, %v1236
          %v1245 = vpop.permute.xlu0 %1244
          %v1247 = vrcp.pop %v1240
          %v1248 = vmul.f32 %v1233, %v1247
          %v1249 = vrcp.pop %v1245
          %v1250 = vmul.f32 %v1234, %v1249
          %v1251 = vld [vmem:[%s1125] sm:$0xff]
          %v1252 = vld [vmem:[%s1125 + $0x8] sm:$0xff]
          %v1253 = vld [vmem:[%s1110] sm:$0xff]
          %v1254 = vld [vmem:[%s1110 + $0x8] sm:$0xff]
          %1256 = vset.pattern.permute.xlu0 0
          %1257 = vperm.xlu0 %1256, %v1253
          %v1258 = vpop.permute.xlu0 %1257
          %1261 = vset.pattern.permute.xlu0 0
          %1262 = vperm.xlu0 %1261, %v1254
          %v1263 = vpop.permute.xlu0 %1262
          %v1265 = vrcp.pop %v1258
          %v1266 = vmul.f32 %v1251, %v1265
          %v1267 = vrcp.pop %v1263
          %v1268 = vmul.f32 %v1252, %v1267
          %1271 = vrot.lane.b32.xlu0 %v1230, 32
          %v1272 = vpop.permute.xlu0 %1271
          %1273 = vrot.lane.b32.xlu0 %v1232, 32
          %v1274 = vpop.permute.xlu0 %1273
          %1279 = vrot.lane.b32.xlu0 %v1248, 64
          %v1280 = vpop.permute.xlu0 %1279
          %1281 = vrot.lane.b32.xlu0 %v1250, 64
          %v1282 = vpop.permute.xlu0 %1281
          %1287 = vrot.lane.b32.xlu0 %v1266, 96
          %v1288 = vpop.permute.xlu0 %1287
          %1289 = vrot.lane.b32.xlu0 %v1268, 96
          %v1290 = vpop.permute.xlu0 %1289
          %v1293 = vsel %vm523, %v1212, %v1272
          %v1294 = vsel %vm523, %v1214, %v1274
          %vm1295 = vcmask 523264
          %v1296 = vsel %vm1295, %v1293, %v1280
          %v1297 = vsel %vm1295, %v1294, %v1282
          %vm1298 = vcmask 785408
          %v1299 = vsel %vm1298, %v1296, %v1288
          %v1300 = vsel %vm1298, %v1297, %v1290
          %v1301 = vpack.c.bf16 %v1300, %v1299
          %v1303 = vunpack.c.l.b16 %v1301
          %v1304 = vunpack.c.h.b16 %v1301
          %v1305 = vpack.c.b16 %v1303, %v1303
          %v1306 = vpack.c.b16 %v1304, %v1304
          %1309 = vst [vmem:[%s449] sm:$0xf] %v1305
          %1310 = vst [vmem:[%s449 + $0x4] sm:$0xf] %v1306
        $region167: #{transformer_forward.40} parent=146 // pred_fallthru
          _
        %s1311 = smul.u32 2, %s21
        %p1312 = scmp.lt.s32.totalorder %s20, 1
        %s1313 = scalar_select %p1312, %s20, 1
        %p1314 = scmp.lt.s32.totalorder %s1311, 1
        %s1315 = scalar_select %p1314, %s1311, 1
        %s1316 = smul.addr %s1313, 2
        %s1317 = sadd.s32 %s1315, %s1316
        %s1318 = smul.addr %s1317, 4
        %s1319 = scalar_lea.vmem %s4, %s1318
        // Predicated region
        $region168: #{transformer_forward.40} parent=146 // pred_check
          %p1320 = pneg %p166
        $region169: #{transformer_forward.40} parent=146 // pred_check_branch
          %1322 = sbr.rel (%p1320) target = $region171
        $region170: #{transformer_forward.40} parent=146 // pred_region
          %s1323 = smul.u32 2, %s21
        $region171: #{transformer_forward.40} parent=146 // pred_fallthru
          _
      $region147: #{transformer_forward.40} parent=5 // pred_fallthru
        _
      %p1324 = scmp.le.s32.totalorder 2, %s10
      // Predicated region
      $region172: #{transformer_forward.40} parent=5 // pred_check
        %p1325 = pneg %p1324
      $region173: #{transformer_forward.40} parent=5 // pred_check_branch
        %1327 = sbr.rel (%p1325) target = $region175
      $region174: #{transformer_forward.40} parent=5 // pred_region
        %s1328 = ssub.s32 %s10, 2
        // Predicated region
        $region176: #{transformer_forward.40} parent=174 // pred_check
          %p1329 = pneg %p172
        $region177: #{transformer_forward.40} parent=174 // pred_check_branch
          %1331 = sbr.rel (%p1329) target = $region179
        $region178: #{transformer_forward.40} parent=174 // pred_region
          %s1332 = smul.u32 2, %s24
          %p1333 = scmp.lt.s32.totalorder %s23, 1
          %s1334 = scalar_select %p1333, %s23, 1
          %p1335 = scmp.lt.s32.totalorder %s1332, 1
          %s1336 = scalar_select %p1335, %s1332, 1
          %s1337 = smul.addr %s1334, 2
          %s1338 = sadd.s32 %s1336, %s1337
          %s1339 = smul.addr %s1338, 4
          %s1340 = scalar_lea.vmem %s4, %s1339
        $region179: #{transformer_forward.40} parent=174 // pred_fallthru
          _
      $region175: #{transformer_forward.40} parent=5 // pred_fallthru
        _
    $region6: #{transformer_forward.40} parent=1 // loop_footer
      %s14 = sadd.s32 1, %s10
    $region7: #{transformer_forward.40} parent=1 // loop_footer_branch
      %9 = sbr.rel target = $region3
    $region8: #{transformer_forward.40} parent=1 // loop_exit
      _

// kernel: transformer_forward.32
$region0: #{transformer_forward.32}
  #allocation0 [shape = 'u32[]', space=smem, size = 0x4, offset = 0x4, fixed_abs, tag = 'smem constant byte address 0x4 - core index']
  #allocation1 [shape = 'u32[144,128]{1,0:T(1,128)}', space=vmem, size = 0x12000, scoped, tag = 'internal scratch']
  #allocation2 [shape = 'f32[32,256]{1,0:T(8,128)}', space=vmem, size = 0x8000, scoped, tag = 'scratch operand']
  %s0 = inlined_call_operand.vmem [shape: f32[32,128], index: 0, kind: input, shape index: {}]
  %s1 = inlined_call_operand.vmem [shape: bf16[128,256], index: 1, kind: input, shape index: {}]
  %s2 = inlined_call_operand.vmem [shape: f32[1,256], index: 2, kind: input, shape index: {}]
  %s3 = inlined_call_operand.vmem [shape: bf16[32,256], index: 3, kind: output, shape index: {}]
  %s4 = sld [smem:[#allocation0]]
  $region30: #{transformer_forward.32} parent=0
    _
  %s6 = ssub.s32 1, %s4
  %s7 = scalar_select 0, %s6, %s4
  // Predicated region
  $region2: #{transformer_forward.32} parent=0 // pred_check
    _
  $region3: #{transformer_forward.32} parent=0 // pred_check_branch
    %9 = sbr.rel (0) target = $region5
  $region4: #{transformer_forward.32} parent=0 // pred_region
    _
  $region5: #{transformer_forward.32} parent=0 // pred_fallthru
    _
  // Predicated region
  $region6: #{transformer_forward.32} parent=0 // pred_check
    _
  $region7: #{transformer_forward.32} parent=0 // pred_check_branch
    %11 = sbr.rel (0) target = $region9
  $region8: #{transformer_forward.32} parent=0 // pred_region
    _
  $region9: #{transformer_forward.32} parent=0 // pred_fallthru
    _
  // Predicated region
  $region10: #{transformer_forward.32} parent=0 // pred_check
    _
  $region11: #{transformer_forward.32} parent=0 // pred_check_branch
    %13 = sbr.rel (0) target = $region13
  $region12: #{transformer_forward.32} parent=0 // pred_region
    _
  $region13: #{transformer_forward.32} parent=0 // pred_fallthru
    _
  %p15 = scmp.eq.s32.totalorder 0, 0
  // Predicated region
  $region14: #{transformer_forward.32} parent=0 // pred_check
    %p16 = pneg %p15
  $region15: #{transformer_forward.32} parent=0 // pred_check_branch
    %18 = sbr.rel (%p16) target = $region17
  $region16: #{transformer_forward.32} parent=0 // pred_region
    %19 = vst [vmem:[#allocation2] sm:$0xff] 0.0
    %20 = vst [vmem:[#allocation2 + $0x8] sm:$0xff] 0.0
    %21 = vst [vmem:[#allocation2 + $0x10] sm:$0xff] 0.0
    %22 = vst [vmem:[#allocation2 + $0x18] sm:$0xff] 0.0
    %23 = vst [vmem:[#allocation2 + $0x20] sm:$0xff] 0.0
    %24 = vst [vmem:[#allocation2 + $0x28] sm:$0xff] 0.0
    %25 = vst [vmem:[#allocation2 + $0x30] sm:$0xff] 0.0
    %26 = vst [vmem:[#allocation2 + $0x38] sm:$0xff] 0.0
  $region17: #{transformer_forward.32} parent=0 // pred_fallthru
    _
  %v27 = vld [vmem:[#allocation2] sm:$0xff]
  %v28 = vld [vmem:[#allocation2 + $0x8] sm:$0xff]
  %v29 = vld [vmem:[#allocation2 + $0x10] sm:$0xff]
  %v30 = vld [vmem:[#allocation2 + $0x18] sm:$0xff]
  %v31 = vld [vmem:[#allocation2 + $0x20] sm:$0xff]
  %v32 = vld [vmem:[#allocation2 + $0x28] sm:$0xff]
  %v33 = vld [vmem:[#allocation2 + $0x30] sm:$0xff]
  %v34 = vld [vmem:[#allocation2 + $0x38] sm:$0xff]
  %v35 = vld [vmem:[%s0] sm:$0xff]
  %v36 = vld [vmem:[%s0 + $0x8] sm:$0xff]
  %v37 = vld [vmem:[%s0 + $0x10] sm:$0xff]
  %v38 = vld [vmem:[%s0 + $0x18] sm:$0xff]
  %v39 = vpack.c.bf16 %v36, %v35
  %v40 = vpack.c.bf16 %v38, %v37
  %v41 = vld [vmem:[%s1] sm:$0xff]
  %v42 = vld [vmem:[%s1 + $0x8] sm:$0xff]
  %v43 = vld [vmem:[%s1 + $0x10] sm:$0xff]
  %v44 = vld [vmem:[%s1 + $0x18] sm:$0xff]
  %v45 = vld [vmem:[%s1 + $0x20] sm:$0xff]
  %v46 = vld [vmem:[%s1 + $0x28] sm:$0xff]
  %v47 = vld [vmem:[%s1 + $0x30] sm:$0xff]
  %v48 = vld [vmem:[%s1 + $0x38] sm:$0xff]
  %v49 = vld [vmem:[%s1 + $0x40] sm:$0xff]
  %v50 = vld [vmem:[%s1 + $0x48] sm:$0xff]
  %v51 = vld [vmem:[%s1 + $0x50] sm:$0xff]
  %v52 = vld [vmem:[%s1 + $0x58] sm:$0xff]
  %v53 = vld [vmem:[%s1 + $0x60] sm:$0xff]
  %v54 = vld [vmem:[%s1 + $0x68] sm:$0xff]
  %v55 = vld [vmem:[%s1 + $0x70] sm:$0xff]
  %v56 = vld [vmem:[%s1 + $0x78] sm:$0xff]
  %v73 = vunpack.c.l.b16 %v41
  %v74 = vunpack.c.h.b16 %v41
  %v75 = vunpack.c.l.b16 %v42
  %v76 = vunpack.c.h.b16 %v42
  %v77 = vunpack.c.l.b16 %v43
  %v78 = vunpack.c.h.b16 %v43
  %v79 = vunpack.c.l.b16 %v44
  %v80 = vunpack.c.h.b16 %v44
  %v81 = vunpack.c.l.b16 %v45
  %v82 = vunpack.c.h.b16 %v45
  %v83 = vunpack.c.l.b16 %v46
  %v84 = vunpack.c.h.b16 %v46
  %v85 = vunpack.c.l.b16 %v47
  %v86 = vunpack.c.h.b16 %v47
  %v87 = vunpack.c.l.b16 %v48
  %v88 = vunpack.c.h.b16 %v48
  %v89 = vunpack.c.l.b16 %v49
  %v90 = vunpack.c.h.b16 %v49
  %v91 = vunpack.c.l.b16 %v50
  %v92 = vunpack.c.h.b16 %v50
  %v93 = vunpack.c.l.b16 %v51
  %v94 = vunpack.c.h.b16 %v51
  %v95 = vunpack.c.l.b16 %v52
  %v96 = vunpack.c.h.b16 %v52
  %v97 = vunpack.c.l.b16 %v53
  %v98 = vunpack.c.h.b16 %v53
  %v99 = vunpack.c.l.b16 %v54
  %v100 = vunpack.c.h.b16 %v54
  %v101 = vunpack.c.l.b16 %v55
  %v102 = vunpack.c.h.b16 %v55
  %v103 = vunpack.c.l.b16 %v56
  %v104 = vunpack.c.h.b16 %v56
  %v105 = vpack.c.b16 %v75, %v73
  %v106 = vpack.c.b16 %v76, %v74
  %v107 = vpack.c.b16 %v79, %v77
  %v108 = vpack.c.b16 %v80, %v78
  %v109 = vpack.c.b16 %v83, %v81
  %v110 = vpack.c.b16 %v84, %v82
  %v111 = vpack.c.b16 %v87, %v85
  %v112 = vpack.c.b16 %v88, %v86
  %v113 = vpack.c.b16 %v91, %v89
  %v114 = vpack.c.b16 %v92, %v90
  %v115 = vpack.c.b16 %v95, %v93
  %v116 = vpack.c.b16 %v96, %v94
  %v117 = vpack.c.b16 %v99, %v97
  %v118 = vpack.c.b16 %v100, %v98
  %v119 = vpack.c.b16 %v103, %v101
  %v120 = vpack.c.b16 %v104, %v102
  %137 = vmatprep.subr.bf16.mxu0 %v106
  %138 = vmatpush1.bf16.msra.mxu0 %v105
  %139 = vmatprep.subr.bf16.mxu0 %v108
  %140 = vmatpush1.bf16.msra.mxu0 %v107
  %141 = vmatprep.subr.bf16.mxu0 %v110
  %142 = vmatpush1.bf16.msra.mxu0 %v109
  %143 = vmatprep.subr.bf16.mxu0 %v112
  %144 = vmatpush1.bf16.msra.mxu0 %v111
  %145 = vmatprep.subr.bf16.mxu0 %v114
  %146 = vmatpush1.bf16.msra.mxu0 %v113
  %147 = vmatprep.subr.bf16.mxu0 %v116
  %148 = vmatpush1.bf16.msra.mxu0 %v115
  %149 = vmatprep.subr.bf16.mxu0 %v118
  %150 = vmatpush1.bf16.msra.mxu0 %v117
  %151 = vmatprep.subr.bf16.mxu0 %v120
  %152 = vmatpush1.bf16.msra.mxu0 %v119
  %153 = vmatprep.subr.bf16.mxu0 0
  %154 = vmatpush1.bf16.msra.mxu0 0
  %155 = vmatprep.subr.bf16.mxu0 0
  %156 = vmatpush1.bf16.msra.mxu0 0
  %157 = vmatprep.subr.bf16.mxu0 0
  %158 = vmatpush1.bf16.msra.mxu0 0
  %159 = vmatprep.subr.bf16.mxu0 0
  %160 = vmatpush1.bf16.msra.mxu0 0
  %161 = vmatprep.subr.bf16.mxu0 0
  %162 = vmatpush1.bf16.msra.mxu0 0
  %163 = vmatprep.subr.bf16.mxu0 0
  %164 = vmatpush1.bf16.msra.mxu0 0
  %165 = vmatprep.subr.bf16.mxu0 0
  %166 = vmatpush1.bf16.msra.mxu0 0
  %167 = vmatprep.subr.bf16.mxu0 0
  %168 = vmatpush1.bf16.msra.mxu0 0
  %169 = vmatprep.mubr.bf16.mxu0 0
  %170 = vmatmul.mubr.bf16.gmra.mrb[0].mxu0 %v39
  %v171 = vpop.f32.mrb[0].mxu0
  %v172 = vadd.f32 0.0, %v171
  %v173 = vpop.f32.mrb[0].mxu0
  %v174 = vadd.f32 0.0, %v173
  %v175 = vpop.f32.mrb[0].mxu0
  %v176 = vadd.f32 0.0, %v175
  %v177 = vpop.f32.mrb[0].mxu0
  %v178 = vadd.f32 0.0, %v177
  %179 = vmatprep.mubr.bf16.mxu0 0
  %180 = vmatmul.mubr.bf16.gmra.mrb[0].mxu0 %v40
  %v181 = vpop.f32.mrb[0].mxu0
  %v182 = vadd.f32 0.0, %v181
  %v183 = vpop.f32.mrb[0].mxu0
  %v184 = vadd.f32 0.0, %v183
  %v185 = vpop.f32.mrb[0].mxu0
  %v186 = vadd.f32 0.0, %v185
  %v187 = vpop.f32.mrb[0].mxu0
  %v188 = vadd.f32 0.0, %v187
  %189 = vdwg.mxu0
  %v190 = vadd.f32 %v27, %v172
  %v191 = vadd.f32 %v28, %v174
  %v192 = vadd.f32 %v29, %v176
  %v193 = vadd.f32 %v30, %v178
  %v194 = vadd.f32 %v31, %v182
  %v195 = vadd.f32 %v32, %v184
  %v196 = vadd.f32 %v33, %v186
  %v197 = vadd.f32 %v34, %v188
  %198 = vst [vmem:[#allocation2] sm:$0xff] %v190
  %199 = vst [vmem:[#allocation2 + $0x8] sm:$0xff] %v191
  %200 = vst [vmem:[#allocation2 + $0x10] sm:$0xff] %v192
  %201 = vst [vmem:[#allocation2 + $0x18] sm:$0xff] %v193
  %202 = vst [vmem:[#allocation2 + $0x20] sm:$0xff] %v194
  %203 = vst [vmem:[#allocation2 + $0x28] sm:$0xff] %v195
  %204 = vst [vmem:[#allocation2 + $0x30] sm:$0xff] %v196
  %205 = vst [vmem:[#allocation2 + $0x38] sm:$0xff] %v197
  // Predicated region
  $region18: #{transformer_forward.32} parent=0 // pred_check
    %p206 = pneg %p15
  $region19: #{transformer_forward.32} parent=0 // pred_check_branch
    %208 = sbr.rel (%p206) target = $region21
  $region20: #{transformer_forward.32} parent=0 // pred_region
    %v209 = vld [vmem:[#allocation2] sm:$0xff]
    %v210 = vld [vmem:[#allocation2 + $0x8] sm:$0xff]
    %v211 = vld [vmem:[#allocation2 + $0x10] sm:$0xff]
    %v212 = vld [vmem:[#allocation2 + $0x18] sm:$0xff]
    %v213 = vld [vmem:[#allocation2 + $0x20] sm:$0xff]
    %v214 = vld [vmem:[#allocation2 + $0x28] sm:$0xff]
    %v215 = vld [vmem:[#allocation2 + $0x30] sm:$0xff]
    %v216 = vld [vmem:[#allocation2 + $0x38] sm:$0xff]
    %v217 = vld [vmem:[%s2] sm:$0x3]
    %v219 = vlaneseq
    %v220 = vshrl.u32 %v219, 7
    %v221 = vsub.s32 0, %v220
    %v222 = vrot.slane %v217, %v221
    %v223 = vlaneseq
    %v224 = vshrl.u32 %v223, 7
    %v225 = vsub.s32 1, %v224
    %v226 = vrot.slane %v217, %v225
    %v229 = vadd.f32 %v209, %v222
    %v230 = vadd.f32 %v210, %v226
    %v231 = vadd.f32 %v211, %v222
    %v232 = vadd.f32 %v212, %v226
    %v233 = vadd.f32 %v213, %v222
    %v234 = vadd.f32 %v214, %v226
    %v235 = vadd.f32 %v215, %v222
    %v236 = vadd.f32 %v216, %v226
    %v237 = vmax.f32 %v229, 0.0
    %v238 = vmax.f32 %v230, 0.0
    %v239 = vmax.f32 %v231, 0.0
    %v240 = vmax.f32 %v232, 0.0
    %v241 = vmax.f32 %v233, 0.0
    %v242 = vmax.f32 %v234, 0.0
    %v243 = vmax.f32 %v235, 0.0
    %v244 = vmax.f32 %v236, 0.0
    %v245 = vpack.c.bf16 %v239, %v237
    %v246 = vpack.c.bf16 %v240, %v238
    %v247 = vpack.c.bf16 %v243, %v241
    %v248 = vpack.c.bf16 %v244, %v242
    %v253 = vunpack.c.l.b16 %v245
    %v254 = vunpack.c.l.b16 %v246
    %v255 = vunpack.c.h.b16 %v245
    %v256 = vunpack.c.h.b16 %v246
    %v257 = vunpack.c.l.b16 %v247
    %v258 = vunpack.c.l.b16 %v248
    %v259 = vunpack.c.h.b16 %v247
    %v260 = vunpack.c.h.b16 %v248
    %v261 = vpack.c.b16 %v254, %v253
    %v262 = vpack.c.b16 %v256, %v255
    %v263 = vpack.c.b16 %v258, %v257
    %v264 = vpack.c.b16 %v260, %v259
    %269 = vst [vmem:[%s3] sm:$0xff] %v261
    %270 = vst [vmem:[%s3 + $0x8] sm:$0xff] %v262
    %271 = vst [vmem:[%s3 + $0x10] sm:$0xff] %v263
    %272 = vst [vmem:[%s3 + $0x18] sm:$0xff] %v264
  $region21: #{transformer_forward.32} parent=0 // pred_fallthru
    _
  // Predicated region
  $region22: #{transformer_forward.32} parent=0 // pred_check
    _
  $region23: #{transformer_forward.32} parent=0 // pred_check_branch
    %274 = sbr.rel (0) target = $region25
  $region24: #{transformer_forward.32} parent=0 // pred_region
    _
  $region25: #{transformer_forward.32} parent=0 // pred_fallthru
    _
  // Predicated region
  $region26: #{transformer_forward.32} parent=0 // pred_check
    _
  $region27: #{transformer_forward.32} parent=0 // pred_check_branch
    %276 = sbr.rel (0) target = $region29
  $region28: #{transformer_forward.32} parent=0 // pred_region
    _
  $region29: #{transformer_forward.32} parent=0 // pred_fallthru
    _

// kernel: transformer_forward.33
$region0: #{transformer_forward.33}
  #allocation0 [shape = 'u32[]', space=smem, size = 0x4, offset = 0x4, fixed_abs, tag = 'smem constant byte address 0x4 - core index']
  #allocation1 [shape = 'u32[144,128]{1,0:T(1,128)}', space=vmem, size = 0x12000, scoped, tag = 'internal scratch']
  #allocation2 [shape = 'f32[32,128]{1,0:T(8,128)}', space=vmem, size = 0x4000, scoped, tag = 'scratch operand']
  %s0 = inlined_call_operand.vmem [shape: bf16[32,256], index: 0, kind: input, shape index: {}]
  %s1 = inlined_call_operand.vmem [shape: bf16[256,128], index: 1, kind: input, shape index: {}]
  %s2 = inlined_call_operand.vmem [shape: f32[1,128], index: 2, kind: input, shape index: {}]
  %s3 = inlined_call_operand.vmem [shape: f32[32,128], index: 3, kind: input, shape index: {}]
  %s4 = inlined_call_operand.vmem [shape: f32[1,128], index: 4, kind: input, shape index: {}]
  %s5 = inlined_call_operand.vmem [shape: f32[1,128], index: 5, kind: input, shape index: {}]
  %s6 = inlined_call_operand.vmem [shape: f32[32,128], index: 6, kind: output, shape index: {}]
  %s7 = sld [smem:[#allocation0]]
  $region42: #{transformer_forward.33} parent=0
    _
  %s9 = ssub.s32 1, %s7
  %s10 = scalar_select 0, %s9, %s7
  // Predicated region
  $region2: #{transformer_forward.33} parent=0 // pred_check
    _
  $region3: #{transformer_forward.33} parent=0 // pred_check_branch
    %12 = sbr.rel (0) target = $region5
  $region4: #{transformer_forward.33} parent=0 // pred_region
    _
  $region5: #{transformer_forward.33} parent=0 // pred_fallthru
    _
  // Predicated region
  $region6: #{transformer_forward.33} parent=0 // pred_check
    _
  $region7: #{transformer_forward.33} parent=0 // pred_check_branch
    %14 = sbr.rel (0) target = $region9
  $region8: #{transformer_forward.33} parent=0 // pred_region
    _
  $region9: #{transformer_forward.33} parent=0 // pred_fallthru
    _
  // Predicated region
  $region10: #{transformer_forward.33} parent=0 // pred_check
    _
  $region11: #{transformer_forward.33} parent=0 // pred_check_branch
    %16 = sbr.rel (0) target = $region13
  $region12: #{transformer_forward.33} parent=0 // pred_region
    _
  $region13: #{transformer_forward.33} parent=0 // pred_fallthru
    _
  // Predicated region
  $region14: #{transformer_forward.33} parent=0 // pred_check
    _
  $region15: #{transformer_forward.33} parent=0 // pred_check_branch
    %18 = sbr.rel (0) target = $region17
  $region16: #{transformer_forward.33} parent=0 // pred_region
    _
  $region17: #{transformer_forward.33} parent=0 // pred_fallthru
    _
  // Predicated region
  $region18: #{transformer_forward.33} parent=0 // pred_check
    _
  $region19: #{transformer_forward.33} parent=0 // pred_check_branch
    %20 = sbr.rel (0) target = $region21
  $region20: #{transformer_forward.33} parent=0 // pred_region
    _
  $region21: #{transformer_forward.33} parent=0 // pred_fallthru
    _
  // Predicated region
  $region22: #{transformer_forward.33} parent=0 // pred_check
    _
  $region23: #{transformer_forward.33} parent=0 // pred_check_branch
    %22 = sbr.rel (0) target = $region25
  $region24: #{transformer_forward.33} parent=0 // pred_region
    _
  $region25: #{transformer_forward.33} parent=0 // pred_fallthru
    _
  %p24 = scmp.eq.s32.totalorder 0, 0
  // Predicated region
  $region26: #{transformer_forward.33} parent=0 // pred_check
    %p25 = pneg %p24
  $region27: #{transformer_forward.33} parent=0 // pred_check_branch
    %27 = sbr.rel (%p25) target = $region29
  $region28: #{transformer_forward.33} parent=0 // pred_region
    %28 = vst [vmem:[#allocation2] sm:$0xff] 0.0
    %29 = vst [vmem:[#allocation2 + $0x8] sm:$0xff] 0.0
    %30 = vst [vmem:[#allocation2 + $0x10] sm:$0xff] 0.0
    %31 = vst [vmem:[#allocation2 + $0x18] sm:$0xff] 0.0
  $region29: #{transformer_forward.33} parent=0 // pred_fallthru
    _
  %v32 = vld [vmem:[#allocation2] sm:$0xff]
  %v33 = vld [vmem:[#allocation2 + $0x8] sm:$0xff]
  %v34 = vld [vmem:[#allocation2 + $0x10] sm:$0xff]
  %v35 = vld [vmem:[#allocation2 + $0x18] sm:$0xff]
  %v36 = vld [vmem:[%s0] sm:$0xff]
  %v37 = vld [vmem:[%s0 + $0x8] sm:$0xff]
  %v38 = vld [vmem:[%s0 + $0x10] sm:$0xff]
  %v39 = vld [vmem:[%s0 + $0x18] sm:$0xff]
  %v40 = vld [vmem:[%s1] sm:$0xf]
  %v41 = vld [vmem:[%s1 + $0x4] sm:$0xf]
  %v42 = vld [vmem:[%s1 + $0x8] sm:$0xf]
  %v43 = vld [vmem:[%s1 + $0xc] sm:$0xf]
  %v44 = vld [vmem:[%s1 + $0x10] sm:$0xf]
  %v45 = vld [vmem:[%s1 + $0x14] sm:$0xf]
  %v46 = vld [vmem:[%s1 + $0x18] sm:$0xf]
  %v47 = vld [vmem:[%s1 + $0x1c] sm:$0xf]
  %v48 = vld [vmem:[%s1 + $0x20] sm:$0xf]
  %v49 = vld [vmem:[%s1 + $0x24] sm:$0xf]
  %v50 = vld [vmem:[%s1 + $0x28] sm:$0xf]
  %v51 = vld [vmem:[%s1 + $0x2c] sm:$0xf]
  %v52 = vld [vmem:[%s1 + $0x30] sm:$0xf]
  %v53 = vld [vmem:[%s1 + $0x34] sm:$0xf]
  %v54 = vld [vmem:[%s1 + $0x38] sm:$0xf]
  %v55 = vld [vmem:[%s1 + $0x3c] sm:$0xf]
  %v56 = vld [vmem:[%s1 + $0x40] sm:$0xf]
  %v57 = vld [vmem:[%s1 + $0x44] sm:$0xf]
  %v58 = vld [vmem:[%s1 + $0x48] sm:$0xf]
  %v59 = vld [vmem:[%s1 + $0x4c] sm:$0xf]
  %v60 = vld [vmem:[%s1 + $0x50] sm:$0xf]
  %v61 = vld [vmem:[%s1 + $0x54] sm:$0xf]
  %v62 = vld [vmem:[%s1 + $0x58] sm:$0xf]
  %v63 = vld [vmem:[%s1 + $0x5c] sm:$0xf]
  %v64 = vld [vmem:[%s1 + $0x60] sm:$0xf]
  %v65 = vld [vmem:[%s1 + $0x64] sm:$0xf]
  %v66 = vld [vmem:[%s1 + $0x68] sm:$0xf]
  %v67 = vld [vmem:[%s1 + $0x6c] sm:$0xf]
  %v68 = vld [vmem:[%s1 + $0x70] sm:$0xf]
  %v69 = vld [vmem:[%s1 + $0x74] sm:$0xf]
  %v70 = vld [vmem:[%s1 + $0x78] sm:$0xf]
  %v71 = vld [vmem:[%s1 + $0x7c] sm:$0xf]
  %v76 = vunpack.c.l.b16 %v36
  %v77 = vunpack.c.h.b16 %v36
  %v78 = vunpack.c.l.b16 %v37
  %v79 = vunpack.c.h.b16 %v37
  %v80 = vunpack.c.l.b16 %v38
  %v81 = vunpack.c.h.b16 %v38
  %v82 = vunpack.c.l.b16 %v39
  %v83 = vunpack.c.h.b16 %v39
  %v84 = vpack.c.b16 %v78, %v76
  %v85 = vpack.c.b16 %v79, %v77
  %v86 = vpack.c.b16 %v82, %v80
  %v87 = vpack.c.b16 %v83, %v81
  %v124 = vunpack.c.l.b16 %v40
  %v125 = vunpack.c.l.b16 %v41
  %v126 = vunpack.c.l.b16 %v42
  %v127 = vunpack.c.l.b16 %v43
  %v128 = vunpack.c.l.b16 %v44
  %v129 = vunpack.c.l.b16 %v45
  %v130 = vunpack.c.l.b16 %v46
  %v131 = vunpack.c.l.b16 %v47
  %v132 = vunpack.c.l.b16 %v48
  %v133 = vunpack.c.l.b16 %v49
  %v134 = vunpack.c.l.b16 %v50
  %v135 = vunpack.c.l.b16 %v51
  %v136 = vunpack.c.l.b16 %v52
  %v137 = vunpack.c.l.b16 %v53
  %v138 = vunpack.c.l.b16 %v54
  %v139 = vunpack.c.l.b16 %v55
  %v140 = vunpack.c.l.b16 %v56
  %v141 = vunpack.c.l.b16 %v57
  %v142 = vunpack.c.l.b16 %v58
  %v143 = vunpack.c.l.b16 %v59
  %v144 = vunpack.c.l.b16 %v60
  %v145 = vunpack.c.l.b16 %v61
  %v146 = vunpack.c.l.b16 %v62
  %v147 = vunpack.c.l.b16 %v63
  %v148 = vunpack.c.l.b16 %v64
  %v149 = vunpack.c.l.b16 %v65
  %v150 = vunpack.c.l.b16 %v66
  %v151 = vunpack.c.l.b16 %v67
  %v152 = vunpack.c.l.b16 %v68
  %v153 = vunpack.c.l.b16 %v69
  %v154 = vunpack.c.l.b16 %v70
  %v155 = vunpack.c.l.b16 %v71
  %v156 = vpack.c.b16 %v125, %v124
  %v157 = vpack.c.b16 %v127, %v126
  %v158 = vpack.c.b16 %v129, %v128
  %v159 = vpack.c.b16 %v131, %v130
  %v160 = vpack.c.b16 %v133, %v132
  %v161 = vpack.c.b16 %v135, %v134
  %v162 = vpack.c.b16 %v137, %v136
  %v163 = vpack.c.b16 %v139, %v138
  %v164 = vpack.c.b16 %v141, %v140
  %v165 = vpack.c.b16 %v143, %v142
  %v166 = vpack.c.b16 %v145, %v144
  %v167 = vpack.c.b16 %v147, %v146
  %v168 = vpack.c.b16 %v149, %v148
  %v169 = vpack.c.b16 %v151, %v150
  %v170 = vpack.c.b16 %v153, %v152
  %v171 = vpack.c.b16 %v155, %v154
  %188 = vmatprep.subr.bf16.mxu0 0
  %189 = vmatpush1.bf16.msra.mxu0 %v156
  %190 = vmatprep.subr.bf16.mxu0 0
  %191 = vmatpush1.bf16.msra.mxu0 %v157
  %192 = vmatprep.subr.bf16.mxu0 0
  %193 = vmatpush1.bf16.msra.mxu0 %v158
  %194 = vmatprep.subr.bf16.mxu0 0
  %195 = vmatpush1.bf16.msra.mxu0 %v159
  %196 = vmatprep.subr.bf16.mxu0 0
  %197 = vmatpush1.bf16.msra.mxu0 %v160
  %198 = vmatprep.subr.bf16.mxu0 0
  %199 = vmatpush1.bf16.msra.mxu0 %v161
  %200 = vmatprep.subr.bf16.mxu0 0
  %201 = vmatpush1.bf16.msra.mxu0 %v162
  %202 = vmatprep.subr.bf16.mxu0 0
  %203 = vmatpush1.bf16.msra.mxu0 %v163
  %204 = vmatprep.subr.bf16.mxu0 0
  %205 = vmatpush1.bf16.msra.mxu0 %v164
  %206 = vmatprep.subr.bf16.mxu0 0
  %207 = vmatpush1.bf16.msra.mxu0 %v165
  %208 = vmatprep.subr.bf16.mxu0 0
  %209 = vmatpush1.bf16.msra.mxu0 %v166
  %210 = vmatprep.subr.bf16.mxu0 0
  %211 = vmatpush1.bf16.msra.mxu0 %v167
  %212 = vmatprep.subr.bf16.mxu0 0
  %213 = vmatpush1.bf16.msra.mxu0 %v168
  %214 = vmatprep.subr.bf16.mxu0 0
  %215 = vmatpush1.bf16.msra.mxu0 %v169
  %216 = vmatprep.subr.bf16.mxu0 0
  %217 = vmatpush1.bf16.msra.mxu0 %v170
  %218 = vmatprep.subr.bf16.mxu0 0
  %219 = vmatpush1.bf16.msra.mxu0 %v171
  %220 = vmatprep.mubr.bf16.mxu0 %v85
  %221 = vmatmul.mubr.bf16.gmra.mrb[0].mxu0 %v84
  %v222 = vpop.f32.mrb[0].mxu0
  %v223 = vadd.f32 0.0, %v222
  %v224 = vpop.f32.mrb[0].mxu0
  %v225 = vpop.f32.mrb[0].mxu0
  %v226 = vadd.f32 0.0, %v225
  %v227 = vpop.f32.mrb[0].mxu0
  %228 = vmatprep.mubr.bf16.mxu0 %v87
  %229 = vmatmul.mubr.bf16.gmra.mrb[0].mxu0 %v86
  %v230 = vpop.f32.mrb[0].mxu0
  %v231 = vadd.f32 0.0, %v230
  %v232 = vpop.f32.mrb[0].mxu0
  %v233 = vpop.f32.mrb[0].mxu0
  %v234 = vadd.f32 0.0, %v233
  %v235 = vpop.f32.mrb[0].mxu0
  %236 = vdwg.mxu0
  %v237 = vadd.f32 %v32, %v223
  %v238 = vadd.f32 %v33, %v226
  %v239 = vadd.f32 %v34, %v231
  %v240 = vadd.f32 %v35, %v234
  %241 = vst [vmem:[#allocation2] sm:$0xff] %v237
  %242 = vst [vmem:[#allocation2 + $0x8] sm:$0xff] %v238
  %243 = vst [vmem:[#allocation2 + $0x10] sm:$0xff] %v239
  %244 = vst [vmem:[#allocation2 + $0x18] sm:$0xff] %v240
  // Predicated region
  $region30: #{transformer_forward.33} parent=0 // pred_check
    %p245 = pneg %p24
  $region31: #{transformer_forward.33} parent=0 // pred_check_branch
    %247 = sbr.rel (%p245) target = $region33
  $region32: #{transformer_forward.33} parent=0 // pred_region
    %v248 = vld [vmem:[#allocation2] sm:$0xff]
    %v249 = vld [vmem:[#allocation2 + $0x8] sm:$0xff]
    %v250 = vld [vmem:[#allocation2 + $0x10] sm:$0xff]
    %v251 = vld [vmem:[#allocation2 + $0x18] sm:$0xff]
    %v252 = vld [vmem:[%s2] sm:$0x1]
    %v254 = vlaneseq
    %v255 = vshrl.u32 %v254, 7
    %v256 = vsub.s32 0, %v255
    %v257 = vrot.slane %v252, %v256
    %v259 = vadd.f32 %v248, %v257
    %v260 = vadd.f32 %v249, %v257
    %v261 = vadd.f32 %v250, %v257
    %v262 = vadd.f32 %v251, %v257
    %v263 = vld [vmem:[%s3] sm:$0xff]
    %v264 = vld [vmem:[%s3 + $0x8] sm:$0xff]
    %v265 = vld [vmem:[%s3 + $0x10] sm:$0xff]
    %v266 = vld [vmem:[%s3 + $0x18] sm:$0xff]
    %v267 = vadd.f32 %v259, %v263
    %v268 = vadd.f32 %v260, %v264
    %v269 = vadd.f32 %v261, %v265
    %v270 = vadd.f32 %v262, %v266
    %271 = vadd.xlane.f32.xlu0 %v267
    %v272 = vpop.xlane.xlu0 %271
    %273 = vadd.xlane.f32.xlu0 %v268
    %v274 = vpop.xlane.xlu0 %273
    %275 = vadd.xlane.f32.xlu0 %v269
    %v276 = vpop.xlane.xlu0 %275
    %277 = vadd.xlane.f32.xlu0 %v270
    %v278 = vpop.xlane.xlu0 %277
    %v279 = vrcp.pop 128.0
    %v280 = vmul.f32 %v272, %v279
    %v281 = vmul.f32 %v274, %v279
    %v282 = vmul.f32 %v276, %v279
    %v283 = vmul.f32 %v278, %v279
    %v284 = vsub.f32 %v267, %v280
    %v285 = vsub.f32 %v268, %v281
    %v286 = vsub.f32 %v269, %v282
    %v287 = vsub.f32 %v270, %v283
    %v288 = vmul.f32 %v284, %v284
    %v289 = vmul.f32 %v285, %v285
    %v290 = vmul.f32 %v286, %v286
    %v291 = vmul.f32 %v287, %v287
    %292 = vadd.xlane.f32.xlu0 %v288
    %v293 = vpop.xlane.xlu0 %292
    %294 = vadd.xlane.f32.xlu0 %v289
    %v295 = vpop.xlane.xlu0 %294
    %296 = vadd.xlane.f32.xlu0 %v290
    %v297 = vpop.xlane.xlu0 %296
    %298 = vadd.xlane.f32.xlu0 %v291
    %v299 = vpop.xlane.xlu0 %298
    %v300 = vmul.f32 %v293, %v279
    %v301 = vmul.f32 %v295, %v279
    %v302 = vmul.f32 %v297, %v279
    %v303 = vmul.f32 %v299, %v279
    %v304 = vadd.f32 %v300, 1e-05
    %v305 = vadd.f32 %v301, 1e-05
    %v306 = vadd.f32 %v302, 1e-05
    %v307 = vadd.f32 %v303, 1e-05
    %v308 = vrsqrt.pop %v304
    %v309 = vrsqrt.pop %v305
    %v310 = vrsqrt.pop %v306
    %v311 = vrsqrt.pop %v307
    %v312 = vmul.f32 %v284, %v308
    %v313 = vmul.f32 %v285, %v309
    %v314 = vmul.f32 %v286, %v310
    %v315 = vmul.f32 %v287, %v311
    %v316 = vld [vmem:[%s4] sm:$0x1]
    %v318 = vlaneseq
    %v319 = vshrl.u32 %v318, 7
    %v320 = vsub.s32 0, %v319
    %v321 = vrot.slane %v316, %v320
    %v323 = vmul.f32 %v312, %v321
    %v324 = vmul.f32 %v313, %v321
    %v325 = vmul.f32 %v314, %v321
    %v326 = vmul.f32 %v315, %v321
    %v327 = vld [vmem:[%s5] sm:$0x1]
    %v329 = vlaneseq
    %v330 = vshrl.u32 %v329, 7
    %v331 = vsub.s32 0, %v330
    %v332 = vrot.slane %v327, %v331
    %v334 = vadd.f32 %v323, %v332
    %v335 = vadd.f32 %v324, %v332
    %v336 = vadd.f32 %v325, %v332
    %v337 = vadd.f32 %v326, %v332
    %338 = vst [vmem:[%s6] sm:$0xff] %v334
    %339 = vst [vmem:[%s6 + $0x8] sm:$0xff] %v335
    %340 = vst [vmem:[%s6 + $0x10] sm:$0xff] %v336
    %341 = vst [vmem:[%s6 + $0x18] sm:$0xff] %v337
  $region33: #{transformer_forward.33} parent=0 // pred_fallthru
    _
  // Predicated region
  $region34: #{transformer_forward.33} parent=0 // pred_check
    _
  $region35: #{transformer_forward.33} parent=0 // pred_check_branch
    %343 = sbr.rel (0) target = $region37
  $region36: #{transformer_forward.33} parent=0 // pred_region
    _
  $region37: #{transformer_forward.33} parent=0 // pred_fallthru
    _
  // Predicated region
  $region38: #{transformer_forward.33} parent=0 // pred_check
    _
  $region39: #{transformer_forward.33} parent=0 // pred_check_branch
    %345 = sbr.rel (0) target = $region41
  $region40: #{transformer_forward.33} parent=0 // pred_region
    _
  $region41: #{transformer_forward.33} parent=0 // pred_fallthru
    _

// kernel: transformer_forward.52
$region0: #{transformer_forward.52}
  #allocation0 [shape = 'u32[]', space=smem, size = 0x4, offset = 0x4, fixed_abs, tag = 'smem constant byte address 0x4 - core index']
  #allocation1 [shape = 'u32[144,128]{1,0:T(1,128)}', space=vmem, size = 0x12000, scoped, tag = 'internal scratch']
  #allocation2 [shape = 'f32[32,256]{1,0:T(8,128)}', space=vmem, size = 0x8000, scoped, tag = 'scratch operand']
  %s0 = inlined_call_operand.vmem [shape: f32[32,128], index: 0, kind: input, shape index: {}]
  %s1 = inlined_call_operand.vmem [shape: bf16[128,256], index: 1, kind: input, shape index: {}]
  %s2 = inlined_call_operand.vmem [shape: f32[1,256], index: 2, kind: input, shape index: {}]
  %s3 = inlined_call_operand.vmem [shape: bf16[32,256], index: 3, kind: output, shape index: {}]
  %s4 = sld [smem:[#allocation0]]
  $region30: #{transformer_forward.52} parent=0
    _
  %s6 = ssub.s32 1, %s4
  %s7 = scalar_select 0, %s6, %s4
  // Predicated region
  $region2: #{transformer_forward.52} parent=0 // pred_check
    _
  $region3: #{transformer_forward.52} parent=0 // pred_check_branch
    %9 = sbr.rel (0) target = $region5
  $region4: #{transformer_forward.52} parent=0 // pred_region
    _
  $region5: #{transformer_forward.52} parent=0 // pred_fallthru
    _
  // Predicated region
  $region6: #{transformer_forward.52} parent=0 // pred_check
    _
  $region7: #{transformer_forward.52} parent=0 // pred_check_branch
    %11 = sbr.rel (0) target = $region9
  $region8: #{transformer_forward.52} parent=0 // pred_region
    _
  $region9: #{transformer_forward.52} parent=0 // pred_fallthru
    _
  // Predicated region
  $region10: #{transformer_forward.52} parent=0 // pred_check
    _
  $region11: #{transformer_forward.52} parent=0 // pred_check_branch
    %13 = sbr.rel (0) target = $region13
  $region12: #{transformer_forward.52} parent=0 // pred_region
    _
  $region13: #{transformer_forward.52} parent=0 // pred_fallthru
    _
  %p15 = scmp.eq.s32.totalorder 0, 0
  // Predicated region
  $region14: #{transformer_forward.52} parent=0 // pred_check
    %p16 = pneg %p15
  $region15: #{transformer_forward.52} parent=0 // pred_check_branch
    %18 = sbr.rel (%p16) target = $region17
  $region16: #{transformer_forward.52} parent=0 // pred_region
    %19 = vst [vmem:[#allocation2] sm:$0xff] 0.0
    %20 = vst [vmem:[#allocation2 + $0x8] sm:$0xff] 0.0
    %21 = vst [vmem:[#allocation2 + $0x10] sm:$0xff] 0.0
    %22 = vst [vmem:[#allocation2 + $0x18] sm:$0xff] 0.0
    %23 = vst [vmem:[#allocation2 + $0x20] sm:$0xff] 0.0
    %24 = vst [vmem:[#allocation2 + $0x28] sm:$0xff] 0.0
    %25 = vst [vmem:[#allocation2 + $0x30] sm:$0xff] 0.0
    %26 = vst [vmem:[#allocation2 + $0x38] sm:$0xff] 0.0
  $region17: #{transformer_forward.52} parent=0 // pred_fallthru
    _
  %v27 = vld [vmem:[#allocation2] sm:$0xff]
  %v28 = vld [vmem:[#allocation2 + $0x8] sm:$0xff]
  %v29 = vld [vmem:[#allocation2 + $0x10] sm:$0xff]
  %v30 = vld [vmem:[#allocation2 + $0x18] sm:$0xff]
  %v31 = vld [vmem:[#allocation2 + $0x20] sm:$0xff]
  %v32 = vld [vmem:[#allocation2 + $0x28] sm:$0xff]
  %v33 = vld [vmem:[#allocation2 + $0x30] sm:$0xff]
  %v34 = vld [vmem:[#allocation2 + $0x38] sm:$0xff]
  %v35 = vld [vmem:[%s0] sm:$0xff]
  %v36 = vld [vmem:[%s0 + $0x8] sm:$0xff]
  %v37 = vld [vmem:[%s0 + $0x10] sm:$0xff]
  %v38 = vld [vmem:[%s0 + $0x18] sm:$0xff]
  %v39 = vpack.c.bf16 %v36, %v35
  %v40 = vpack.c.bf16 %v38, %v37
  %v41 = vld [vmem:[%s1] sm:$0xff]
  %v42 = vld [vmem:[%s1 + $0x8] sm:$0xff]
  %v43 = vld [vmem:[%s1 + $0x10] sm:$0xff]
  %v44 = vld [vmem:[%s1 + $0x18] sm:$0xff]
  %v45 = vld [vmem:[%s1 + $0x20] sm:$0xff]
  %v46 = vld [vmem:[%s1 + $0x28] sm:$0xff]
  %v47 = vld [vmem:[%s1 + $0x30] sm:$0xff]
  %v48 = vld [vmem:[%s1 + $0x38] sm:$0xff]
  %v49 = vld [vmem:[%s1 + $0x40] sm:$0xff]
  %v50 = vld [vmem:[%s1 + $0x48] sm:$0xff]
  %v51 = vld [vmem:[%s1 + $0x50] sm:$0xff]
  %v52 = vld [vmem:[%s1 + $0x58] sm:$0xff]
  %v53 = vld [vmem:[%s1 + $0x60] sm:$0xff]
  %v54 = vld [vmem:[%s1 + $0x68] sm:$0xff]
  %v55 = vld [vmem:[%s1 + $0x70] sm:$0xff]
  %v56 = vld [vmem:[%s1 + $0x78] sm:$0xff]
  %v73 = vunpack.c.l.b16 %v41
  %v74 = vunpack.c.h.b16 %v41
  %v75 = vunpack.c.l.b16 %v42
  %v76 = vunpack.c.h.b16 %v42
  %v77 = vunpack.c.l.b16 %v43
  %v78 = vunpack.c.h.b16 %v43
  %v79 = vunpack.c.l.b16 %v44
  %v80 = vunpack.c.h.b16 %v44
  %v81 = vunpack.c.l.b16 %v45
  %v82 = vunpack.c.h.b16 %v45
  %v83 = vunpack.c.l.b16 %v46
  %v84 = vunpack.c.h.b16 %v46
  %v85 = vunpack.c.l.b16 %v47
  %v86 = vunpack.c.h.b16 %v47
  %v87 = vunpack.c.l.b16 %v48
  %v88 = vunpack.c.h.b16 %v48
  %v89 = vunpack.c.l.b16 %v49
  %v90 = vunpack.c.h.b16 %v49
  %v91 = vunpack.c.l.b16 %v50
  %v92 = vunpack.c.h.b16 %v50
  %v93 = vunpack.c.l.b16 %v51
  %v94 = vunpack.c.h.b16 %v51
  %v95 = vunpack.c.l.b16 %v52
  %v96 = vunpack.c.h.b16 %v52
  %v97 = vunpack.c.l.b16 %v53
  %v98 = vunpack.c.h.b16 %v53
  %v99 = vunpack.c.l.b16 %v54
  %v100 = vunpack.c.h.b16 %v54
  %v101 = vunpack.c.l.b16 %v55
  %v102 = vunpack.c.h.b16 %v55
  %v103 = vunpack.c.l.b16 %v56
  %v104 = vunpack.c.h.b16 %v56
  %v105 = vpack.c.b16 %v75, %v73
  %v106 = vpack.c.b16 %v76, %v74
  %v107 = vpack.c.b16 %v79, %v77
  %v108 = vpack.c.b16 %v80, %v78
  %v109 = vpack.c.b16 %v83, %v81
  %v110 = vpack.c.b16 %v84, %v82
  %v111 = vpack.c.b16 %v87, %v85
  %v112 = vpack.c.b16 %v88, %v86
  %v113 = vpack.c.b16 %v91, %v89
  %v114 = vpack.c.b16 %v92, %v90
  %v115 = vpack.c.b16 %v95, %v93
  %v116 = vpack.c.b16 %v96, %v94
  %v117 = vpack.c.b16 %v99, %v97
  %v118 = vpack.c.b16 %v100, %v98
  %v119 = vpack.c.b16 %v103, %v101
  %v120 = vpack.c.b16 %v104, %v102
  %137 = vmatprep.subr.bf16.mxu0 %v106
  %138 = vmatpush1.bf16.msra.mxu0 %v105
  %139 = vmatprep.subr.bf16.mxu0 %v108
  %140 = vmatpush1.bf16.msra.mxu0 %v107
  %141 = vmatprep.subr.bf16.mxu0 %v110
  %142 = vmatpush1.bf16.msra.mxu0 %v109
  %143 = vmatprep.subr.bf16.mxu0 %v112
  %144 = vmatpush1.bf16.msra.mxu0 %v111
  %145 = vmatprep.subr.bf16.mxu0 %v114
  %146 = vmatpush1.bf16.msra.mxu0 %v113
  %147 = vmatprep.subr.bf16.mxu0 %v116
  %148 = vmatpush1.bf16.msra.mxu0 %v115
  %149 = vmatprep.subr.bf16.mxu0 %v118
  %150 = vmatpush1.bf16.msra.mxu0 %v117
  %151 = vmatprep.subr.bf16.mxu0 %v120
  %152 = vmatpush1.bf16.msra.mxu0 %v119
  %153 = vmatprep.subr.bf16.mxu0 0
  %154 = vmatpush1.bf16.msra.mxu0 0
  %155 = vmatprep.subr.bf16.mxu0 0
  %156 = vmatpush1.bf16.msra.mxu0 0
  %157 = vmatprep.subr.bf16.mxu0 0
  %158 = vmatpush1.bf16.msra.mxu0 0
  %159 = vmatprep.subr.bf16.mxu0 0
  %160 = vmatpush1.bf16.msra.mxu0 0
  %161 = vmatprep.subr.bf16.mxu0 0
  %162 = vmatpush1.bf16.msra.mxu0 0
  %163 = vmatprep.subr.bf16.mxu0 0
  %164 = vmatpush1.bf16.msra.mxu0 0
  %165 = vmatprep.subr.bf16.mxu0 0
  %166 = vmatpush1.bf16.msra.mxu0 0
  %167 = vmatprep.subr.bf16.mxu0 0
  %168 = vmatpush1.bf16.msra.mxu0 0
  %169 = vmatprep.mubr.bf16.mxu0 0
  %170 = vmatmul.mubr.bf16.gmra.mrb[0].mxu0 %v39
  %v171 = vpop.f32.mrb[0].mxu0
  %v172 = vadd.f32 0.0, %v171
  %v173 = vpop.f32.mrb[0].mxu0
  %v174 = vadd.f32 0.0, %v173
  %v175 = vpop.f32.mrb[0].mxu0
  %v176 = vadd.f32 0.0, %v175
  %v177 = vpop.f32.mrb[0].mxu0
  %v178 = vadd.f32 0.0, %v177
  %179 = vmatprep.mubr.bf16.mxu0 0
  %180 = vmatmul.mubr.bf16.gmra.mrb[0].mxu0 %v40
  %v181 = vpop.f32.mrb[0].mxu0
  %v182 = vadd.f32 0.0, %v181
  %v183 = vpop.f32.mrb[0].mxu0
  %v184 = vadd.f32 0.0, %v183
  %v185 = vpop.f32.mrb[0].mxu0
  %v186 = vadd.f32 0.0, %v185
  %v187 = vpop.f32.mrb[0].mxu0
  %v188 = vadd.f32 0.0, %v187
  %189 = vdwg.mxu0
  %v190 = vadd.f32 %v27, %v172
  %v191 = vadd.f32 %v28, %v174
  %v192 = vadd.f32 %v29, %v176
  %v193 = vadd.f32 %v30, %v178
  %v194 = vadd.f32 %v31, %v182
  %v195 = vadd.f32 %v32, %v184
  %v196 = vadd.f32 %v33, %v186
  %v197 = vadd.f32 %v34, %v188
  %198 = vst [vmem:[#allocation2] sm:$0xff] %v190
  %199 = vst [vmem:[#allocation2 + $0x8] sm:$0xff] %v191
  %200 = vst [vmem:[#allocation2 + $0x10] sm:$0xff] %v192
  %201 = vst [vmem:[#allocation2 + $0x18] sm:$0xff] %v193
  %202 = vst [vmem:[#allocation2 + $0x20] sm:$0xff] %v194
  %203 = vst [vmem:[#allocation2 + $0x28] sm:$0xff] %v195
  %204 = vst [vmem:[#allocation2 + $0x30] sm:$0xff] %v196
  %205 = vst [vmem:[#allocation2 + $0x38] sm:$0xff] %v197
  // Predicated region
  $region18: #{transformer_forward.52} parent=0 // pred_check
    %p206 = pneg %p15
  $region19: #{transformer_forward.52} parent=0 // pred_check_branch
    %208 = sbr.rel (%p206) target = $region21
  $region20: #{transformer_forward.52} parent=0 // pred_region
    %v209 = vld [vmem:[#allocation2] sm:$0xff]
    %v210 = vld [vmem:[#allocation2 + $0x8] sm:$0xff]
    %v211 = vld [vmem:[#allocation2 + $0x10] sm:$0xff]
    %v212 = vld [vmem:[#allocation2 + $0x18] sm:$0xff]
    %v213 = vld [vmem:[#allocation2 + $0x20] sm:$0xff]
    %v214 = vld [vmem:[#allocation2 + $0x28] sm:$0xff]
    %v215 = vld [vmem:[#allocation2 + $0x30] sm:$0xff]
    %v216 = vld [vmem:[#allocation2 + $0x38] sm:$0xff]
    %v217 = vld [vmem:[%s2] sm:$0x3]
    %v219 = vlaneseq
    %v220 = vshrl.u32 %v219, 7
    %v221 = vsub.s32 0, %v220
    %v222 = vrot.slane %v217, %v221
    %v223 = vlaneseq
    %v224 = vshrl.u32 %v223, 7
    %v225 = vsub.s32 1, %v224
    %v226 = vrot.slane %v217, %v225
    %v229 = vadd.f32 %v209, %v222
    %v230 = vadd.f32 %v210, %v226
    %v231 = vadd.f32 %v211, %v222
    %v232 = vadd.f32 %v212, %v226
    %v233 = vadd.f32 %v213, %v222
    %v234 = vadd.f32 %v214, %v226
    %v235 = vadd.f32 %v215, %v222
    %v236 = vadd.f32 %v216, %v226
    %v237 = vpack.c.bf16 %v231, %v229
    %v238 = vpack.c.bf16 %v232, %v230
    %v239 = vpack.c.bf16 %v235, %v233
    %v240 = vpack.c.bf16 %v236, %v234
    %v245 = vunpack.c.l.b16 %v237
    %v246 = vunpack.c.l.b16 %v238
    %v247 = vunpack.c.h.b16 %v237
    %v248 = vunpack.c.h.b16 %v238
    %v249 = vunpack.c.l.b16 %v239
    %v250 = vunpack.c.l.b16 %v240
    %v251 = vunpack.c.h.b16 %v239
    %v252 = vunpack.c.h.b16 %v240
    %v253 = vpack.c.b16 %v246, %v245
    %v254 = vpack.c.b16 %v248, %v247
    %v255 = vpack.c.b16 %v250, %v249
    %v256 = vpack.c.b16 %v252, %v251
    %261 = vst [vmem:[%s3] sm:$0xff] %v253
    %262 = vst [vmem:[%s3 + $0x8] sm:$0xff] %v254
    %263 = vst [vmem:[%s3 + $0x10] sm:$0xff] %v255
    %264 = vst [vmem:[%s3 + $0x18] sm:$0xff] %v256
  $region21: #{transformer_forward.52} parent=0 // pred_fallthru
    _
  // Predicated region
  $region22: #{transformer_forward.52} parent=0 // pred_check
    _
  $region23: #{transformer_forward.52} parent=0 // pred_check_branch
    %266 = sbr.rel (0) target = $region25
  $region24: #{transformer_forward.52} parent=0 // pred_region
    _
  $region25: #{transformer_forward.52} parent=0 // pred_fallthru
    _
  // Predicated region
  $region26: #{transformer_forward.52} parent=0 // pred_check
    _
  $region27: #{transformer_forward.52} parent=0 // pred_check_branch
    %268 = sbr.rel (0) target = $region29
  $region28: #{transformer_forward.52} parent=0 // pred_region
    _
  $region29: #{transformer_forward.52} parent=0 // pred_fallthru
    _

// kernel: transformer_forward.30
$region0: #{transformer_forward.30}
  #allocation0 [shape = 'u32[]', space=smem, size = 0x4, offset = 0x4, fixed_abs, tag = 'smem constant byte address 0x4 - core index']
  #allocation1 [shape = 'u32[144,128]{1,0:T(1,128)}', space=vmem, size = 0x12000, scoped, tag = 'internal scratch']
  #allocation2 [shape = 'f32[4,16,1]{2,1,0:T(8,128)}', space=vmem, size = 0x8000, scoped, tag = 'scratch operand']
  #allocation3 [shape = 'f32[4,16,1]{2,1,0:T(8,128)}', space=vmem, size = 0x8000, scoped, tag = 'scratch operand']
  #allocation4 [shape = 'f32[4,16,32]{2,1,0:T(8,128)}', space=vmem, size = 0x8000, scoped, tag = 'scratch operand']
  %s0 = inlined_call_operand.vmem [shape: f32[2,1,16], index: 0, kind: input, shape index: {}]
  %s1 = inlined_call_operand.vmem [shape: bf16[2,16,384], index: 1, kind: input, shape index: {}, may-alias: {1,2,3}]
  %s2 = inlined_call_operand.vmem [shape: bf16[2,16,384], index: 2, kind: input, shape index: {}, may-alias: {1,2,3}]
  %s3 = inlined_call_operand.vmem [shape: bf16[2,16,384], index: 3, kind: input, shape index: {}, may-alias: {1,2,3}]
  %s4 = inlined_call_operand.vmem [shape: bf16[2,16,128], index: 4, kind: output, shape index: {}]
  %s5 = sld [smem:[#allocation0]]
  $region180: #{transformer_forward.30} parent=0
    _
  %s7 = ssub.s32 1, %s5
  %s8 = scalar_select 0, %s7, %s5
  $region1: #{transformer_forward.30} parent=0
    #allocation5 [shape = 'u8[8192]{0}', space=vmem, size = 0x2000, scoped, tag = 'input window, operand 1']
    #allocation6 [shape = 'u8[8192]{0}', space=vmem, size = 0x2000, scoped, tag = 'input window, operand 2']
    #allocation7 [shape = 'u8[8192]{0}', space=vmem, size = 0x2000, scoped, tag = 'input window, operand 3']
    loop: start=0, step=1, limit=4
    $region2: #{transformer_forward.30} parent=1 // loop_pre_header
      _
    $region3: #{transformer_forward.30} parent=1 // loop_header
      %s10 = sphi 0, %s14
      %p11 = scmp.ge.s32.totalorder %s10, 4
      %s17 = sphi 0, %s36
      %s18 = sphi 0, %s32
      %s19 = sphi 0, %s28
      %s20 = sphi 0, %s17
      %s21 = sphi 0, %s18
      %s22 = sphi 0, %s19
      %s23 = sphi 0, %s20
      %s24 = sphi 0, %s21
      %s25 = sphi 0, %s22
      %s41 = sphi 0, %s43
      %s44 = sphi 0, %s41
      %s45 = sphi 0, %s44
      %s61 = sphi 0, %s45
      %s69 = sphi 0, %s71
      %s72 = sphi 0, %s69
      %s73 = sphi 0, %s72
      %s89 = sphi 0, %s73
      %s97 = sphi 0, %s99
      %s100 = sphi 0, %s97
      %s101 = sphi 0, %s100
      %s117 = sphi 0, %s101
      %s125 = sphi 0, %s127
      %s128 = sphi 0, %s125
      %s129 = sphi 0, %s128
      %s145 = sphi 0, %s129
      %s153 = sphi 0, %s155
      %s156 = sphi 0, %s153
      %s157 = sphi 0, %s156
      %s173 = sphi 0, %s157
    $region4: #{transformer_forward.30} parent=1 // loop_header_branch
      %13 = sbr.rel (%p11) target = $region8
    $region5: #{transformer_forward.30} parent=1 // loop_body
      %s15 = ssub.s32 %s10, 1
      %s16 = ssub.s32 %s10, 2
      %s26 = sadd.s32 1, %s19
      %p27 = scmp.ge.s32.totalorder %s26, 1
      %s28 = scalar_select %p27, 0, %s26
      %s29 = sadd.s32 1, %s18
      %s30 = scalar_select %p27, %s29, %s18
      %p31 = scmp.ge.s32.totalorder %s30, 1
      %s32 = scalar_select %p31, 0, %s30
      %s33 = sadd.s32 1, %s17
      %s34 = scalar_select %p31, %s33, %s17
      %p35 = scmp.ge.s32.totalorder %s34, 2
      %s36 = scalar_select %p35, 0, %s34
      %s37 = ssub.s32 %s17, %s36
      %s38 = ssub.s32 %s19, %s28
      %s39 = sor.u32 %s37, %s38
      %p40 = scmp.eq.s32.totalorder %s39, 0
      %s42 = sadd.s32 %s41, 1
      %s43 = scalar_select %p40, %s41, %s42
      %p46 = pneg %p40
      %p47 = scmp.eq.s32.totalorder %s10, 1
      %p48 = por %p46, %p47
      %p49 = scmp.ne.s32.totalorder %s41, %s44
      %p50 = scmp.eq.s32.totalorder %s10, 0
      %p51 = por %p49, %p50
      %p52 = scmp.ne.s32.totalorder %s41, %s44
      %p53 = scmp.eq.s32.totalorder %s15, 1
      %p54 = por %p52, %p53
      %p55 = scmp.ne.s32.totalorder %s44, %s45
      %p56 = scmp.eq.s32.totalorder %s15, 0
      %p57 = por %p55, %p56
      %p58 = scmp.ne.s32.totalorder %s44, %s45
      %p59 = scmp.eq.s32.totalorder %s16, 1
      %p60 = por %p58, %p59
      %p62 = scmp.ne.s32.totalorder %s45, %s61
      %p63 = scmp.eq.s32.totalorder %s16, 0
      %p64 = por %p62, %p63
      %s65 = ssub.s32 %s17, %s36
      %s66 = ssub.s32 %s18, %s32
      %s67 = sor.u32 %s65, %s66
      %p68 = scmp.eq.s32.totalorder %s67, 0
      %s70 = sadd.s32 %s69, 1
      %s71 = scalar_select %p68, %s69, %s70
      %p74 = pneg %p68
      %p75 = scmp.eq.s32.totalorder %s10, 1
      %p76 = por %p74, %p75
      %p77 = scmp.ne.s32.totalorder %s69, %s72
      %p78 = scmp.eq.s32.totalorder %s10, 0
      %p79 = por %p77, %p78
      %p80 = scmp.ne.s32.totalorder %s69, %s72
      %p81 = scmp.eq.s32.totalorder %s15, 1
      %p82 = por %p80, %p81
      %p83 = scmp.ne.s32.totalorder %s72, %s73
      %p84 = scmp.eq.s32.totalorder %s15, 0
      %p85 = por %p83, %p84
      %p86 = scmp.ne.s32.totalorder %s72, %s73
      %p87 = scmp.eq.s32.totalorder %s16, 1
      %p88 = por %p86, %p87
      %p90 = scmp.ne.s32.totalorder %s73, %s89
      %p91 = scmp.eq.s32.totalorder %s16, 0
      %p92 = por %p90, %p91
      %s93 = ssub.s32 %s17, %s36
      %s94 = ssub.s32 %s19, %s28
      %s95 = sor.u32 %s93, %s94
      %p96 = scmp.eq.s32.totalorder %s95, 0
      %s98 = sadd.s32 %s97, 1
      %s99 = scalar_select %p96, %s97, %s98
      %p102 = pneg %p96
      %p103 = scmp.eq.s32.totalorder %s10, 1
      %p104 = por %p102, %p103
      %p105 = scmp.ne.s32.totalorder %s97, %s100
      %p106 = scmp.eq.s32.totalorder %s10, 0
      %p107 = por %p105, %p106
      %p108 = scmp.ne.s32.totalorder %s97, %s100
      %p109 = scmp.eq.s32.totalorder %s15, 1
      %p110 = por %p108, %p109
      %p111 = scmp.ne.s32.totalorder %s100, %s101
      %p112 = scmp.eq.s32.totalorder %s15, 0
      %p113 = por %p111, %p112
      %p114 = scmp.ne.s32.totalorder %s100, %s101
      %p115 = scmp.eq.s32.totalorder %s16, 1
      %p116 = por %p114, %p115
      %p118 = scmp.ne.s32.totalorder %s101, %s117
      %p119 = scmp.eq.s32.totalorder %s16, 0
      %p120 = por %p118, %p119
      %s121 = ssub.s32 %s17, %s36
      %s122 = ssub.s32 %s19, %s28
      %s123 = sor.u32 %s121, %s122
      %p124 = scmp.eq.s32.totalorder %s123, 0
      %s126 = sadd.s32 %s125, 1
      %s127 = scalar_select %p124, %s125, %s126
      %p130 = pneg %p124
      %p131 = scmp.eq.s32.totalorder %s10, 1
      %p132 = por %p130, %p131
      %p133 = scmp.ne.s32.totalorder %s125, %s128
      %p134 = scmp.eq.s32.totalorder %s10, 0
      %p135 = por %p133, %p134
      %p136 = scmp.ne.s32.totalorder %s125, %s128
      %p137 = scmp.eq.s32.totalorder %s15, 1
      %p138 = por %p136, %p137
      %p139 = scmp.ne.s32.totalorder %s128, %s129
      %p140 = scmp.eq.s32.totalorder %s15, 0
      %p141 = por %p139, %p140
      %p142 = scmp.ne.s32.totalorder %s128, %s129
      %p143 = scmp.eq.s32.totalorder %s16, 1
      %p144 = por %p142, %p143
      %p146 = scmp.ne.s32.totalorder %s129, %s145
      %p147 = scmp.eq.s32.totalorder %s16, 0
      %p148 = por %p146, %p147
      %s149 = ssub.s32 %s17, %s36
      %s150 = ssub.s32 %s18, %s32
      %s151 = sor.u32 %s149, %s150
      %p152 = scmp.eq.s32.totalorder %s151, 0
      %s154 = sadd.s32 %s153, 1
      %s155 = scalar_select %p152, %s153, %s154
      %p158 = pneg %p152
      %p159 = scmp.eq.s32.totalorder %s10, 1
      %p160 = por %p158, %p159
      %p161 = scmp.ne.s32.totalorder %s153, %s156
      %p162 = scmp.eq.s32.totalorder %s10, 0
      %p163 = por %p161, %p162
      %p164 = scmp.ne.s32.totalorder %s153, %s156
      %p165 = scmp.eq.s32.totalorder %s15, 1
      %p166 = por %p164, %p165
      %p167 = scmp.ne.s32.totalorder %s156, %s157
      %p168 = scmp.eq.s32.totalorder %s15, 0
      %p169 = por %p167, %p168
      %p170 = scmp.ne.s32.totalorder %s156, %s157
      %p171 = scmp.eq.s32.totalorder %s16, 1
      %p172 = por %p170, %p171
      %p174 = scmp.ne.s32.totalorder %s157, %s173
      %p175 = scmp.eq.s32.totalorder %s16, 0
      %p176 = por %p174, %p175
      %p177 = scmp.le.s32.totalorder 1, %s10
      %p178 = scmp.lt.s32.totalorder %s10, 3
      %p179 = pnand %p177, %p178
      %p180 = pneg %p179
      // Predicated region
      $region9: #{transformer_forward.30} parent=5 // pred_check
        _
      $region10: #{transformer_forward.30} parent=5 // pred_check_branch
        %182 = sbr.rel (%p179) target = $region12
      $region11: #{transformer_forward.30} parent=5 // pred_region
        %s183 = ssub.s32 %s10, 1
      $region12: #{transformer_forward.30} parent=5 // pred_fallthru
        _
      %p184 = scmp.lt.s32.totalorder %s10, 2
      // Predicated region
      $region13: #{transformer_forward.30} parent=5 // pred_check
        %p185 = pneg %p184
      $region14: #{transformer_forward.30} parent=5 // pred_check_branch
        %187 = sbr.rel (%p185) target = $region16
      $region15: #{transformer_forward.30} parent=5 // pred_region
        // Predicated region
        $region17: #{transformer_forward.30} parent=15 // pred_check
          %p188 = pneg %p51
        $region18: #{transformer_forward.30} parent=15 // pred_check_branch
          %190 = sbr.rel (%p188) target = $region20
        $region19: #{transformer_forward.30} parent=15 // pred_region
          %p191 = scmp.lt.s32.totalorder %s17, 1
          %s192 = scalar_select %p191, %s17, 1
          %p193 = scmp.lt.s32.totalorder %s19, 0
          %s194 = scalar_select %p193, %s19, 0
          %s195 = sadd.s32 %s194, %s192
          %s196 = scalar_lea.vmem %s0, %s195
        $region20: #{transformer_forward.30} parent=15 // pred_fallthru
          _
        // Predicated region
        $region21: #{transformer_forward.30} parent=15 // pred_check
          %p197 = pneg %p79
        $region22: #{transformer_forward.30} parent=15 // pred_check_branch
          %199 = sbr.rel (%p197) target = $region24
        $region23: #{transformer_forward.30} parent=15 // pred_region
          %s200 = sand.u32 %s69, 1
          %s201 = sand.u32 %s69, 1
          %s202 = smul.addr %s201, 8
          %s203 = scalar_lea.vmem [#allocation5], %s202
          %s204 = smul.u32 2, %s18
          %s205 = smul.addr %s204, 3
          %s206 = smul.addr %s17, 6
          %s207 = sadd.s32 %s205, %s206
          %s208 = smul.addr %s207, 4
          %s209 = scalar_lea.vmem %s1, %s208
          // Predicated region
          $region25: #{transformer_forward.30} parent=23 // pred_check
            _
          $region26: #{transformer_forward.30} parent=23 // pred_check_branch
            %211 = sbr.rel (0) target = $region28
          $region27: #{transformer_forward.30} parent=23 // pred_region
            // Predicated region
            $region29: #{transformer_forward.30} parent=27 // pred_check
              _
            $region30: #{transformer_forward.30} parent=27 // pred_check_branch
              %213 = sbr.rel target = $region32
            $region31: #{transformer_forward.30} parent=27 // pred_region
              // Predicated region
              $region44: #{transformer_forward.30} parent=31 // pred_check
                _
              $region45: #{transformer_forward.30} parent=31 // pred_check_branch
                %230 = sbr.rel (0) target = $region47
              $region46: #{transformer_forward.30} parent=31 // pred_region
                loop: start=0, step=1, limit=1
                $region48: #{transformer_forward.30} parent=46 // loop_pre_header
                  _
                $region49: #{transformer_forward.30} parent=46 // loop_header
                  %s232 = sphi 0, %s236
                  %p233 = scmp.ge.s32.totalorder %s232, 1
                  %s237 = sphi %s209, %s209
                  %s238 = sphi %s203, %s203
                $region50: #{transformer_forward.30} parent=46 // loop_header_branch
                  %235 = sbr.rel (%p233) target = $region54
                $region51: #{transformer_forward.30} parent=46 // loop_body
                  _
                $region52: #{transformer_forward.30} parent=46 // loop_footer
                  %s236 = sadd.s32 1, %s232
                $region53: #{transformer_forward.30} parent=46 // loop_footer_branch
                  %231 = sbr.rel target = $region49
                $region54: #{transformer_forward.30} parent=46 // loop_exit
                  _
                loop: start=0, step=1, limit=1
                $region55: #{transformer_forward.30} parent=46 // loop_pre_header
                  _
                $region56: #{transformer_forward.30} parent=46 // loop_header
                  %s241 = sphi 0, %s245
                  %p242 = scmp.ge.s32.totalorder %s241, 1
                  %s246 = sphi %s209, %s209
                  %s247 = sphi %s203, %s203
                $region57: #{transformer_forward.30} parent=46 // loop_header_branch
                  %244 = sbr.rel (%p242) target = $region61
                $region58: #{transformer_forward.30} parent=46 // loop_body
                  %v248 = vld [vmem:[%s246] sm:$0xf]
                  %249 = vst [vmem:[%s247] sm:$0xf] %v248
                  %v250 = vld [vmem:[%s246 + $0xc] sm:$0xf]
                  %251 = vst [vmem:[%s247 + $0x4] sm:$0xf] %v250
                $region59: #{transformer_forward.30} parent=46 // loop_footer
                  %s245 = sadd.s32 1, %s241
                $region60: #{transformer_forward.30} parent=46 // loop_footer_branch
                  %240 = sbr.rel target = $region56
                $region61: #{transformer_forward.30} parent=46 // loop_exit
                  _
              $region47: #{transformer_forward.30} parent=31 // pred_fallthru
                _
            $region32: #{transformer_forward.30} parent=27 // pred_fallthru
              _
            // Predicated region
            $region33: #{transformer_forward.30} parent=27 // pred_check
              _
            $region34: #{transformer_forward.30} parent=27 // pred_check_branch
              %215 = sbr.rel (0) target = $region36
            $region35: #{transformer_forward.30} parent=27 // pred_region
              loop: start=0, step=1, limit=1
              $region37: #{transformer_forward.30} parent=35 // loop_pre_header
                _
              $region38: #{transformer_forward.30} parent=35 // loop_header
                %s218 = sphi 0, %s222
                %p219 = scmp.ge.s32.totalorder %s218, 1
                %s223 = sphi %s209, %s209
                %s224 = sphi %s203, %s203
              $region39: #{transformer_forward.30} parent=35 // loop_header_branch
                %221 = sbr.rel (%p219) target = $region43
              $region40: #{transformer_forward.30} parent=35 // loop_body
                %v225 = vld [vmem:[%s223] sm:$0xf]
                %226 = vst [vmem:[%s224] sm:$0xf] %v225
                %v227 = vld [vmem:[%s223 + $0xc] sm:$0xf]
                %228 = vst [vmem:[%s224 + $0x4] sm:$0xf] %v227
              $region41: #{transformer_forward.30} parent=35 // loop_footer
                %s222 = sadd.s32 1, %s218
              $region42: #{transformer_forward.30} parent=35 // loop_footer_branch
                %217 = sbr.rel target = $region38
              $region43: #{transformer_forward.30} parent=35 // loop_exit
                _
            $region36: #{transformer_forward.30} parent=27 // pred_fallthru
              _
          $region28: #{transformer_forward.30} parent=23 // pred_fallthru
            _
          %252 = vnop
        $region24: #{transformer_forward.30} parent=15 // pred_fallthru
          _
        // Predicated region
        $region62: #{transformer_forward.30} parent=15 // pred_check
          %p253 = pneg %p107
        $region63: #{transformer_forward.30} parent=15 // pred_check_branch
          %255 = sbr.rel (%p253) target = $region65
        $region64: #{transformer_forward.30} parent=15 // pred_region
          %s256 = sand.u32 %s97, 1
          %s257 = sand.u32 %s97, 1
          %s258 = smul.addr %s257, 8
          %s259 = scalar_lea.vmem [#allocation6], %s258
          %s260 = smul.u32 2, %s19
          %s261 = smul.addr %s260, 3
          %s262 = sadd.s32 1, %s261
          %s263 = smul.addr %s17, 6
          %s264 = sadd.s32 %s262, %s263
          %s265 = smul.addr %s264, 4
          %s266 = scalar_lea.vmem %s2, %s265
          // Predicated region
          $region66: #{transformer_forward.30} parent=64 // pred_check
            _
          $region67: #{transformer_forward.30} parent=64 // pred_check_branch
            %268 = sbr.rel (0) target = $region69
          $region68: #{transformer_forward.30} parent=64 // pred_region
            // Predicated region
            $region70: #{transformer_forward.30} parent=68 // pred_check
              _
            $region71: #{transformer_forward.30} parent=68 // pred_check_branch
              %270 = sbr.rel target = $region73
            $region72: #{transformer_forward.30} parent=68 // pred_region
              // Predicated region
              $region85: #{transformer_forward.30} parent=72 // pred_check
                _
              $region86: #{transformer_forward.30} parent=72 // pred_check_branch
                %287 = sbr.rel (0) target = $region88
              $region87: #{transformer_forward.30} parent=72 // pred_region
                loop: start=0, step=1, limit=1
                $region89: #{transformer_forward.30} parent=87 // loop_pre_header
                  _
                $region90: #{transformer_forward.30} parent=87 // loop_header
                  %s289 = sphi 0, %s293
                  %p290 = scmp.ge.s32.totalorder %s289, 1
                  %s294 = sphi %s266, %s266
                  %s295 = sphi %s259, %s259
                $region91: #{transformer_forward.30} parent=87 // loop_header_branch
                  %292 = sbr.rel (%p290) target = $region95
                $region92: #{transformer_forward.30} parent=87 // loop_body
                  _
                $region93: #{transformer_forward.30} parent=87 // loop_footer
                  %s293 = sadd.s32 1, %s289
                $region94: #{transformer_forward.30} parent=87 // loop_footer_branch
                  %288 = sbr.rel target = $region90
                $region95: #{transformer_forward.30} parent=87 // loop_exit
                  _
                loop: start=0, step=1, limit=1
                $region96: #{transformer_forward.30} parent=87 // loop_pre_header
                  _
                $region97: #{transformer_forward.30} parent=87 // loop_header
                  %s298 = sphi 0, %s302
                  %p299 = scmp.ge.s32.totalorder %s298, 1
                  %s303 = sphi %s266, %s266
                  %s304 = sphi %s259, %s259
                $region98: #{transformer_forward.30} parent=87 // loop_header_branch
                  %301 = sbr.rel (%p299) target = $region102
                $region99: #{transformer_forward.30} parent=87 // loop_body
                  %v305 = vld [vmem:[%s303] sm:$0xf]
                  %306 = vst [vmem:[%s304] sm:$0xf] %v305
                  %v307 = vld [vmem:[%s303 + $0xc] sm:$0xf]
                  %308 = vst [vmem:[%s304 + $0x4] sm:$0xf] %v307
                $region100: #{transformer_forward.30} parent=87 // loop_footer
                  %s302 = sadd.s32 1, %s298
                $region101: #{transformer_forward.30} parent=87 // loop_footer_branch
                  %297 = sbr.rel target = $region97
                $region102: #{transformer_forward.30} parent=87 // loop_exit
                  _
              $region88: #{transformer_forward.30} parent=72 // pred_fallthru
                _
            $region73: #{transformer_forward.30} parent=68 // pred_fallthru
              _
            // Predicated region
            $region74: #{transformer_forward.30} parent=68 // pred_check
              _
            $region75: #{transformer_forward.30} parent=68 // pred_check_branch
              %272 = sbr.rel (0) target = $region77
            $region76: #{transformer_forward.30} parent=68 // pred_region
              loop: start=0, step=1, limit=1
              $region78: #{transformer_forward.30} parent=76 // loop_pre_header
                _
              $region79: #{transformer_forward.30} parent=76 // loop_header
                %s275 = sphi 0, %s279
                %p276 = scmp.ge.s32.totalorder %s275, 1
                %s280 = sphi %s266, %s266
                %s281 = sphi %s259, %s259
              $region80: #{transformer_forward.30} parent=76 // loop_header_branch
                %278 = sbr.rel (%p276) target = $region84
              $region81: #{transformer_forward.30} parent=76 // loop_body
                %v282 = vld [vmem:[%s280] sm:$0xf]
                %283 = vst [vmem:[%s281] sm:$0xf] %v282
                %v284 = vld [vmem:[%s280 + $0xc] sm:$0xf]
                %285 = vst [vmem:[%s281 + $0x4] sm:$0xf] %v284
              $region82: #{transformer_forward.30} parent=76 // loop_footer
                %s279 = sadd.s32 1, %s275
              $region83: #{transformer_forward.30} parent=76 // loop_footer_branch
                %274 = sbr.rel target = $region79
              $region84: #{transformer_forward.30} parent=76 // loop_exit
                _
            $region77: #{transformer_forward.30} parent=68 // pred_fallthru
              _
          $region69: #{transformer_forward.30} parent=64 // pred_fallthru
            _
          %309 = vnop
        $region65: #{transformer_forward.30} parent=15 // pred_fallthru
          _
        // Predicated region
        $region103: #{transformer_forward.30} parent=15 // pred_check
          %p310 = pneg %p135
        $region104: #{transformer_forward.30} parent=15 // pred_check_branch
          %312 = sbr.rel (%p310) target = $region106
        $region105: #{transformer_forward.30} parent=15 // pred_region
          %s313 = sand.u32 %s125, 1
          %s314 = sand.u32 %s125, 1
          %s315 = smul.addr %s314, 8
          %s316 = scalar_lea.vmem [#allocation7], %s315
          %s317 = smul.u32 2, %s19
          %s318 = smul.addr %s317, 3
          %s319 = sadd.s32 2, %s318
          %s320 = smul.addr %s17, 6
          %s321 = sadd.s32 %s319, %s320
          %s322 = smul.addr %s321, 4
          %s323 = scalar_lea.vmem %s3, %s322
          // Predicated region
          $region107: #{transformer_forward.30} parent=105 // pred_check
            _
          $region108: #{transformer_forward.30} parent=105 // pred_check_branch
            %325 = sbr.rel (0) target = $region110
          $region109: #{transformer_forward.30} parent=105 // pred_region
            // Predicated region
            $region111: #{transformer_forward.30} parent=109 // pred_check
              _
            $region112: #{transformer_forward.30} parent=109 // pred_check_branch
              %327 = sbr.rel target = $region114
            $region113: #{transformer_forward.30} parent=109 // pred_region
              // Predicated region
              $region126: #{transformer_forward.30} parent=113 // pred_check
                _
              $region127: #{transformer_forward.30} parent=113 // pred_check_branch
                %344 = sbr.rel (0) target = $region129
              $region128: #{transformer_forward.30} parent=113 // pred_region
                loop: start=0, step=1, limit=1
                $region130: #{transformer_forward.30} parent=128 // loop_pre_header
                  _
                $region131: #{transformer_forward.30} parent=128 // loop_header
                  %s346 = sphi 0, %s350
                  %p347 = scmp.ge.s32.totalorder %s346, 1
                  %s351 = sphi %s323, %s323
                  %s352 = sphi %s316, %s316
                $region132: #{transformer_forward.30} parent=128 // loop_header_branch
                  %349 = sbr.rel (%p347) target = $region136
                $region133: #{transformer_forward.30} parent=128 // loop_body
                  _
                $region134: #{transformer_forward.30} parent=128 // loop_footer
                  %s350 = sadd.s32 1, %s346
                $region135: #{transformer_forward.30} parent=128 // loop_footer_branch
                  %345 = sbr.rel target = $region131
                $region136: #{transformer_forward.30} parent=128 // loop_exit
                  _
                loop: start=0, step=1, limit=1
                $region137: #{transformer_forward.30} parent=128 // loop_pre_header
                  _
                $region138: #{transformer_forward.30} parent=128 // loop_header
                  %s355 = sphi 0, %s359
                  %p356 = scmp.ge.s32.totalorder %s355, 1
                  %s360 = sphi %s323, %s323
                  %s361 = sphi %s316, %s316
                $region139: #{transformer_forward.30} parent=128 // loop_header_branch
                  %358 = sbr.rel (%p356) target = $region143
                $region140: #{transformer_forward.30} parent=128 // loop_body
                  %v362 = vld [vmem:[%s360] sm:$0xf]
                  %363 = vst [vmem:[%s361] sm:$0xf] %v362
                  %v364 = vld [vmem:[%s360 + $0xc] sm:$0xf]
                  %365 = vst [vmem:[%s361 + $0x4] sm:$0xf] %v364
                $region141: #{transformer_forward.30} parent=128 // loop_footer
                  %s359 = sadd.s32 1, %s355
                $region142: #{transformer_forward.30} parent=128 // loop_footer_branch
                  %354 = sbr.rel target = $region138
                $region143: #{transformer_forward.30} parent=128 // loop_exit
                  _
              $region129: #{transformer_forward.30} parent=113 // pred_fallthru
                _
            $region114: #{transformer_forward.30} parent=109 // pred_fallthru
              _
            // Predicated region
            $region115: #{transformer_forward.30} parent=109 // pred_check
              _
            $region116: #{transformer_forward.30} parent=109 // pred_check_branch
              %329 = sbr.rel (0) target = $region118
            $region117: #{transformer_forward.30} parent=109 // pred_region
              loop: start=0, step=1, limit=1
              $region119: #{transformer_forward.30} parent=117 // loop_pre_header
                _
              $region120: #{transformer_forward.30} parent=117 // loop_header
                %s332 = sphi 0, %s336
                %p333 = scmp.ge.s32.totalorder %s332, 1
                %s337 = sphi %s323, %s323
                %s338 = sphi %s316, %s316
              $region121: #{transformer_forward.30} parent=117 // loop_header_branch
                %335 = sbr.rel (%p333) target = $region125
              $region122: #{transformer_forward.30} parent=117 // loop_body
                %v339 = vld [vmem:[%s337] sm:$0xf]
                %340 = vst [vmem:[%s338] sm:$0xf] %v339
                %v341 = vld [vmem:[%s337 + $0xc] sm:$0xf]
                %342 = vst [vmem:[%s338 + $0x4] sm:$0xf] %v341
              $region123: #{transformer_forward.30} parent=117 // loop_footer
                %s336 = sadd.s32 1, %s332
              $region124: #{transformer_forward.30} parent=117 // loop_footer_branch
                %331 = sbr.rel target = $region120
              $region125: #{transformer_forward.30} parent=117 // loop_exit
                _
            $region118: #{transformer_forward.30} parent=109 // pred_fallthru
              _
          $region110: #{transformer_forward.30} parent=105 // pred_fallthru
            _
          %366 = vnop
        $region106: #{transformer_forward.30} parent=15 // pred_fallthru
          _
      $region16: #{transformer_forward.30} parent=5 // pred_fallthru
        _
      %p367 = scmp.le.s32.totalorder 1, %s10
      %p368 = scmp.lt.s32.totalorder %s10, 3
      %p369 = pnand %p367, %p368
      %p370 = pneg %p369
      // Predicated region
      $region144: #{transformer_forward.30} parent=5 // pred_check
        _
      $region145: #{transformer_forward.30} parent=5 // pred_check_branch
        %372 = sbr.rel (%p369) target = $region147
      $region146: #{transformer_forward.30} parent=5 // pred_region
        %s373 = ssub.s32 %s10, 1
        %s374 = sand.u32 %s72, 1
        %s375 = sand.u32 %s72, 1
        %s376 = smul.addr %s375, 8
        %s377 = scalar_lea.vmem [#allocation5], %s376
        // Predicated region
        $region148: #{transformer_forward.30} parent=146 // pred_check
          %p378 = pneg %p85
        $region149: #{transformer_forward.30} parent=146 // pred_check_branch
          %380 = sbr.rel (%p378) target = $region151
        $region150: #{transformer_forward.30} parent=146 // pred_region
          _
        $region151: #{transformer_forward.30} parent=146 // pred_fallthru
          _
        %s381 = sand.u32 %s100, 1
        %s382 = sand.u32 %s100, 1
        %s383 = smul.addr %s382, 8
        %s384 = scalar_lea.vmem [#allocation6], %s383
        // Predicated region
        $region152: #{transformer_forward.30} parent=146 // pred_check
          %p385 = pneg %p113
        $region153: #{transformer_forward.30} parent=146 // pred_check_branch
          %387 = sbr.rel (%p385) target = $region155
        $region154: #{transformer_forward.30} parent=146 // pred_region
          _
        $region155: #{transformer_forward.30} parent=146 // pred_fallthru
          _
        %s388 = sand.u32 %s128, 1
        %s389 = sand.u32 %s128, 1
        %s390 = smul.addr %s389, 8
        %s391 = scalar_lea.vmem [#allocation7], %s390
        // Predicated region
        $region156: #{transformer_forward.30} parent=146 // pred_check
          %p392 = pneg %p141
        $region157: #{transformer_forward.30} parent=146 // pred_check_branch
          %394 = sbr.rel (%p392) target = $region159
        $region158: #{transformer_forward.30} parent=146 // pred_region
          _
        $region159: #{transformer_forward.30} parent=146 // pred_fallthru
          _
        %p395 = scmp.lt.s32.totalorder %s20, 1
        %s396 = scalar_select %p395, %s20, 1
        %p397 = scmp.lt.s32.totalorder %s22, 0
        %s398 = scalar_select %p397, %s22, 0
        %s399 = sadd.s32 %s398, %s396
        %s400 = scalar_lea.vmem %s0, %s399
        %p401 = pneg %p57
        %p402 = pneg %p54
        %s403 = sand.u32 %s72, 1
        %s404 = sand.u32 %s72, 1
        %s405 = smul.addr %s404, 8
        %s406 = scalar_lea.vmem [#allocation5], %s405
        %p407 = pneg %p85
        %p408 = pneg %p82
        %s409 = sand.u32 %s100, 1
        %s410 = sand.u32 %s100, 1
        %s411 = smul.addr %s410, 8
        %s412 = scalar_lea.vmem [#allocation6], %s411
        %p413 = pneg %p113
        %p414 = pneg %p110
        %s415 = sand.u32 %s128, 1
        %s416 = sand.u32 %s128, 1
        %s417 = smul.addr %s416, 8
        %s418 = scalar_lea.vmem [#allocation7], %s417
        %p419 = pneg %p141
        %p420 = pneg %p138
        %p421 = pneg %p169
        %p422 = pneg %p166
        %s423 = smul.u32 2, %s21
        %p424 = scmp.lt.s32.totalorder %s20, 1
        %s425 = scalar_select %p424, %s20, 1
        %p426 = scmp.lt.s32.totalorder %s423, 1
        %s427 = scalar_select %p426, %s423, 1
        %s428 = smul.addr %s425, 2
        %s429 = sadd.s32 %s427, %s428
        %s430 = smul.addr %s429, 4
        %s431 = scalar_lea.vmem %s4, %s430
        %p432 = scmp.lt.s32.totalorder %s20, 1
        %s433 = scalar_select %p432, %s20, 1
        %p434 = scmp.lt.s32.totalorder %s22, 0
        %s435 = scalar_select %p434, %s22, 0
        %s436 = sadd.s32 %s435, %s433
        %s437 = scalar_lea.vmem %s0, %s436
        %s438 = smul.u32 2, %s21
        %s439 = smul.u32 2, %s22
        %s440 = smul.u32 2, %s22
        %s441 = smul.u32 2, %s21
        %p442 = scmp.lt.s32.totalorder %s20, 1
        %s443 = scalar_select %p442, %s20, 1
        %p444 = scmp.lt.s32.totalorder %s441, 1
        %s445 = scalar_select %p444, %s441, 1
        %s446 = smul.addr %s443, 2
        %s447 = sadd.s32 %s445, %s446
        %s448 = smul.addr %s447, 4
        %s449 = scalar_lea.vmem %s4, %s448
        %s450 = smul.u32 2, %s21
        %p452 = scmp.eq.s32.totalorder %s22, 0
        // Predicated region
        $region160: #{transformer_forward.30} parent=146 // pred_check
          %p453 = pneg %p452
        $region161: #{transformer_forward.30} parent=146 // pred_check_branch
          %455 = sbr.rel (%p453) target = $region163
        $region162: #{transformer_forward.30} parent=146 // pred_region
          %vm456 = vcmask 7168
          %457 = vst.msk [vmem:[#allocation2] sm:$0xff] %vm456, -inf
          %458 = vst.msk [vmem:[#allocation2 + $0x8] sm:$0xff] %vm456, -inf
          %459 = vst.msk [vmem:[#allocation2 + $0x10] sm:$0xff] %vm456, -inf
          %460 = vst.msk [vmem:[#allocation2 + $0x18] sm:$0xff] %vm456, -inf
          %461 = vst.msk [vmem:[#allocation2 + $0x20] sm:$0xff] %vm456, -inf
          %462 = vst.msk [vmem:[#allocation2 + $0x28] sm:$0xff] %vm456, -inf
          %463 = vst.msk [vmem:[#allocation2 + $0x30] sm:$0xff] %vm456, -inf
          %464 = vst.msk [vmem:[#allocation2 + $0x38] sm:$0xff] %vm456, -inf
          %465 = vst.msk [vmem:[#allocation3] sm:$0xff] %vm456, 0.0
          %466 = vst.msk [vmem:[#allocation3 + $0x8] sm:$0xff] %vm456, 0.0
          %467 = vst.msk [vmem:[#allocation3 + $0x10] sm:$0xff] %vm456, 0.0
          %468 = vst.msk [vmem:[#allocation3 + $0x18] sm:$0xff] %vm456, 0.0
          %469 = vst.msk [vmem:[#allocation3 + $0x20] sm:$0xff] %vm456, 0.0
          %470 = vst.msk [vmem:[#allocation3 + $0x28] sm:$0xff] %vm456, 0.0
          %471 = vst.msk [vmem:[#allocation3 + $0x30] sm:$0xff] %vm456, 0.0
          %472 = vst.msk [vmem:[#allocation3 + $0x38] sm:$0xff] %vm456, 0.0
          %vm473 = vcmask 261120
          %474 = vst.msk [vmem:[#allocation4] sm:$0xff] %vm473, 0.0
          %475 = vst.msk [vmem:[#allocation4 + $0x8] sm:$0xff] %vm473, 0.0
          %476 = vst.msk [vmem:[#allocation4 + $0x10] sm:$0xff] %vm473, 0.0
          %477 = vst.msk [vmem:[#allocation4 + $0x18] sm:$0xff] %vm473, 0.0
          %478 = vst.msk [vmem:[#allocation4 + $0x20] sm:$0xff] %vm473, 0.0
          %479 = vst.msk [vmem:[#allocation4 + $0x28] sm:$0xff] %vm473, 0.0
          %480 = vst.msk [vmem:[#allocation4 + $0x30] sm:$0xff] %vm473, 0.0
          %481 = vst.msk [vmem:[#allocation4 + $0x38] sm:$0xff] %vm473, 0.0
        $region163: #{transformer_forward.30} parent=146 // pred_fallthru
          _
        %v482 = vld [vmem:[%s377] sm:$0xf]
        %v483 = vld [vmem:[%s377 + $0x4] sm:$0xf]
        %v484 = vld [vmem:[%s384] sm:$0xf]
        %v485 = vld [vmem:[%s384 + $0x4] sm:$0xf]
        %v486 = vld [vmem:[%s391] sm:$0xf]
        %v487 = vld [vmem:[%s391 + $0x4] sm:$0xf]
        %v488 = vld [vmem:[%s437] sm:$0x1]
        %v490 = vlaneseq
        %v491 = vshrl.u32 %v490, 7
        %v492 = vsub.s32 0, %v491
        %v493 = vrot.slane %v488, %v492
        %v497 = vunpack.c.l.b16 %v482
        %v498 = vunpack.c.l.b16 %v483
        %v499 = vpack.c.b16 %v498, %v497
        %v502 = vunpack.c.l.b16 %v484
        %v503 = vunpack.c.l.b16 %v485
        %v504 = vpack.c.b16 %v503, %v502
        %vm505 = vcmask 261120
        %v507 = vsel %vm505, %v499, 0
        %v510 = vsel %vm505, %v504, 0
        %512 = vmatprep.subr.bf16.mxu0 0
        %513 = vmatpush1.bf16.xpose.msra.mxu0 %v510
        %514 = vmatprep.subr.bf16.mxu0 0
        %515 = vmatpush1.bf16.xpose.msra.mxu0 0
        %516 = vmatprep.subr.bf16.mxu0 0
        %517 = vmatpush1.bf16.xpose.msra.mxu0 0
        %518 = vmatprep.subr.bf16.mxu0 0
        %519 = vmatpush1.bf16.xpose.msra.mxu0 0
        %520 = vmatprep.subr.bf16.mxu0 0
        %521 = vmatpush1.bf16.xpose.msra.mxu0 0
        %522 = vmatprep.subr.bf16.mxu0 0
        %523 = vmatpush1.bf16.xpose.msra.mxu0 0
        %524 = vmatprep.subr.bf16.mxu0 0
        %525 = vmatpush1.bf16.xpose.msra.mxu0 0
        %526 = vmatprep.subr.bf16.mxu0 0
        %527 = vmatpush1.bf16.xpose.msra.mxu0 0
        %528 = vmatprep.subr.bf16.mxu0 0
        %529 = vmatpush1.bf16.xpose.msra.mxu0 0
        %530 = vmatprep.subr.bf16.mxu0 0
        %531 = vmatpush1.bf16.xpose.msra.mxu0 0
        %532 = vmatprep.subr.bf16.mxu0 0
        %533 = vmatpush1.bf16.xpose.msra.mxu0 0
        %534 = vmatprep.subr.bf16.mxu0 0
        %535 = vmatpush1.bf16.xpose.msra.mxu0 0
        %536 = vmatprep.subr.bf16.mxu0 0
        %537 = vmatpush1.bf16.xpose.msra.mxu0 0
        %538 = vmatprep.subr.bf16.mxu0 0
        %539 = vmatpush1.bf16.xpose.msra.mxu0 0
        %540 = vmatprep.subr.bf16.mxu0 0
        %541 = vmatpush1.bf16.xpose.msra.mxu0 0
        %542 = vmatprep.subr.bf16.mxu0 0
        %543 = vmatpush1.bf16.xpose.msra.mxu0 0
        %544 = vmatprep.mubr.bf16.mxu0 0
        %545 = vmatmul.mubr.bf16.gmra.mrb[0].mxu0 %v507
        %v546 = vpop.f32.mrb[0].mxu0
        %v547 = vadd.f32 %v493, %v546
        %v548 = vpop.f32.mrb[0].mxu0
        %v549 = vpop.f32.mrb[0].mxu0
        %v550 = vadd.f32 %v493, %v549
        %v551 = vpop.f32.mrb[0].mxu0
        %552 = vdwg.mxu0
        %v553 = vld [vmem:[#allocation2] sm:$0xff]
        %v554 = vld [vmem:[#allocation2 + $0x8] sm:$0xff]
        %vm555 = vcmask 130048
        %v556 = vsel %vm555, %v547, -inf
        %557 = vmax.xlane.f32.xlu0 %v556
        %v558 = vpop.xlane.xlu0 %557
        %v559 = vsel %vm555, %v550, -inf
        %560 = vmax.xlane.f32.xlu0 %v559
        %v561 = vpop.xlane.xlu0 %560
        %v562 = vmax.f32 %v553, %v558
        %v563 = vmax.f32 %v554, %v561
        %v564 = vsub.f32 %v553, %v562
        %v565 = vsub.f32 %v554, %v563
        %v566 = vmul.f32 %v564, 1.442695
        %v567 = vpow.pop %v566
        %v568 = vmul.f32 %v565, 1.442695
        %v569 = vpow.pop %v568
        %571 = vset.pattern.permute.xlu0 0
        %572 = vperm.xlu0 %571, %v562
        %v573 = vpop.permute.xlu0 %572
        %576 = vset.pattern.permute.xlu0 0
        %577 = vperm.xlu0 %576, %v563
        %v578 = vpop.permute.xlu0 %577
        %v580 = vsub.f32 %v547, %v573
        %v581 = vsub.f32 %v550, %v578
        %v582 = vmul.f32 %v580, 1.442695
        %v583 = vpow.pop %v582
        %v584 = vmul.f32 %v581, 1.442695
        %v585 = vpow.pop %v584
        %v586 = vld [vmem:[#allocation3] sm:$0xff]
        %v587 = vld [vmem:[#allocation3 + $0x8] sm:$0xff]
        %v588 = vmul.f32 %v567, %v586
        %v589 = vmul.f32 %v569, %v587
        %v590 = vsel %vm555, %v583, 0.0
        %591 = vadd.xlane.f32.xlu0 %v590
        %v592 = vpop.xlane.xlu0 %591
        %v593 = vsel %vm555, %v585, 0.0
        %594 = vadd.xlane.f32.xlu0 %v593
        %v595 = vpop.xlane.xlu0 %594
        %v596 = vadd.f32 %v588, %v592
        %v597 = vadd.f32 %v589, %v595
        %vm598 = vcmask 7168
        %599 = vst.msk [vmem:[#allocation3] sm:$0xff] %vm598, %v596
        %600 = vst.msk [vmem:[#allocation3 + $0x8] sm:$0xff] %vm598, %v597
        %v601 = vld [vmem:[#allocation4] sm:$0xff]
        %v602 = vld [vmem:[#allocation4 + $0x8] sm:$0xff]
        %604 = vset.pattern.permute.xlu0 0
        %605 = vperm.xlu0 %604, %v567
        %v606 = vpop.permute.xlu0 %605
        %609 = vset.pattern.permute.xlu0 0
        %610 = vperm.xlu0 %609, %v569
        %v611 = vpop.permute.xlu0 %610
        %v613 = vmul.f32 %v606, %v601
        %v614 = vmul.f32 %v611, %v602
        %v615 = vpack.c.bf16 %v585, %v583
        %v618 = vunpack.c.l.b16 %v486
        %v619 = vunpack.c.l.b16 %v487
        %v620 = vpack.c.b16 %v619, %v618
        %v623 = vsel %vm555, %v615, 0
        %625 = vmatprep.subr.bf16.mxu0 0
        %626 = vmatpush1.bf16.msra.mxu0 %v620
        %627 = vmatprep.subr.bf16.mxu0 0
        %628 = vmatpush1.bf16.msra.mxu0 0
        %629 = vmatprep.subr.bf16.mxu0 0
        %630 = vmatpush1.bf16.msra.mxu0 0
        %631 = vmatprep.subr.bf16.mxu0 0
        %632 = vmatpush1.bf16.msra.mxu0 0
        %633 = vmatprep.subr.bf16.mxu0 0
        %634 = vmatpush1.bf16.msra.mxu0 0
        %635 = vmatprep.subr.bf16.mxu0 0
        %636 = vmatpush1.bf16.msra.mxu0 0
        %637 = vmatprep.subr.bf16.mxu0 0
        %638 = vmatpush1.bf16.msra.mxu0 0
        %639 = vmatprep.subr.bf16.mxu0 0
        %640 = vmatpush1.bf16.msra.mxu0 0
        %641 = vmatprep.subr.bf16.mxu0 0
        %642 = vmatpush1.bf16.msra.mxu0 0
        %643 = vmatprep.subr.bf16.mxu0 0
        %644 = vmatpush1.bf16.msra.mxu0 0
        %645 = vmatprep.subr.bf16.mxu0 0
        %646 = vmatpush1.bf16.msra.mxu0 0
        %647 = vmatprep.subr.bf16.mxu0 0
        %648 = vmatpush1.bf16.msra.mxu0 0
        %649 = vmatprep.subr.bf16.mxu0 0
        %650 = vmatpush1.bf16.msra.mxu0 0
        %651 = vmatprep.subr.bf16.mxu0 0
        %652 = vmatpush1.bf16.msra.mxu0 0
        %653 = vmatprep.subr.bf16.mxu0 0
        %654 = vmatpush1.bf16.msra.mxu0 0
        %655 = vmatprep.subr.bf16.mxu0 0
        %656 = vmatpush1.bf16.msra.mxu0 0
        %657 = vmatprep.mubr.bf16.mxu0 0
        %658 = vmatmul.mubr.bf16.gmra.mrb[0].mxu0 %v623
        %v659 = vpop.f32.mrb[0].mxu0
        %v660 = vadd.f32 0.0, %v659
        %v661 = vpop.f32.mrb[0].mxu0
        %v662 = vpop.f32.mrb[0].mxu0
        %v663 = vadd.f32 0.0, %v662
        %v664 = vpop.f32.mrb[0].mxu0
        %665 = vdwg.mxu0
        %v666 = vadd.f32 %v613, %v660
        %v667 = vadd.f32 %v614, %v663
        %668 = vst.msk [vmem:[#allocation4] sm:$0xff] %vm505, %v666
        %669 = vst.msk [vmem:[#allocation4 + $0x8] sm:$0xff] %vm505, %v667
        %670 = vst.msk [vmem:[#allocation2] sm:$0xff] %vm598, %v562
        %671 = vst.msk [vmem:[#allocation2 + $0x8] sm:$0xff] %vm598, %v563
        %672 = vrot.lane.b32.xlu0 %v499, 96
        %v673 = vpop.permute.xlu0 %672
        %674 = vrot.lane.b32.xlu0 %v504, 96
        %v675 = vpop.permute.xlu0 %674
        %v677 = vsel %vm505, %v673, 0
        %v680 = vsel %vm505, %v675, 0
        %682 = vmatprep.subr.bf16.mxu0 0
        %683 = vmatpush1.bf16.xpose.msra.mxu0 %v680
        %684 = vmatprep.subr.bf16.mxu0 0
        %685 = vmatpush1.bf16.xpose.msra.mxu0 0
        %686 = vmatprep.subr.bf16.mxu0 0
        %687 = vmatpush1.bf16.xpose.msra.mxu0 0
        %688 = vmatprep.subr.bf16.mxu0 0
        %689 = vmatpush1.bf16.xpose.msra.mxu0 0
        %690 = vmatprep.subr.bf16.mxu0 0
        %691 = vmatpush1.bf16.xpose.msra.mxu0 0
        %692 = vmatprep.subr.bf16.mxu0 0
        %693 = vmatpush1.bf16.xpose.msra.mxu0 0
        %694 = vmatprep.subr.bf16.mxu0 0
        %695 = vmatpush1.bf16.xpose.msra.mxu0 0
        %696 = vmatprep.subr.bf16.mxu0 0
        %697 = vmatpush1.bf16.xpose.msra.mxu0 0
        %698 = vmatprep.subr.bf16.mxu0 0
        %699 = vmatpush1.bf16.xpose.msra.mxu0 0
        %700 = vmatprep.subr.bf16.mxu0 0
        %701 = vmatpush1.bf16.xpose.msra.mxu0 0
        %702 = vmatprep.subr.bf16.mxu0 0
        %703 = vmatpush1.bf16.xpose.msra.mxu0 0
        %704 = vmatprep.subr.bf16.mxu0 0
        %705 = vmatpush1.bf16.xpose.msra.mxu0 0
        %706 = vmatprep.subr.bf16.mxu0 0
        %707 = vmatpush1.bf16.xpose.msra.mxu0 0
        %708 = vmatprep.subr.bf16.mxu0 0
        %709 = vmatpush1.bf16.xpose.msra.mxu0 0
        %710 = vmatprep.subr.bf16.mxu0 0
        %711 = vmatpush1.bf16.xpose.msra.mxu0 0
        %712 = vmatprep.subr.bf16.mxu0 0
        %713 = vmatpush1.bf16.xpose.msra.mxu0 0
        %714 = vmatprep.mubr.bf16.mxu0 0
        %715 = vmatmul.mubr.bf16.gmra.mrb[0].mxu0 %v677
        %v716 = vpop.f32.mrb[0].mxu0
        %v717 = vadd.f32 %v493, %v716
        %v718 = vpop.f32.mrb[0].mxu0
        %v719 = vpop.f32.mrb[0].mxu0
        %v720 = vadd.f32 %v493, %v719
        %v721 = vpop.f32.mrb[0].mxu0
        %722 = vdwg.mxu0
        %s723 = scalar_lea.vmem [#allocation2], 16
        %v724 = vld [vmem:[%s723] sm:$0xff]
        %v725 = vld [vmem:[%s723 + $0x8] sm:$0xff]
        %v726 = vsel %vm555, %v717, -inf
        %727 = vmax.xlane.f32.xlu0 %v726
        %v728 = vpop.xlane.xlu0 %727
        %v729 = vsel %vm555, %v720, -inf
        %730 = vmax.xlane.f32.xlu0 %v729
        %v731 = vpop.xlane.xlu0 %730
        %v732 = vmax.f32 %v724, %v728
        %v733 = vmax.f32 %v725, %v731
        %v734 = vsub.f32 %v724, %v732
        %v735 = vsub.f32 %v725, %v733
        %v736 = vmul.f32 %v734, 1.442695
        %v737 = vpow.pop %v736
        %v738 = vmul.f32 %v735, 1.442695
        %v739 = vpow.pop %v738
        %741 = vset.pattern.permute.xlu0 0
        %742 = vperm.xlu0 %741, %v732
        %v743 = vpop.permute.xlu0 %742
        %746 = vset.pattern.permute.xlu0 0
        %747 = vperm.xlu0 %746, %v733
        %v748 = vpop.permute.xlu0 %747
        %v750 = vsub.f32 %v717, %v743
        %v751 = vsub.f32 %v720, %v748
        %v752 = vmul.f32 %v750, 1.442695
        %v753 = vpow.pop %v752
        %v754 = vmul.f32 %v751, 1.442695
        %v755 = vpow.pop %v754
        %s756 = scalar_lea.vmem [#allocation3], 16
        %v757 = vld [vmem:[%s756] sm:$0xff]
        %v758 = vld [vmem:[%s756 + $0x8] sm:$0xff]
        %v759 = vmul.f32 %v737, %v757
        %v760 = vmul.f32 %v739, %v758
        %v761 = vsel %vm555, %v753, 0.0
        %762 = vadd.xlane.f32.xlu0 %v761
        %v763 = vpop.xlane.xlu0 %762
        %v764 = vsel %vm555, %v755, 0.0
        %765 = vadd.xlane.f32.xlu0 %v764
        %v766 = vpop.xlane.xlu0 %765
        %v767 = vadd.f32 %v759, %v763
        %v768 = vadd.f32 %v760, %v766
        %769 = vst.msk [vmem:[%s756] sm:$0xff] %vm598, %v767
        %770 = vst.msk [vmem:[%s756 + $0x8] sm:$0xff] %vm598, %v768
        %s771 = scalar_lea.vmem [#allocation4], 16
        %v772 = vld [vmem:[%s771] sm:$0xff]
        %v773 = vld [vmem:[%s771 + $0x8] sm:$0xff]
        %775 = vset.pattern.permute.xlu0 0
        %776 = vperm.xlu0 %775, %v737
        %v777 = vpop.permute.xlu0 %776
        %780 = vset.pattern.permute.xlu0 0
        %781 = vperm.xlu0 %780, %v739
        %v782 = vpop.permute.xlu0 %781
        %v784 = vmul.f32 %v777, %v772
        %v785 = vmul.f32 %v782, %v773
        %v786 = vpack.c.bf16 %v755, %v753
        %787 = vrot.lane.b32.xlu0 %v620, 96
        %v788 = vpop.permute.xlu0 %787
        %v791 = vsel %vm555, %v786, 0
        %793 = vmatprep.subr.bf16.mxu0 0
        %794 = vmatpush1.bf16.msra.mxu0 %v788
        %795 = vmatprep.subr.bf16.mxu0 0
        %796 = vmatpush1.bf16.msra.mxu0 0
        %797 = vmatprep.subr.bf16.mxu0 0
        %798 = vmatpush1.bf16.msra.mxu0 0
        %799 = vmatprep.subr.bf16.mxu0 0
        %800 = vmatpush1.bf16.msra.mxu0 0
        %801 = vmatprep.subr.bf16.mxu0 0
        %802 = vmatpush1.bf16.msra.mxu0 0
        %803 = vmatprep.subr.bf16.mxu0 0
        %804 = vmatpush1.bf16.msra.mxu0 0
        %805 = vmatprep.subr.bf16.mxu0 0
        %806 = vmatpush1.bf16.msra.mxu0 0
        %807 = vmatprep.subr.bf16.mxu0 0
        %808 = vmatpush1.bf16.msra.mxu0 0
        %809 = vmatprep.subr.bf16.mxu0 0
        %810 = vmatpush1.bf16.msra.mxu0 0
        %811 = vmatprep.subr.bf16.mxu0 0
        %812 = vmatpush1.bf16.msra.mxu0 0
        %813 = vmatprep.subr.bf16.mxu0 0
        %814 = vmatpush1.bf16.msra.mxu0 0
        %815 = vmatprep.subr.bf16.mxu0 0
        %816 = vmatpush1.bf16.msra.mxu0 0
        %817 = vmatprep.subr.bf16.mxu0 0
        %818 = vmatpush1.bf16.msra.mxu0 0
        %819 = vmatprep.subr.bf16.mxu0 0
        %820 = vmatpush1.bf16.msra.mxu0 0
        %821 = vmatprep.subr.bf16.mxu0 0
        %822 = vmatpush1.bf16.msra.mxu0 0
        %823 = vmatprep.subr.bf16.mxu0 0
        %824 = vmatpush1.bf16.msra.mxu0 0
        %825 = vmatprep.mubr.bf16.mxu0 0
        %826 = vmatmul.mubr.bf16.gmra.mrb[0].mxu0 %v791
        %v827 = vpop.f32.mrb[0].mxu0
        %v828 = vadd.f32 0.0, %v827
        %v829 = vpop.f32.mrb[0].mxu0
        %v830 = vpop.f32.mrb[0].mxu0
        %v831 = vadd.f32 0.0, %v830
        %v832 = vpop.f32.mrb[0].mxu0
        %833 = vdwg.mxu0
        %v834 = vadd.f32 %v784, %v828
        %v835 = vadd.f32 %v785, %v831
        %836 = vst.msk [vmem:[%s771] sm:$0xff] %vm505, %v834
        %837 = vst.msk [vmem:[%s771 + $0x8] sm:$0xff] %vm505, %v835
        %838 = vst.msk [vmem:[%s723] sm:$0xff] %vm598, %v732
        %839 = vst.msk [vmem:[%s723 + $0x8] sm:$0xff] %vm598, %v733
        %840 = vrot.lane.b32.xlu0 %v499, 64
        %v841 = vpop.permute.xlu0 %840
        %842 = vrot.lane.b32.xlu0 %v504, 64
        %v843 = vpop.permute.xlu0 %842
        %v845 = vsel %vm505, %v841, 0
        %v848 = vsel %vm505, %v843, 0
        %850 = vmatprep.subr.bf16.mxu0 0
        %851 = vmatpush1.bf16.xpose.msra.mxu0 %v848
        %852 = vmatprep.subr.bf16.mxu0 0
        %853 = vmatpush1.bf16.xpose.msra.mxu0 0
        %854 = vmatprep.subr.bf16.mxu0 0
        %855 = vmatpush1.bf16.xpose.msra.mxu0 0
        %856 = vmatprep.subr.bf16.mxu0 0
        %857 = vmatpush1.bf16.xpose.msra.mxu0 0
        %858 = vmatprep.subr.bf16.mxu0 0
        %859 = vmatpush1.bf16.xpose.msra.mxu0 0
        %860 = vmatprep.subr.bf16.mxu0 0
        %861 = vmatpush1.bf16.xpose.msra.mxu0 0
        %862 = vmatprep.subr.bf16.mxu0 0
        %863 = vmatpush1.bf16.xpose.msra.mxu0 0
        %864 = vmatprep.subr.bf16.mxu0 0
        %865 = vmatpush1.bf16.xpose.msra.mxu0 0
        %866 = vmatprep.subr.bf16.mxu0 0
        %867 = vmatpush1.bf16.xpose.msra.mxu0 0
        %868 = vmatprep.subr.bf16.mxu0 0
        %869 = vmatpush1.bf16.xpose.msra.mxu0 0
        %870 = vmatprep.subr.bf16.mxu0 0
        %871 = vmatpush1.bf16.xpose.msra.mxu0 0
        %872 = vmatprep.subr.bf16.mxu0 0
        %873 = vmatpush1.bf16.xpose.msra.mxu0 0
        %874 = vmatprep.subr.bf16.mxu0 0
        %875 = vmatpush1.bf16.xpose.msra.mxu0 0
        %876 = vmatprep.subr.bf16.mxu0 0
        %877 = vmatpush1.bf16.xpose.msra.mxu0 0
        %878 = vmatprep.subr.bf16.mxu0 0
        %879 = vmatpush1.bf16.xpose.msra.mxu0 0
        %880 = vmatprep.subr.bf16.mxu0 0
        %881 = vmatpush1.bf16.xpose.msra.mxu0 0
        %882 = vmatprep.mubr.bf16.mxu0 0
        %883 = vmatmul.mubr.bf16.gmra.mrb[0].mxu0 %v845
        %v884 = vpop.f32.mrb[0].mxu0
        %v885 = vadd.f32 %v493, %v884
        %v886 = vpop.f32.mrb[0].mxu0
        %v887 = vpop.f32.mrb[0].mxu0
        %v888 = vadd.f32 %v493, %v887
        %v889 = vpop.f32.mrb[0].mxu0
        %890 = vdwg.mxu0
        %s891 = scalar_lea.vmem [#allocation2], 32
        %v892 = vld [vmem:[%s891] sm:$0xff]
        %v893 = vld [vmem:[%s891 + $0x8] sm:$0xff]
        %v894 = vsel %vm555, %v885, -inf
        %895 = vmax.xlane.f32.xlu0 %v894
        %v896 = vpop.xlane.xlu0 %895
        %v897 = vsel %vm555, %v888, -inf
        %898 = vmax.xlane.f32.xlu0 %v897
        %v899 = vpop.xlane.xlu0 %898
        %v900 = vmax.f32 %v892, %v896
        %v901 = vmax.f32 %v893, %v899
        %v902 = vsub.f32 %v892, %v900
        %v903 = vsub.f32 %v893, %v901
        %v904 = vmul.f32 %v902, 1.442695
        %v905 = vpow.pop %v904
        %v906 = vmul.f32 %v903, 1.442695
        %v907 = vpow.pop %v906
        %909 = vset.pattern.permute.xlu0 0
        %910 = vperm.xlu0 %909, %v900
        %v911 = vpop.permute.xlu0 %910
        %914 = vset.pattern.permute.xlu0 0
        %915 = vperm.xlu0 %914, %v901
        %v916 = vpop.permute.xlu0 %915
        %v918 = vsub.f32 %v885, %v911
        %v919 = vsub.f32 %v888, %v916
        %v920 = vmul.f32 %v918, 1.442695
        %v921 = vpow.pop %v920
        %v922 = vmul.f32 %v919, 1.442695
        %v923 = vpow.pop %v922
        %s924 = scalar_lea.vmem [#allocation3], 32
        %v925 = vld [vmem:[%s924] sm:$0xff]
        %v926 = vld [vmem:[%s924 + $0x8] sm:$0xff]
        %v927 = vmul.f32 %v905, %v925
        %v928 = vmul.f32 %v907, %v926
        %v929 = vsel %vm555, %v921, 0.0
        %930 = vadd.xlane.f32.xlu0 %v929
        %v931 = vpop.xlane.xlu0 %930
        %v932 = vsel %vm555, %v923, 0.0
        %933 = vadd.xlane.f32.xlu0 %v932
        %v934 = vpop.xlane.xlu0 %933
        %v935 = vadd.f32 %v927, %v931
        %v936 = vadd.f32 %v928, %v934
        %937 = vst.msk [vmem:[%s924] sm:$0xff] %vm598, %v935
        %938 = vst.msk [vmem:[%s924 + $0x8] sm:$0xff] %vm598, %v936
        %s939 = scalar_lea.vmem [#allocation4], 32
        %v940 = vld [vmem:[%s939] sm:$0xff]
        %v941 = vld [vmem:[%s939 + $0x8] sm:$0xff]
        %943 = vset.pattern.permute.xlu0 0
        %944 = vperm.xlu0 %943, %v905
        %v945 = vpop.permute.xlu0 %944
        %948 = vset.pattern.permute.xlu0 0
        %949 = vperm.xlu0 %948, %v907
        %v950 = vpop.permute.xlu0 %949
        %v952 = vmul.f32 %v945, %v940
        %v953 = vmul.f32 %v950, %v941
        %v954 = vpack.c.bf16 %v923, %v921
        %955 = vrot.lane.b32.xlu0 %v620, 64
        %v956 = vpop.permute.xlu0 %955
        %v959 = vsel %vm555, %v954, 0
        %961 = vmatprep.subr.bf16.mxu0 0
        %962 = vmatpush1.bf16.msra.mxu0 %v956
        %963 = vmatprep.subr.bf16.mxu0 0
        %964 = vmatpush1.bf16.msra.mxu0 0
        %965 = vmatprep.subr.bf16.mxu0 0
        %966 = vmatpush1.bf16.msra.mxu0 0
        %967 = vmatprep.subr.bf16.mxu0 0
        %968 = vmatpush1.bf16.msra.mxu0 0
        %969 = vmatprep.subr.bf16.mxu0 0
        %970 = vmatpush1.bf16.msra.mxu0 0
        %971 = vmatprep.subr.bf16.mxu0 0
        %972 = vmatpush1.bf16.msra.mxu0 0
        %973 = vmatprep.subr.bf16.mxu0 0
        %974 = vmatpush1.bf16.msra.mxu0 0
        %975 = vmatprep.subr.bf16.mxu0 0
        %976 = vmatpush1.bf16.msra.mxu0 0
        %977 = vmatprep.subr.bf16.mxu0 0
        %978 = vmatpush1.bf16.msra.mxu0 0
        %979 = vmatprep.subr.bf16.mxu0 0
        %980 = vmatpush1.bf16.msra.mxu0 0
        %981 = vmatprep.subr.bf16.mxu0 0
        %982 = vmatpush1.bf16.msra.mxu0 0
        %983 = vmatprep.subr.bf16.mxu0 0
        %984 = vmatpush1.bf16.msra.mxu0 0
        %985 = vmatprep.subr.bf16.mxu0 0
        %986 = vmatpush1.bf16.msra.mxu0 0
        %987 = vmatprep.subr.bf16.mxu0 0
        %988 = vmatpush1.bf16.msra.mxu0 0
        %989 = vmatprep.subr.bf16.mxu0 0
        %990 = vmatpush1.bf16.msra.mxu0 0
        %991 = vmatprep.subr.bf16.mxu0 0
        %992 = vmatpush1.bf16.msra.mxu0 0
        %993 = vmatprep.mubr.bf16.mxu0 0
        %994 = vmatmul.mubr.bf16.gmra.mrb[0].mxu0 %v959
        %v995 = vpop.f32.mrb[0].mxu0
        %v996 = vadd.f32 0.0, %v995
        %v997 = vpop.f32.mrb[0].mxu0
        %v998 = vpop.f32.mrb[0].mxu0
        %v999 = vadd.f32 0.0, %v998
        %v1000 = vpop.f32.mrb[0].mxu0
        %1001 = vdwg.mxu0
        %v1002 = vadd.f32 %v952, %v996
        %v1003 = vadd.f32 %v953, %v999
        %1004 = vst.msk [vmem:[%s939] sm:$0xff] %vm505, %v1002
        %1005 = vst.msk [vmem:[%s939 + $0x8] sm:$0xff] %vm505, %v1003
        %1006 = vst.msk [vmem:[%s891] sm:$0xff] %vm598, %v900
        %1007 = vst.msk [vmem:[%s891 + $0x8] sm:$0xff] %vm598, %v901
        %1008 = vrot.lane.b32.xlu0 %v499, 32
        %v1009 = vpop.permute.xlu0 %1008
        %1010 = vrot.lane.b32.xlu0 %v504, 32
        %v1011 = vpop.permute.xlu0 %1010
        %v1013 = vsel %vm505, %v1009, 0
        %v1016 = vsel %vm505, %v1011, 0
        %1018 = vmatprep.subr.bf16.mxu0 0
        %1019 = vmatpush1.bf16.xpose.msra.mxu0 %v1016
        %1020 = vmatprep.subr.bf16.mxu0 0
        %1021 = vmatpush1.bf16.xpose.msra.mxu0 0
        %1022 = vmatprep.subr.bf16.mxu0 0
        %1023 = vmatpush1.bf16.xpose.msra.mxu0 0
        %1024 = vmatprep.subr.bf16.mxu0 0
        %1025 = vmatpush1.bf16.xpose.msra.mxu0 0
        %1026 = vmatprep.subr.bf16.mxu0 0
        %1027 = vmatpush1.bf16.xpose.msra.mxu0 0
        %1028 = vmatprep.subr.bf16.mxu0 0
        %1029 = vmatpush1.bf16.xpose.msra.mxu0 0
        %1030 = vmatprep.subr.bf16.mxu0 0
        %1031 = vmatpush1.bf16.xpose.msra.mxu0 0
        %1032 = vmatprep.subr.bf16.mxu0 0
        %1033 = vmatpush1.bf16.xpose.msra.mxu0 0
        %1034 = vmatprep.subr.bf16.mxu0 0
        %1035 = vmatpush1.bf16.xpose.msra.mxu0 0
        %1036 = vmatprep.subr.bf16.mxu0 0
        %1037 = vmatpush1.bf16.xpose.msra.mxu0 0
        %1038 = vmatprep.subr.bf16.mxu0 0
        %1039 = vmatpush1.bf16.xpose.msra.mxu0 0
        %1040 = vmatprep.subr.bf16.mxu0 0
        %1041 = vmatpush1.bf16.xpose.msra.mxu0 0
        %1042 = vmatprep.subr.bf16.mxu0 0
        %1043 = vmatpush1.bf16.xpose.msra.mxu0 0
        %1044 = vmatprep.subr.bf16.mxu0 0
        %1045 = vmatpush1.bf16.xpose.msra.mxu0 0
        %1046 = vmatprep.subr.bf16.mxu0 0
        %1047 = vmatpush1.bf16.xpose.msra.mxu0 0
        %1048 = vmatprep.subr.bf16.mxu0 0
        %1049 = vmatpush1.bf16.xpose.msra.mxu0 0
        %1050 = vmatprep.mubr.bf16.mxu0 0
        %1051 = vmatmul.mubr.bf16.gmra.mrb[0].mxu0 %v1013
        %v1052 = vpop.f32.mrb[0].mxu0
        %v1053 = vadd.f32 %v493, %v1052
        %v1054 = vpop.f32.mrb[0].mxu0
        %v1055 = vpop.f32.mrb[0].mxu0
        %v1056 = vadd.f32 %v493, %v1055
        %v1057 = vpop.f32.mrb[0].mxu0
        %1058 = vdwg.mxu0
        %s1059 = scalar_lea.vmem [#allocation2], 48
        %v1060 = vld [vmem:[%s1059] sm:$0xff]
        %v1061 = vld [vmem:[%s1059 + $0x8] sm:$0xff]
        %v1062 = vsel %vm555, %v1053, -inf
        %1063 = vmax.xlane.f32.xlu0 %v1062
        %v1064 = vpop.xlane.xlu0 %1063
        %v1065 = vsel %vm555, %v1056, -inf
        %1066 = vmax.xlane.f32.xlu0 %v1065
        %v1067 = vpop.xlane.xlu0 %1066
        %v1068 = vmax.f32 %v1060, %v1064
        %v1069 = vmax.f32 %v1061, %v1067
        %v1070 = vsub.f32 %v1060, %v1068
        %v1071 = vsub.f32 %v1061, %v1069
        %v1072 = vmul.f32 %v1070, 1.442695
        %v1073 = vpow.pop %v1072
        %v1074 = vmul.f32 %v1071, 1.442695
        %v1075 = vpow.pop %v1074
        %1077 = vset.pattern.permute.xlu0 0
        %1078 = vperm.xlu0 %1077, %v1068
        %v1079 = vpop.permute.xlu0 %1078
        %1082 = vset.pattern.permute.xlu0 0
        %1083 = vperm.xlu0 %1082, %v1069
        %v1084 = vpop.permute.xlu0 %1083
        %v1086 = vsub.f32 %v1053, %v1079
        %v1087 = vsub.f32 %v1056, %v1084
        %v1088 = vmul.f32 %v1086, 1.442695
        %v1089 = vpow.pop %v1088
        %v1090 = vmul.f32 %v1087, 1.442695
        %v1091 = vpow.pop %v1090
        %s1092 = scalar_lea.vmem [#allocation3], 48
        %v1093 = vld [vmem:[%s1092] sm:$0xff]
        %v1094 = vld [vmem:[%s1092 + $0x8] sm:$0xff]
        %v1095 = vmul.f32 %v1073, %v1093
        %v1096 = vmul.f32 %v1075, %v1094
        %v1097 = vsel %vm555, %v1089, 0.0
        %1098 = vadd.xlane.f32.xlu0 %v1097
        %v1099 = vpop.xlane.xlu0 %1098
        %v1100 = vsel %vm555, %v1091, 0.0
        %1101 = vadd.xlane.f32.xlu0 %v1100
        %v1102 = vpop.xlane.xlu0 %1101
        %v1103 = vadd.f32 %v1095, %v1099
        %v1104 = vadd.f32 %v1096, %v1102
        %1105 = vst.msk [vmem:[%s1092] sm:$0xff] %vm598, %v1103
        %1106 = vst.msk [vmem:[%s1092 + $0x8] sm:$0xff] %vm598, %v1104
        %s1107 = scalar_lea.vmem [#allocation4], 48
        %v1108 = vld [vmem:[%s1107] sm:$0xff]
        %v1109 = vld [vmem:[%s1107 + $0x8] sm:$0xff]
        %1111 = vset.pattern.permute.xlu0 0
        %1112 = vperm.xlu0 %1111, %v1073
        %v1113 = vpop.permute.xlu0 %1112
        %1116 = vset.pattern.permute.xlu0 0
        %1117 = vperm.xlu0 %1116, %v1075
        %v1118 = vpop.permute.xlu0 %1117
        %v1120 = vmul.f32 %v1113, %v1108
        %v1121 = vmul.f32 %v1118, %v1109
        %v1122 = vpack.c.bf16 %v1091, %v1089
        %1123 = vrot.lane.b32.xlu0 %v620, 32
        %v1124 = vpop.permute.xlu0 %1123
        %v1127 = vsel %vm555, %v1122, 0
        %1129 = vmatprep.subr.bf16.mxu0 0
        %1130 = vmatpush1.bf16.msra.mxu0 %v1124
        %1131 = vmatprep.subr.bf16.mxu0 0
        %1132 = vmatpush1.bf16.msra.mxu0 0
        %1133 = vmatprep.subr.bf16.mxu0 0
        %1134 = vmatpush1.bf16.msra.mxu0 0
        %1135 = vmatprep.subr.bf16.mxu0 0
        %1136 = vmatpush1.bf16.msra.mxu0 0
        %1137 = vmatprep.subr.bf16.mxu0 0
        %1138 = vmatpush1.bf16.msra.mxu0 0
        %1139 = vmatprep.subr.bf16.mxu0 0
        %1140 = vmatpush1.bf16.msra.mxu0 0
        %1141 = vmatprep.subr.bf16.mxu0 0
        %1142 = vmatpush1.bf16.msra.mxu0 0
        %1143 = vmatprep.subr.bf16.mxu0 0
        %1144 = vmatpush1.bf16.msra.mxu0 0
        %1145 = vmatprep.subr.bf16.mxu0 0
        %1146 = vmatpush1.bf16.msra.mxu0 0
        %1147 = vmatprep.subr.bf16.mxu0 0
        %1148 = vmatpush1.bf16.msra.mxu0 0
        %1149 = vmatprep.subr.bf16.mxu0 0
        %1150 = vmatpush1.bf16.msra.mxu0 0
        %1151 = vmatprep.subr.bf16.mxu0 0
        %1152 = vmatpush1.bf16.msra.mxu0 0
        %1153 = vmatprep.subr.bf16.mxu0 0
        %1154 = vmatpush1.bf16.msra.mxu0 0
        %1155 = vmatprep.subr.bf16.mxu0 0
        %1156 = vmatpush1.bf16.msra.mxu0 0
        %1157 = vmatprep.subr.bf16.mxu0 0
        %1158 = vmatpush1.bf16.msra.mxu0 0
        %1159 = vmatprep.subr.bf16.mxu0 0
        %1160 = vmatpush1.bf16.msra.mxu0 0
        %1161 = vmatprep.mubr.bf16.mxu0 0
        %1162 = vmatmul.mubr.bf16.gmra.mrb[0].mxu0 %v1127
        %v1163 = vpop.f32.mrb[0].mxu0
        %v1164 = vadd.f32 0.0, %v1163
        %v1165 = vpop.f32.mrb[0].mxu0
        %v1166 = vpop.f32.mrb[0].mxu0
        %v1167 = vadd.f32 0.0, %v1166
        %v1168 = vpop.f32.mrb[0].mxu0
        %1169 = vdwg.mxu0
        %v1170 = vadd.f32 %v1120, %v1164
        %v1171 = vadd.f32 %v1121, %v1167
        %1172 = vst.msk [vmem:[%s1107] sm:$0xff] %vm505, %v1170
        %1173 = vst.msk [vmem:[%s1107 + $0x8] sm:$0xff] %vm505, %v1171
        %1174 = vst.msk [vmem:[%s1059] sm:$0xff] %vm598, %v1068
        %1175 = vst.msk [vmem:[%s1059 + $0x8] sm:$0xff] %vm598, %v1069
        // Predicated region
        $region164: #{transformer_forward.30} parent=146 // pred_check
          %p1176 = pneg %p452
        $region165: #{transformer_forward.30} parent=146 // pred_check_branch
          %1178 = sbr.rel (%p1176) target = $region167
        $region166: #{transformer_forward.30} parent=146 // pred_region
          %v1179 = vld [vmem:[#allocation4] sm:$0xff]
          %v1180 = vld [vmem:[#allocation4 + $0x8] sm:$0xff]
          %v1181 = vld [vmem:[#allocation3] sm:$0xff]
          %v1182 = vld [vmem:[#allocation3 + $0x8] sm:$0xff]
          %1184 = vset.pattern.permute.xlu0 0
          %1185 = vperm.xlu0 %1184, %v1181
          %v1186 = vpop.permute.xlu0 %1185
          %1189 = vset.pattern.permute.xlu0 0
          %1190 = vperm.xlu0 %1189, %v1182
          %v1191 = vpop.permute.xlu0 %1190
          %v1193 = vrcp.pop %v1186
          %v1194 = vmul.f32 %v1179, %v1193
          %v1195 = vrcp.pop %v1191
          %v1196 = vmul.f32 %v1180, %v1195
          %v1197 = vld [vmem:[%s771] sm:$0xff]
          %v1198 = vld [vmem:[%s771 + $0x8] sm:$0xff]
          %v1199 = vld [vmem:[%s756] sm:$0xff]
          %v1200 = vld [vmem:[%s756 + $0x8] sm:$0xff]
          %1202 = vset.pattern.permute.xlu0 0
          %1203 = vperm.xlu0 %1202, %v1199
          %v1204 = vpop.permute.xlu0 %1203
          %1207 = vset.pattern.permute.xlu0 0
          %1208 = vperm.xlu0 %1207, %v1200
          %v1209 = vpop.permute.xlu0 %1208
          %v1211 = vrcp.pop %v1204
          %v1212 = vmul.f32 %v1197, %v1211
          %v1213 = vrcp.pop %v1209
          %v1214 = vmul.f32 %v1198, %v1213
          %v1215 = vld [vmem:[%s939] sm:$0xff]
          %v1216 = vld [vmem:[%s939 + $0x8] sm:$0xff]
          %v1217 = vld [vmem:[%s924] sm:$0xff]
          %v1218 = vld [vmem:[%s924 + $0x8] sm:$0xff]
          %1220 = vset.pattern.permute.xlu0 0
          %1221 = vperm.xlu0 %1220, %v1217
          %v1222 = vpop.permute.xlu0 %1221
          %1225 = vset.pattern.permute.xlu0 0
          %1226 = vperm.xlu0 %1225, %v1218
          %v1227 = vpop.permute.xlu0 %1226
          %v1229 = vrcp.pop %v1222
          %v1230 = vmul.f32 %v1215, %v1229
          %v1231 = vrcp.pop %v1227
          %v1232 = vmul.f32 %v1216, %v1231
          %v1233 = vld [vmem:[%s1107] sm:$0xff]
          %v1234 = vld [vmem:[%s1107 + $0x8] sm:$0xff]
          %v1235 = vld [vmem:[%s1092] sm:$0xff]
          %v1236 = vld [vmem:[%s1092 + $0x8] sm:$0xff]
          %1238 = vset.pattern.permute.xlu0 0
          %1239 = vperm.xlu0 %1238, %v1235
          %v1240 = vpop.permute.xlu0 %1239
          %1243 = vset.pattern.permute.xlu0 0
          %1244 = vperm.xlu0 %1243, %v1236
          %v1245 = vpop.permute.xlu0 %1244
          %v1247 = vrcp.pop %v1240
          %v1248 = vmul.f32 %v1233, %v1247
          %v1249 = vrcp.pop %v1245
          %v1250 = vmul.f32 %v1234, %v1249
          %1253 = vrot.lane.b32.xlu0 %v1212, 32
          %v1254 = vpop.permute.xlu0 %1253
          %1255 = vrot.lane.b32.xlu0 %v1214, 32
          %v1256 = vpop.permute.xlu0 %1255
          %1261 = vrot.lane.b32.xlu0 %v1230, 64
          %v1262 = vpop.permute.xlu0 %1261
          %1263 = vrot.lane.b32.xlu0 %v1232, 64
          %v1264 = vpop.permute.xlu0 %1263
          %1269 = vrot.lane.b32.xlu0 %v1248, 96
          %v1270 = vpop.permute.xlu0 %1269
          %1271 = vrot.lane.b32.xlu0 %v1250, 96
          %v1272 = vpop.permute.xlu0 %1271
          %v1275 = vsel %vm505, %v1194, %v1254
          %v1276 = vsel %vm505, %v1196, %v1256
          %vm1277 = vcmask 523264
          %v1278 = vsel %vm1277, %v1275, %v1262
          %v1279 = vsel %vm1277, %v1276, %v1264
          %vm1280 = vcmask 785408
          %v1281 = vsel %vm1280, %v1278, %v1270
          %v1282 = vsel %vm1280, %v1279, %v1272
          %v1283 = vpack.c.bf16 %v1282, %v1281
          %v1285 = vunpack.c.l.b16 %v1283
          %v1286 = vunpack.c.h.b16 %v1283
          %v1287 = vpack.c.b16 %v1285, %v1285
          %v1288 = vpack.c.b16 %v1286, %v1286
          %1291 = vst [vmem:[%s449] sm:$0xf] %v1287
          %1292 = vst [vmem:[%s449 + $0x4] sm:$0xf] %v1288
        $region167: #{transformer_forward.30} parent=146 // pred_fallthru
          _
        %s1293 = smul.u32 2, %s21
        %p1294 = scmp.lt.s32.totalorder %s20, 1
        %s1295 = scalar_select %p1294, %s20, 1
        %p1296 = scmp.lt.s32.totalorder %s1293, 1
        %s1297 = scalar_select %p1296, %s1293, 1
        %s1298 = smul.addr %s1295, 2
        %s1299 = sadd.s32 %s1297, %s1298
        %s1300 = smul.addr %s1299, 4
        %s1301 = scalar_lea.vmem %s4, %s1300
        // Predicated region
        $region168: #{transformer_forward.30} parent=146 // pred_check
          %p1302 = pneg %p166
        $region169: #{transformer_forward.30} parent=146 // pred_check_branch
          %1304 = sbr.rel (%p1302) target = $region171
        $region170: #{transformer_forward.30} parent=146 // pred_region
          %s1305 = smul.u32 2, %s21
        $region171: #{transformer_forward.30} parent=146 // pred_fallthru
          _
      $region147: #{transformer_forward.30} parent=5 // pred_fallthru
        _
      %p1306 = scmp.le.s32.totalorder 2, %s10
      // Predicated region
      $region172: #{transformer_forward.30} parent=5 // pred_check
        %p1307 = pneg %p1306
      $region173: #{transformer_forward.30} parent=5 // pred_check_branch
        %1309 = sbr.rel (%p1307) target = $region175
      $region174: #{transformer_forward.30} parent=5 // pred_region
        %s1310 = ssub.s32 %s10, 2
        // Predicated region
        $region176: #{transformer_forward.30} parent=174 // pred_check
          %p1311 = pneg %p172
        $region177: #{transformer_forward.30} parent=174 // pred_check_branch
          %1313 = sbr.rel (%p1311) target = $region179
        $region178: #{transformer_forward.30} parent=174 // pred_region
          %s1314 = smul.u32 2, %s24
          %p1315 = scmp.lt.s32.totalorder %s23, 1
          %s1316 = scalar_select %p1315, %s23, 1
          %p1317 = scmp.lt.s32.totalorder %s1314, 1
          %s1318 = scalar_select %p1317, %s1314, 1
          %s1319 = smul.addr %s1316, 2
          %s1320 = sadd.s32 %s1318, %s1319
          %s1321 = smul.addr %s1320, 4
          %s1322 = scalar_lea.vmem %s4, %s1321
        $region179: #{transformer_forward.30} parent=174 // pred_fallthru
          _
      $region175: #{transformer_forward.30} parent=5 // pred_fallthru
        _
    $region6: #{transformer_forward.30} parent=1 // loop_footer
      %s14 = sadd.s32 1, %s10
    $region7: #{transformer_forward.30} parent=1 // loop_footer_branch
      %9 = sbr.rel target = $region3
    $region8: #{transformer_forward.30} parent=1 // loop_exit
      _

// kernel: transformer_forward.57
$region0: #{transformer_forward.57}
  #allocation0 [shape = 'u32[]', space=smem, size = 0x4, offset = 0x4, fixed_abs, tag = 'smem constant byte address 0x4 - core index']
  #allocation1 [shape = 'u32[144,128]{1,0:T(1,128)}', space=vmem, size = 0x12000, scoped, tag = 'internal scratch']
  #allocation2 [shape = 'f32[32,128]{1,0:T(8,128)}', space=vmem, size = 0x4000, scoped, tag = 'scratch operand']
  %s0 = inlined_call_operand.vmem [shape: f32[32,128], index: 0, kind: input, shape index: {}]
  %s1 = inlined_call_operand.vmem [shape: bf16[128,128], index: 1, kind: input, shape index: {}]
  %s2 = inlined_call_operand.vmem [shape: f32[1,128], index: 2, kind: input, shape index: {}]
  %s3 = inlined_call_operand.hbm [shape: f32[32,128], index: 3, kind: output, shape index: {}]
  %s4 = sld [smem:[#allocation0]]
  $region30: #{transformer_forward.57} parent=0
    _
  %s6 = ssub.s32 1, %s4
  %s7 = scalar_select 0, %s6, %s4
  $region1: #{transformer_forward.57} parent=0
    #allocation3 [shape = 'u8[16384]{0}', space=vmem, size = 0x4000, scoped, tag = 'output window, operand 0, single buffered']
    #allocation4 [shape = 's32[1]{0}', space=sflag, size = 0x4, scoped, tag = 'scoped memory for transformer_forward.57']
    %8 = vsyncpa [#allocation4], 0
    // Predicated region
    $region2: #{transformer_forward.57} parent=1 // pred_check
      _
    $region3: #{transformer_forward.57} parent=1 // pred_check_branch
      %10 = sbr.rel (0) target = $region5
    $region4: #{transformer_forward.57} parent=1 // pred_region
      _
    $region5: #{transformer_forward.57} parent=1 // pred_fallthru
      _
    // Predicated region
    $region6: #{transformer_forward.57} parent=1 // pred_check
      _
    $region7: #{transformer_forward.57} parent=1 // pred_check_branch
      %12 = sbr.rel (0) target = $region9
    $region8: #{transformer_forward.57} parent=1 // pred_region
      _
    $region9: #{transformer_forward.57} parent=1 // pred_fallthru
      _
    // Predicated region
    $region10: #{transformer_forward.57} parent=1 // pred_check
      _
    $region11: #{transformer_forward.57} parent=1 // pred_check_branch
      %14 = sbr.rel (0) target = $region13
    $region12: #{transformer_forward.57} parent=1 // pred_region
      _
    $region13: #{transformer_forward.57} parent=1 // pred_fallthru
      _
    %p16 = scmp.eq.s32.totalorder 0, 0
    // Predicated region
    $region14: #{transformer_forward.57} parent=1 // pred_check
      %p17 = pneg %p16
    $region15: #{transformer_forward.57} parent=1 // pred_check_branch
      %19 = sbr.rel (%p17) target = $region17
    $region16: #{transformer_forward.57} parent=1 // pred_region
      %20 = vst [vmem:[#allocation2] sm:$0xff] 0.0
      %21 = vst [vmem:[#allocation2 + $0x8] sm:$0xff] 0.0
      %22 = vst [vmem:[#allocation2 + $0x10] sm:$0xff] 0.0
      %23 = vst [vmem:[#allocation2 + $0x18] sm:$0xff] 0.0
    $region17: #{transformer_forward.57} parent=1 // pred_fallthru
      _
    %v24 = vld [vmem:[#allocation2] sm:$0xff]
    %v25 = vld [vmem:[#allocation2 + $0x8] sm:$0xff]
    %v26 = vld [vmem:[#allocation2 + $0x10] sm:$0xff]
    %v27 = vld [vmem:[#allocation2 + $0x18] sm:$0xff]
    %v28 = vld [vmem:[%s0] sm:$0xff]
    %v29 = vld [vmem:[%s0 + $0x8] sm:$0xff]
    %v30 = vld [vmem:[%s0 + $0x10] sm:$0xff]
    %v31 = vld [vmem:[%s0 + $0x18] sm:$0xff]
    %v32 = vpack.c.bf16 %v29, %v28
    %v33 = vpack.c.bf16 %v31, %v30
    %v34 = vld [vmem:[%s1] sm:$0xf]
    %v35 = vld [vmem:[%s1 + $0x4] sm:$0xf]
    %v36 = vld [vmem:[%s1 + $0x8] sm:$0xf]
    %v37 = vld [vmem:[%s1 + $0xc] sm:$0xf]
    %v38 = vld [vmem:[%s1 + $0x10] sm:$0xf]
    %v39 = vld [vmem:[%s1 + $0x14] sm:$0xf]
    %v40 = vld [vmem:[%s1 + $0x18] sm:$0xf]
    %v41 = vld [vmem:[%s1 + $0x1c] sm:$0xf]
    %v42 = vld [vmem:[%s1 + $0x20] sm:$0xf]
    %v43 = vld [vmem:[%s1 + $0x24] sm:$0xf]
    %v44 = vld [vmem:[%s1 + $0x28] sm:$0xf]
    %v45 = vld [vmem:[%s1 + $0x2c] sm:$0xf]
    %v46 = vld [vmem:[%s1 + $0x30] sm:$0xf]
    %v47 = vld [vmem:[%s1 + $0x34] sm:$0xf]
    %v48 = vld [vmem:[%s1 + $0x38] sm:$0xf]
    %v49 = vld [vmem:[%s1 + $0x3c] sm:$0xf]
    %v66 = vunpack.c.l.b16 %v34
    %v67 = vunpack.c.l.b16 %v35
    %v68 = vunpack.c.l.b16 %v36
    %v69 = vunpack.c.l.b16 %v37
    %v70 = vunpack.c.l.b16 %v38
    %v71 = vunpack.c.l.b16 %v39
    %v72 = vunpack.c.l.b16 %v40
    %v73 = vunpack.c.l.b16 %v41
    %v74 = vunpack.c.l.b16 %v42
    %v75 = vunpack.c.l.b16 %v43
    %v76 = vunpack.c.l.b16 %v44
    %v77 = vunpack.c.l.b16 %v45
    %v78 = vunpack.c.l.b16 %v46
    %v79 = vunpack.c.l.b16 %v47
    %v80 = vunpack.c.l.b16 %v48
    %v81 = vunpack.c.l.b16 %v49
    %v82 = vpack.c.b16 %v67, %v66
    %v83 = vpack.c.b16 %v69, %v68
    %v84 = vpack.c.b16 %v71, %v70
    %v85 = vpack.c.b16 %v73, %v72
    %v86 = vpack.c.b16 %v75, %v74
    %v87 = vpack.c.b16 %v77, %v76
    %v88 = vpack.c.b16 %v79, %v78
    %v89 = vpack.c.b16 %v81, %v80
    %98 = vmatprep.subr.bf16.mxu0 0
    %99 = vmatpush1.bf16.msra.mxu0 %v82
    %100 = vmatprep.subr.bf16.mxu0 0
    %101 = vmatpush1.bf16.msra.mxu0 %v83
    %102 = vmatprep.subr.bf16.mxu0 0
    %103 = vmatpush1.bf16.msra.mxu0 %v84
    %104 = vmatprep.subr.bf16.mxu0 0
    %105 = vmatpush1.bf16.msra.mxu0 %v85
    %106 = vmatprep.subr.bf16.mxu0 0
    %107 = vmatpush1.bf16.msra.mxu0 %v86
    %108 = vmatprep.subr.bf16.mxu0 0
    %109 = vmatpush1.bf16.msra.mxu0 %v87
    %110 = vmatprep.subr.bf16.mxu0 0
    %111 = vmatpush1.bf16.msra.mxu0 %v88
    %112 = vmatprep.subr.bf16.mxu0 0
    %113 = vmatpush1.bf16.msra.mxu0 %v89
    %114 = vmatprep.subr.bf16.mxu0 0
    %115 = vmatpush1.bf16.msra.mxu0 0
    %116 = vmatprep.subr.bf16.mxu0 0
    %117 = vmatpush1.bf16.msra.mxu0 0
    %118 = vmatprep.subr.bf16.mxu0 0
    %119 = vmatpush1.bf16.msra.mxu0 0
    %120 = vmatprep.subr.bf16.mxu0 0
    %121 = vmatpush1.bf16.msra.mxu0 0
    %122 = vmatprep.subr.bf16.mxu0 0
    %123 = vmatpush1.bf16.msra.mxu0 0
    %124 = vmatprep.subr.bf16.mxu0 0
    %125 = vmatpush1.bf16.msra.mxu0 0
    %126 = vmatprep.subr.bf16.mxu0 0
    %127 = vmatpush1.bf16.msra.mxu0 0
    %128 = vmatprep.subr.bf16.mxu0 0
    %129 = vmatpush1.bf16.msra.mxu0 0
    %130 = vmatprep.mubr.bf16.mxu0 0
    %131 = vmatmul.mubr.bf16.gmra.mrb[0].mxu0 %v32
    %v132 = vpop.f32.mrb[0].mxu0
    %v133 = vadd.f32 0.0, %v132
    %v134 = vpop.f32.mrb[0].mxu0
    %v135 = vpop.f32.mrb[0].mxu0
    %v136 = vadd.f32 0.0, %v135
    %v137 = vpop.f32.mrb[0].mxu0
    %138 = vmatprep.mubr.bf16.mxu0 0
    %139 = vmatmul.mubr.bf16.gmra.mrb[0].mxu0 %v33
    %v140 = vpop.f32.mrb[0].mxu0
    %v141 = vadd.f32 0.0, %v140
    %v142 = vpop.f32.mrb[0].mxu0
    %v143 = vpop.f32.mrb[0].mxu0
    %v144 = vadd.f32 0.0, %v143
    %v145 = vpop.f32.mrb[0].mxu0
    %146 = vdwg.mxu0
    %v147 = vadd.f32 %v24, %v133
    %v148 = vadd.f32 %v25, %v136
    %v149 = vadd.f32 %v26, %v141
    %v150 = vadd.f32 %v27, %v144
    %151 = vst [vmem:[#allocation2] sm:$0xff] %v147
    %152 = vst [vmem:[#allocation2 + $0x8] sm:$0xff] %v148
    %153 = vst [vmem:[#allocation2 + $0x10] sm:$0xff] %v149
    %154 = vst [vmem:[#allocation2 + $0x18] sm:$0xff] %v150
    // Predicated region
    $region18: #{transformer_forward.57} parent=1 // pred_check
      %p155 = pneg %p16
    $region19: #{transformer_forward.57} parent=1 // pred_check_branch
      %157 = sbr.rel (%p155) target = $region21
    $region20: #{transformer_forward.57} parent=1 // pred_region
      %v158 = vld [vmem:[#allocation2] sm:$0xff]
      %v159 = vld [vmem:[#allocation2 + $0x8] sm:$0xff]
      %v160 = vld [vmem:[#allocation2 + $0x10] sm:$0xff]
      %v161 = vld [vmem:[#allocation2 + $0x18] sm:$0xff]
      %v162 = vld [vmem:[%s2] sm:$0x1]
      %v164 = vlaneseq
      %v165 = vshrl.u32 %v164, 7
      %v166 = vsub.s32 0, %v165
      %v167 = vrot.slane %v162, %v166
      %v169 = vadd.f32 %v158, %v167
      %v170 = vadd.f32 %v159, %v167
      %v171 = vadd.f32 %v160, %v167
      %v172 = vadd.f32 %v161, %v167
      %173 = vst [vmem:[#allocation3] sm:$0xff] %v169
      %174 = vst [vmem:[#allocation3 + $0x8] sm:$0xff] %v170
      %175 = vst [vmem:[#allocation3 + $0x10] sm:$0xff] %v171
      %176 = vst [vmem:[#allocation3 + $0x18] sm:$0xff] %v172
    $region21: #{transformer_forward.57} parent=1 // pred_fallthru
      _
    // Predicated region
    $region22: #{transformer_forward.57} parent=1 // pred_check
      _
    $region23: #{transformer_forward.57} parent=1 // pred_check_branch
      %178 = sbr.rel (0) target = $region25
    $region24: #{transformer_forward.57} parent=1 // pred_region
      %s180 = ssub.s32 512, 512
      %181 = vsyncadd [#allocation4], %s180
      %s182 = sshll.u32 [#allocation3], 4
      %s183 = int_to_ptr.vmem [resolvable:$true] %s182
      %188 = dma.vmem_to_hbm [thread:$0]  %s183, 512, %s3, [#allocation4], 128, 128, 8
    $region25: #{transformer_forward.57} parent=1 // pred_fallthru
      _
    // Predicated region
    $region26: #{transformer_forward.57} parent=1 // pred_check
      _
    $region27: #{transformer_forward.57} parent=1 // pred_check_branch
      %190 = sbr.rel (0) target = $region29
    $region28: #{transformer_forward.57} parent=1 // pred_region
      %191 = dma.done [#allocation4], 512
    $region29: #{transformer_forward.57} parent=1 // pred_fallthru
      _
    %192 = vsyncpa [#allocation4], 1

// kernel: transformer_forward.44
$region0: #{transformer_forward.44}
  #allocation0 [shape = 'u32[]', space=smem, size = 0x4, offset = 0x4, fixed_abs, tag = 'smem constant byte address 0x4 - core index']
  #allocation1 [shape = 'u32[144,128]{1,0:T(1,128)}', space=vmem, size = 0x12000, scoped, tag = 'internal scratch']
  #allocation2 [shape = 'f32[4,16,1]{2,1,0:T(8,128)}', space=vmem, size = 0x8000, scoped, tag = 'scratch operand']
  #allocation3 [shape = 'f32[4,16,1]{2,1,0:T(8,128)}', space=vmem, size = 0x8000, scoped, tag = 'scratch operand']
  #allocation4 [shape = 'f32[4,16,32]{2,1,0:T(8,128)}', space=vmem, size = 0x8000, scoped, tag = 'scratch operand']
  %s0 = inlined_call_operand.vmem [shape: f32[2,1,16], index: 0, kind: input, shape index: {}]
  %s1 = inlined_call_operand.vmem [shape: bf16[2,16,128], index: 1, kind: input, shape index: {}]
  %s2 = inlined_call_operand.vmem [shape: bf16[2,16,256], index: 2, kind: input, shape index: {}, may-alias: {2,3}]
  %s3 = inlined_call_operand.vmem [shape: bf16[2,16,256], index: 3, kind: input, shape index: {}, may-alias: {2,3}]
  %s4 = inlined_call_operand.vmem [shape: bf16[2,16,128], index: 4, kind: output, shape index: {}]
  %s5 = sld [smem:[#allocation0]]
  $region139: #{transformer_forward.44} parent=0
    _
  %s7 = ssub.s32 1, %s5
  %s8 = scalar_select 0, %s7, %s5
  $region1: #{transformer_forward.44} parent=0
    #allocation5 [shape = 'u8[8192]{0}', space=vmem, size = 0x2000, scoped, tag = 'input window, operand 2']
    #allocation6 [shape = 'u8[8192]{0}', space=vmem, size = 0x2000, scoped, tag = 'input window, operand 3']
    loop: start=0, step=1, limit=4
    $region2: #{transformer_forward.44} parent=1 // loop_pre_header
      _
    $region3: #{transformer_forward.44} parent=1 // loop_header
      %s10 = sphi 0, %s14
      %p11 = scmp.ge.s32.totalorder %s10, 4
      %s17 = sphi 0, %s36
      %s18 = sphi 0, %s32
      %s19 = sphi 0, %s28
      %s20 = sphi 0, %s17
      %s21 = sphi 0, %s18
      %s22 = sphi 0, %s19
      %s23 = sphi 0, %s20
      %s24 = sphi 0, %s21
      %s25 = sphi 0, %s22
      %s41 = sphi 0, %s43
      %s44 = sphi 0, %s41
      %s45 = sphi 0, %s44
      %s61 = sphi 0, %s45
      %s69 = sphi 0, %s71
      %s72 = sphi 0, %s69
      %s73 = sphi 0, %s72
      %s89 = sphi 0, %s73
      %s97 = sphi 0, %s99
      %s100 = sphi 0, %s97
      %s101 = sphi 0, %s100
      %s117 = sphi 0, %s101
      %s125 = sphi 0, %s127
      %s128 = sphi 0, %s125
      %s129 = sphi 0, %s128
      %s145 = sphi 0, %s129
      %s153 = sphi 0, %s155
      %s156 = sphi 0, %s153
      %s157 = sphi 0, %s156
      %s173 = sphi 0, %s157
    $region4: #{transformer_forward.44} parent=1 // loop_header_branch
      %13 = sbr.rel (%p11) target = $region8
    $region5: #{transformer_forward.44} parent=1 // loop_body
      %s15 = ssub.s32 %s10, 1
      %s16 = ssub.s32 %s10, 2
      %s26 = sadd.s32 1, %s19
      %p27 = scmp.ge.s32.totalorder %s26, 1
      %s28 = scalar_select %p27, 0, %s26
      %s29 = sadd.s32 1, %s18
      %s30 = scalar_select %p27, %s29, %s18
      %p31 = scmp.ge.s32.totalorder %s30, 1
      %s32 = scalar_select %p31, 0, %s30
      %s33 = sadd.s32 1, %s17
      %s34 = scalar_select %p31, %s33, %s17
      %p35 = scmp.ge.s32.totalorder %s34, 2
      %s36 = scalar_select %p35, 0, %s34
      %s37 = ssub.s32 %s17, %s36
      %s38 = ssub.s32 %s19, %s28
      %s39 = sor.u32 %s37, %s38
      %p40 = scmp.eq.s32.totalorder %s39, 0
      %s42 = sadd.s32 %s41, 1
      %s43 = scalar_select %p40, %s41, %s42
      %p46 = pneg %p40
      %p47 = scmp.eq.s32.totalorder %s10, 1
      %p48 = por %p46, %p47
      %p49 = scmp.ne.s32.totalorder %s41, %s44
      %p50 = scmp.eq.s32.totalorder %s10, 0
      %p51 = por %p49, %p50
      %p52 = scmp.ne.s32.totalorder %s41, %s44
      %p53 = scmp.eq.s32.totalorder %s15, 1
      %p54 = por %p52, %p53
      %p55 = scmp.ne.s32.totalorder %s44, %s45
      %p56 = scmp.eq.s32.totalorder %s15, 0
      %p57 = por %p55, %p56
      %p58 = scmp.ne.s32.totalorder %s44, %s45
      %p59 = scmp.eq.s32.totalorder %s16, 1
      %p60 = por %p58, %p59
      %p62 = scmp.ne.s32.totalorder %s45, %s61
      %p63 = scmp.eq.s32.totalorder %s16, 0
      %p64 = por %p62, %p63
      %s65 = ssub.s32 %s17, %s36
      %s66 = ssub.s32 %s18, %s32
      %s67 = sor.u32 %s65, %s66
      %p68 = scmp.eq.s32.totalorder %s67, 0
      %s70 = sadd.s32 %s69, 1
      %s71 = scalar_select %p68, %s69, %s70
      %p74 = pneg %p68
      %p75 = scmp.eq.s32.totalorder %s10, 1
      %p76 = por %p74, %p75
      %p77 = scmp.ne.s32.totalorder %s69, %s72
      %p78 = scmp.eq.s32.totalorder %s10, 0
      %p79 = por %p77, %p78
      %p80 = scmp.ne.s32.totalorder %s69, %s72
      %p81 = scmp.eq.s32.totalorder %s15, 1
      %p82 = por %p80, %p81
      %p83 = scmp.ne.s32.totalorder %s72, %s73
      %p84 = scmp.eq.s32.totalorder %s15, 0
      %p85 = por %p83, %p84
      %p86 = scmp.ne.s32.totalorder %s72, %s73
      %p87 = scmp.eq.s32.totalorder %s16, 1
      %p88 = por %p86, %p87
      %p90 = scmp.ne.s32.totalorder %s73, %s89
      %p91 = scmp.eq.s32.totalorder %s16, 0
      %p92 = por %p90, %p91
      %s93 = ssub.s32 %s17, %s36
      %s94 = ssub.s32 %s19, %s28
      %s95 = sor.u32 %s93, %s94
      %p96 = scmp.eq.s32.totalorder %s95, 0
      %s98 = sadd.s32 %s97, 1
      %s99 = scalar_select %p96, %s97, %s98
      %p102 = pneg %p96
      %p103 = scmp.eq.s32.totalorder %s10, 1
      %p104 = por %p102, %p103
      %p105 = scmp.ne.s32.totalorder %s97, %s100
      %p106 = scmp.eq.s32.totalorder %s10, 0
      %p107 = por %p105, %p106
      %p108 = scmp.ne.s32.totalorder %s97, %s100
      %p109 = scmp.eq.s32.totalorder %s15, 1
      %p110 = por %p108, %p109
      %p111 = scmp.ne.s32.totalorder %s100, %s101
      %p112 = scmp.eq.s32.totalorder %s15, 0
      %p113 = por %p111, %p112
      %p114 = scmp.ne.s32.totalorder %s100, %s101
      %p115 = scmp.eq.s32.totalorder %s16, 1
      %p116 = por %p114, %p115
      %p118 = scmp.ne.s32.totalorder %s101, %s117
      %p119 = scmp.eq.s32.totalorder %s16, 0
      %p120 = por %p118, %p119
      %s121 = ssub.s32 %s17, %s36
      %s122 = ssub.s32 %s19, %s28
      %s123 = sor.u32 %s121, %s122
      %p124 = scmp.eq.s32.totalorder %s123, 0
      %s126 = sadd.s32 %s125, 1
      %s127 = scalar_select %p124, %s125, %s126
      %p130 = pneg %p124
      %p131 = scmp.eq.s32.totalorder %s10, 1
      %p132 = por %p130, %p131
      %p133 = scmp.ne.s32.totalorder %s125, %s128
      %p134 = scmp.eq.s32.totalorder %s10, 0
      %p135 = por %p133, %p134
      %p136 = scmp.ne.s32.totalorder %s125, %s128
      %p137 = scmp.eq.s32.totalorder %s15, 1
      %p138 = por %p136, %p137
      %p139 = scmp.ne.s32.totalorder %s128, %s129
      %p140 = scmp.eq.s32.totalorder %s15, 0
      %p141 = por %p139, %p140
      %p142 = scmp.ne.s32.totalorder %s128, %s129
      %p143 = scmp.eq.s32.totalorder %s16, 1
      %p144 = por %p142, %p143
      %p146 = scmp.ne.s32.totalorder %s129, %s145
      %p147 = scmp.eq.s32.totalorder %s16, 0
      %p148 = por %p146, %p147
      %s149 = ssub.s32 %s17, %s36
      %s150 = ssub.s32 %s18, %s32
      %s151 = sor.u32 %s149, %s150
      %p152 = scmp.eq.s32.totalorder %s151, 0
      %s154 = sadd.s32 %s153, 1
      %s155 = scalar_select %p152, %s153, %s154
      %p158 = pneg %p152
      %p159 = scmp.eq.s32.totalorder %s10, 1
      %p160 = por %p158, %p159
      %p161 = scmp.ne.s32.totalorder %s153, %s156
      %p162 = scmp.eq.s32.totalorder %s10, 0
      %p163 = por %p161, %p162
      %p164 = scmp.ne.s32.totalorder %s153, %s156
      %p165 = scmp.eq.s32.totalorder %s15, 1
      %p166 = por %p164, %p165
      %p167 = scmp.ne.s32.totalorder %s156, %s157
      %p168 = scmp.eq.s32.totalorder %s15, 0
      %p169 = por %p167, %p168
      %p170 = scmp.ne.s32.totalorder %s156, %s157
      %p171 = scmp.eq.s32.totalorder %s16, 1
      %p172 = por %p170, %p171
      %p174 = scmp.ne.s32.totalorder %s157, %s173
      %p175 = scmp.eq.s32.totalorder %s16, 0
      %p176 = por %p174, %p175
      %p177 = scmp.le.s32.totalorder 1, %s10
      %p178 = scmp.lt.s32.totalorder %s10, 3
      %p179 = pnand %p177, %p178
      %p180 = pneg %p179
      // Predicated region
      $region9: #{transformer_forward.44} parent=5 // pred_check
        _
      $region10: #{transformer_forward.44} parent=5 // pred_check_branch
        %182 = sbr.rel (%p179) target = $region12
      $region11: #{transformer_forward.44} parent=5 // pred_region
        %s183 = ssub.s32 %s10, 1
      $region12: #{transformer_forward.44} parent=5 // pred_fallthru
        _
      %p184 = scmp.lt.s32.totalorder %s10, 2
      // Predicated region
      $region13: #{transformer_forward.44} parent=5 // pred_check
        %p185 = pneg %p184
      $region14: #{transformer_forward.44} parent=5 // pred_check_branch
        %187 = sbr.rel (%p185) target = $region16
      $region15: #{transformer_forward.44} parent=5 // pred_region
        // Predicated region
        $region17: #{transformer_forward.44} parent=15 // pred_check
          %p188 = pneg %p51
        $region18: #{transformer_forward.44} parent=15 // pred_check_branch
          %190 = sbr.rel (%p188) target = $region20
        $region19: #{transformer_forward.44} parent=15 // pred_region
          %p191 = scmp.lt.s32.totalorder %s17, 1
          %s192 = scalar_select %p191, %s17, 1
          %p193 = scmp.lt.s32.totalorder %s19, 0
          %s194 = scalar_select %p193, %s19, 0
          %s195 = sadd.s32 %s194, %s192
          %s196 = scalar_lea.vmem %s0, %s195
        $region20: #{transformer_forward.44} parent=15 // pred_fallthru
          _
        // Predicated region
        $region21: #{transformer_forward.44} parent=15 // pred_check
          %p197 = pneg %p79
        $region22: #{transformer_forward.44} parent=15 // pred_check_branch
          %199 = sbr.rel (%p197) target = $region24
        $region23: #{transformer_forward.44} parent=15 // pred_region
          %s200 = smul.u32 2, %s18
          %p201 = scmp.lt.s32.totalorder %s17, 1
          %s202 = scalar_select %p201, %s17, 1
          %p203 = scmp.lt.s32.totalorder %s200, 1
          %s204 = scalar_select %p203, %s200, 1
          %s205 = smul.addr %s202, 2
          %s206 = sadd.s32 %s204, %s205
          %s207 = smul.addr %s206, 4
          %s208 = scalar_lea.vmem %s1, %s207
          %s209 = smul.u32 2, %s18
        $region24: #{transformer_forward.44} parent=15 // pred_fallthru
          _
        // Predicated region
        $region25: #{transformer_forward.44} parent=15 // pred_check
          %p210 = pneg %p107
        $region26: #{transformer_forward.44} parent=15 // pred_check_branch
          %212 = sbr.rel (%p210) target = $region28
        $region27: #{transformer_forward.44} parent=15 // pred_region
          %s213 = sand.u32 %s97, 1
          %s214 = sand.u32 %s97, 1
          %s215 = smul.addr %s214, 8
          %s216 = scalar_lea.vmem [#allocation5], %s215
          %s217 = smul.u32 2, %s19
          %s218 = smul.addr %s217, 2
          %s219 = smul.addr %s17, 4
          %s220 = sadd.s32 %s218, %s219
          %s221 = smul.addr %s220, 4
          %s222 = scalar_lea.vmem %s2, %s221
          // Predicated region
          $region29: #{transformer_forward.44} parent=27 // pred_check
            _
          $region30: #{transformer_forward.44} parent=27 // pred_check_branch
            %224 = sbr.rel (0) target = $region32
          $region31: #{transformer_forward.44} parent=27 // pred_region
            // Predicated region
            $region33: #{transformer_forward.44} parent=31 // pred_check
              _
            $region34: #{transformer_forward.44} parent=31 // pred_check_branch
              %226 = sbr.rel target = $region36
            $region35: #{transformer_forward.44} parent=31 // pred_region
              // Predicated region
              $region48: #{transformer_forward.44} parent=35 // pred_check
                _
              $region49: #{transformer_forward.44} parent=35 // pred_check_branch
                %243 = sbr.rel (0) target = $region51
              $region50: #{transformer_forward.44} parent=35 // pred_region
                loop: start=0, step=1, limit=1
                $region52: #{transformer_forward.44} parent=50 // loop_pre_header
                  _
                $region53: #{transformer_forward.44} parent=50 // loop_header
                  %s245 = sphi 0, %s249
                  %p246 = scmp.ge.s32.totalorder %s245, 1
                  %s250 = sphi %s222, %s222
                  %s251 = sphi %s216, %s216
                $region54: #{transformer_forward.44} parent=50 // loop_header_branch
                  %248 = sbr.rel (%p246) target = $region58
                $region55: #{transformer_forward.44} parent=50 // loop_body
                  _
                $region56: #{transformer_forward.44} parent=50 // loop_footer
                  %s249 = sadd.s32 1, %s245
                $region57: #{transformer_forward.44} parent=50 // loop_footer_branch
                  %244 = sbr.rel target = $region53
                $region58: #{transformer_forward.44} parent=50 // loop_exit
                  _
                loop: start=0, step=1, limit=1
                $region59: #{transformer_forward.44} parent=50 // loop_pre_header
                  _
                $region60: #{transformer_forward.44} parent=50 // loop_header
                  %s254 = sphi 0, %s258
                  %p255 = scmp.ge.s32.totalorder %s254, 1
                  %s259 = sphi %s222, %s222
                  %s260 = sphi %s216, %s216
                $region61: #{transformer_forward.44} parent=50 // loop_header_branch
                  %257 = sbr.rel (%p255) target = $region65
                $region62: #{transformer_forward.44} parent=50 // loop_body
                  %v261 = vld [vmem:[%s259] sm:$0xf]
                  %262 = vst [vmem:[%s260] sm:$0xf] %v261
                  %v263 = vld [vmem:[%s259 + $0x8] sm:$0xf]
                  %264 = vst [vmem:[%s260 + $0x4] sm:$0xf] %v263
                $region63: #{transformer_forward.44} parent=50 // loop_footer
                  %s258 = sadd.s32 1, %s254
                $region64: #{transformer_forward.44} parent=50 // loop_footer_branch
                  %253 = sbr.rel target = $region60
                $region65: #{transformer_forward.44} parent=50 // loop_exit
                  _
              $region51: #{transformer_forward.44} parent=35 // pred_fallthru
                _
            $region36: #{transformer_forward.44} parent=31 // pred_fallthru
              _
            // Predicated region
            $region37: #{transformer_forward.44} parent=31 // pred_check
              _
            $region38: #{transformer_forward.44} parent=31 // pred_check_branch
              %228 = sbr.rel (0) target = $region40
            $region39: #{transformer_forward.44} parent=31 // pred_region
              loop: start=0, step=1, limit=1
              $region41: #{transformer_forward.44} parent=39 // loop_pre_header
                _
              $region42: #{transformer_forward.44} parent=39 // loop_header
                %s231 = sphi 0, %s235
                %p232 = scmp.ge.s32.totalorder %s231, 1
                %s236 = sphi %s222, %s222
                %s237 = sphi %s216, %s216
              $region43: #{transformer_forward.44} parent=39 // loop_header_branch
                %234 = sbr.rel (%p232) target = $region47
              $region44: #{transformer_forward.44} parent=39 // loop_body
                %v238 = vld [vmem:[%s236] sm:$0xf]
                %239 = vst [vmem:[%s237] sm:$0xf] %v238
                %v240 = vld [vmem:[%s236 + $0x8] sm:$0xf]
                %241 = vst [vmem:[%s237 + $0x4] sm:$0xf] %v240
              $region45: #{transformer_forward.44} parent=39 // loop_footer
                %s235 = sadd.s32 1, %s231
              $region46: #{transformer_forward.44} parent=39 // loop_footer_branch
                %230 = sbr.rel target = $region42
              $region47: #{transformer_forward.44} parent=39 // loop_exit
                _
            $region40: #{transformer_forward.44} parent=31 // pred_fallthru
              _
          $region32: #{transformer_forward.44} parent=27 // pred_fallthru
            _
          %265 = vnop
        $region28: #{transformer_forward.44} parent=15 // pred_fallthru
          _
        // Predicated region
        $region66: #{transformer_forward.44} parent=15 // pred_check
          %p266 = pneg %p135
        $region67: #{transformer_forward.44} parent=15 // pred_check_branch
          %268 = sbr.rel (%p266) target = $region69
        $region68: #{transformer_forward.44} parent=15 // pred_region
          %s269 = sand.u32 %s125, 1
          %s270 = sand.u32 %s125, 1
          %s271 = smul.addr %s270, 8
          %s272 = scalar_lea.vmem [#allocation6], %s271
          %s273 = smul.u32 2, %s19
          %s274 = smul.addr %s273, 2
          %s275 = sadd.s32 1, %s274
          %s276 = smul.addr %s17, 4
          %s277 = sadd.s32 %s275, %s276
          %s278 = smul.addr %s277, 4
          %s279 = scalar_lea.vmem %s3, %s278
          // Predicated region
          $region70: #{transformer_forward.44} parent=68 // pred_check
            _
          $region71: #{transformer_forward.44} parent=68 // pred_check_branch
            %281 = sbr.rel (0) target = $region73
          $region72: #{transformer_forward.44} parent=68 // pred_region
            // Predicated region
            $region74: #{transformer_forward.44} parent=72 // pred_check
              _
            $region75: #{transformer_forward.44} parent=72 // pred_check_branch
              %283 = sbr.rel target = $region77
            $region76: #{transformer_forward.44} parent=72 // pred_region
              // Predicated region
              $region89: #{transformer_forward.44} parent=76 // pred_check
                _
              $region90: #{transformer_forward.44} parent=76 // pred_check_branch
                %300 = sbr.rel (0) target = $region92
              $region91: #{transformer_forward.44} parent=76 // pred_region
                loop: start=0, step=1, limit=1
                $region93: #{transformer_forward.44} parent=91 // loop_pre_header
                  _
                $region94: #{transformer_forward.44} parent=91 // loop_header
                  %s302 = sphi 0, %s306
                  %p303 = scmp.ge.s32.totalorder %s302, 1
                  %s307 = sphi %s279, %s279
                  %s308 = sphi %s272, %s272
                $region95: #{transformer_forward.44} parent=91 // loop_header_branch
                  %305 = sbr.rel (%p303) target = $region99
                $region96: #{transformer_forward.44} parent=91 // loop_body
                  _
                $region97: #{transformer_forward.44} parent=91 // loop_footer
                  %s306 = sadd.s32 1, %s302
                $region98: #{transformer_forward.44} parent=91 // loop_footer_branch
                  %301 = sbr.rel target = $region94
                $region99: #{transformer_forward.44} parent=91 // loop_exit
                  _
                loop: start=0, step=1, limit=1
                $region100: #{transformer_forward.44} parent=91 // loop_pre_header
                  _
                $region101: #{transformer_forward.44} parent=91 // loop_header
                  %s311 = sphi 0, %s315
                  %p312 = scmp.ge.s32.totalorder %s311, 1
                  %s316 = sphi %s279, %s279
                  %s317 = sphi %s272, %s272
                $region102: #{transformer_forward.44} parent=91 // loop_header_branch
                  %314 = sbr.rel (%p312) target = $region106
                $region103: #{transformer_forward.44} parent=91 // loop_body
                  %v318 = vld [vmem:[%s316] sm:$0xf]
                  %319 = vst [vmem:[%s317] sm:$0xf] %v318
                  %v320 = vld [vmem:[%s316 + $0x8] sm:$0xf]
                  %321 = vst [vmem:[%s317 + $0x4] sm:$0xf] %v320
                $region104: #{transformer_forward.44} parent=91 // loop_footer
                  %s315 = sadd.s32 1, %s311
                $region105: #{transformer_forward.44} parent=91 // loop_footer_branch
                  %310 = sbr.rel target = $region101
                $region106: #{transformer_forward.44} parent=91 // loop_exit
                  _
              $region92: #{transformer_forward.44} parent=76 // pred_fallthru
                _
            $region77: #{transformer_forward.44} parent=72 // pred_fallthru
              _
            // Predicated region
            $region78: #{transformer_forward.44} parent=72 // pred_check
              _
            $region79: #{transformer_forward.44} parent=72 // pred_check_branch
              %285 = sbr.rel (0) target = $region81
            $region80: #{transformer_forward.44} parent=72 // pred_region
              loop: start=0, step=1, limit=1
              $region82: #{transformer_forward.44} parent=80 // loop_pre_header
                _
              $region83: #{transformer_forward.44} parent=80 // loop_header
                %s288 = sphi 0, %s292
                %p289 = scmp.ge.s32.totalorder %s288, 1
                %s293 = sphi %s279, %s279
                %s294 = sphi %s272, %s272
              $region84: #{transformer_forward.44} parent=80 // loop_header_branch
                %291 = sbr.rel (%p289) target = $region88
              $region85: #{transformer_forward.44} parent=80 // loop_body
                %v295 = vld [vmem:[%s293] sm:$0xf]
                %296 = vst [vmem:[%s294] sm:$0xf] %v295
                %v297 = vld [vmem:[%s293 + $0x8] sm:$0xf]
                %298 = vst [vmem:[%s294 + $0x4] sm:$0xf] %v297
              $region86: #{transformer_forward.44} parent=80 // loop_footer
                %s292 = sadd.s32 1, %s288
              $region87: #{transformer_forward.44} parent=80 // loop_footer_branch
                %287 = sbr.rel target = $region83
              $region88: #{transformer_forward.44} parent=80 // loop_exit
                _
            $region81: #{transformer_forward.44} parent=72 // pred_fallthru
              _
          $region73: #{transformer_forward.44} parent=68 // pred_fallthru
            _
          %322 = vnop
        $region69: #{transformer_forward.44} parent=15 // pred_fallthru
          _
      $region16: #{transformer_forward.44} parent=5 // pred_fallthru
        _
      %p323 = scmp.le.s32.totalorder 1, %s10
      %p324 = scmp.lt.s32.totalorder %s10, 3
      %p325 = pnand %p323, %p324
      %p326 = pneg %p325
      // Predicated region
      $region107: #{transformer_forward.44} parent=5 // pred_check
        _
      $region108: #{transformer_forward.44} parent=5 // pred_check_branch
        %328 = sbr.rel (%p325) target = $region110
      $region109: #{transformer_forward.44} parent=5 // pred_region
        %s329 = ssub.s32 %s10, 1
        %s330 = sand.u32 %s100, 1
        %s331 = sand.u32 %s100, 1
        %s332 = smul.addr %s331, 8
        %s333 = scalar_lea.vmem [#allocation5], %s332
        // Predicated region
        $region111: #{transformer_forward.44} parent=109 // pred_check
          %p334 = pneg %p113
        $region112: #{transformer_forward.44} parent=109 // pred_check_branch
          %336 = sbr.rel (%p334) target = $region114
        $region113: #{transformer_forward.44} parent=109 // pred_region
          _
        $region114: #{transformer_forward.44} parent=109 // pred_fallthru
          _
        %s337 = sand.u32 %s128, 1
        %s338 = sand.u32 %s128, 1
        %s339 = smul.addr %s338, 8
        %s340 = scalar_lea.vmem [#allocation6], %s339
        // Predicated region
        $region115: #{transformer_forward.44} parent=109 // pred_check
          %p341 = pneg %p141
        $region116: #{transformer_forward.44} parent=109 // pred_check_branch
          %343 = sbr.rel (%p341) target = $region118
        $region117: #{transformer_forward.44} parent=109 // pred_region
          _
        $region118: #{transformer_forward.44} parent=109 // pred_fallthru
          _
        %p344 = scmp.lt.s32.totalorder %s20, 1
        %s345 = scalar_select %p344, %s20, 1
        %p346 = scmp.lt.s32.totalorder %s22, 0
        %s347 = scalar_select %p346, %s22, 0
        %s348 = sadd.s32 %s347, %s345
        %s349 = scalar_lea.vmem %s0, %s348
        %p350 = pneg %p57
        %p351 = pneg %p54
        %s352 = smul.u32 2, %s21
        %p353 = scmp.lt.s32.totalorder %s20, 1
        %s354 = scalar_select %p353, %s20, 1
        %p355 = scmp.lt.s32.totalorder %s352, 1
        %s356 = scalar_select %p355, %s352, 1
        %s357 = smul.addr %s354, 2
        %s358 = sadd.s32 %s356, %s357
        %s359 = smul.addr %s358, 4
        %s360 = scalar_lea.vmem %s1, %s359
        %p361 = pneg %p85
        %p362 = pneg %p82
        %s363 = sand.u32 %s100, 1
        %s364 = sand.u32 %s100, 1
        %s365 = smul.addr %s364, 8
        %s366 = scalar_lea.vmem [#allocation5], %s365
        %p367 = pneg %p113
        %p368 = pneg %p110
        %s369 = sand.u32 %s128, 1
        %s370 = sand.u32 %s128, 1
        %s371 = smul.addr %s370, 8
        %s372 = scalar_lea.vmem [#allocation6], %s371
        %p373 = pneg %p141
        %p374 = pneg %p138
        %p375 = pneg %p169
        %p376 = pneg %p166
        %s377 = smul.u32 2, %s21
        %p378 = scmp.lt.s32.totalorder %s20, 1
        %s379 = scalar_select %p378, %s20, 1
        %p380 = scmp.lt.s32.totalorder %s377, 1
        %s381 = scalar_select %p380, %s377, 1
        %s382 = smul.addr %s379, 2
        %s383 = sadd.s32 %s381, %s382
        %s384 = smul.addr %s383, 4
        %s385 = scalar_lea.vmem %s4, %s384
        %p386 = scmp.lt.s32.totalorder %s20, 1
        %s387 = scalar_select %p386, %s20, 1
        %p388 = scmp.lt.s32.totalorder %s22, 0
        %s389 = scalar_select %p388, %s22, 0
        %s390 = sadd.s32 %s389, %s387
        %s391 = scalar_lea.vmem %s0, %s390
        %s392 = smul.u32 2, %s21
        %p393 = scmp.lt.s32.totalorder %s20, 1
        %s394 = scalar_select %p393, %s20, 1
        %p395 = scmp.lt.s32.totalorder %s392, 1
        %s396 = scalar_select %p395, %s392, 1
        %s397 = smul.addr %s394, 2
        %s398 = sadd.s32 %s396, %s397
        %s399 = smul.addr %s398, 4
        %s400 = scalar_lea.vmem %s1, %s399
        %s401 = smul.u32 2, %s21
        %s402 = smul.u32 2, %s22
        %s403 = smul.u32 2, %s22
        %s404 = smul.u32 2, %s21
        %p405 = scmp.lt.s32.totalorder %s20, 1
        %s406 = scalar_select %p405, %s20, 1
        %p407 = scmp.lt.s32.totalorder %s404, 1
        %s408 = scalar_select %p407, %s404, 1
        %s409 = smul.addr %s406, 2
        %s410 = sadd.s32 %s408, %s409
        %s411 = smul.addr %s410, 4
        %s412 = scalar_lea.vmem %s4, %s411
        %s413 = smul.u32 2, %s21
        %p415 = scmp.eq.s32.totalorder %s22, 0
        // Predicated region
        $region119: #{transformer_forward.44} parent=109 // pred_check
          %p416 = pneg %p415
        $region120: #{transformer_forward.44} parent=109 // pred_check_branch
          %418 = sbr.rel (%p416) target = $region122
        $region121: #{transformer_forward.44} parent=109 // pred_region
          %vm419 = vcmask 7168
          %420 = vst.msk [vmem:[#allocation2] sm:$0xff] %vm419, -inf
          %421 = vst.msk [vmem:[#allocation2 + $0x8] sm:$0xff] %vm419, -inf
          %422 = vst.msk [vmem:[#allocation2 + $0x10] sm:$0xff] %vm419, -inf
          %423 = vst.msk [vmem:[#allocation2 + $0x18] sm:$0xff] %vm419, -inf
          %424 = vst.msk [vmem:[#allocation2 + $0x20] sm:$0xff] %vm419, -inf
          %425 = vst.msk [vmem:[#allocation2 + $0x28] sm:$0xff] %vm419, -inf
          %426 = vst.msk [vmem:[#allocation2 + $0x30] sm:$0xff] %vm419, -inf
          %427 = vst.msk [vmem:[#allocation2 + $0x38] sm:$0xff] %vm419, -inf
          %428 = vst.msk [vmem:[#allocation3] sm:$0xff] %vm419, 0.0
          %429 = vst.msk [vmem:[#allocation3 + $0x8] sm:$0xff] %vm419, 0.0
          %430 = vst.msk [vmem:[#allocation3 + $0x10] sm:$0xff] %vm419, 0.0
          %431 = vst.msk [vmem:[#allocation3 + $0x18] sm:$0xff] %vm419, 0.0
          %432 = vst.msk [vmem:[#allocation3 + $0x20] sm:$0xff] %vm419, 0.0
          %433 = vst.msk [vmem:[#allocation3 + $0x28] sm:$0xff] %vm419, 0.0
          %434 = vst.msk [vmem:[#allocation3 + $0x30] sm:$0xff] %vm419, 0.0
          %435 = vst.msk [vmem:[#allocation3 + $0x38] sm:$0xff] %vm419, 0.0
          %vm436 = vcmask 261120
          %437 = vst.msk [vmem:[#allocation4] sm:$0xff] %vm436, 0.0
          %438 = vst.msk [vmem:[#allocation4 + $0x8] sm:$0xff] %vm436, 0.0
          %439 = vst.msk [vmem:[#allocation4 + $0x10] sm:$0xff] %vm436, 0.0
          %440 = vst.msk [vmem:[#allocation4 + $0x18] sm:$0xff] %vm436, 0.0
          %441 = vst.msk [vmem:[#allocation4 + $0x20] sm:$0xff] %vm436, 0.0
          %442 = vst.msk [vmem:[#allocation4 + $0x28] sm:$0xff] %vm436, 0.0
          %443 = vst.msk [vmem:[#allocation4 + $0x30] sm:$0xff] %vm436, 0.0
          %444 = vst.msk [vmem:[#allocation4 + $0x38] sm:$0xff] %vm436, 0.0
        $region122: #{transformer_forward.44} parent=109 // pred_fallthru
          _
        %v445 = vld [vmem:[%s400] sm:$0xf]
        %v446 = vld [vmem:[%s400 + $0x4] sm:$0xf]
        %v447 = vld [vmem:[%s333] sm:$0xf]
        %v448 = vld [vmem:[%s333 + $0x4] sm:$0xf]
        %v449 = vld [vmem:[%s340] sm:$0xf]
        %v450 = vld [vmem:[%s340 + $0x4] sm:$0xf]
        %v451 = vld [vmem:[%s391] sm:$0x1]
        %v453 = vlaneseq
        %v454 = vshrl.u32 %v453, 7
        %v455 = vsub.s32 0, %v454
        %v456 = vrot.slane %v451, %v455
        %v460 = vunpack.c.l.b16 %v445
        %v461 = vunpack.c.l.b16 %v446
        %v462 = vpack.c.b16 %v461, %v460
        %v465 = vunpack.c.l.b16 %v447
        %v466 = vunpack.c.l.b16 %v448
        %v467 = vpack.c.b16 %v466, %v465
        %vm468 = vcmask 261120
        %v470 = vsel %vm468, %v462, 0
        %v473 = vsel %vm468, %v467, 0
        %475 = vmatprep.subr.bf16.mxu0 0
        %476 = vmatpush1.bf16.xpose.msra.mxu0 %v473
        %477 = vmatprep.subr.bf16.mxu0 0
        %478 = vmatpush1.bf16.xpose.msra.mxu0 0
        %479 = vmatprep.subr.bf16.mxu0 0
        %480 = vmatpush1.bf16.xpose.msra.mxu0 0
        %481 = vmatprep.subr.bf16.mxu0 0
        %482 = vmatpush1.bf16.xpose.msra.mxu0 0
        %483 = vmatprep.subr.bf16.mxu0 0
        %484 = vmatpush1.bf16.xpose.msra.mxu0 0
        %485 = vmatprep.subr.bf16.mxu0 0
        %486 = vmatpush1.bf16.xpose.msra.mxu0 0
        %487 = vmatprep.subr.bf16.mxu0 0
        %488 = vmatpush1.bf16.xpose.msra.mxu0 0
        %489 = vmatprep.subr.bf16.mxu0 0
        %490 = vmatpush1.bf16.xpose.msra.mxu0 0
        %491 = vmatprep.subr.bf16.mxu0 0
        %492 = vmatpush1.bf16.xpose.msra.mxu0 0
        %493 = vmatprep.subr.bf16.mxu0 0
        %494 = vmatpush1.bf16.xpose.msra.mxu0 0
        %495 = vmatprep.subr.bf16.mxu0 0
        %496 = vmatpush1.bf16.xpose.msra.mxu0 0
        %497 = vmatprep.subr.bf16.mxu0 0
        %498 = vmatpush1.bf16.xpose.msra.mxu0 0
        %499 = vmatprep.subr.bf16.mxu0 0
        %500 = vmatpush1.bf16.xpose.msra.mxu0 0
        %501 = vmatprep.subr.bf16.mxu0 0
        %502 = vmatpush1.bf16.xpose.msra.mxu0 0
        %503 = vmatprep.subr.bf16.mxu0 0
        %504 = vmatpush1.bf16.xpose.msra.mxu0 0
        %505 = vmatprep.subr.bf16.mxu0 0
        %506 = vmatpush1.bf16.xpose.msra.mxu0 0
        %507 = vmatprep.mubr.bf16.mxu0 0
        %508 = vmatmul.mubr.bf16.gmra.mrb[0].mxu0 %v470
        %v509 = vpop.f32.mrb[0].mxu0
        %v510 = vadd.f32 %v456, %v509
        %v511 = vpop.f32.mrb[0].mxu0
        %v512 = vpop.f32.mrb[0].mxu0
        %v513 = vadd.f32 %v456, %v512
        %v514 = vpop.f32.mrb[0].mxu0
        %515 = vdwg.mxu0
        %v516 = vld [vmem:[#allocation2] sm:$0xff]
        %v517 = vld [vmem:[#allocation2 + $0x8] sm:$0xff]
        %vm518 = vcmask 130048
        %v519 = vsel %vm518, %v510, -inf
        %520 = vmax.xlane.f32.xlu0 %v519
        %v521 = vpop.xlane.xlu0 %520
        %v522 = vsel %vm518, %v513, -inf
        %523 = vmax.xlane.f32.xlu0 %v522
        %v524 = vpop.xlane.xlu0 %523
        %v525 = vmax.f32 %v516, %v521
        %v526 = vmax.f32 %v517, %v524
        %v527 = vsub.f32 %v516, %v525
        %v528 = vsub.f32 %v517, %v526
        %v529 = vmul.f32 %v527, 1.442695
        %v530 = vpow.pop %v529
        %v531 = vmul.f32 %v528, 1.442695
        %v532 = vpow.pop %v531
        %534 = vset.pattern.permute.xlu0 0
        %535 = vperm.xlu0 %534, %v525
        %v536 = vpop.permute.xlu0 %535
        %539 = vset.pattern.permute.xlu0 0
        %540 = vperm.xlu0 %539, %v526
        %v541 = vpop.permute.xlu0 %540
        %v543 = vsub.f32 %v510, %v536
        %v544 = vsub.f32 %v513, %v541
        %v545 = vmul.f32 %v543, 1.442695
        %v546 = vpow.pop %v545
        %v547 = vmul.f32 %v544, 1.442695
        %v548 = vpow.pop %v547
        %v549 = vld [vmem:[#allocation3] sm:$0xff]
        %v550 = vld [vmem:[#allocation3 + $0x8] sm:$0xff]
        %v551 = vmul.f32 %v530, %v549
        %v552 = vmul.f32 %v532, %v550
        %v553 = vsel %vm518, %v546, 0.0
        %554 = vadd.xlane.f32.xlu0 %v553
        %v555 = vpop.xlane.xlu0 %554
        %v556 = vsel %vm518, %v548, 0.0
        %557 = vadd.xlane.f32.xlu0 %v556
        %v558 = vpop.xlane.xlu0 %557
        %v559 = vadd.f32 %v551, %v555
        %v560 = vadd.f32 %v552, %v558
        %vm561 = vcmask 7168
        %562 = vst.msk [vmem:[#allocation3] sm:$0xff] %vm561, %v559
        %563 = vst.msk [vmem:[#allocation3 + $0x8] sm:$0xff] %vm561, %v560
        %v564 = vld [vmem:[#allocation4] sm:$0xff]
        %v565 = vld [vmem:[#allocation4 + $0x8] sm:$0xff]
        %567 = vset.pattern.permute.xlu0 0
        %568 = vperm.xlu0 %567, %v530
        %v569 = vpop.permute.xlu0 %568
        %572 = vset.pattern.permute.xlu0 0
        %573 = vperm.xlu0 %572, %v532
        %v574 = vpop.permute.xlu0 %573
        %v576 = vmul.f32 %v569, %v564
        %v577 = vmul.f32 %v574, %v565
        %v578 = vpack.c.bf16 %v548, %v546
        %v581 = vunpack.c.l.b16 %v449
        %v582 = vunpack.c.l.b16 %v450
        %v583 = vpack.c.b16 %v582, %v581
        %v586 = vsel %vm518, %v578, 0
        %588 = vmatprep.subr.bf16.mxu0 0
        %589 = vmatpush1.bf16.msra.mxu0 %v583
        %590 = vmatprep.subr.bf16.mxu0 0
        %591 = vmatpush1.bf16.msra.mxu0 0
        %592 = vmatprep.subr.bf16.mxu0 0
        %593 = vmatpush1.bf16.msra.mxu0 0
        %594 = vmatprep.subr.bf16.mxu0 0
        %595 = vmatpush1.bf16.msra.mxu0 0
        %596 = vmatprep.subr.bf16.mxu0 0
        %597 = vmatpush1.bf16.msra.mxu0 0
        %598 = vmatprep.subr.bf16.mxu0 0
        %599 = vmatpush1.bf16.msra.mxu0 0
        %600 = vmatprep.subr.bf16.mxu0 0
        %601 = vmatpush1.bf16.msra.mxu0 0
        %602 = vmatprep.subr.bf16.mxu0 0
        %603 = vmatpush1.bf16.msra.mxu0 0
        %604 = vmatprep.subr.bf16.mxu0 0
        %605 = vmatpush1.bf16.msra.mxu0 0
        %606 = vmatprep.subr.bf16.mxu0 0
        %607 = vmatpush1.bf16.msra.mxu0 0
        %608 = vmatprep.subr.bf16.mxu0 0
        %609 = vmatpush1.bf16.msra.mxu0 0
        %610 = vmatprep.subr.bf16.mxu0 0
        %611 = vmatpush1.bf16.msra.mxu0 0
        %612 = vmatprep.subr.bf16.mxu0 0
        %613 = vmatpush1.bf16.msra.mxu0 0
        %614 = vmatprep.subr.bf16.mxu0 0
        %615 = vmatpush1.bf16.msra.mxu0 0
        %616 = vmatprep.subr.bf16.mxu0 0
        %617 = vmatpush1.bf16.msra.mxu0 0
        %618 = vmatprep.subr.bf16.mxu0 0
        %619 = vmatpush1.bf16.msra.mxu0 0
        %620 = vmatprep.mubr.bf16.mxu0 0
        %621 = vmatmul.mubr.bf16.gmra.mrb[0].mxu0 %v586
        %v622 = vpop.f32.mrb[0].mxu0
        %v623 = vadd.f32 0.0, %v622
        %v624 = vpop.f32.mrb[0].mxu0
        %v625 = vpop.f32.mrb[0].mxu0
        %v626 = vadd.f32 0.0, %v625
        %v627 = vpop.f32.mrb[0].mxu0
        %628 = vdwg.mxu0
        %v629 = vadd.f32 %v576, %v623
        %v630 = vadd.f32 %v577, %v626
        %631 = vst.msk [vmem:[#allocation4] sm:$0xff] %vm468, %v629
        %632 = vst.msk [vmem:[#allocation4 + $0x8] sm:$0xff] %vm468, %v630
        %633 = vst.msk [vmem:[#allocation2] sm:$0xff] %vm561, %v525
        %634 = vst.msk [vmem:[#allocation2 + $0x8] sm:$0xff] %vm561, %v526
        %635 = vrot.lane.b32.xlu0 %v462, 96
        %v636 = vpop.permute.xlu0 %635
        %637 = vrot.lane.b32.xlu0 %v467, 96
        %v638 = vpop.permute.xlu0 %637
        %v640 = vsel %vm468, %v636, 0
        %v643 = vsel %vm468, %v638, 0
        %645 = vmatprep.subr.bf16.mxu0 0
        %646 = vmatpush1.bf16.xpose.msra.mxu0 %v643
        %647 = vmatprep.subr.bf16.mxu0 0
        %648 = vmatpush1.bf16.xpose.msra.mxu0 0
        %649 = vmatprep.subr.bf16.mxu0 0
        %650 = vmatpush1.bf16.xpose.msra.mxu0 0
        %651 = vmatprep.subr.bf16.mxu0 0
        %652 = vmatpush1.bf16.xpose.msra.mxu0 0
        %653 = vmatprep.subr.bf16.mxu0 0
        %654 = vmatpush1.bf16.xpose.msra.mxu0 0
        %655 = vmatprep.subr.bf16.mxu0 0
        %656 = vmatpush1.bf16.xpose.msra.mxu0 0
        %657 = vmatprep.subr.bf16.mxu0 0
        %658 = vmatpush1.bf16.xpose.msra.mxu0 0
        %659 = vmatprep.subr.bf16.mxu0 0
        %660 = vmatpush1.bf16.xpose.msra.mxu0 0
        %661 = vmatprep.subr.bf16.mxu0 0
        %662 = vmatpush1.bf16.xpose.msra.mxu0 0
        %663 = vmatprep.subr.bf16.mxu0 0
        %664 = vmatpush1.bf16.xpose.msra.mxu0 0
        %665 = vmatprep.subr.bf16.mxu0 0
        %666 = vmatpush1.bf16.xpose.msra.mxu0 0
        %667 = vmatprep.subr.bf16.mxu0 0
        %668 = vmatpush1.bf16.xpose.msra.mxu0 0
        %669 = vmatprep.subr.bf16.mxu0 0
        %670 = vmatpush1.bf16.xpose.msra.mxu0 0
        %671 = vmatprep.subr.bf16.mxu0 0
        %672 = vmatpush1.bf16.xpose.msra.mxu0 0
        %673 = vmatprep.subr.bf16.mxu0 0
        %674 = vmatpush1.bf16.xpose.msra.mxu0 0
        %675 = vmatprep.subr.bf16.mxu0 0
        %676 = vmatpush1.bf16.xpose.msra.mxu0 0
        %677 = vmatprep.mubr.bf16.mxu0 0
        %678 = vmatmul.mubr.bf16.gmra.mrb[0].mxu0 %v640
        %v679 = vpop.f32.mrb[0].mxu0
        %v680 = vadd.f32 %v456, %v679
        %v681 = vpop.f32.mrb[0].mxu0
        %v682 = vpop.f32.mrb[0].mxu0
        %v683 = vadd.f32 %v456, %v682
        %v684 = vpop.f32.mrb[0].mxu0
        %685 = vdwg.mxu0
        %s686 = scalar_lea.vmem [#allocation2], 16
        %v687 = vld [vmem:[%s686] sm:$0xff]
        %v688 = vld [vmem:[%s686 + $0x8] sm:$0xff]
        %v689 = vsel %vm518, %v680, -inf
        %690 = vmax.xlane.f32.xlu0 %v689
        %v691 = vpop.xlane.xlu0 %690
        %v692 = vsel %vm518, %v683, -inf
        %693 = vmax.xlane.f32.xlu0 %v692
        %v694 = vpop.xlane.xlu0 %693
        %v695 = vmax.f32 %v687, %v691
        %v696 = vmax.f32 %v688, %v694
        %v697 = vsub.f32 %v687, %v695
        %v698 = vsub.f32 %v688, %v696
        %v699 = vmul.f32 %v697, 1.442695
        %v700 = vpow.pop %v699
        %v701 = vmul.f32 %v698, 1.442695
        %v702 = vpow.pop %v701
        %704 = vset.pattern.permute.xlu0 0
        %705 = vperm.xlu0 %704, %v695
        %v706 = vpop.permute.xlu0 %705
        %709 = vset.pattern.permute.xlu0 0
        %710 = vperm.xlu0 %709, %v696
        %v711 = vpop.permute.xlu0 %710
        %v713 = vsub.f32 %v680, %v706
        %v714 = vsub.f32 %v683, %v711
        %v715 = vmul.f32 %v713, 1.442695
        %v716 = vpow.pop %v715
        %v717 = vmul.f32 %v714, 1.442695
        %v718 = vpow.pop %v717
        %s719 = scalar_lea.vmem [#allocation3], 16
        %v720 = vld [vmem:[%s719] sm:$0xff]
        %v721 = vld [vmem:[%s719 + $0x8] sm:$0xff]
        %v722 = vmul.f32 %v700, %v720
        %v723 = vmul.f32 %v702, %v721
        %v724 = vsel %vm518, %v716, 0.0
        %725 = vadd.xlane.f32.xlu0 %v724
        %v726 = vpop.xlane.xlu0 %725
        %v727 = vsel %vm518, %v718, 0.0
        %728 = vadd.xlane.f32.xlu0 %v727
        %v729 = vpop.xlane.xlu0 %728
        %v730 = vadd.f32 %v722, %v726
        %v731 = vadd.f32 %v723, %v729
        %732 = vst.msk [vmem:[%s719] sm:$0xff] %vm561, %v730
        %733 = vst.msk [vmem:[%s719 + $0x8] sm:$0xff] %vm561, %v731
        %s734 = scalar_lea.vmem [#allocation4], 16
        %v735 = vld [vmem:[%s734] sm:$0xff]
        %v736 = vld [vmem:[%s734 + $0x8] sm:$0xff]
        %738 = vset.pattern.permute.xlu0 0
        %739 = vperm.xlu0 %738, %v700
        %v740 = vpop.permute.xlu0 %739
        %743 = vset.pattern.permute.xlu0 0
        %744 = vperm.xlu0 %743, %v702
        %v745 = vpop.permute.xlu0 %744
        %v747 = vmul.f32 %v740, %v735
        %v748 = vmul.f32 %v745, %v736
        %v749 = vpack.c.bf16 %v718, %v716
        %750 = vrot.lane.b32.xlu0 %v583, 96
        %v751 = vpop.permute.xlu0 %750
        %v754 = vsel %vm518, %v749, 0
        %756 = vmatprep.subr.bf16.mxu0 0
        %757 = vmatpush1.bf16.msra.mxu0 %v751
        %758 = vmatprep.subr.bf16.mxu0 0
        %759 = vmatpush1.bf16.msra.mxu0 0
        %760 = vmatprep.subr.bf16.mxu0 0
        %761 = vmatpush1.bf16.msra.mxu0 0
        %762 = vmatprep.subr.bf16.mxu0 0
        %763 = vmatpush1.bf16.msra.mxu0 0
        %764 = vmatprep.subr.bf16.mxu0 0
        %765 = vmatpush1.bf16.msra.mxu0 0
        %766 = vmatprep.subr.bf16.mxu0 0
        %767 = vmatpush1.bf16.msra.mxu0 0
        %768 = vmatprep.subr.bf16.mxu0 0
        %769 = vmatpush1.bf16.msra.mxu0 0
        %770 = vmatprep.subr.bf16.mxu0 0
        %771 = vmatpush1.bf16.msra.mxu0 0
        %772 = vmatprep.subr.bf16.mxu0 0
        %773 = vmatpush1.bf16.msra.mxu0 0
        %774 = vmatprep.subr.bf16.mxu0 0
        %775 = vmatpush1.bf16.msra.mxu0 0
        %776 = vmatprep.subr.bf16.mxu0 0
        %777 = vmatpush1.bf16.msra.mxu0 0
        %778 = vmatprep.subr.bf16.mxu0 0
        %779 = vmatpush1.bf16.msra.mxu0 0
        %780 = vmatprep.subr.bf16.mxu0 0
        %781 = vmatpush1.bf16.msra.mxu0 0
        %782 = vmatprep.subr.bf16.mxu0 0
        %783 = vmatpush1.bf16.msra.mxu0 0
        %784 = vmatprep.subr.bf16.mxu0 0
        %785 = vmatpush1.bf16.msra.mxu0 0
        %786 = vmatprep.subr.bf16.mxu0 0
        %787 = vmatpush1.bf16.msra.mxu0 0
        %788 = vmatprep.mubr.bf16.mxu0 0
        %789 = vmatmul.mubr.bf16.gmra.mrb[0].mxu0 %v754
        %v790 = vpop.f32.mrb[0].mxu0
        %v791 = vadd.f32 0.0, %v790
        %v792 = vpop.f32.mrb[0].mxu0
        %v793 = vpop.f32.mrb[0].mxu0
        %v794 = vadd.f32 0.0, %v793
        %v795 = vpop.f32.mrb[0].mxu0
        %796 = vdwg.mxu0
        %v797 = vadd.f32 %v747, %v791
        %v798 = vadd.f32 %v748, %v794
        %799 = vst.msk [vmem:[%s734] sm:$0xff] %vm468, %v797
        %800 = vst.msk [vmem:[%s734 + $0x8] sm:$0xff] %vm468, %v798
        %801 = vst.msk [vmem:[%s686] sm:$0xff] %vm561, %v695
        %802 = vst.msk [vmem:[%s686 + $0x8] sm:$0xff] %vm561, %v696
        %803 = vrot.lane.b32.xlu0 %v462, 64
        %v804 = vpop.permute.xlu0 %803
        %805 = vrot.lane.b32.xlu0 %v467, 64
        %v806 = vpop.permute.xlu0 %805
        %v808 = vsel %vm468, %v804, 0
        %v811 = vsel %vm468, %v806, 0
        %813 = vmatprep.subr.bf16.mxu0 0
        %814 = vmatpush1.bf16.xpose.msra.mxu0 %v811
        %815 = vmatprep.subr.bf16.mxu0 0
        %816 = vmatpush1.bf16.xpose.msra.mxu0 0
        %817 = vmatprep.subr.bf16.mxu0 0
        %818 = vmatpush1.bf16.xpose.msra.mxu0 0
        %819 = vmatprep.subr.bf16.mxu0 0
        %820 = vmatpush1.bf16.xpose.msra.mxu0 0
        %821 = vmatprep.subr.bf16.mxu0 0
        %822 = vmatpush1.bf16.xpose.msra.mxu0 0
        %823 = vmatprep.subr.bf16.mxu0 0
        %824 = vmatpush1.bf16.xpose.msra.mxu0 0
        %825 = vmatprep.subr.bf16.mxu0 0
        %826 = vmatpush1.bf16.xpose.msra.mxu0 0
        %827 = vmatprep.subr.bf16.mxu0 0
        %828 = vmatpush1.bf16.xpose.msra.mxu0 0
        %829 = vmatprep.subr.bf16.mxu0 0
        %830 = vmatpush1.bf16.xpose.msra.mxu0 0
        %831 = vmatprep.subr.bf16.mxu0 0
        %832 = vmatpush1.bf16.xpose.msra.mxu0 0
        %833 = vmatprep.subr.bf16.mxu0 0
        %834 = vmatpush1.bf16.xpose.msra.mxu0 0
        %835 = vmatprep.subr.bf16.mxu0 0
        %836 = vmatpush1.bf16.xpose.msra.mxu0 0
        %837 = vmatprep.subr.bf16.mxu0 0
        %838 = vmatpush1.bf16.xpose.msra.mxu0 0
        %839 = vmatprep.subr.bf16.mxu0 0
        %840 = vmatpush1.bf16.xpose.msra.mxu0 0
        %841 = vmatprep.subr.bf16.mxu0 0
        %842 = vmatpush1.bf16.xpose.msra.mxu0 0
        %843 = vmatprep.subr.bf16.mxu0 0
        %844 = vmatpush1.bf16.xpose.msra.mxu0 0
        %845 = vmatprep.mubr.bf16.mxu0 0
        %846 = vmatmul.mubr.bf16.gmra.mrb[0].mxu0 %v808
        %v847 = vpop.f32.mrb[0].mxu0
        %v848 = vadd.f32 %v456, %v847
        %v849 = vpop.f32.mrb[0].mxu0
        %v850 = vpop.f32.mrb[0].mxu0
        %v851 = vadd.f32 %v456, %v850
        %v852 = vpop.f32.mrb[0].mxu0
        %853 = vdwg.mxu0
        %s854 = scalar_lea.vmem [#allocation2], 32
        %v855 = vld [vmem:[%s854] sm:$0xff]
        %v856 = vld [vmem:[%s854 + $0x8] sm:$0xff]
        %v857 = vsel %vm518, %v848, -inf
        %858 = vmax.xlane.f32.xlu0 %v857
        %v859 = vpop.xlane.xlu0 %858
        %v860 = vsel %vm518, %v851, -inf
        %861 = vmax.xlane.f32.xlu0 %v860
        %v862 = vpop.xlane.xlu0 %861
        %v863 = vmax.f32 %v855, %v859
        %v864 = vmax.f32 %v856, %v862
        %v865 = vsub.f32 %v855, %v863
        %v866 = vsub.f32 %v856, %v864
        %v867 = vmul.f32 %v865, 1.442695
        %v868 = vpow.pop %v867
        %v869 = vmul.f32 %v866, 1.442695
        %v870 = vpow.pop %v869
        %872 = vset.pattern.permute.xlu0 0
        %873 = vperm.xlu0 %872, %v863
        %v874 = vpop.permute.xlu0 %873
        %877 = vset.pattern.permute.xlu0 0
        %878 = vperm.xlu0 %877, %v864
        %v879 = vpop.permute.xlu0 %878
        %v881 = vsub.f32 %v848, %v874
        %v882 = vsub.f32 %v851, %v879
        %v883 = vmul.f32 %v881, 1.442695
        %v884 = vpow.pop %v883
        %v885 = vmul.f32 %v882, 1.442695
        %v886 = vpow.pop %v885
        %s887 = scalar_lea.vmem [#allocation3], 32
        %v888 = vld [vmem:[%s887] sm:$0xff]
        %v889 = vld [vmem:[%s887 + $0x8] sm:$0xff]
        %v890 = vmul.f32 %v868, %v888
        %v891 = vmul.f32 %v870, %v889
        %v892 = vsel %vm518, %v884, 0.0
        %893 = vadd.xlane.f32.xlu0 %v892
        %v894 = vpop.xlane.xlu0 %893
        %v895 = vsel %vm518, %v886, 0.0
        %896 = vadd.xlane.f32.xlu0 %v895
        %v897 = vpop.xlane.xlu0 %896
        %v898 = vadd.f32 %v890, %v894
        %v899 = vadd.f32 %v891, %v897
        %900 = vst.msk [vmem:[%s887] sm:$0xff] %vm561, %v898
        %901 = vst.msk [vmem:[%s887 + $0x8] sm:$0xff] %vm561, %v899
        %s902 = scalar_lea.vmem [#allocation4], 32
        %v903 = vld [vmem:[%s902] sm:$0xff]
        %v904 = vld [vmem:[%s902 + $0x8] sm:$0xff]
        %906 = vset.pattern.permute.xlu0 0
        %907 = vperm.xlu0 %906, %v868
        %v908 = vpop.permute.xlu0 %907
        %911 = vset.pattern.permute.xlu0 0
        %912 = vperm.xlu0 %911, %v870
        %v913 = vpop.permute.xlu0 %912
        %v915 = vmul.f32 %v908, %v903
        %v916 = vmul.f32 %v913, %v904
        %v917 = vpack.c.bf16 %v886, %v884
        %918 = vrot.lane.b32.xlu0 %v583, 64
        %v919 = vpop.permute.xlu0 %918
        %v922 = vsel %vm518, %v917, 0
        %924 = vmatprep.subr.bf16.mxu0 0
        %925 = vmatpush1.bf16.msra.mxu0 %v919
        %926 = vmatprep.subr.bf16.mxu0 0
        %927 = vmatpush1.bf16.msra.mxu0 0
        %928 = vmatprep.subr.bf16.mxu0 0
        %929 = vmatpush1.bf16.msra.mxu0 0
        %930 = vmatprep.subr.bf16.mxu0 0
        %931 = vmatpush1.bf16.msra.mxu0 0
        %932 = vmatprep.subr.bf16.mxu0 0
        %933 = vmatpush1.bf16.msra.mxu0 0
        %934 = vmatprep.subr.bf16.mxu0 0
        %935 = vmatpush1.bf16.msra.mxu0 0
        %936 = vmatprep.subr.bf16.mxu0 0
        %937 = vmatpush1.bf16.msra.mxu0 0
        %938 = vmatprep.subr.bf16.mxu0 0
        %939 = vmatpush1.bf16.msra.mxu0 0
        %940 = vmatprep.subr.bf16.mxu0 0
        %941 = vmatpush1.bf16.msra.mxu0 0
        %942 = vmatprep.subr.bf16.mxu0 0
        %943 = vmatpush1.bf16.msra.mxu0 0
        %944 = vmatprep.subr.bf16.mxu0 0
        %945 = vmatpush1.bf16.msra.mxu0 0
        %946 = vmatprep.subr.bf16.mxu0 0
        %947 = vmatpush1.bf16.msra.mxu0 0
        %948 = vmatprep.subr.bf16.mxu0 0
        %949 = vmatpush1.bf16.msra.mxu0 0
        %950 = vmatprep.subr.bf16.mxu0 0
        %951 = vmatpush1.bf16.msra.mxu0 0
        %952 = vmatprep.subr.bf16.mxu0 0
        %953 = vmatpush1.bf16.msra.mxu0 0
        %954 = vmatprep.subr.bf16.mxu0 0
        %955 = vmatpush1.bf16.msra.mxu0 0
        %956 = vmatprep.mubr.bf16.mxu0 0
        %957 = vmatmul.mubr.bf16.gmra.mrb[0].mxu0 %v922
        %v958 = vpop.f32.mrb[0].mxu0
        %v959 = vadd.f32 0.0, %v958
        %v960 = vpop.f32.mrb[0].mxu0
        %v961 = vpop.f32.mrb[0].mxu0
        %v962 = vadd.f32 0.0, %v961
        %v963 = vpop.f32.mrb[0].mxu0
        %964 = vdwg.mxu0
        %v965 = vadd.f32 %v915, %v959
        %v966 = vadd.f32 %v916, %v962
        %967 = vst.msk [vmem:[%s902] sm:$0xff] %vm468, %v965
        %968 = vst.msk [vmem:[%s902 + $0x8] sm:$0xff] %vm468, %v966
        %969 = vst.msk [vmem:[%s854] sm:$0xff] %vm561, %v863
        %970 = vst.msk [vmem:[%s854 + $0x8] sm:$0xff] %vm561, %v864
        %971 = vrot.lane.b32.xlu0 %v462, 32
        %v972 = vpop.permute.xlu0 %971
        %973 = vrot.lane.b32.xlu0 %v467, 32
        %v974 = vpop.permute.xlu0 %973
        %v976 = vsel %vm468, %v972, 0
        %v979 = vsel %vm468, %v974, 0
        %981 = vmatprep.subr.bf16.mxu0 0
        %982 = vmatpush1.bf16.xpose.msra.mxu0 %v979
        %983 = vmatprep.subr.bf16.mxu0 0
        %984 = vmatpush1.bf16.xpose.msra.mxu0 0
        %985 = vmatprep.subr.bf16.mxu0 0
        %986 = vmatpush1.bf16.xpose.msra.mxu0 0
        %987 = vmatprep.subr.bf16.mxu0 0
        %988 = vmatpush1.bf16.xpose.msra.mxu0 0
        %989 = vmatprep.subr.bf16.mxu0 0
        %990 = vmatpush1.bf16.xpose.msra.mxu0 0
        %991 = vmatprep.subr.bf16.mxu0 0
        %992 = vmatpush1.bf16.xpose.msra.mxu0 0
        %993 = vmatprep.subr.bf16.mxu0 0
        %994 = vmatpush1.bf16.xpose.msra.mxu0 0
        %995 = vmatprep.subr.bf16.mxu0 0
        %996 = vmatpush1.bf16.xpose.msra.mxu0 0
        %997 = vmatprep.subr.bf16.mxu0 0
        %998 = vmatpush1.bf16.xpose.msra.mxu0 0
        %999 = vmatprep.subr.bf16.mxu0 0
        %1000 = vmatpush1.bf16.xpose.msra.mxu0 0
        %1001 = vmatprep.subr.bf16.mxu0 0
        %1002 = vmatpush1.bf16.xpose.msra.mxu0 0
        %1003 = vmatprep.subr.bf16.mxu0 0
        %1004 = vmatpush1.bf16.xpose.msra.mxu0 0
        %1005 = vmatprep.subr.bf16.mxu0 0
        %1006 = vmatpush1.bf16.xpose.msra.mxu0 0
        %1007 = vmatprep.subr.bf16.mxu0 0
        %1008 = vmatpush1.bf16.xpose.msra.mxu0 0
        %1009 = vmatprep.subr.bf16.mxu0 0
        %1010 = vmatpush1.bf16.xpose.msra.mxu0 0
        %1011 = vmatprep.subr.bf16.mxu0 0
        %1012 = vmatpush1.bf16.xpose.msra.mxu0 0
        %1013 = vmatprep.mubr.bf16.mxu0 0
        %1014 = vmatmul.mubr.bf16.gmra.mrb[0].mxu0 %v976
        %v1015 = vpop.f32.mrb[0].mxu0
        %v1016 = vadd.f32 %v456, %v1015
        %v1017 = vpop.f32.mrb[0].mxu0
        %v1018 = vpop.f32.mrb[0].mxu0
        %v1019 = vadd.f32 %v456, %v1018
        %v1020 = vpop.f32.mrb[0].mxu0
        %1021 = vdwg.mxu0
        %s1022 = scalar_lea.vmem [#allocation2], 48
        %v1023 = vld [vmem:[%s1022] sm:$0xff]
        %v1024 = vld [vmem:[%s1022 + $0x8] sm:$0xff]
        %v1025 = vsel %vm518, %v1016, -inf
        %1026 = vmax.xlane.f32.xlu0 %v1025
        %v1027 = vpop.xlane.xlu0 %1026
        %v1028 = vsel %vm518, %v1019, -inf
        %1029 = vmax.xlane.f32.xlu0 %v1028
        %v1030 = vpop.xlane.xlu0 %1029
        %v1031 = vmax.f32 %v1023, %v1027
        %v1032 = vmax.f32 %v1024, %v1030
        %v1033 = vsub.f32 %v1023, %v1031
        %v1034 = vsub.f32 %v1024, %v1032
        %v1035 = vmul.f32 %v1033, 1.442695
        %v1036 = vpow.pop %v1035
        %v1037 = vmul.f32 %v1034, 1.442695
        %v1038 = vpow.pop %v1037
        %1040 = vset.pattern.permute.xlu0 0
        %1041 = vperm.xlu0 %1040, %v1031
        %v1042 = vpop.permute.xlu0 %1041
        %1045 = vset.pattern.permute.xlu0 0
        %1046 = vperm.xlu0 %1045, %v1032
        %v1047 = vpop.permute.xlu0 %1046
        %v1049 = vsub.f32 %v1016, %v1042
        %v1050 = vsub.f32 %v1019, %v1047
        %v1051 = vmul.f32 %v1049, 1.442695
        %v1052 = vpow.pop %v1051
        %v1053 = vmul.f32 %v1050, 1.442695
        %v1054 = vpow.pop %v1053
        %s1055 = scalar_lea.vmem [#allocation3], 48
        %v1056 = vld [vmem:[%s1055] sm:$0xff]
        %v1057 = vld [vmem:[%s1055 + $0x8] sm:$0xff]
        %v1058 = vmul.f32 %v1036, %v1056
        %v1059 = vmul.f32 %v1038, %v1057
        %v1060 = vsel %vm518, %v1052, 0.0
        %1061 = vadd.xlane.f32.xlu0 %v1060
        %v1062 = vpop.xlane.xlu0 %1061
        %v1063 = vsel %vm518, %v1054, 0.0
        %1064 = vadd.xlane.f32.xlu0 %v1063
        %v1065 = vpop.xlane.xlu0 %1064
        %v1066 = vadd.f32 %v1058, %v1062
        %v1067 = vadd.f32 %v1059, %v1065
        %1068 = vst.msk [vmem:[%s1055] sm:$0xff] %vm561, %v1066
        %1069 = vst.msk [vmem:[%s1055 + $0x8] sm:$0xff] %vm561, %v1067
        %s1070 = scalar_lea.vmem [#allocation4], 48
        %v1071 = vld [vmem:[%s1070] sm:$0xff]
        %v1072 = vld [vmem:[%s1070 + $0x8] sm:$0xff]
        %1074 = vset.pattern.permute.xlu0 0
        %1075 = vperm.xlu0 %1074, %v1036
        %v1076 = vpop.permute.xlu0 %1075
        %1079 = vset.pattern.permute.xlu0 0
        %1080 = vperm.xlu0 %1079, %v1038
        %v1081 = vpop.permute.xlu0 %1080
        %v1083 = vmul.f32 %v1076, %v1071
        %v1084 = vmul.f32 %v1081, %v1072
        %v1085 = vpack.c.bf16 %v1054, %v1052
        %1086 = vrot.lane.b32.xlu0 %v583, 32
        %v1087 = vpop.permute.xlu0 %1086
        %v1090 = vsel %vm518, %v1085, 0
        %1092 = vmatprep.subr.bf16.mxu0 0
        %1093 = vmatpush1.bf16.msra.mxu0 %v1087
        %1094 = vmatprep.subr.bf16.mxu0 0
        %1095 = vmatpush1.bf16.msra.mxu0 0
        %1096 = vmatprep.subr.bf16.mxu0 0
        %1097 = vmatpush1.bf16.msra.mxu0 0
        %1098 = vmatprep.subr.bf16.mxu0 0
        %1099 = vmatpush1.bf16.msra.mxu0 0
        %1100 = vmatprep.subr.bf16.mxu0 0
        %1101 = vmatpush1.bf16.msra.mxu0 0
        %1102 = vmatprep.subr.bf16.mxu0 0
        %1103 = vmatpush1.bf16.msra.mxu0 0
        %1104 = vmatprep.subr.bf16.mxu0 0
        %1105 = vmatpush1.bf16.msra.mxu0 0
        %1106 = vmatprep.subr.bf16.mxu0 0
        %1107 = vmatpush1.bf16.msra.mxu0 0
        %1108 = vmatprep.subr.bf16.mxu0 0
        %1109 = vmatpush1.bf16.msra.mxu0 0
        %1110 = vmatprep.subr.bf16.mxu0 0
        %1111 = vmatpush1.bf16.msra.mxu0 0
        %1112 = vmatprep.subr.bf16.mxu0 0
        %1113 = vmatpush1.bf16.msra.mxu0 0
        %1114 = vmatprep.subr.bf16.mxu0 0
        %1115 = vmatpush1.bf16.msra.mxu0 0
        %1116 = vmatprep.subr.bf16.mxu0 0
        %1117 = vmatpush1.bf16.msra.mxu0 0
        %1118 = vmatprep.subr.bf16.mxu0 0
        %1119 = vmatpush1.bf16.msra.mxu0 0
        %1120 = vmatprep.subr.bf16.mxu0 0
        %1121 = vmatpush1.bf16.msra.mxu0 0
        %1122 = vmatprep.subr.bf16.mxu0 0
        %1123 = vmatpush1.bf16.msra.mxu0 0
        %1124 = vmatprep.mubr.bf16.mxu0 0
        %1125 = vmatmul.mubr.bf16.gmra.mrb[0].mxu0 %v1090
        %v1126 = vpop.f32.mrb[0].mxu0
        %v1127 = vadd.f32 0.0, %v1126
        %v1128 = vpop.f32.mrb[0].mxu0
        %v1129 = vpop.f32.mrb[0].mxu0
        %v1130 = vadd.f32 0.0, %v1129
        %v1131 = vpop.f32.mrb[0].mxu0
        %1132 = vdwg.mxu0
        %v1133 = vadd.f32 %v1083, %v1127
        %v1134 = vadd.f32 %v1084, %v1130
        %1135 = vst.msk [vmem:[%s1070] sm:$0xff] %vm468, %v1133
        %1136 = vst.msk [vmem:[%s1070 + $0x8] sm:$0xff] %vm468, %v1134
        %1137 = vst.msk [vmem:[%s1022] sm:$0xff] %vm561, %v1031
        %1138 = vst.msk [vmem:[%s1022 + $0x8] sm:$0xff] %vm561, %v1032
        // Predicated region
        $region123: #{transformer_forward.44} parent=109 // pred_check
          %p1139 = pneg %p415
        $region124: #{transformer_forward.44} parent=109 // pred_check_branch
          %1141 = sbr.rel (%p1139) target = $region126
        $region125: #{transformer_forward.44} parent=109 // pred_region
          %v1142 = vld [vmem:[#allocation4] sm:$0xff]
          %v1143 = vld [vmem:[#allocation4 + $0x8] sm:$0xff]
          %v1144 = vld [vmem:[#allocation3] sm:$0xff]
          %v1145 = vld [vmem:[#allocation3 + $0x8] sm:$0xff]
          %1147 = vset.pattern.permute.xlu0 0
          %1148 = vperm.xlu0 %1147, %v1144
          %v1149 = vpop.permute.xlu0 %1148
          %1152 = vset.pattern.permute.xlu0 0
          %1153 = vperm.xlu0 %1152, %v1145
          %v1154 = vpop.permute.xlu0 %1153
          %v1156 = vrcp.pop %v1149
          %v1157 = vmul.f32 %v1142, %v1156
          %v1158 = vrcp.pop %v1154
          %v1159 = vmul.f32 %v1143, %v1158
          %v1160 = vld [vmem:[%s734] sm:$0xff]
          %v1161 = vld [vmem:[%s734 + $0x8] sm:$0xff]
          %v1162 = vld [vmem:[%s719] sm:$0xff]
          %v1163 = vld [vmem:[%s719 + $0x8] sm:$0xff]
          %1165 = vset.pattern.permute.xlu0 0
          %1166 = vperm.xlu0 %1165, %v1162
          %v1167 = vpop.permute.xlu0 %1166
          %1170 = vset.pattern.permute.xlu0 0
          %1171 = vperm.xlu0 %1170, %v1163
          %v1172 = vpop.permute.xlu0 %1171
          %v1174 = vrcp.pop %v1167
          %v1175 = vmul.f32 %v1160, %v1174
          %v1176 = vrcp.pop %v1172
          %v1177 = vmul.f32 %v1161, %v1176
          %v1178 = vld [vmem:[%s902] sm:$0xff]
          %v1179 = vld [vmem:[%s902 + $0x8] sm:$0xff]
          %v1180 = vld [vmem:[%s887] sm:$0xff]
          %v1181 = vld [vmem:[%s887 + $0x8] sm:$0xff]
          %1183 = vset.pattern.permute.xlu0 0
          %1184 = vperm.xlu0 %1183, %v1180
          %v1185 = vpop.permute.xlu0 %1184
          %1188 = vset.pattern.permute.xlu0 0
          %1189 = vperm.xlu0 %1188, %v1181
          %v1190 = vpop.permute.xlu0 %1189
          %v1192 = vrcp.pop %v1185
          %v1193 = vmul.f32 %v1178, %v1192
          %v1194 = vrcp.pop %v1190
          %v1195 = vmul.f32 %v1179, %v1194
          %v1196 = vld [vmem:[%s1070] sm:$0xff]
          %v1197 = vld [vmem:[%s1070 + $0x8] sm:$0xff]
          %v1198 = vld [vmem:[%s1055] sm:$0xff]
          %v1199 = vld [vmem:[%s1055 + $0x8] sm:$0xff]
          %1201 = vset.pattern.permute.xlu0 0
          %1202 = vperm.xlu0 %1201, %v1198
          %v1203 = vpop.permute.xlu0 %1202
          %1206 = vset.pattern.permute.xlu0 0
          %1207 = vperm.xlu0 %1206, %v1199
          %v1208 = vpop.permute.xlu0 %1207
          %v1210 = vrcp.pop %v1203
          %v1211 = vmul.f32 %v1196, %v1210
          %v1212 = vrcp.pop %v1208
          %v1213 = vmul.f32 %v1197, %v1212
          %1216 = vrot.lane.b32.xlu0 %v1175, 32
          %v1217 = vpop.permute.xlu0 %1216
          %1218 = vrot.lane.b32.xlu0 %v1177, 32
          %v1219 = vpop.permute.xlu0 %1218
          %1224 = vrot.lane.b32.xlu0 %v1193, 64
          %v1225 = vpop.permute.xlu0 %1224
          %1226 = vrot.lane.b32.xlu0 %v1195, 64
          %v1227 = vpop.permute.xlu0 %1226
          %1232 = vrot.lane.b32.xlu0 %v1211, 96
          %v1233 = vpop.permute.xlu0 %1232
          %1234 = vrot.lane.b32.xlu0 %v1213, 96
          %v1235 = vpop.permute.xlu0 %1234
          %v1238 = vsel %vm468, %v1157, %v1217
          %v1239 = vsel %vm468, %v1159, %v1219
          %vm1240 = vcmask 523264
          %v1241 = vsel %vm1240, %v1238, %v1225
          %v1242 = vsel %vm1240, %v1239, %v1227
          %vm1243 = vcmask 785408
          %v1244 = vsel %vm1243, %v1241, %v1233
          %v1245 = vsel %vm1243, %v1242, %v1235
          %v1246 = vpack.c.bf16 %v1245, %v1244
          %v1248 = vunpack.c.l.b16 %v1246
          %v1249 = vunpack.c.h.b16 %v1246
          %v1250 = vpack.c.b16 %v1248, %v1248
          %v1251 = vpack.c.b16 %v1249, %v1249
          %1254 = vst [vmem:[%s412] sm:$0xf] %v1250
          %1255 = vst [vmem:[%s412 + $0x4] sm:$0xf] %v1251
        $region126: #{transformer_forward.44} parent=109 // pred_fallthru
          _
        %s1256 = smul.u32 2, %s21
        %p1257 = scmp.lt.s32.totalorder %s20, 1
        %s1258 = scalar_select %p1257, %s20, 1
        %p1259 = scmp.lt.s32.totalorder %s1256, 1
        %s1260 = scalar_select %p1259, %s1256, 1
        %s1261 = smul.addr %s1258, 2
        %s1262 = sadd.s32 %s1260, %s1261
        %s1263 = smul.addr %s1262, 4
        %s1264 = scalar_lea.vmem %s4, %s1263
        // Predicated region
        $region127: #{transformer_forward.44} parent=109 // pred_check
          %p1265 = pneg %p166
        $region128: #{transformer_forward.44} parent=109 // pred_check_branch
          %1267 = sbr.rel (%p1265) target = $region130
        $region129: #{transformer_forward.44} parent=109 // pred_region
          %s1268 = smul.u32 2, %s21
        $region130: #{transformer_forward.44} parent=109 // pred_fallthru
          _
      $region110: #{transformer_forward.44} parent=5 // pred_fallthru
        _
      %p1269 = scmp.le.s32.totalorder 2, %s10
      // Predicated region
      $region131: #{transformer_forward.44} parent=5 // pred_check
        %p1270 = pneg %p1269
      $region132: #{transformer_forward.44} parent=5 // pred_check_branch
        %1272 = sbr.rel (%p1270) target = $region134
      $region133: #{transformer_forward.44} parent=5 // pred_region
        %s1273 = ssub.s32 %s10, 2
        // Predicated region
        $region135: #{transformer_forward.44} parent=133 // pred_check
          %p1274 = pneg %p172
        $region136: #{transformer_forward.44} parent=133 // pred_check_branch
          %1276 = sbr.rel (%p1274) target = $region138
        $region137: #{transformer_forward.44} parent=133 // pred_region
          %s1277 = smul.u32 2, %s24
          %p1278 = scmp.lt.s32.totalorder %s23, 1
          %s1279 = scalar_select %p1278, %s23, 1
          %p1280 = scmp.lt.s32.totalorder %s1277, 1
          %s1281 = scalar_select %p1280, %s1277, 1
          %s1282 = smul.addr %s1279, 2
          %s1283 = sadd.s32 %s1281, %s1282
          %s1284 = smul.addr %s1283, 4
          %s1285 = scalar_lea.vmem %s4, %s1284
        $region138: #{transformer_forward.44} parent=133 // pred_fallthru
          _
      $region134: #{transformer_forward.44} parent=5 // pred_fallthru
        _
    $region6: #{transformer_forward.44} parent=1 // loop_footer
      %s14 = sadd.s32 1, %s10
    $region7: #{transformer_forward.44} parent=1 // loop_footer_branch
      %9 = sbr.rel target = $region3
    $region8: #{transformer_forward.44} parent=1 // loop_exit
      _

</llo_original>
